<compile_context>
chip_gen: v7x
topology: tpu7x:2x2x1
jax: 0.10.0
libtpu: 0.0.40
codegen_flags: <defaults>
</compile_context>

<pallas_src>
import functools
import math

import jax
import jax.numpy as jnp
import numpy as np
from jax import lax
from jax.experimental import pallas as pl
from jax.experimental.pallas import tpu as pltpu


def _deconv_out_len(L, stride, K=3, padding=0):
    # PyTorch ConvTranspose1d output length (dilation=1, output_padding=0).
    return (L - 1) * stride + K - 2 * padding


def _make_fused_kernel(*, L0, stride, K, N, n_hops, blocks_per_hop, eps):
    """Kernel body for the whole CNN_decoder_share forward pass.

    Layout inside the kernel: every activation slab is (L, N*C) float32 --
    length on the sublane axis, batch x channels packed on the lane axis.
    """

    def kernel(x_ref, wd_ref, vo_ref, a_ref, bd_ref, g_ref, b_ref, bo_ref,
               h1_ref, h2_ref, h3_ref, buf):
        NC = x_ref.shape[1]          # N * Cin   (lanes of the working slabs)
        a = a_ref[...]               # (NC, NC)  0/1 channel-sharing matrix
        bd = bd_ref[...]             # (1, NC)   deconv bias per lane
        g = g_ref[...]               # (1, NC)   BN gamma per lane
        b = b_ref[...]               # (1, NC)   BN beta per lane
        bo = bo_ref[...]             # (1, N*Cout) deconv_out bias per lane

        def deconv_bn_relu(slab, L):
            """[ConvTranspose1d(stride, pad=0) -> BatchNorm1d(train) -> ReLU]."""
            Lout = (L - 1) * stride + K
            # Zero the assembly window (stale rows from earlier, shorter layers).
            buf[0:Lout, :] = jnp.zeros((Lout, NC), jnp.float32)
            # Polyphase accumulation: tap k lands on output rows k, k+s, k+2s, ...
            # (sublane-strided store; taps that share a residue class simply
            # accumulate via the read-modify-write).
            for k in range(K):
                y_k = jnp.dot(slab, wd_ref[k],
                              preferred_element_type=jnp.float32)     # (L, NC)
                cur = buf[pl.ds(k, L, stride), :]
                buf[pl.ds(k, L, stride), :] = cur + y_k
            conv = buf[0:Lout, :] + bd                                 # (Lout, NC)

            # One-pass batch statistics over (N, Lout) per channel.
            s1 = jnp.sum(conv, axis=0, keepdims=True)                  # (1, NC)
            s2 = jnp.sum(conv * conv, axis=0, keepdims=True)           # (1, NC)
            tot1 = jnp.dot(s1, a, preferred_element_type=jnp.float32)
            tot2 = jnp.dot(s2, a, preferred_element_type=jnp.float32)
            inv_cnt = 1.0 / float(N * Lout)
            mean = tot1 * inv_cnt
            var = tot2 * inv_cnt - mean * mean                         # biased
            scale = g * lax.rsqrt(var + eps)                           # EUP
            shift = b - mean * scale
            out = jnp.maximum(conv * scale + shift, 0.0)               # BN+ReLU
            return out, Lout

        def hop(slab, L, h_ref):
            """deconv_out: ConvTranspose1d(stride=1, pad=1, K=3) + bias.

            out[t] = z0[t+1] + z1[t] + z2[t-1]  (zero outside [0, L)).
            The shifted terms come from reading the slab back at sublane
            offsets 0 / 1; edges are handled by the staggered store ranges.
            """
            buf[0:L, :] = slab
            z1 = jnp.dot(slab, vo_ref[1], preferred_element_type=jnp.float32)
            z0s = jnp.dot(buf[1:L, :], vo_ref[0],
                          preferred_element_type=jnp.float32)          # (L-1, NCo)
            z2s = jnp.dot(buf[0:L - 1, :], vo_ref[2],
                          preferred_element_type=jnp.float32)          # (L-1, NCo)
            h_ref[...] = z1 + bo
            h_ref[0:L - 1, :] = h_ref[0:L - 1, :] + z0s
            h_ref[1:L, :] = h_ref[1:L, :] + z2s

        slab = x_ref[...]                                              # (L0, NC)
        L = L0
        hop_refs = (h1_ref, h2_ref, h3_ref)
        for h in range(n_hops):
            for _ in range(blocks_per_hop):
                slab, L = deconv_bn_relu(slab, L)
            hop(slab, L, hop_refs[h])

    return kernel


@functools.partial(jax.jit, static_argnames=("stride",))
def cnn_decoder_share_forward(params, x_ncl, stride):
    """Forward pass of CNN_decoder_share.

    x_ncl: (N, Cin, L0) float32 (PyTorch batch * channel * length).
    Returns (x_hop1, x_hop2, x_hop3), each (N, Cout, L_hop).
    """
    N, Cin, L0 = x_ncl.shape
    cin_w, cout_w, K = params["w_deconv"].shape
    Cout = params["w_out"].shape[1]
    assert cin_w == Cin and cout_w == Cin and K == 3
    eps = 1e-5
    n_hops, blocks_per_hop = 3, 2          # forward() is hard-coded to 3 hops

    # ---- host-side packing (tiny, handled by XLA outside the kernel) -------
    # Activations: (N, C, L) -> (L, N*C): length on sublanes, batch*chan lanes.
    x_packed = jnp.transpose(x_ncl.astype(jnp.float32), (2, 0, 1))
    x_packed = x_packed.reshape(L0, N * Cin)
    eye_n = jnp.eye(N, dtype=jnp.float32)
    # Block-diagonal per-tap weights: both samples mixed in one matmul.
    wd_blk = jnp.stack(
        [jnp.kron(eye_n, params["w_deconv"][:, :, k].astype(jnp.float32))
         for k in range(K)], axis=0)                        # (K, N*Cin, N*Cin)
    vo_blk = jnp.stack(
        [jnp.kron(eye_n, params["w_out"][:, :, k].astype(jnp.float32))
         for k in range(K)], axis=0)                        # (K, N*Cin, N*Cout)
    # Channel-sharing matrix: sums the per-lane stats over the N batch copies.
    a_mat = jnp.kron(jnp.ones((N, N), jnp.float32),
                     jnp.eye(Cin, dtype=jnp.float32))       # (N*Cin, N*Cin)
    bd_l = jnp.tile(params["b_deconv"].astype(jnp.float32), N).reshape(1, N * Cin)
    g_l = jnp.tile(params["gamma"].astype(jnp.float32), N).reshape(1, N * Cin)
    b_l = jnp.tile(params["beta"].astype(jnp.float32), N).reshape(1, N * Cin)
    bo_l = jnp.tile(params["b_out"].astype(jnp.float32), N).reshape(1, N * Cout)

    # Static per-layer lengths.
    L = L0
    hop_lens = []
    for _ in range(n_hops):
        for _ in range(blocks_per_hop):
            L = _deconv_out_len(L, stride, K, 0)
        hop_lens.append(L)                                  # deconv_out keeps L
    max_rows = ((max(hop_lens) + 7) // 8) * 8               # scratch sublanes

    kernel = _make_fused_kernel(L0=L0, stride=stride, K=K, N=N,
                                n_hops=n_hops, blocks_per_hop=blocks_per_hop,
                                eps=eps)

    vmem = pltpu.MemorySpace.VMEM
    out_shape = tuple(jax.ShapeDtypeStruct((hl, N * Cout), jnp.float32)
                      for hl in hop_lens)
    # TODO(synk): if N grows, split the batch over the two v7x TensorCores and
    # exchange the per-channel (sum, sumsq) BN partials; at N=2 stay single-core.
    hops = pl.pallas_call(
        kernel,
        out_shape=out_shape,
        in_specs=[pl.BlockSpec(memory_space=vmem)] * 8,
        out_specs=tuple(pl.BlockSpec(memory_space=vmem) for _ in range(n_hops)),
        scratch_shapes=[pltpu.VMEM((max_rows, N * Cin), jnp.float32)],
    )(x_packed, wd_blk, vo_blk, a_mat, bd_l, g_l, b_l, bo_l)

    # (L, N*Cout) -> (N, Cout, L).  Outputs are tiny (< 10 KiB total); this
    # layout fix-up is one cheap XLA transpose outside the kernel.
    return tuple(h.T.reshape(N, Cout, h.shape[0]) for h in hops)


# ----------------------------------------------------------------------------
# Parameter init (mirrors the PyTorch module's __init__; init-only).
# ----------------------------------------------------------------------------
def init_params(key, input_size, output_size):
    gain = math.sqrt(2.0)  # nn.init.calculate_gain('relu')
    k1, k2, k3, k4 = jax.random.split(key, 4)

    bound = gain * math.sqrt(6.0 / (input_size * 3 + input_size * 3))
    w_deconv = jax.random.uniform(k1, (input_size, input_size, 3),
                                  jnp.float32, -bound, bound)
    b_bd = 1.0 / math.sqrt(input_size * 3)
    b_deconv = jax.random.uniform(k2, (input_size,), jnp.float32, -b_bd, b_bd)

    bound_o = gain * math.sqrt(6.0 / (output_size * 3 + input_size * 3))
    w_out = jax.random.uniform(k3, (input_size, output_size, 3),
                               jnp.float32, -bound_o, bound_o)
    b_bo = 1.0 / math.sqrt(output_size * 3)
    b_out = jax.random.uniform(k4, (output_size,), jnp.float32, -b_bo, b_bo)

    gamma = jnp.ones((input_size,), jnp.float32)   # BatchNorm weight = 1
    beta = jnp.zeros((input_size,), jnp.float32)   # BatchNorm bias = 0
    return dict(w_deconv=w_deconv, b_deconv=b_deconv, w_out=w_out, b_out=b_out,
                gamma=gamma, beta=beta)


# ----------------------------------------------------------------------------
# Plain NumPy reference of CNN_decoder_share.forward (float64), for checking.
# ----------------------------------------------------------------------------
def _reference_forward(params, x, stride):
    w_d = np.asarray(params["w_deconv"], np.float64)
    b_d = np.asarray(params["b_deconv"], np.float64)
    w_o = np.asarray(params["w_out"], np.float64)
    b_o = np.asarray(params["b_out"], np.float64)
    g = np.asarray(params["gamma"], np.float64)
    be = np.asarray(params["beta"], np.float64)

    def convt(x, w, b, s, p):
        n, ci, l = x.shape
        co, k = w.shape[1], w.shape[2]
        lout = (l - 1) * s + k - 2 * p
        y = np.zeros((n, co, lout), np.float64)
        for j in range(l):
            for kk in range(k):
                t = s * j + kk - p
                if 0 <= t < lout:
                    y[:, :, t] += x[:, :, j] @ w[:, :, kk]
        return y + b.reshape(1, co, 1)

    def bn_relu(x):
        mean = x.mean(axis=(0, 2), keepdims=True)
        var = x.var(axis=(0, 2), keepdims=True)           # biased (training)
        xh = (x - mean) / np.sqrt(var + 1e-5)
        return np.maximum(xh * g.reshape(1, -1, 1) + be.reshape(1, -1, 1), 0.0)

    x = np.asarray(x, np.float64)
    outs = []
    for _ in range(3):
        x = bn_relu(convt(x, w_d, b_d, stride, 0))
        x = bn_relu(convt(x, w_d, b_d, stride, 0))
        outs.append(convt(x, w_o, b_o, 1, 1))
    return outs


if __name__ == "__main__":
    # Small, forward-consistent shapes: batch=2, input_size=4 channels,
    # output_size=2 channels, length=8, stride=2, 3 hops.
    input_size, output_size, stride = 4, 2, 2
    N, L = 2, 8

    key = jax.random.PRNGKey(0)
    pkey, xkey = jax.random.split(key)
    params = init_params(pkey, input_size, output_size)
    x = jax.random.normal(xkey, (N, input_size, L), jnp.float32)

    hop1, hop2, hop3 = cnn_decoder_share_forward(params, x, stride=stride)
    jax.block_until_ready((hop1, hop2, hop3))

    # Expected lengths: 8 -> 17 -> 35 (hop1) -> 71 -> 143 (hop2) -> 287 -> 575.
    assert hop1.shape == (N, output_size, 35), hop1.shape
    assert hop2.shape == (N, output_size, 143), hop2.shape
    assert hop3.shape == (N, output_size, 575), hop3.shape

    refs = _reference_forward(params, x, stride)
    for got, want in zip((hop1, hop2, hop3), refs):
        np.testing.assert_allclose(np.asarray(got), want, rtol=2e-3, atol=2e-3)

    print("KERNEL_OK")
</pallas_src>

<mosaic_0001>
module attributes {stable_mosaic.version = 11 : i64} {
  func.func @kernel(%arg0: memref<8x8xf32, #tpu.memory_space<vmem>>, %arg1: memref<3x8x8xf32, #tpu.memory_space<vmem>>, %arg2: memref<3x8x4xf32, #tpu.memory_space<vmem>>, %arg3: memref<8x8xf32, #tpu.memory_space<vmem>>, %arg4: memref<1x8xf32, #tpu.memory_space<vmem>>, %arg5: memref<1x8xf32, #tpu.memory_space<vmem>>, %arg6: memref<1x8xf32, #tpu.memory_space<vmem>>, %arg7: memref<1x4xf32, #tpu.memory_space<vmem>>, %arg8: memref<35x4xf32, #tpu.memory_space<vmem>>, %arg9: memref<143x4xf32, #tpu.memory_space<vmem>>, %arg10: memref<575x4xf32, #tpu.memory_space<vmem>>, %arg11: memref<576x8xf32, #tpu.memory_space<vmem>>) attributes {dimension_semantics = [], scalar_prefetch = 0 : i64, scratch_operands = 1 : i64, tpu.core_type = #tpu.core_type<tc>} {
    %c0 = arith.constant 0 : index
    %c0_0 = arith.constant 0 : index
    %0 = vector.load %arg3[%c0, %c0_0] : memref<8x8xf32, #tpu.memory_space<vmem>>, vector<8x8xf32>
    %c0_1 = arith.constant 0 : index
    %c0_2 = arith.constant 0 : index
    %1 = vector.load %arg4[%c0_1, %c0_2] : memref<1x8xf32, #tpu.memory_space<vmem>>, vector<1x8xf32>
    %c0_3 = arith.constant 0 : index
    %c0_4 = arith.constant 0 : index
    %2 = vector.load %arg5[%c0_3, %c0_4] : memref<1x8xf32, #tpu.memory_space<vmem>>, vector<1x8xf32>
    %c0_5 = arith.constant 0 : index
    %c0_6 = arith.constant 0 : index
    %3 = vector.load %arg6[%c0_5, %c0_6] : memref<1x8xf32, #tpu.memory_space<vmem>>, vector<1x8xf32>
    %c0_7 = arith.constant 0 : index
    %c0_8 = arith.constant 0 : index
    %4 = vector.load %arg7[%c0_7, %c0_8] : memref<1x4xf32, #tpu.memory_space<vmem>>, vector<1x4xf32>
    %c0_9 = arith.constant 0 : index
    %c0_10 = arith.constant 0 : index
    %5 = vector.load %arg0[%c0_9, %c0_10] : memref<8x8xf32, #tpu.memory_space<vmem>>, vector<8x8xf32>
    %cst = arith.constant 0.000000e+00 : f32
    %6 = vector.broadcast %cst : f32 to vector<17x8xf32>
    %c0_11 = arith.constant 0 : index
    %c0_12 = arith.constant 0 : index
    %7 = vector.load %arg11[%c0_11, %c0_12] : memref<576x8xf32, #tpu.memory_space<vmem>>, vector<17x8xf32>
    tpu.vector_store %arg11[%c0_11, %c0_12], %6 {strides = array<i32>} : memref<576x8xf32, #tpu.memory_space<vmem>>, vector<17x8xf32>,
    %c0_13 = arith.constant 0 : index
    %c0_14 = arith.constant 0 : index
    %c0_15 = arith.constant 0 : index
    %8 = vector.load %arg1[%c0_13, %c0_14, %c0_15] : memref<3x8x8xf32, #tpu.memory_space<vmem>>, vector<1x8x8xf32>
    %9 = vector.shape_cast %8 : vector<1x8x8xf32> to vector<8x8xf32>
    %cst_16 = arith.constant dense<0.000000e+00> : vector<8x8xf32>
    %10 = tpu.matmul %5, %9, %cst_16 {dimension_numbers = #tpu.dot_dimension_numbers<[1], [0], [0], [1], [0, 0, 1, 1], [], []>} : vector<8x8xf32>, vector<8x8xf32>, vector<8x8xf32> -> vector<8x8xf32>
    %c0_17 = arith.constant 0 : index
    %c0_18 = arith.constant 0 : index
    %11 = tpu.strided_load %arg11[%c0_17, %c0_18] {strides = array<i32: 2, 1>} : memref<576x8xf32, #tpu.memory_space<vmem>>, vector<8x8xf32>
    %12 = arith.addf %11, %10 : vector<8x8xf32>
    %c0_19 = arith.constant 0 : index
    %c0_20 = arith.constant 0 : index
    %13 = tpu.strided_load %arg11[%c0_19, %c0_20] {strides = array<i32: 2, 1>} : memref<576x8xf32, #tpu.memory_space<vmem>>, vector<8x8xf32>
    tpu.strided_store %arg11[%c0_19, %c0_20], %12 {strides = array<i32: 2, 1>} : memref<576x8xf32, #tpu.memory_space<vmem>>, vector<8x8xf32>
    %c1 = arith.constant 1 : index
    %c0_21 = arith.constant 0 : index
    %c0_22 = arith.constant 0 : index
    %14 = vector.load %arg1[%c1, %c0_21, %c0_22] : memref<3x8x8xf32, #tpu.memory_space<vmem>>, vector<1x8x8xf32>
    %15 = vector.shape_cast %14 : vector<1x8x8xf32> to vector<8x8xf32>
    %cst_23 = arith.constant dense<0.000000e+00> : vector<8x8xf32>
    %16 = tpu.matmul %5, %15, %cst_23 {dimension_numbers = #tpu.dot_dimension_numbers<[1], [0], [0], [1], [0, 0, 1, 1], [], []>} : vector<8x8xf32>, vector<8x8xf32>, vector<8x8xf32> -> vector<8x8xf32>
    %c1_24 = arith.constant 1 : index
    %c0_25 = arith.constant 0 : index
    %17 = tpu.strided_load %arg11[%c1_24, %c0_25] {strides = array<i32: 2, 1>} : memref<576x8xf32, #tpu.memory_space<vmem>>, vector<8x8xf32>
    %18 = arith.addf %17, %16 : vector<8x8xf32>
    %c1_26 = arith.constant 1 : index
    %c0_27 = arith.constant 0 : index
    %19 = tpu.strided_load %arg11[%c1_26, %c0_27] {strides = array<i32: 2, 1>} : memref<576x8xf32, #tpu.memory_space<vmem>>, vector<8x8xf32>
    tpu.strided_store %arg11[%c1_26, %c0_27], %18 {strides = array<i32: 2, 1>} : memref<576x8xf32, #tpu.memory_space<vmem>>, vector<8x8xf32>
    %c2 = arith.constant 2 : index
    %c0_28 = arith.constant 0 : index
    %c0_29 = arith.constant 0 : index
    %20 = vector.load %arg1[%c2, %c0_28, %c0_29] : memref<3x8x8xf32, #tpu.memory_space<vmem>>, vector<1x8x8xf32>
    %21 = vector.shape_cast %20 : vector<1x8x8xf32> to vector<8x8xf32>
    %cst_30 = arith.constant dense<0.000000e+00> : vector<8x8xf32>
    %22 = tpu.matmul %5, %21, %cst_30 {dimension_numbers = #tpu.dot_dimension_numbers<[1], [0], [0], [1], [0, 0, 1, 1], [], []>} : vector<8x8xf32>, vector<8x8xf32>, vector<8x8xf32> -> vector<8x8xf32>
    %c2_31 = arith.constant 2 : index
    %c0_32 = arith.constant 0 : index
    %23 = tpu.strided_load %arg11[%c2_31, %c0_32] {strides = array<i32: 2, 1>} : memref<576x8xf32, #tpu.memory_space<vmem>>, vector<8x8xf32>
    %24 = arith.addf %23, %22 : vector<8x8xf32>
    %c2_33 = arith.constant 2 : index
    %c0_34 = arith.constant 0 : index
    %25 = tpu.strided_load %arg11[%c2_33, %c0_34] {strides = array<i32: 2, 1>} : memref<576x8xf32, #tpu.memory_space<vmem>>, vector<8x8xf32>
    tpu.strided_store %arg11[%c2_33, %c0_34], %24 {strides = array<i32: 2, 1>} : memref<576x8xf32, #tpu.memory_space<vmem>>, vector<8x8xf32>
    %c0_35 = arith.constant 0 : index
    %c0_36 = arith.constant 0 : index
    %26 = vector.load %arg11[%c0_35, %c0_36] : memref<576x8xf32, #tpu.memory_space<vmem>>, vector<17x8xf32>
    %27 = vector.broadcast %1 : vector<1x8xf32> to vector<17x8xf32>
    %28 = arith.addf %26, %27 : vector<17x8xf32>
    %cst_37 = arith.constant dense<0.000000e+00> : vector<8xf32>
    %29 = vector.multi_reduction <add>, %28, %cst_37 [0] : vector<17x8xf32> to vector<8xf32>
    %30 = vector.shape_cast %29 : vector<8xf32> to vector<1x8xf32>
    %31 = arith.mulf %28, %28 : vector<17x8xf32>
    %cst_38 = arith.constant dense<0.000000e+00> : vector<8xf32>
    %32 = vector.multi_reduction <add>, %31, %cst_38 [0] : vector<17x8xf32> to vector<8xf32>
    %33 = vector.shape_cast %32 : vector<8xf32> to vector<1x8xf32>
    %cst_39 = arith.constant dense<0.000000e+00> : vector<1x8xf32>
    %34 = tpu.matmul %30, %0, %cst_39 {dimension_numbers = #tpu.dot_dimension_numbers<[1], [0], [0], [1], [0, 0, 1, 1], [], []>} : vector<1x8xf32>, vector<8x8xf32>, vector<1x8xf32> -> vector<1x8xf32>
    %cst_40 = arith.constant dense<0.000000e+00> : vector<1x8xf32>
    %35 = tpu.matmul %33, %0, %cst_40 {dimension_numbers = #tpu.dot_dimension_numbers<[1], [0], [0], [1], [0, 0, 1, 1], [], []>} : vector<1x8xf32>, vector<8x8xf32>, vector<1x8xf32> -> vector<1x8xf32>
    %cst_41 = arith.constant 0.0294117648 : f32
    %36 = vector.broadcast %cst_41 : f32 to vector<1x8xf32>
    %37 = arith.mulf %34, %36 : vector<1x8xf32>
    %cst_42 = arith.constant 0.0294117648 : f32
    %38 = vector.broadcast %cst_42 : f32 to vector<1x8xf32>
    %39 = arith.mulf %35, %38 : vector<1x8xf32>
    %40 = arith.mulf %37, %37 : vector<1x8xf32>
    %41 = arith.subf %39, %40 : vector<1x8xf32>
    %cst_43 = arith.constant 9.99999974E-6 : f32
    %42 = vector.broadcast %cst_43 : f32 to vector<1x8xf32>
    %43 = arith.addf %41, %42 : vector<1x8xf32>
    %44 = math.rsqrt %43 : vector<1x8xf32>
    %45 = arith.mulf %2, %44 : vector<1x8xf32>
    %46 = arith.mulf %37, %45 : vector<1x8xf32>
    %47 = arith.subf %3, %46 : vector<1x8xf32>
    %48 = vector.broadcast %45 : vector<1x8xf32> to vector<17x8xf32>
    %49 = arith.mulf %28, %48 : vector<17x8xf32>
    %50 = vector.broadcast %47 : vector<1x8xf32> to vector<17x8xf32>
    %51 = arith.addf %49, %50 : vector<17x8xf32>
    %cst_44 = arith.constant 0.000000e+00 : f32
    %52 = vector.broadcast %cst_44 : f32 to vector<17x8xf32>
    %53 = arith.maximumf %51, %52 : vector<17x8xf32>
    %cst_45 = arith.constant 0.000000e+00 : f32
    %54 = vector.broadcast %cst_45 : f32 to vector<35x8xf32>
    %c0_46 = arith.constant 0 : index
    %c0_47 = arith.constant 0 : index
    %55 = vector.load %arg11[%c0_46, %c0_47] : memref<576x8xf32, #tpu.memory_space<vmem>>, vector<35x8xf32>
    tpu.vector_store %arg11[%c0_46, %c0_47], %54 {strides = array<i32>} : memref<576x8xf32, #tpu.memory_space<vmem>>, vector<35x8xf32>,
    %c0_48 = arith.constant 0 : index
    %c0_49 = arith.constant 0 : index
    %c0_50 = arith.constant 0 : index
    %56 = vector.load %arg1[%c0_48, %c0_49, %c0_50] : memref<3x8x8xf32, #tpu.memory_space<vmem>>, vector<1x8x8xf32>
    %57 = vector.shape_cast %56 : vector<1x8x8xf32> to vector<8x8xf32>
    %cst_51 = arith.constant dense<0.000000e+00> : vector<17x8xf32>
    %58 = tpu.matmul %53, %57, %cst_51 {dimension_numbers = #tpu.dot_dimension_numbers<[1], [0], [0], [1], [0, 0, 1, 1], [], []>} : vector<17x8xf32>, vector<8x8xf32>, vector<17x8xf32> -> vector<17x8xf32>
    %c0_52 = arith.constant 0 : index
    %c0_53 = arith.constant 0 : index
    %59 = tpu.strided_load %arg11[%c0_52, %c0_53] {strides = array<i32: 2, 1>} : memref<576x8xf32, #tpu.memory_space<vmem>>, vector<17x8xf32>
    %60 = arith.addf %59, %58 : vector<17x8xf32>
    %c0_54 = arith.constant 0 : index
    %c0_55 = arith.constant 0 : index
    %61 = tpu.strided_load %arg11[%c0_54, %c0_55] {strides = array<i32: 2, 1>} : memref<576x8xf32, #tpu.memory_space<vmem>>, vector<17x8xf32>
    tpu.strided_store %arg11[%c0_54, %c0_55], %60 {strides = array<i32: 2, 1>} : memref<576x8xf32, #tpu.memory_space<vmem>>, vector<17x8xf32>
    %c1_56 = arith.constant 1 : index
    %c0_57 = arith.constant 0 : index
    %c0_58 = arith.constant 0 : index
    %62 = vector.load %arg1[%c1_56, %c0_57, %c0_58] : memref<3x8x8xf32, #tpu.memory_space<vmem>>, vector<1x8x8xf32>
    %63 = vector.shape_cast %62 : vector<1x8x8xf32> to vector<8x8xf32>
    %cst_59 = arith.constant dense<0.000000e+00> : vector<17x8xf32>
    %64 = tpu.matmul %53, %63, %cst_59 {dimension_numbers = #tpu.dot_dimension_numbers<[1], [0], [0], [1], [0, 0, 1, 1], [], []>} : vector<17x8xf32>, vector<8x8xf32>, vector<17x8xf32> -> vector<17x8xf32>
    %c1_60 = arith.constant 1 : index
    %c0_61 = arith.constant 0 : index
    %65 = tpu.strided_load %arg11[%c1_60, %c0_61] {strides = array<i32: 2, 1>} : memref<576x8xf32, #tpu.memory_space<vmem>>, vector<17x8xf32>
    %66 = arith.addf %65, %64 : vector<17x8xf32>
    %c1_62 = arith.constant 1 : index
    %c0_63 = arith.constant 0 : index
    %67 = tpu.strided_load %arg11[%c1_62, %c0_63] {strides = array<i32: 2, 1>} : memref<576x8xf32, #tpu.memory_space<vmem>>, vector<17x8xf32>
    tpu.strided_store %arg11[%c1_62, %c0_63], %66 {strides = array<i32: 2, 1>} : memref<576x8xf32, #tpu.memory_space<vmem>>, vector<17x8xf32>
    %c2_64 = arith.constant 2 : index
    %c0_65 = arith.constant 0 : index
    %c0_66 = arith.constant 0 : index
    %68 = vector.load %arg1[%c2_64, %c0_65, %c0_66] : memref<3x8x8xf32, #tpu.memory_space<vmem>>, vector<1x8x8xf32>
    %69 = vector.shape_cast %68 : vector<1x8x8xf32> to vector<8x8xf32>
    %cst_67 = arith.constant dense<0.000000e+00> : vector<17x8xf32>
    %70 = tpu.matmul %53, %69, %cst_67 {dimension_numbers = #tpu.dot_dimension_numbers<[1], [0], [0], [1], [0, 0, 1, 1], [], []>} : vector<17x8xf32>, vector<8x8xf32>, vector<17x8xf32> -> vector<17x8xf32>
    %c2_68 = arith.constant 2 : index
    %c0_69 = arith.constant 0 : index
    %71 = tpu.strided_load %arg11[%c2_68, %c0_69] {strides = array<i32: 2, 1>} : memref<576x8xf32, #tpu.memory_space<vmem>>, vector<17x8xf32>
    %72 = arith.addf %71, %70 : vector<17x8xf32>
    %c2_70 = arith.constant 2 : index
    %c0_71 = arith.constant 0 : index
    %73 = tpu.strided_load %arg11[%c2_70, %c0_71] {strides = array<i32: 2, 1>} : memref<576x8xf32, #tpu.memory_space<vmem>>, vector<17x8xf32>
    tpu.strided_store %arg11[%c2_70, %c0_71], %72 {strides = array<i32: 2, 1>} : memref<576x8xf32, #tpu.memory_space<vmem>>, vector<17x8xf32>
    %c0_72 = arith.constant 0 : index
    %c0_73 = arith.constant 0 : index
    %74 = vector.load %arg11[%c0_72, %c0_73] : memref<576x8xf32, #tpu.memory_space<vmem>>, vector<35x8xf32>
    %75 = vector.broadcast %1 : vector<1x8xf32> to vector<35x8xf32>
    %76 = arith.addf %74, %75 : vector<35x8xf32>
    %cst_74 = arith.constant dense<0.000000e+00> : vector<8xf32>
    %77 = vector.multi_reduction <add>, %76, %cst_74 [0] : vector<35x8xf32> to vector<8xf32>
    %78 = vector.shape_cast %77 : vector<8xf32> to vector<1x8xf32>
    %79 = arith.mulf %76, %76 : vector<35x8xf32>
    %cst_75 = arith.constant dense<0.000000e+00> : vector<8xf32>
    %80 = vector.multi_reduction <add>, %79, %cst_75 [0] : vector<35x8xf32> to vector<8xf32>
    %81 = vector.shape_cast %80 : vector<8xf32> to vector<1x8xf32>
    %cst_76 = arith.constant dense<0.000000e+00> : vector<1x8xf32>
    %82 = tpu.matmul %78, %0, %cst_76 {dimension_numbers = #tpu.dot_dimension_numbers<[1], [0], [0], [1], [0, 0, 1, 1], [], []>} : vector<1x8xf32>, vector<8x8xf32>, vector<1x8xf32> -> vector<1x8xf32>
    %cst_77 = arith.constant dense<0.000000e+00> : vector<1x8xf32>
    %83 = tpu.matmul %81, %0, %cst_77 {dimension_numbers = #tpu.dot_dimension_numbers<[1], [0], [0], [1], [0, 0, 1, 1], [], []>} : vector<1x8xf32>, vector<8x8xf32>, vector<1x8xf32> -> vector<1x8xf32>
    %cst_78 = arith.constant 0.0142857144 : f32
    %84 = vector.broadcast %cst_78 : f32 to vector<1x8xf32>
    %85 = arith.mulf %82, %84 : vector<1x8xf32>
    %cst_79 = arith.constant 0.0142857144 : f32
    %86 = vector.broadcast %cst_79 : f32 to vector<1x8xf32>
    %87 = arith.mulf %83, %86 : vector<1x8xf32>
    %88 = arith.mulf %85, %85 : vector<1x8xf32>
    %89 = arith.subf %87, %88 : vector<1x8xf32>
    %cst_80 = arith.constant 9.99999974E-6 : f32
    %90 = vector.broadcast %cst_80 : f32 to vector<1x8xf32>
    %91 = arith.addf %89, %90 : vector<1x8xf32>
    %92 = math.rsqrt %91 : vector<1x8xf32>
    %93 = arith.mulf %2, %92 : vector<1x8xf32>
    %94 = arith.mulf %85, %93 : vector<1x8xf32>
    %95 = arith.subf %3, %94 : vector<1x8xf32>
    %96 = vector.broadcast %93 : vector<1x8xf32> to vector<35x8xf32>
    %97 = arith.mulf %76, %96 : vector<35x8xf32>
    %98 = vector.broadcast %95 : vector<1x8xf32> to vector<35x8xf32>
    %99 = arith.addf %97, %98 : vector<35x8xf32>
    %cst_81 = arith.constant 0.000000e+00 : f32
    %100 = vector.broadcast %cst_81 : f32 to vector<35x8xf32>
    %101 = arith.maximumf %99, %100 : vector<35x8xf32>
    %c0_82 = arith.constant 0 : index
    %c0_83 = arith.constant 0 : index
    %102 = vector.load %arg11[%c0_82, %c0_83] : memref<576x8xf32, #tpu.memory_space<vmem>>, vector<35x8xf32>
    tpu.vector_store %arg11[%c0_82, %c0_83], %101 {strides = array<i32>} : memref<576x8xf32, #tpu.memory_space<vmem>>, vector<35x8xf32>,
    %c1_84 = arith.constant 1 : index
    %c0_85 = arith.constant 0 : index
    %c0_86 = arith.constant 0 : index
    %103 = vector.load %arg2[%c1_84, %c0_85, %c0_86] : memref<3x8x4xf32, #tpu.memory_space<vmem>>, vector<1x8x4xf32>
    %104 = vector.shape_cast %103 : vector<1x8x4xf32> to vector<8x4xf32>
    %cst_87 = arith.constant dense<0.000000e+00> : vector<35x4xf32>
    %105 = tpu.matmul %101, %104, %cst_87 {dimension_numbers = #tpu.dot_dimension_numbers<[1], [0], [0], [1], [0, 0, 1, 1], [], []>} : vector<35x8xf32>, vector<8x4xf32>, vector<35x4xf32> -> vector<35x4xf32>
    %c1_88 = arith.constant 1 : index
    %c0_89 = arith.constant 0 : index
    %106 = vector.load %arg11[%c1_88, %c0_89] : memref<576x8xf32, #tpu.memory_space<vmem>>, vector<34x8xf32>
    %c0_90 = arith.constant 0 : index
    %c0_91 = arith.constant 0 : index
    %c0_92 = arith.constant 0 : index
    %107 = vector.load %arg2[%c0_90, %c0_91, %c0_92] : memref<3x8x4xf32, #tpu.memory_space<vmem>>, vector<1x8x4xf32>
    %108 = vector.shape_cast %107 : vector<1x8x4xf32> to vector<8x4xf32>
    %cst_93 = arith.constant dense<0.000000e+00> : vector<34x4xf32>
    %109 = tpu.matmul %106, %108, %cst_93 {dimension_numbers = #tpu.dot_dimension_numbers<[1], [0], [0], [1], [0, 0, 1, 1], [], []>} : vector<34x8xf32>, vector<8x4xf32>, vector<34x4xf32> -> vector<34x4xf32>
    %c0_94 = arith.constant 0 : index
    %c0_95 = arith.constant 0 : index
    %110 = vector.load %arg11[%c0_94, %c0_95] : memref<576x8xf32, #tpu.memory_space<vmem>>, vector<34x8xf32>
    %c2_96 = arith.constant 2 : index
    %c0_97 = arith.constant 0 : index
    %c0_98 = arith.constant 0 : index
    %111 = vector.load %arg2[%c2_96, %c0_97, %c0_98] : memref<3x8x4xf32, #tpu.memory_space<vmem>>, vector<1x8x4xf32>
    %112 = vector.shape_cast %111 : vector<1x8x4xf32> to vector<8x4xf32>
    %cst_99 = arith.constant dense<0.000000e+00> : vector<34x4xf32>
    %113 = tpu.matmul %110, %112, %cst_99 {dimension_numbers = #tpu.dot_dimension_numbers<[1], [0], [0], [1], [0, 0, 1, 1], [], []>} : vector<34x8xf32>, vector<8x4xf32>, vector<34x4xf32> -> vector<34x4xf32>
    %114 = vector.broadcast %4 : vector<1x4xf32> to vector<35x4xf32>
    %115 = arith.addf %105, %114 : vector<35x4xf32>
    %c0_100 = arith.constant 0 : index
    %c0_101 = arith.constant 0 : index
    %116 = vector.load %arg8[%c0_100, %c0_101] : memref<35x4xf32, #tpu.memory_space<vmem>>, vector<35x4xf32>
    tpu.vector_store %arg8[%c0_100, %c0_101], %115 {strides = array<i32>} : memref<35x4xf32, #tpu.memory_space<vmem>>, vector<35x4xf32>,
    %c0_102 = arith.constant 0 : index
    %c0_103 = arith.constant 0 : index
    %117 = vector.load %arg8[%c0_102, %c0_103] : memref<35x4xf32, #tpu.memory_space<vmem>>, vector<34x4xf32>
    %118 = arith.addf %117, %109 : vector<34x4xf32>
    %c0_104 = arith.constant 0 : index
    %c0_105 = arith.constant 0 : index
    %119 = vector.load %arg8[%c0_104, %c0_105] : memref<35x4xf32, #tpu.memory_space<vmem>>, vector<34x4xf32>
    tpu.vector_store %arg8[%c0_104, %c0_105], %118 {strides = array<i32>} : memref<35x4xf32, #tpu.memory_space<vmem>>, vector<34x4xf32>,
    %c1_106 = arith.constant 1 : index
    %c0_107 = arith.constant 0 : index
    %120 = vector.load %arg8[%c1_106, %c0_107] : memref<35x4xf32, #tpu.memory_space<vmem>>, vector<34x4xf32>
    %121 = arith.addf %120, %113 : vector<34x4xf32>
    %c1_108 = arith.constant 1 : index
    %c0_109 = arith.constant 0 : index
    %122 = vector.load %arg8[%c1_108, %c0_109] : memref<35x4xf32, #tpu.memory_space<vmem>>, vector<34x4xf32>
    tpu.vector_store %arg8[%c1_108, %c0_109], %121 {strides = array<i32>} : memref<35x4xf32, #tpu.memory_space<vmem>>, vector<34x4xf32>,
    %cst_110 = arith.constant 0.000000e+00 : f32
    %123 = vector.broadcast %cst_110 : f32 to vector<71x8xf32>
    %c0_111 = arith.constant 0 : index
    %c0_112 = arith.constant 0 : index
    %124 = vector.load %arg11[%c0_111, %c0_112] : memref<576x8xf32, #tpu.memory_space<vmem>>, vector<71x8xf32>
    tpu.vector_store %arg11[%c0_111, %c0_112], %123 {strides = array<i32>} : memref<576x8xf32, #tpu.memory_space<vmem>>, vector<71x8xf32>,
    %c0_113 = arith.constant 0 : index
    %c0_114 = arith.constant 0 : index
    %c0_115 = arith.constant 0 : index
    %125 = vector.load %arg1[%c0_113, %c0_114, %c0_115] : memref<3x8x8xf32, #tpu.memory_space<vmem>>, vector<1x8x8xf32>
    %126 = vector.shape_cast %125 : vector<1x8x8xf32> to vector<8x8xf32>
    %cst_116 = arith.constant dense<0.000000e+00> : vector<35x8xf32>
    %127 = tpu.matmul %101, %126, %cst_116 {dimension_numbers = #tpu.dot_dimension_numbers<[1], [0], [0], [1], [0, 0, 1, 1], [], []>} : vector<35x8xf32>, vector<8x8xf32>, vector<35x8xf32> -> vector<35x8xf32>
    %c0_117 = arith.constant 0 : index
    %c0_118 = arith.constant 0 : index
    %128 = tpu.strided_load %arg11[%c0_117, %c0_118] {strides = array<i32: 2, 1>} : memref<576x8xf32, #tpu.memory_space<vmem>>, vector<35x8xf32>
    %129 = arith.addf %128, %127 : vector<35x8xf32>
    %c0_119 = arith.constant 0 : index
    %c0_120 = arith.constant 0 : index
    %130 = tpu.strided_load %arg11[%c0_119, %c0_120] {strides = array<i32: 2, 1>} : memref<576x8xf32, #tpu.memory_space<vmem>>, vector<35x8xf32>
    tpu.strided_store %arg11[%c0_119, %c0_120], %129 {strides = array<i32: 2, 1>} : memref<576x8xf32, #tpu.memory_space<vmem>>, vector<35x8xf32>
    %c1_121 = arith.constant 1 : index
    %c0_122 = arith.constant 0 : index
    %c0_123 = arith.constant 0 : index
    %131 = vector.load %arg1[%c1_121, %c0_122, %c0_123] : memref<3x8x8xf32, #tpu.memory_space<vmem>>, vector<1x8x8xf32>
    %132 = vector.shape_cast %131 : vector<1x8x8xf32> to vector<8x8xf32>
    %cst_124 = arith.constant dense<0.000000e+00> : vector<35x8xf32>
    %133 = tpu.matmul %101, %132, %cst_124 {dimension_numbers = #tpu.dot_dimension_numbers<[1], [0], [0], [1], [0, 0, 1, 1], [], []>} : vector<35x8xf32>, vector<8x8xf32>, vector<35x8xf32> -> vector<35x8xf32>
    %c1_125 = arith.constant 1 : index
    %c0_126 = arith.constant 0 : index
    %134 = tpu.strided_load %arg11[%c1_125, %c0_126] {strides = array<i32: 2, 1>} : memref<576x8xf32, #tpu.memory_space<vmem>>, vector<35x8xf32>
    %135 = arith.addf %134, %133 : vector<35x8xf32>
    %c1_127 = arith.constant 1 : index
    %c0_128 = arith.constant 0 : index
    %136 = tpu.strided_load %arg11[%c1_127, %c0_128] {strides = array<i32: 2, 1>} : memref<576x8xf32, #tpu.memory_space<vmem>>, vector<35x8xf32>
    tpu.strided_store %arg11[%c1_127, %c0_128], %135 {strides = array<i32: 2, 1>} : memref<576x8xf32, #tpu.memory_space<vmem>>, vector<35x8xf32>
    %c2_129 = arith.constant 2 : index
    %c0_130 = arith.constant 0 : index
    %c0_131 = arith.constant 0 : index
    %137 = vector.load %arg1[%c2_129, %c0_130, %c0_131] : memref<3x8x8xf32, #tpu.memory_space<vmem>>, vector<1x8x8xf32>
    %138 = vector.shape_cast %137 : vector<1x8x8xf32> to vector<8x8xf32>
    %cst_132 = arith.constant dense<0.000000e+00> : vector<35x8xf32>
    %139 = tpu.matmul %101, %138, %cst_132 {dimension_numbers = #tpu.dot_dimension_numbers<[1], [0], [0], [1], [0, 0, 1, 1], [], []>} : vector<35x8xf32>, vector<8x8xf32>, vector<35x8xf32> -> vector<35x8xf32>
    %c2_133 = arith.constant 2 : index
    %c0_134 = arith.constant 0 : index
    %140 = tpu.strided_load %arg11[%c2_133, %c0_134] {strides = array<i32: 2, 1>} : memref<576x8xf32, #tpu.memory_space<vmem>>, vector<35x8xf32>
    %141 = arith.addf %140, %139 : vector<35x8xf32>
    %c2_135 = arith.constant 2 : index
    %c0_136 = arith.constant 0 : index
    %142 = tpu.strided_load %arg11[%c2_135, %c0_136] {strides = array<i32: 2, 1>} : memref<576x8xf32, #tpu.memory_space<vmem>>, vector<35x8xf32>
    tpu.strided_store %arg11[%c2_135, %c0_136], %141 {strides = array<i32: 2, 1>} : memref<576x8xf32, #tpu.memory_space<vmem>>, vector<35x8xf32>
    %c0_137 = arith.constant 0 : index
    %c0_138 = arith.constant 0 : index
    %143 = vector.load %arg11[%c0_137, %c0_138] : memref<576x8xf32, #tpu.memory_space<vmem>>, vector<71x8xf32>
    %144 = vector.broadcast %1 : vector<1x8xf32> to vector<71x8xf32>
    %145 = arith.addf %143, %144 : vector<71x8xf32>
    %cst_139 = arith.constant dense<0.000000e+00> : vector<8xf32>
    %146 = vector.multi_reduction <add>, %145, %cst_139 [0] : vector<71x8xf32> to vector<8xf32>
    %147 = vector.shape_cast %146 : vector<8xf32> to vector<1x8xf32>
    %148 = arith.mulf %145, %145 : vector<71x8xf32>
    %cst_140 = arith.constant dense<0.000000e+00> : vector<8xf32>
    %149 = vector.multi_reduction <add>, %148, %cst_140 [0] : vector<71x8xf32> to vector<8xf32>
    %150 = vector.shape_cast %149 : vector<8xf32> to vector<1x8xf32>
    %cst_141 = arith.constant dense<0.000000e+00> : vector<1x8xf32>
    %151 = tpu.matmul %147, %0, %cst_141 {dimension_numbers = #tpu.dot_dimension_numbers<[1], [0], [0], [1], [0, 0, 1, 1], [], []>} : vector<1x8xf32>, vector<8x8xf32>, vector<1x8xf32> -> vector<1x8xf32>
    %cst_142 = arith.constant dense<0.000000e+00> : vector<1x8xf32>
    %152 = tpu.matmul %150, %0, %cst_142 {dimension_numbers = #tpu.dot_dimension_numbers<[1], [0], [0], [1], [0, 0, 1, 1], [], []>} : vector<1x8xf32>, vector<8x8xf32>, vector<1x8xf32> -> vector<1x8xf32>
    %cst_143 = arith.constant 0.00704225338 : f32
    %153 = vector.broadcast %cst_143 : f32 to vector<1x8xf32>
    %154 = arith.mulf %151, %153 : vector<1x8xf32>
    %cst_144 = arith.constant 0.00704225338 : f32
    %155 = vector.broadcast %cst_144 : f32 to vector<1x8xf32>
    %156 = arith.mulf %152, %155 : vector<1x8xf32>
    %157 = arith.mulf %154, %154 : vector<1x8xf32>
    %158 = arith.subf %156, %157 : vector<1x8xf32>
    %cst_145 = arith.constant 9.99999974E-6 : f32
    %159 = vector.broadcast %cst_145 : f32 to vector<1x8xf32>
    %160 = arith.addf %158, %159 : vector<1x8xf32>
    %161 = math.rsqrt %160 : vector<1x8xf32>
    %162 = arith.mulf %2, %161 : vector<1x8xf32>
    %163 = arith.mulf %154, %162 : vector<1x8xf32>
    %164 = arith.subf %3, %163 : vector<1x8xf32>
    %165 = vector.broadcast %162 : vector<1x8xf32> to vector<71x8xf32>
    %166 = arith.mulf %145, %165 : vector<71x8xf32>
    %167 = vector.broadcast %164 : vector<1x8xf32> to vector<71x8xf32>
    %168 = arith.addf %166, %167 : vector<71x8xf32>
    %cst_146 = arith.constant 0.000000e+00 : f32
    %169 = vector.broadcast %cst_146 : f32 to vector<71x8xf32>
    %170 = arith.maximumf %168, %169 : vector<71x8xf32>
    %cst_147 = arith.constant 0.000000e+00 : f32
    %171 = vector.broadcast %cst_147 : f32 to vector<143x8xf32>
    %c0_148 = arith.constant 0 : index
    %c0_149 = arith.constant 0 : index
    %172 = vector.load %arg11[%c0_148, %c0_149] : memref<576x8xf32, #tpu.memory_space<vmem>>, vector<143x8xf32>
    tpu.vector_store %arg11[%c0_148, %c0_149], %171 {strides = array<i32>} : memref<576x8xf32, #tpu.memory_space<vmem>>, vector<143x8xf32>,
    %c0_150 = arith.constant 0 : index
    %c0_151 = arith.constant 0 : index
    %c0_152 = arith.constant 0 : index
    %173 = vector.load %arg1[%c0_150, %c0_151, %c0_152] : memref<3x8x8xf32, #tpu.memory_space<vmem>>, vector<1x8x8xf32>
    %174 = vector.shape_cast %173 : vector<1x8x8xf32> to vector<8x8xf32>
    %cst_153 = arith.constant dense<0.000000e+00> : vector<71x8xf32>
    %175 = tpu.matmul %170, %174, %cst_153 {dimension_numbers = #tpu.dot_dimension_numbers<[1], [0], [0], [1], [0, 0, 1, 1], [], []>} : vector<71x8xf32>, vector<8x8xf32>, vector<71x8xf32> -> vector<71x8xf32>
    %c0_154 = arith.constant 0 : index
    %c0_155 = arith.constant 0 : index
    %176 = tpu.strided_load %arg11[%c0_154, %c0_155] {strides = array<i32: 2, 1>} : memref<576x8xf32, #tpu.memory_space<vmem>>, vector<71x8xf32>
    %177 = arith.addf %176, %175 : vector<71x8xf32>
    %c0_156 = arith.constant 0 : index
    %c0_157 = arith.constant 0 : index
    %178 = tpu.strided_load %arg11[%c0_156, %c0_157] {strides = array<i32: 2, 1>} : memref<576x8xf32, #tpu.memory_space<vmem>>, vector<71x8xf32>
    tpu.strided_store %arg11[%c0_156, %c0_157], %177 {strides = array<i32: 2, 1>} : memref<576x8xf32, #tpu.memory_space<vmem>>, vector<71x8xf32>
    %c1_158 = arith.constant 1 : index
    %c0_159 = arith.constant 0 : index
    %c0_160 = arith.constant 0 : index
    %179 = vector.load %arg1[%c1_158, %c0_159, %c0_160] : memref<3x8x8xf32, #tpu.memory_space<vmem>>, vector<1x8x8xf32>
    %180 = vector.shape_cast %179 : vector<1x8x8xf32> to vector<8x8xf32>
    %cst_161 = arith.constant dense<0.000000e+00> : vector<71x8xf32>
    %181 = tpu.matmul %170, %180, %cst_161 {dimension_numbers = #tpu.dot_dimension_numbers<[1], [0], [0], [1], [0, 0, 1, 1], [], []>} : vector<71x8xf32>, vector<8x8xf32>, vector<71x8xf32> -> vector<71x8xf32>
    %c1_162 = arith.constant 1 : index
    %c0_163 = arith.constant 0 : index
    %182 = tpu.strided_load %arg11[%c1_162, %c0_163] {strides = array<i32: 2, 1>} : memref<576x8xf32, #tpu.memory_space<vmem>>, vector<71x8xf32>
    %183 = arith.addf %182, %181 : vector<71x8xf32>
    %c1_164 = arith.constant 1 : index
    %c0_165 = arith.constant 0 : index
    %184 = tpu.strided_load %arg11[%c1_164, %c0_165] {strides = array<i32: 2, 1>} : memref<576x8xf32, #tpu.memory_space<vmem>>, vector<71x8xf32>
    tpu.strided_store %arg11[%c1_164, %c0_165], %183 {strides = array<i32: 2, 1>} : memref<576x8xf32, #tpu.memory_space<vmem>>, vector<71x8xf32>
    %c2_166 = arith.constant 2 : index
    %c0_167 = arith.constant 0 : index
    %c0_168 = arith.constant 0 : index
    %185 = vector.load %arg1[%c2_166, %c0_167, %c0_168] : memref<3x8x8xf32, #tpu.memory_space<vmem>>, vector<1x8x8xf32>
    %186 = vector.shape_cast %185 : vector<1x8x8xf32> to vector<8x8xf32>
    %cst_169 = arith.constant dense<0.000000e+00> : vector<71x8xf32>
    %187 = tpu.matmul %170, %186, %cst_169 {dimension_numbers = #tpu.dot_dimension_numbers<[1], [0], [0], [1], [0, 0, 1, 1], [], []>} : vector<71x8xf32>, vector<8x8xf32>, vector<71x8xf32> -> vector<71x8xf32>
    %c2_170 = arith.constant 2 : index
    %c0_171 = arith.constant 0 : index
    %188 = tpu.strided_load %arg11[%c2_170, %c0_171] {strides = array<i32: 2, 1>} : memref<576x8xf32, #tpu.memory_space<vmem>>, vector<71x8xf32>
    %189 = arith.addf %188, %187 : vector<71x8xf32>
    %c2_172 = arith.constant 2 : index
    %c0_173 = arith.constant 0 : index
    %190 = tpu.strided_load %arg11[%c2_172, %c0_173] {strides = array<i32: 2, 1>} : memref<576x8xf32, #tpu.memory_space<vmem>>, vector<71x8xf32>
    tpu.strided_store %arg11[%c2_172, %c0_173], %189 {strides = array<i32: 2, 1>} : memref<576x8xf32, #tpu.memory_space<vmem>>, vector<71x8xf32>
    %c0_174 = arith.constant 0 : index
    %c0_175 = arith.constant 0 : index
    %191 = vector.load %arg11[%c0_174, %c0_175] : memref<576x8xf32, #tpu.memory_space<vmem>>, vector<143x8xf32>
    %192 = vector.broadcast %1 : vector<1x8xf32> to vector<143x8xf32>
    %193 = arith.addf %191, %192 : vector<143x8xf32>
    %cst_176 = arith.constant dense<0.000000e+00> : vector<8xf32>
    %194 = vector.multi_reduction <add>, %193, %cst_176 [0] : vector<143x8xf32> to vector<8xf32>
    %195 = vector.shape_cast %194 : vector<8xf32> to vector<1x8xf32>
    %196 = arith.mulf %193, %193 : vector<143x8xf32>
    %cst_177 = arith.constant dense<0.000000e+00> : vector<8xf32>
    %197 = vector.multi_reduction <add>, %196, %cst_177 [0] : vector<143x8xf32> to vector<8xf32>
    %198 = vector.shape_cast %197 : vector<8xf32> to vector<1x8xf32>
    %cst_178 = arith.constant dense<0.000000e+00> : vector<1x8xf32>
    %199 = tpu.matmul %195, %0, %cst_178 {dimension_numbers = #tpu.dot_dimension_numbers<[1], [0], [0], [1], [0, 0, 1, 1], [], []>} : vector<1x8xf32>, vector<8x8xf32>, vector<1x8xf32> -> vector<1x8xf32>
    %cst_179 = arith.constant dense<0.000000e+00> : vector<1x8xf32>
    %200 = tpu.matmul %198, %0, %cst_179 {dimension_numbers = #tpu.dot_dimension_numbers<[1], [0], [0], [1], [0, 0, 1, 1], [], []>} : vector<1x8xf32>, vector<8x8xf32>, vector<1x8xf32> -> vector<1x8xf32>
    %cst_180 = arith.constant 0.00349650346 : f32
    %201 = vector.broadcast %cst_180 : f32 to vector<1x8xf32>
    %202 = arith.mulf %199, %201 : vector<1x8xf32>
    %cst_181 = arith.constant 0.00349650346 : f32
    %203 = vector.broadcast %cst_181 : f32 to vector<1x8xf32>
    %204 = arith.mulf %200, %203 : vector<1x8xf32>
    %205 = arith.mulf %202, %202 : vector<1x8xf32>
    %206 = arith.subf %204, %205 : vector<1x8xf32>
    %cst_182 = arith.constant 9.99999974E-6 : f32
    %207 = vector.broadcast %cst_182 : f32 to vector<1x8xf32>
    %208 = arith.addf %206, %207 : vector<1x8xf32>
    %209 = math.rsqrt %208 : vector<1x8xf32>
    %210 = arith.mulf %2, %209 : vector<1x8xf32>
    %211 = arith.mulf %202, %210 : vector<1x8xf32>
    %212 = arith.subf %3, %211 : vector<1x8xf32>
    %213 = vector.broadcast %210 : vector<1x8xf32> to vector<143x8xf32>
    %214 = arith.mulf %193, %213 : vector<143x8xf32>
    %215 = vector.broadcast %212 : vector<1x8xf32> to vector<143x8xf32>
    %216 = arith.addf %214, %215 : vector<143x8xf32>
    %cst_183 = arith.constant 0.000000e+00 : f32
    %217 = vector.broadcast %cst_183 : f32 to vector<143x8xf32>
    %218 = arith.maximumf %216, %217 : vector<143x8xf32>
    %c0_184 = arith.constant 0 : index
    %c0_185 = arith.constant 0 : index
    %219 = vector.load %arg11[%c0_184, %c0_185] : memref<576x8xf32, #tpu.memory_space<vmem>>, vector<143x8xf32>
    tpu.vector_store %arg11[%c0_184, %c0_185], %218 {strides = array<i32>} : memref<576x8xf32, #tpu.memory_space<vmem>>, vector<143x8xf32>,
    %c1_186 = arith.constant 1 : index
    %c0_187 = arith.constant 0 : index
    %c0_188 = arith.constant 0 : index
    %220 = vector.load %arg2[%c1_186, %c0_187, %c0_188] : memref<3x8x4xf32, #tpu.memory_space<vmem>>, vector<1x8x4xf32>
    %221 = vector.shape_cast %220 : vector<1x8x4xf32> to vector<8x4xf32>
    %cst_189 = arith.constant dense<0.000000e+00> : vector<143x4xf32>
    %222 = tpu.matmul %218, %221, %cst_189 {dimension_numbers = #tpu.dot_dimension_numbers<[1], [0], [0], [1], [0, 0, 1, 1], [], []>} : vector<143x8xf32>, vector<8x4xf32>, vector<143x4xf32> -> vector<143x4xf32>
    %c1_190 = arith.constant 1 : index
    %c0_191 = arith.constant 0 : index
    %223 = vector.load %arg11[%c1_190, %c0_191] : memref<576x8xf32, #tpu.memory_space<vmem>>, vector<142x8xf32>
    %c0_192 = arith.constant 0 : index
    %c0_193 = arith.constant 0 : index
    %c0_194 = arith.constant 0 : index
    %224 = vector.load %arg2[%c0_192, %c0_193, %c0_194] : memref<3x8x4xf32, #tpu.memory_space<vmem>>, vector<1x8x4xf32>
    %225 = vector.shape_cast %224 : vector<1x8x4xf32> to vector<8x4xf32>
    %cst_195 = arith.constant dense<0.000000e+00> : vector<142x4xf32>
    %226 = tpu.matmul %223, %225, %cst_195 {dimension_numbers = #tpu.dot_dimension_numbers<[1], [0], [0], [1], [0, 0, 1, 1], [], []>} : vector<142x8xf32>, vector<8x4xf32>, vector<142x4xf32> -> vector<142x4xf32>
    %c0_196 = arith.constant 0 : index
    %c0_197 = arith.constant 0 : index
    %227 = vector.load %arg11[%c0_196, %c0_197] : memref<576x8xf32, #tpu.memory_space<vmem>>, vector<142x8xf32>
    %c2_198 = arith.constant 2 : index
    %c0_199 = arith.constant 0 : index
    %c0_200 = arith.constant 0 : index
    %228 = vector.load %arg2[%c2_198, %c0_199, %c0_200] : memref<3x8x4xf32, #tpu.memory_space<vmem>>, vector<1x8x4xf32>
    %229 = vector.shape_cast %228 : vector<1x8x4xf32> to vector<8x4xf32>
    %cst_201 = arith.constant dense<0.000000e+00> : vector<142x4xf32>
    %230 = tpu.matmul %227, %229, %cst_201 {dimension_numbers = #tpu.dot_dimension_numbers<[1], [0], [0], [1], [0, 0, 1, 1], [], []>} : vector<142x8xf32>, vector<8x4xf32>, vector<142x4xf32> -> vector<142x4xf32>
    %231 = vector.broadcast %4 : vector<1x4xf32> to vector<143x4xf32>
    %232 = arith.addf %222, %231 : vector<143x4xf32>
    %c0_202 = arith.constant 0 : index
    %c0_203 = arith.constant 0 : index
    %233 = vector.load %arg9[%c0_202, %c0_203] : memref<143x4xf32, #tpu.memory_space<vmem>>, vector<143x4xf32>
    tpu.vector_store %arg9[%c0_202, %c0_203], %232 {strides = array<i32>} : memref<143x4xf32, #tpu.memory_space<vmem>>, vector<143x4xf32>,
    %c0_204 = arith.constant 0 : index
    %c0_205 = arith.constant 0 : index
    %234 = vector.load %arg9[%c0_204, %c0_205] : memref<143x4xf32, #tpu.memory_space<vmem>>, vector<142x4xf32>
    %235 = arith.addf %234, %226 : vector<142x4xf32>
    %c0_206 = arith.constant 0 : index
    %c0_207 = arith.constant 0 : index
    %236 = vector.load %arg9[%c0_206, %c0_207] : memref<143x4xf32, #tpu.memory_space<vmem>>, vector<142x4xf32>
    tpu.vector_store %arg9[%c0_206, %c0_207], %235 {strides = array<i32>} : memref<143x4xf32, #tpu.memory_space<vmem>>, vector<142x4xf32>,
    %c1_208 = arith.constant 1 : index
    %c0_209 = arith.constant 0 : index
    %237 = vector.load %arg9[%c1_208, %c0_209] : memref<143x4xf32, #tpu.memory_space<vmem>>, vector<142x4xf32>
    %238 = arith.addf %237, %230 : vector<142x4xf32>
    %c1_210 = arith.constant 1 : index
    %c0_211 = arith.constant 0 : index
    %239 = vector.load %arg9[%c1_210, %c0_211] : memref<143x4xf32, #tpu.memory_space<vmem>>, vector<142x4xf32>
    tpu.vector_store %arg9[%c1_210, %c0_211], %238 {strides = array<i32>} : memref<143x4xf32, #tpu.memory_space<vmem>>, vector<142x4xf32>,
    %cst_212 = arith.constant 0.000000e+00 : f32
    %240 = vector.broadcast %cst_212 : f32 to vector<287x8xf32>
    %c0_213 = arith.constant 0 : index
    %c0_214 = arith.constant 0 : index
    %241 = vector.load %arg11[%c0_213, %c0_214] : memref<576x8xf32, #tpu.memory_space<vmem>>, vector<287x8xf32>
    tpu.vector_store %arg11[%c0_213, %c0_214], %240 {strides = array<i32>} : memref<576x8xf32, #tpu.memory_space<vmem>>, vector<287x8xf32>,
    %c0_215 = arith.constant 0 : index
    %c0_216 = arith.constant 0 : index
    %c0_217 = arith.constant 0 : index
    %242 = vector.load %arg1[%c0_215, %c0_216, %c0_217] : memref<3x8x8xf32, #tpu.memory_space<vmem>>, vector<1x8x8xf32>
    %243 = vector.shape_cast %242 : vector<1x8x8xf32> to vector<8x8xf32>
    %cst_218 = arith.constant dense<0.000000e+00> : vector<143x8xf32>
    %244 = tpu.matmul %218, %243, %cst_218 {dimension_numbers = #tpu.dot_dimension_numbers<[1], [0], [0], [1], [0, 0, 1, 1], [], []>} : vector<143x8xf32>, vector<8x8xf32>, vector<143x8xf32> -> vector<143x8xf32>
    %c0_219 = arith.constant 0 : index
    %c0_220 = arith.constant 0 : index
    %245 = tpu.strided_load %arg11[%c0_219, %c0_220] {strides = array<i32: 2, 1>} : memref<576x8xf32, #tpu.memory_space<vmem>>, vector<143x8xf32>
    %246 = arith.addf %245, %244 : vector<143x8xf32>
    %c0_221 = arith.constant 0 : index
    %c0_222 = arith.constant 0 : index
    %247 = tpu.strided_load %arg11[%c0_221, %c0_222] {strides = array<i32: 2, 1>} : memref<576x8xf32, #tpu.memory_space<vmem>>, vector<143x8xf32>
    tpu.strided_store %arg11[%c0_221, %c0_222], %246 {strides = array<i32: 2, 1>} : memref<576x8xf32, #tpu.memory_space<vmem>>, vector<143x8xf32>
    %c1_223 = arith.constant 1 : index
    %c0_224 = arith.constant 0 : index
    %c0_225 = arith.constant 0 : index
    %248 = vector.load %arg1[%c1_223, %c0_224, %c0_225] : memref<3x8x8xf32, #tpu.memory_space<vmem>>, vector<1x8x8xf32>
    %249 = vector.shape_cast %248 : vector<1x8x8xf32> to vector<8x8xf32>
    %cst_226 = arith.constant dense<0.000000e+00> : vector<143x8xf32>
    %250 = tpu.matmul %218, %249, %cst_226 {dimension_numbers = #tpu.dot_dimension_numbers<[1], [0], [0], [1], [0, 0, 1, 1], [], []>} : vector<143x8xf32>, vector<8x8xf32>, vector<143x8xf32> -> vector<143x8xf32>
    %c1_227 = arith.constant 1 : index
    %c0_228 = arith.constant 0 : index
    %251 = tpu.strided_load %arg11[%c1_227, %c0_228] {strides = array<i32: 2, 1>} : memref<576x8xf32, #tpu.memory_space<vmem>>, vector<143x8xf32>
    %252 = arith.addf %251, %250 : vector<143x8xf32>
    %c1_229 = arith.constant 1 : index
    %c0_230 = arith.constant 0 : index
    %253 = tpu.strided_load %arg11[%c1_229, %c0_230] {strides = array<i32: 2, 1>} : memref<576x8xf32, #tpu.memory_space<vmem>>, vector<143x8xf32>
    tpu.strided_store %arg11[%c1_229, %c0_230], %252 {strides = array<i32: 2, 1>} : memref<576x8xf32, #tpu.memory_space<vmem>>, vector<143x8xf32>
    %c2_231 = arith.constant 2 : index
    %c0_232 = arith.constant 0 : index
    %c0_233 = arith.constant 0 : index
    %254 = vector.load %arg1[%c2_231, %c0_232, %c0_233] : memref<3x8x8xf32, #tpu.memory_space<vmem>>, vector<1x8x8xf32>
    %255 = vector.shape_cast %254 : vector<1x8x8xf32> to vector<8x8xf32>
    %cst_234 = arith.constant dense<0.000000e+00> : vector<143x8xf32>
    %256 = tpu.matmul %218, %255, %cst_234 {dimension_numbers = #tpu.dot_dimension_numbers<[1], [0], [0], [1], [0, 0, 1, 1], [], []>} : vector<143x8xf32>, vector<8x8xf32>, vector<143x8xf32> -> vector<143x8xf32>
    %c2_235 = arith.constant 2 : index
    %c0_236 = arith.constant 0 : index
    %257 = tpu.strided_load %arg11[%c2_235, %c0_236] {strides = array<i32: 2, 1>} : memref<576x8xf32, #tpu.memory_space<vmem>>, vector<143x8xf32>
    %258 = arith.addf %257, %256 : vector<143x8xf32>
    %c2_237 = arith.constant 2 : index
    %c0_238 = arith.constant 0 : index
    %259 = tpu.strided_load %arg11[%c2_237, %c0_238] {strides = array<i32: 2, 1>} : memref<576x8xf32, #tpu.memory_space<vmem>>, vector<143x8xf32>
    tpu.strided_store %arg11[%c2_237, %c0_238], %258 {strides = array<i32: 2, 1>} : memref<576x8xf32, #tpu.memory_space<vmem>>, vector<143x8xf32>
    %c0_239 = arith.constant 0 : index
    %c0_240 = arith.constant 0 : index
    %260 = vector.load %arg11[%c0_239, %c0_240] : memref<576x8xf32, #tpu.memory_space<vmem>>, vector<287x8xf32>
    %261 = vector.broadcast %1 : vector<1x8xf32> to vector<287x8xf32>
    %262 = arith.addf %260, %261 : vector<287x8xf32>
    %cst_241 = arith.constant dense<0.000000e+00> : vector<8xf32>
    %263 = vector.multi_reduction <add>, %262, %cst_241 [0] : vector<287x8xf32> to vector<8xf32>
    %264 = vector.shape_cast %263 : vector<8xf32> to vector<1x8xf32>
    %265 = arith.mulf %262, %262 : vector<287x8xf32>
    %cst_242 = arith.constant dense<0.000000e+00> : vector<8xf32>
    %266 = vector.multi_reduction <add>, %265, %cst_242 [0] : vector<287x8xf32> to vector<8xf32>
    %267 = vector.shape_cast %266 : vector<8xf32> to vector<1x8xf32>
    %cst_243 = arith.constant dense<0.000000e+00> : vector<1x8xf32>
    %268 = tpu.matmul %264, %0, %cst_243 {dimension_numbers = #tpu.dot_dimension_numbers<[1], [0], [0], [1], [0, 0, 1, 1], [], []>} : vector<1x8xf32>, vector<8x8xf32>, vector<1x8xf32> -> vector<1x8xf32>
    %cst_244 = arith.constant dense<0.000000e+00> : vector<1x8xf32>
    %269 = tpu.matmul %267, %0, %cst_244 {dimension_numbers = #tpu.dot_dimension_numbers<[1], [0], [0], [1], [0, 0, 1, 1], [], []>} : vector<1x8xf32>, vector<8x8xf32>, vector<1x8xf32> -> vector<1x8xf32>
    %cst_245 = arith.constant 0.0017421603 : f32
    %270 = vector.broadcast %cst_245 : f32 to vector<1x8xf32>
    %271 = arith.mulf %268, %270 : vector<1x8xf32>
    %cst_246 = arith.constant 0.0017421603 : f32
    %272 = vector.broadcast %cst_246 : f32 to vector<1x8xf32>
    %273 = arith.mulf %269, %272 : vector<1x8xf32>
    %274 = arith.mulf %271, %271 : vector<1x8xf32>
    %275 = arith.subf %273, %274 : vector<1x8xf32>
    %cst_247 = arith.constant 9.99999974E-6 : f32
    %276 = vector.broadcast %cst_247 : f32 to vector<1x8xf32>
    %277 = arith.addf %275, %276 : vector<1x8xf32>
    %278 = math.rsqrt %277 : vector<1x8xf32>
    %279 = arith.mulf %2, %278 : vector<1x8xf32>
    %280 = arith.mulf %271, %279 : vector<1x8xf32>
    %281 = arith.subf %3, %280 : vector<1x8xf32>
    %282 = vector.broadcast %279 : vector<1x8xf32> to vector<287x8xf32>
    %283 = arith.mulf %262, %282 : vector<287x8xf32>
    %284 = vector.broadcast %281 : vector<1x8xf32> to vector<287x8xf32>
    %285 = arith.addf %283, %284 : vector<287x8xf32>
    %cst_248 = arith.constant 0.000000e+00 : f32
    %286 = vector.broadcast %cst_248 : f32 to vector<287x8xf32>
    %287 = arith.maximumf %285, %286 : vector<287x8xf32>
    %cst_249 = arith.constant 0.000000e+00 : f32
    %288 = vector.broadcast %cst_249 : f32 to vector<575x8xf32>
    %c0_250 = arith.constant 0 : index
    %c0_251 = arith.constant 0 : index
    %289 = vector.load %arg11[%c0_250, %c0_251] : memref<576x8xf32, #tpu.memory_space<vmem>>, vector<575x8xf32>
    tpu.vector_store %arg11[%c0_250, %c0_251], %288 {strides = array<i32>} : memref<576x8xf32, #tpu.memory_space<vmem>>, vector<575x8xf32>,
    %c0_252 = arith.constant 0 : index
    %c0_253 = arith.constant 0 : index
    %c0_254 = arith.constant 0 : index
    %290 = vector.load %arg1[%c0_252, %c0_253, %c0_254] : memref<3x8x8xf32, #tpu.memory_space<vmem>>, vector<1x8x8xf32>
    %291 = vector.shape_cast %290 : vector<1x8x8xf32> to vector<8x8xf32>
    %cst_255 = arith.constant dense<0.000000e+00> : vector<287x8xf32>
    %292 = tpu.matmul %287, %291, %cst_255 {dimension_numbers = #tpu.dot_dimension_numbers<[1], [0], [0], [1], [0, 0, 1, 1], [], []>} : vector<287x8xf32>, vector<8x8xf32>, vector<287x8xf32> -> vector<287x8xf32>
    %c0_256 = arith.constant 0 : index
    %c0_257 = arith.constant 0 : index
    %293 = tpu.strided_load %arg11[%c0_256, %c0_257] {strides = array<i32: 2, 1>} : memref<576x8xf32, #tpu.memory_space<vmem>>, vector<287x8xf32>
    %294 = arith.addf %293, %292 : vector<287x8xf32>
    %c0_258 = arith.constant 0 : index
    %c0_259 = arith.constant 0 : index
    %295 = tpu.strided_load %arg11[%c0_258, %c0_259] {strides = array<i32: 2, 1>} : memref<576x8xf32, #tpu.memory_space<vmem>>, vector<287x8xf32>
    tpu.strided_store %arg11[%c0_258, %c0_259], %294 {strides = array<i32: 2, 1>} : memref<576x8xf32, #tpu.memory_space<vmem>>, vector<287x8xf32>
    %c1_260 = arith.constant 1 : index
    %c0_261 = arith.constant 0 : index
    %c0_262 = arith.constant 0 : index
    %296 = vector.load %arg1[%c1_260, %c0_261, %c0_262] : memref<3x8x8xf32, #tpu.memory_space<vmem>>, vector<1x8x8xf32>
    %297 = vector.shape_cast %296 : vector<1x8x8xf32> to vector<8x8xf32>
    %cst_263 = arith.constant dense<0.000000e+00> : vector<287x8xf32>
    %298 = tpu.matmul %287, %297, %cst_263 {dimension_numbers = #tpu.dot_dimension_numbers<[1], [0], [0], [1], [0, 0, 1, 1], [], []>} : vector<287x8xf32>, vector<8x8xf32>, vector<287x8xf32> -> vector<287x8xf32>
    %c1_264 = arith.constant 1 : index
    %c0_265 = arith.constant 0 : index
    %299 = tpu.strided_load %arg11[%c1_264, %c0_265] {strides = array<i32: 2, 1>} : memref<576x8xf32, #tpu.memory_space<vmem>>, vector<287x8xf32>
    %300 = arith.addf %299, %298 : vector<287x8xf32>
    %c1_266 = arith.constant 1 : index
    %c0_267 = arith.constant 0 : index
    %301 = tpu.strided_load %arg11[%c1_266, %c0_267] {strides = array<i32: 2, 1>} : memref<576x8xf32, #tpu.memory_space<vmem>>, vector<287x8xf32>
    tpu.strided_store %arg11[%c1_266, %c0_267], %300 {strides = array<i32: 2, 1>} : memref<576x8xf32, #tpu.memory_space<vmem>>, vector<287x8xf32>
    %c2_268 = arith.constant 2 : index
    %c0_269 = arith.constant 0 : index
    %c0_270 = arith.constant 0 : index
    %302 = vector.load %arg1[%c2_268, %c0_269, %c0_270] : memref<3x8x8xf32, #tpu.memory_space<vmem>>, vector<1x8x8xf32>
    %303 = vector.shape_cast %302 : vector<1x8x8xf32> to vector<8x8xf32>
    %cst_271 = arith.constant dense<0.000000e+00> : vector<287x8xf32>
    %304 = tpu.matmul %287, %303, %cst_271 {dimension_numbers = #tpu.dot_dimension_numbers<[1], [0], [0], [1], [0, 0, 1, 1], [], []>} : vector<287x8xf32>, vector<8x8xf32>, vector<287x8xf32> -> vector<287x8xf32>
    %c2_272 = arith.constant 2 : index
    %c0_273 = arith.constant 0 : index
    %305 = tpu.strided_load %arg11[%c2_272, %c0_273] {strides = array<i32: 2, 1>} : memref<576x8xf32, #tpu.memory_space<vmem>>, vector<287x8xf32>
    %306 = arith.addf %305, %304 : vector<287x8xf32>
    %c2_274 = arith.constant 2 : index
    %c0_275 = arith.constant 0 : index
    %307 = tpu.strided_load %arg11[%c2_274, %c0_275] {strides = array<i32: 2, 1>} : memref<576x8xf32, #tpu.memory_space<vmem>>, vector<287x8xf32>
    tpu.strided_store %arg11[%c2_274, %c0_275], %306 {strides = array<i32: 2, 1>} : memref<576x8xf32, #tpu.memory_space<vmem>>, vector<287x8xf32>
    %c0_276 = arith.constant 0 : index
    %c0_277 = arith.constant 0 : index
    %308 = vector.load %arg11[%c0_276, %c0_277] : memref<576x8xf32, #tpu.memory_space<vmem>>, vector<575x8xf32>
    %309 = vector.broadcast %1 : vector<1x8xf32> to vector<575x8xf32>
    %310 = arith.addf %308, %309 : vector<575x8xf32>
    %cst_278 = arith.constant dense<0.000000e+00> : vector<8xf32>
    %311 = vector.multi_reduction <add>, %310, %cst_278 [0] : vector<575x8xf32> to vector<8xf32>
    %312 = vector.shape_cast %311 : vector<8xf32> to vector<1x8xf32>
    %313 = arith.mulf %310, %310 : vector<575x8xf32>
    %cst_279 = arith.constant dense<0.000000e+00> : vector<8xf32>
    %314 = vector.multi_reduction <add>, %313, %cst_279 [0] : vector<575x8xf32> to vector<8xf32>
    %315 = vector.shape_cast %314 : vector<8xf32> to vector<1x8xf32>
    %cst_280 = arith.constant dense<0.000000e+00> : vector<1x8xf32>
    %316 = tpu.matmul %312, %0, %cst_280 {dimension_numbers = #tpu.dot_dimension_numbers<[1], [0], [0], [1], [0, 0, 1, 1], [], []>} : vector<1x8xf32>, vector<8x8xf32>, vector<1x8xf32> -> vector<1x8xf32>
    %cst_281 = arith.constant dense<0.000000e+00> : vector<1x8xf32>
    %317 = tpu.matmul %315, %0, %cst_281 {dimension_numbers = #tpu.dot_dimension_numbers<[1], [0], [0], [1], [0, 0, 1, 1], [], []>} : vector<1x8xf32>, vector<8x8xf32>, vector<1x8xf32> -> vector<1x8xf32>
    %cst_282 = arith.constant 8.69565236E-4 : f32
    %318 = vector.broadcast %cst_282 : f32 to vector<1x8xf32>
    %319 = arith.mulf %316, %318 : vector<1x8xf32>
    %cst_283 = arith.constant 8.69565236E-4 : f32
    %320 = vector.broadcast %cst_283 : f32 to vector<1x8xf32>
    %321 = arith.mulf %317, %320 : vector<1x8xf32>
    %322 = arith.mulf %319, %319 : vector<1x8xf32>
    %323 = arith.subf %321, %322 : vector<1x8xf32>
    %cst_284 = arith.constant 9.99999974E-6 : f32
    %324 = vector.broadcast %cst_284 : f32 to vector<1x8xf32>
    %325 = arith.addf %323, %324 : vector<1x8xf32>
    %326 = math.rsqrt %325 : vector<1x8xf32>
    %327 = arith.mulf %2, %326 : vector<1x8xf32>
    %328 = arith.mulf %319, %327 : vector<1x8xf32>
    %329 = arith.subf %3, %328 : vector<1x8xf32>
    %330 = vector.broadcast %327 : vector<1x8xf32> to vector<575x8xf32>
    %331 = arith.mulf %310, %330 : vector<575x8xf32>
    %332 = vector.broadcast %329 : vector<1x8xf32> to vector<575x8xf32>
    %333 = arith.addf %331, %332 : vector<575x8xf32>
    %cst_285 = arith.constant 0.000000e+00 : f32
    %334 = vector.broadcast %cst_285 : f32 to vector<575x8xf32>
    %335 = arith.maximumf %333, %334 : vector<575x8xf32>
    %c0_286 = arith.constant 0 : index
    %c0_287 = arith.constant 0 : index
    %336 = vector.load %arg11[%c0_286, %c0_287] : memref<576x8xf32, #tpu.memory_space<vmem>>, vector<575x8xf32>
    tpu.vector_store %arg11[%c0_286, %c0_287], %335 {strides = array<i32>} : memref<576x8xf32, #tpu.memory_space<vmem>>, vector<575x8xf32>,
    %c1_288 = arith.constant 1 : index
    %c0_289 = arith.constant 0 : index
    %c0_290 = arith.constant 0 : index
    %337 = vector.load %arg2[%c1_288, %c0_289, %c0_290] : memref<3x8x4xf32, #tpu.memory_space<vmem>>, vector<1x8x4xf32>
    %338 = vector.shape_cast %337 : vector<1x8x4xf32> to vector<8x4xf32>
    %cst_291 = arith.constant dense<0.000000e+00> : vector<575x4xf32>
    %339 = tpu.matmul %335, %338, %cst_291 {dimension_numbers = #tpu.dot_dimension_numbers<[1], [0], [0], [1], [0, 0, 1, 1], [], []>} : vector<575x8xf32>, vector<8x4xf32>, vector<575x4xf32> -> vector<575x4xf32>
    %c1_292 = arith.constant 1 : index
    %c0_293 = arith.constant 0 : index
    %340 = vector.load %arg11[%c1_292, %c0_293] : memref<576x8xf32, #tpu.memory_space<vmem>>, vector<574x8xf32>
    %c0_294 = arith.constant 0 : index
    %c0_295 = arith.constant 0 : index
    %c0_296 = arith.constant 0 : index
    %341 = vector.load %arg2[%c0_294, %c0_295, %c0_296] : memref<3x8x4xf32, #tpu.memory_space<vmem>>, vector<1x8x4xf32>
    %342 = vector.shape_cast %341 : vector<1x8x4xf32> to vector<8x4xf32>
    %cst_297 = arith.constant dense<0.000000e+00> : vector<574x4xf32>
    %343 = tpu.matmul %340, %342, %cst_297 {dimension_numbers = #tpu.dot_dimension_numbers<[1], [0], [0], [1], [0, 0, 1, 1], [], []>} : vector<574x8xf32>, vector<8x4xf32>, vector<574x4xf32> -> vector<574x4xf32>
    %c0_298 = arith.constant 0 : index
    %c0_299 = arith.constant 0 : index
    %344 = vector.load %arg11[%c0_298, %c0_299] : memref<576x8xf32, #tpu.memory_space<vmem>>, vector<574x8xf32>
    %c2_300 = arith.constant 2 : index
    %c0_301 = arith.constant 0 : index
    %c0_302 = arith.constant 0 : index
    %345 = vector.load %arg2[%c2_300, %c0_301, %c0_302] : memref<3x8x4xf32, #tpu.memory_space<vmem>>, vector<1x8x4xf32>
    %346 = vector.shape_cast %345 : vector<1x8x4xf32> to vector<8x4xf32>
    %cst_303 = arith.constant dense<0.000000e+00> : vector<574x4xf32>
    %347 = tpu.matmul %344, %346, %cst_303 {dimension_numbers = #tpu.dot_dimension_numbers<[1], [0], [0], [1], [0, 0, 1, 1], [], []>} : vector<574x8xf32>, vector<8x4xf32>, vector<574x4xf32> -> vector<574x4xf32>
    %348 = vector.broadcast %4 : vector<1x4xf32> to vector<575x4xf32>
    %349 = arith.addf %339, %348 : vector<575x4xf32>
    %c0_304 = arith.constant 0 : index
    %c0_305 = arith.constant 0 : index
    %350 = vector.load %arg10[%c0_304, %c0_305] : memref<575x4xf32, #tpu.memory_space<vmem>>, vector<575x4xf32>
    tpu.vector_store %arg10[%c0_304, %c0_305], %349 {strides = array<i32>} : memref<575x4xf32, #tpu.memory_space<vmem>>, vector<575x4xf32>,
    %c0_306 = arith.constant 0 : index
    %c0_307 = arith.constant 0 : index
    %351 = vector.load %arg10[%c0_306, %c0_307] : memref<575x4xf32, #tpu.memory_space<vmem>>, vector<574x4xf32>
    %352 = arith.addf %351, %343 : vector<574x4xf32>
    %c0_308 = arith.constant 0 : index
    %c0_309 = arith.constant 0 : index
    %353 = vector.load %arg10[%c0_308, %c0_309] : memref<575x4xf32, #tpu.memory_space<vmem>>, vector<574x4xf32>
    tpu.vector_store %arg10[%c0_308, %c0_309], %352 {strides = array<i32>} : memref<575x4xf32, #tpu.memory_space<vmem>>, vector<574x4xf32>,
    %c1_310 = arith.constant 1 : index
    %c0_311 = arith.constant 0 : index
    %354 = vector.load %arg10[%c1_310, %c0_311] : memref<575x4xf32, #tpu.memory_space<vmem>>, vector<574x4xf32>
    %355 = arith.addf %354, %347 : vector<574x4xf32>
    %c1_312 = arith.constant 1 : index
    %c0_313 = arith.constant 0 : index
    %356 = vector.load %arg10[%c1_312, %c0_313] : memref<575x4xf32, #tpu.memory_space<vmem>>, vector<574x4xf32>
    tpu.vector_store %arg10[%c1_312, %c0_313], %355 {strides = array<i32>} : memref<575x4xf32, #tpu.memory_space<vmem>>, vector<574x4xf32>,
    return
  }
}

</mosaic_0001>

<llo_original>
// kernel: tile.23
$region0: #{tile.23}
  #allocation0 [shape = 's32[1]{0}', space=sflag, size = 0x4, scoped, tag = 'scoped memory for tile.23']
  %s0 = inlined_call_operand.vmem [shape: f32[4], index: 0, kind: input, shape index: {}]
  %s1 = inlined_call_operand.vmem [shape: f32[2,4], index: 1, kind: output, shape index: {}]
  // Predicated region
  $region2: #{tile.23} parent=0 // pred_check
    _
  $region3: #{tile.23} parent=0 // pred_check_branch
    %3 = sbr.rel (0) target = $region5
  $region4: #{tile.23} parent=0 // pred_region
    _
  $region5: #{tile.23} parent=0 // pred_fallthru
    _
  %v4 = vld [vmem:[%s0] ss:$0 sm:$0xff]
  %5 = vst [vmem:[%s1] sm:$0x3] %v4

// kernel: tile.24
$region0: #{tile.24}
  %s0 = inlined_call_operand.vmem [shape: f32[2,4], index: 0, kind: input, shape index: {}]
  %s1 = inlined_call_operand.vmem [shape: f32[1,8], index: 1, kind: output, shape index: {}]
  $region1: #{tile.24} parent=0
    #allocation0 [shape = 'u8[4096]{0}', space=vmem, size = 0x1000, scoped, tag = 'scoped mem for output reshape']
    #allocation1 [shape = 'u8[4096]{0}', space=vmem, size = 0x1000, scoped, tag = 'scoped mem for input reshape']
    %s3 = sshllo.u32 0, 2
    %v4 = vld [vmem:[%s0] sm:%s3]
    %5 = vst [vmem:[#allocation1] sm:%s3] %v4
    %v6 = vld [vmem:[#allocation1] sm:$0x1]
    %vm7 = vcmask 31744
    %8 = vst.msk [vmem:[#allocation0] sm:$0x1] %vm7, %v6
    %s9 = scalar_lea.vmem [#allocation1], 1
    %v10 = vld [vmem:[%s9] sm:$0x1]
    %11 = vrot.lane.b32.xlu0 %v10, 4
    %v12 = vpop.permute.xlu0 %11
    %vm13 = vcmask 64544
    %14 = vst.msk [vmem:[#allocation0] sm:$0x1] %vm13, %v12
    %s16 = sshllo.u32 0, 1
    %v18 = vld [vmem:[#allocation0] sm:%s16]
    %s19 = sshllo.u32 0, 1
    %20 = vst [vmem:[%s1] sm:%s19] %v18

// kernel: tile.38
$region0: #{tile.38}
  #allocation0 [shape = 's32[1]{0}', space=sflag, size = 0x4, scoped, tag = 'scoped memory for tile.38']
  %s0 = inlined_call_operand.vmem [shape: f32[2], index: 0, kind: input, shape index: {}]
  %s1 = inlined_call_operand.vmem [shape: f32[2,2], index: 1, kind: output, shape index: {}]
  // Predicated region
  $region2: #{tile.38} parent=0 // pred_check
    _
  $region3: #{tile.38} parent=0 // pred_check_branch
    %3 = sbr.rel (0) target = $region5
  $region4: #{tile.38} parent=0 // pred_region
    _
  $region5: #{tile.38} parent=0 // pred_fallthru
    _
  %v4 = vld [vmem:[%s0] ss:$0 sm:$0xff]
  %5 = vst [vmem:[%s1] sm:$0x3] %v4

// kernel: tile.39
$region0: #{tile.39}
  %s0 = inlined_call_operand.vmem [shape: f32[2,2], index: 0, kind: input, shape index: {}]
  %s1 = inlined_call_operand.vmem [shape: f32[1,4], index: 1, kind: output, shape index: {}]
  $region1: #{tile.39} parent=0
    #allocation0 [shape = 'u8[4096]{0}', space=vmem, size = 0x1000, scoped, tag = 'scoped mem for output reshape']
    #allocation1 [shape = 'u8[4096]{0}', space=vmem, size = 0x1000, scoped, tag = 'scoped mem for input reshape']
    %s3 = sshllo.u32 0, 2
    %v4 = vld [vmem:[%s0] sm:%s3]
    %5 = vst [vmem:[#allocation1] sm:%s3] %v4
    %v6 = vld [vmem:[#allocation1] sm:$0x1]
    %vm7 = vcmask 15360
    %8 = vst.msk [vmem:[#allocation0] sm:$0x1] %vm7, %v6
    %s9 = scalar_lea.vmem [#allocation1], 1
    %v10 = vld [vmem:[%s9] sm:$0x1]
    %11 = vrot.lane.b32.xlu0 %v10, 2
    %v12 = vpop.permute.xlu0 %11
    %vm13 = vcmask 31760
    %14 = vst.msk [vmem:[#allocation0] sm:$0x1] %vm13, %v12
    %s16 = sshllo.u32 0, 1
    %v18 = vld [vmem:[#allocation0] sm:%s16]
    %s19 = sshllo.u32 0, 1
    %20 = vst [vmem:[%s1] sm:%s19] %v18

// kernel: cnn_decoder_share_forward.1
$region0: #{cnn_decoder_share_forward.1}
  #allocation0 [shape = 'u32[]', space=smem, size = 0x4, offset = 0x4, fixed_abs, tag = 'smem constant byte address 0x4 - core index']
  #allocation1 [shape = 'u32[144,128]{1,0:T(1,128)}', space=vmem, size = 0x12000, scoped, tag = 'internal scratch']
  #allocation2 [shape = 'f32[576,8]{1,0:T(8,128)}', space=vmem, size = 0x48000, scoped, tag = 'scratch operand']
  %s0 = inlined_call_operand.vmem [shape: f32[8,8], index: 0, kind: input, shape index: {}]
  %s1 = inlined_call_operand.vmem [shape: f32[3,8,8], index: 1, kind: input, shape index: {}]
  %s2 = inlined_call_operand.vmem [shape: f32[3,8,4], index: 2, kind: input, shape index: {}]
  %s3 = inlined_call_operand.vmem [shape: f32[8,8], index: 3, kind: input, shape index: {}]
  %s4 = inlined_call_operand.vmem [shape: f32[1,8], index: 4, kind: input, shape index: {}]
  %s5 = inlined_call_operand.vmem [shape: f32[1,8], index: 5, kind: input, shape index: {}]
  %s6 = inlined_call_operand.vmem [shape: f32[1,8], index: 6, kind: input, shape index: {}]
  %s7 = inlined_call_operand.vmem [shape: f32[1,4], index: 7, kind: input, shape index: {}]
  %s8 = inlined_call_operand.vmem [shape: f32[35,4], index: 8, kind: output, shape index: {0}]
  %s9 = inlined_call_operand.vmem [shape: f32[143,4], index: 9, kind: output, shape index: {1}]
  %s10 = inlined_call_operand.vmem [shape: f32[575,4], index: 10, kind: output, shape index: {2}]
  %11 = xla_tuple %s8, %s9, %s10
  %s12 = sld [smem:[#allocation0]]
  $region58: #{cnn_decoder_share_forward.1} parent=0
    _
  %s14 = ssub.s32 1, %s12
  %s15 = scalar_select 0, %s14, %s12
  // Predicated region
  $region2: #{cnn_decoder_share_forward.1} parent=0 // pred_check
    _
  $region3: #{cnn_decoder_share_forward.1} parent=0 // pred_check_branch
    %17 = sbr.rel (0) target = $region5
  $region4: #{cnn_decoder_share_forward.1} parent=0 // pred_region
    _
  $region5: #{cnn_decoder_share_forward.1} parent=0 // pred_fallthru
    _
  // Predicated region
  $region6: #{cnn_decoder_share_forward.1} parent=0 // pred_check
    _
  $region7: #{cnn_decoder_share_forward.1} parent=0 // pred_check_branch
    %19 = sbr.rel (0) target = $region9
  $region8: #{cnn_decoder_share_forward.1} parent=0 // pred_region
    _
  $region9: #{cnn_decoder_share_forward.1} parent=0 // pred_fallthru
    _
  // Predicated region
  $region10: #{cnn_decoder_share_forward.1} parent=0 // pred_check
    _
  $region11: #{cnn_decoder_share_forward.1} parent=0 // pred_check_branch
    %21 = sbr.rel (0) target = $region13
  $region12: #{cnn_decoder_share_forward.1} parent=0 // pred_region
    _
  $region13: #{cnn_decoder_share_forward.1} parent=0 // pred_fallthru
    _
  // Predicated region
  $region14: #{cnn_decoder_share_forward.1} parent=0 // pred_check
    _
  $region15: #{cnn_decoder_share_forward.1} parent=0 // pred_check_branch
    %23 = sbr.rel (0) target = $region17
  $region16: #{cnn_decoder_share_forward.1} parent=0 // pred_region
    _
  $region17: #{cnn_decoder_share_forward.1} parent=0 // pred_fallthru
    _
  // Predicated region
  $region18: #{cnn_decoder_share_forward.1} parent=0 // pred_check
    _
  $region19: #{cnn_decoder_share_forward.1} parent=0 // pred_check_branch
    %25 = sbr.rel (0) target = $region21
  $region20: #{cnn_decoder_share_forward.1} parent=0 // pred_region
    _
  $region21: #{cnn_decoder_share_forward.1} parent=0 // pred_fallthru
    _
  // Predicated region
  $region22: #{cnn_decoder_share_forward.1} parent=0 // pred_check
    _
  $region23: #{cnn_decoder_share_forward.1} parent=0 // pred_check_branch
    %27 = sbr.rel (0) target = $region25
  $region24: #{cnn_decoder_share_forward.1} parent=0 // pred_region
    _
  $region25: #{cnn_decoder_share_forward.1} parent=0 // pred_fallthru
    _
  // Predicated region
  $region26: #{cnn_decoder_share_forward.1} parent=0 // pred_check
    _
  $region27: #{cnn_decoder_share_forward.1} parent=0 // pred_check_branch
    %29 = sbr.rel (0) target = $region29
  $region28: #{cnn_decoder_share_forward.1} parent=0 // pred_region
    _
  $region29: #{cnn_decoder_share_forward.1} parent=0 // pred_fallthru
    _
  // Predicated region
  $region30: #{cnn_decoder_share_forward.1} parent=0 // pred_check
    _
  $region31: #{cnn_decoder_share_forward.1} parent=0 // pred_check_branch
    %31 = sbr.rel (0) target = $region33
  $region32: #{cnn_decoder_share_forward.1} parent=0 // pred_region
    _
  $region33: #{cnn_decoder_share_forward.1} parent=0 // pred_fallthru
    _
  %v32 = vld [vmem:[%s3] sm:$0xff]
  %v33 = vld [vmem:[%s4] sm:$0x1]
  %v34 = vld [vmem:[%s5] sm:$0x1]
  %v35 = vld [vmem:[%s6] sm:$0x1]
  %v36 = vld [vmem:[%s7] sm:$0x1]
  %v37 = vld [vmem:[%s0] sm:$0xff]
  %vm38 = vcmask 64512
  %39 = vst.msk [vmem:[#allocation2] sm:$0xff] %vm38, 0.0
  %40 = vst.msk [vmem:[#allocation2 + $0x8] sm:$0xff] %vm38, 0.0
  %vm41 = vcmask 57344
  %42 = vst.msk [vmem:[#allocation2 + $0x10] sm:$0x1] %vm41, 0.0
  %v43 = vld [vmem:[%s1] sm:$0xff]
  %v45 = vsel %vm38, %v37, 0
  %47 = vmatprep.subr.mxu0 0.0
  %48 = vmatpush1.msra.mxu0 %v43
  %49 = vmatprep.subr.mxu0 0.0
  %50 = vmatpush1.msra.mxu0 0.0
  %51 = vmatprep.subr.mxu0 0.0
  %52 = vmatpush1.msra.mxu0 0.0
  %53 = vmatprep.subr.mxu0 0.0
  %54 = vmatpush1.msra.mxu0 0.0
  %55 = vmatprep.subr.mxu0 0.0
  %56 = vmatpush1.msra.mxu0 0.0
  %57 = vmatprep.subr.mxu0 0.0
  %58 = vmatpush1.msra.mxu0 0.0
  %59 = vmatprep.subr.mxu0 0.0
  %60 = vmatpush1.msra.mxu0 0.0
  %61 = vmatprep.subr.mxu0 0.0
  %62 = vmatpush1.msra.mxu0 0.0
  %63 = vmatprep.subr.mxu0 0.0
  %64 = vmatpush1.msra.mxu0 0.0
  %65 = vmatprep.subr.mxu0 0.0
  %66 = vmatpush1.msra.mxu0 0.0
  %67 = vmatprep.subr.mxu0 0.0
  %68 = vmatpush1.msra.mxu0 0.0
  %69 = vmatprep.subr.mxu0 0.0
  %70 = vmatpush1.msra.mxu0 0.0
  %71 = vmatprep.subr.mxu0 0.0
  %72 = vmatpush1.msra.mxu0 0.0
  %73 = vmatprep.subr.mxu0 0.0
  %74 = vmatpush1.msra.mxu0 0.0
  %75 = vmatprep.subr.mxu0 0.0
  %76 = vmatpush1.msra.mxu0 0.0
  %77 = vmatprep.subr.mxu0 0.0
  %78 = vmatpush1.msra.mxu0 0.0
  %79 = vmatprep.subr.mxu0 0.0
  %80 = vmatpush1.msra.mxu0 0.0
  %81 = vmatprep.subr.mxu0 0.0
  %82 = vmatpush1.msra.mxu0 0.0
  %83 = vmatprep.subr.mxu0 0.0
  %84 = vmatpush1.msra.mxu0 0.0
  %85 = vmatprep.subr.mxu0 0.0
  %86 = vmatpush1.msra.mxu0 0.0
  %87 = vmatprep.subr.mxu0 0.0
  %88 = vmatpush1.msra.mxu0 0.0
  %89 = vmatprep.subr.mxu0 0.0
  %90 = vmatpush1.msra.mxu0 0.0
  %91 = vmatprep.subr.mxu0 0.0
  %92 = vmatpush1.msra.mxu0 0.0
  %93 = vmatprep.subr.mxu0 0.0
  %94 = vmatpush1.msra.mxu0 0.0
  %95 = vmatprep.subr.mxu0 0.0
  %96 = vmatpush1.msra.mxu0 0.0
  %97 = vmatprep.subr.mxu0 0.0
  %98 = vmatpush1.msra.mxu0 0.0
  %99 = vmatprep.subr.mxu0 0.0
  %100 = vmatpush1.msra.mxu0 0.0
  %101 = vmatprep.subr.mxu0 0.0
  %102 = vmatpush1.msra.mxu0 0.0
  %103 = vmatprep.subr.mxu0 0.0
  %104 = vmatpush1.msra.mxu0 0.0
  %105 = vmatprep.subr.mxu0 0.0
  %106 = vmatpush1.msra.mxu0 0.0
  %107 = vmatprep.subr.mxu0 0.0
  %108 = vmatpush1.msra.mxu0 0.0
  %109 = vmatprep.subr.mxu0 0.0
  %110 = vmatpush1.msra.mxu0 0.0
  %111 = vmatprep.mubr.f32.mxu0 0.0
  %112 = vmatmul.mubr.f32.gmra.mrb[0].mxu0 %v45
  %v113 = vpop.f32.mrb[0].mxu0
  %v114 = vadd.f32 0.0, %v113
  %v115 = vpop.f32.mrb[0].mxu0
  %116 = vdwg.mxu0
  %v117 = vld [vmem:[#allocation2] ss:$2 sm:$0xff]
  %v118 = vadd.f32 %v117, %v114
  %119 = vst [vmem:[#allocation2] ss:$2 sm:$0xff] %v118
  %s120 = scalar_lea.vmem %s1, 8
  %v121 = vld [vmem:[%s120] sm:$0xff]
  %122 = vmatprep.subr.mxu0 0.0
  %123 = vmatpush1.msra.mxu0 %v121
  %124 = vmatprep.subr.mxu0 0.0
  %125 = vmatpush1.msra.mxu0 0.0
  %126 = vmatprep.subr.mxu0 0.0
  %127 = vmatpush1.msra.mxu0 0.0
  %128 = vmatprep.subr.mxu0 0.0
  %129 = vmatpush1.msra.mxu0 0.0
  %130 = vmatprep.subr.mxu0 0.0
  %131 = vmatpush1.msra.mxu0 0.0
  %132 = vmatprep.subr.mxu0 0.0
  %133 = vmatpush1.msra.mxu0 0.0
  %134 = vmatprep.subr.mxu0 0.0
  %135 = vmatpush1.msra.mxu0 0.0
  %136 = vmatprep.subr.mxu0 0.0
  %137 = vmatpush1.msra.mxu0 0.0
  %138 = vmatprep.subr.mxu0 0.0
  %139 = vmatpush1.msra.mxu0 0.0
  %140 = vmatprep.subr.mxu0 0.0
  %141 = vmatpush1.msra.mxu0 0.0
  %142 = vmatprep.subr.mxu0 0.0
  %143 = vmatpush1.msra.mxu0 0.0
  %144 = vmatprep.subr.mxu0 0.0
  %145 = vmatpush1.msra.mxu0 0.0
  %146 = vmatprep.subr.mxu0 0.0
  %147 = vmatpush1.msra.mxu0 0.0
  %148 = vmatprep.subr.mxu0 0.0
  %149 = vmatpush1.msra.mxu0 0.0
  %150 = vmatprep.subr.mxu0 0.0
  %151 = vmatpush1.msra.mxu0 0.0
  %152 = vmatprep.subr.mxu0 0.0
  %153 = vmatpush1.msra.mxu0 0.0
  %154 = vmatprep.subr.mxu0 0.0
  %155 = vmatpush1.msra.mxu0 0.0
  %156 = vmatprep.subr.mxu0 0.0
  %157 = vmatpush1.msra.mxu0 0.0
  %158 = vmatprep.subr.mxu0 0.0
  %159 = vmatpush1.msra.mxu0 0.0
  %160 = vmatprep.subr.mxu0 0.0
  %161 = vmatpush1.msra.mxu0 0.0
  %162 = vmatprep.subr.mxu0 0.0
  %163 = vmatpush1.msra.mxu0 0.0
  %164 = vmatprep.subr.mxu0 0.0
  %165 = vmatpush1.msra.mxu0 0.0
  %166 = vmatprep.subr.mxu0 0.0
  %167 = vmatpush1.msra.mxu0 0.0
  %168 = vmatprep.subr.mxu0 0.0
  %169 = vmatpush1.msra.mxu0 0.0
  %170 = vmatprep.subr.mxu0 0.0
  %171 = vmatpush1.msra.mxu0 0.0
  %172 = vmatprep.subr.mxu0 0.0
  %173 = vmatpush1.msra.mxu0 0.0
  %174 = vmatprep.subr.mxu0 0.0
  %175 = vmatpush1.msra.mxu0 0.0
  %176 = vmatprep.subr.mxu0 0.0
  %177 = vmatpush1.msra.mxu0 0.0
  %178 = vmatprep.subr.mxu0 0.0
  %179 = vmatpush1.msra.mxu0 0.0
  %180 = vmatprep.subr.mxu0 0.0
  %181 = vmatpush1.msra.mxu0 0.0
  %182 = vmatprep.subr.mxu0 0.0
  %183 = vmatpush1.msra.mxu0 0.0
  %184 = vmatprep.subr.mxu0 0.0
  %185 = vmatpush1.msra.mxu0 0.0
  %186 = vmatprep.mubr.f32.mxu0 0.0
  %187 = vmatmul.mubr.f32.gmra.mrb[0].mxu0 %v45
  %v188 = vpop.f32.mrb[0].mxu0
  %v189 = vadd.f32 0.0, %v188
  %v190 = vpop.f32.mrb[0].mxu0
  %191 = vdwg.mxu0
  %s192 = scalar_lea.vmem [#allocation2], 1
  %v193 = vld [vmem:[%s192] ss:$2 sm:$0xff]
  %v194 = vadd.f32 %v193, %v189
  %195 = vst [vmem:[%s192] ss:$2 sm:$0xff] %v194
  %s196 = scalar_lea.vmem %s1, 16
  %v197 = vld [vmem:[%s196] sm:$0xff]
  %198 = vmatprep.subr.mxu0 0.0
  %199 = vmatpush1.msra.mxu0 %v197
  %200 = vmatprep.subr.mxu0 0.0
  %201 = vmatpush1.msra.mxu0 0.0
  %202 = vmatprep.subr.mxu0 0.0
  %203 = vmatpush1.msra.mxu0 0.0
  %204 = vmatprep.subr.mxu0 0.0
  %205 = vmatpush1.msra.mxu0 0.0
  %206 = vmatprep.subr.mxu0 0.0
  %207 = vmatpush1.msra.mxu0 0.0
  %208 = vmatprep.subr.mxu0 0.0
  %209 = vmatpush1.msra.mxu0 0.0
  %210 = vmatprep.subr.mxu0 0.0
  %211 = vmatpush1.msra.mxu0 0.0
  %212 = vmatprep.subr.mxu0 0.0
  %213 = vmatpush1.msra.mxu0 0.0
  %214 = vmatprep.subr.mxu0 0.0
  %215 = vmatpush1.msra.mxu0 0.0
  %216 = vmatprep.subr.mxu0 0.0
  %217 = vmatpush1.msra.mxu0 0.0
  %218 = vmatprep.subr.mxu0 0.0
  %219 = vmatpush1.msra.mxu0 0.0
  %220 = vmatprep.subr.mxu0 0.0
  %221 = vmatpush1.msra.mxu0 0.0
  %222 = vmatprep.subr.mxu0 0.0
  %223 = vmatpush1.msra.mxu0 0.0
  %224 = vmatprep.subr.mxu0 0.0
  %225 = vmatpush1.msra.mxu0 0.0
  %226 = vmatprep.subr.mxu0 0.0
  %227 = vmatpush1.msra.mxu0 0.0
  %228 = vmatprep.subr.mxu0 0.0
  %229 = vmatpush1.msra.mxu0 0.0
  %230 = vmatprep.subr.mxu0 0.0
  %231 = vmatpush1.msra.mxu0 0.0
  %232 = vmatprep.subr.mxu0 0.0
  %233 = vmatpush1.msra.mxu0 0.0
  %234 = vmatprep.subr.mxu0 0.0
  %235 = vmatpush1.msra.mxu0 0.0
  %236 = vmatprep.subr.mxu0 0.0
  %237 = vmatpush1.msra.mxu0 0.0
  %238 = vmatprep.subr.mxu0 0.0
  %239 = vmatpush1.msra.mxu0 0.0
  %240 = vmatprep.subr.mxu0 0.0
  %241 = vmatpush1.msra.mxu0 0.0
  %242 = vmatprep.subr.mxu0 0.0
  %243 = vmatpush1.msra.mxu0 0.0
  %244 = vmatprep.subr.mxu0 0.0
  %245 = vmatpush1.msra.mxu0 0.0
  %246 = vmatprep.subr.mxu0 0.0
  %247 = vmatpush1.msra.mxu0 0.0
  %248 = vmatprep.subr.mxu0 0.0
  %249 = vmatpush1.msra.mxu0 0.0
  %250 = vmatprep.subr.mxu0 0.0
  %251 = vmatpush1.msra.mxu0 0.0
  %252 = vmatprep.subr.mxu0 0.0
  %253 = vmatpush1.msra.mxu0 0.0
  %254 = vmatprep.subr.mxu0 0.0
  %255 = vmatpush1.msra.mxu0 0.0
  %256 = vmatprep.subr.mxu0 0.0
  %257 = vmatpush1.msra.mxu0 0.0
  %258 = vmatprep.subr.mxu0 0.0
  %259 = vmatpush1.msra.mxu0 0.0
  %260 = vmatprep.subr.mxu0 0.0
  %261 = vmatpush1.msra.mxu0 0.0
  %262 = vmatprep.mubr.f32.mxu0 0.0
  %263 = vmatmul.mubr.f32.gmra.mrb[0].mxu0 %v45
  %v264 = vpop.f32.mrb[0].mxu0
  %v265 = vadd.f32 0.0, %v264
  %v266 = vpop.f32.mrb[0].mxu0
  %267 = vdwg.mxu0
  %s268 = scalar_lea.vmem [#allocation2], 2
  %v269 = vld [vmem:[%s268] ss:$2 sm:$0xff]
  %v270 = vadd.f32 %v269, %v265
  %271 = vst [vmem:[%s268] ss:$2 sm:$0xff] %v270
  %v272 = vld [vmem:[#allocation2] sm:$0xff]
  %v273 = vld [vmem:[#allocation2 + $0x8] sm:$0xff]
  %v274 = vld [vmem:[#allocation2 + $0x10] sm:$0x1]
  %v276 = vlaneseq
  %v277 = vshrl.u32 %v276, 7
  %v278 = vsub.s32 0, %v277
  %v279 = vrot.slane %v33, %v278
  %v281 = vadd.f32 %v272, %v279
  %v282 = vadd.f32 %v273, %v279
  %v283 = vadd.f32 %v274, %v279
  %v284 = vsel %vm38, %v281, 0.0
  %v285 = vsel %vm38, %v282, 0.0
  %v286 = vadd.f32 %v284, %v285
  %v287 = vsel %vm41, %v283, 0.0
  %v288 = vadd.f32 %v286, %v287
  %v289 = vrot.slane %v288, 4
  %v290 = vadd.f32 %v288, %v289
  %v291 = vrot.slane %v290, 2
  %v292 = vadd.f32 %v290, %v291
  %v293 = vrot.slane %v292, 1
  %v294 = vadd.f32 %v292, %v293
  %v295 = vmul.f32 %v281, %v281
  %v296 = vmul.f32 %v282, %v282
  %v297 = vmul.f32 %v283, %v283
  %v298 = vsel %vm38, %v295, 0.0
  %v299 = vsel %vm38, %v296, 0.0
  %v300 = vadd.f32 %v298, %v299
  %v301 = vsel %vm41, %v297, 0.0
  %v302 = vadd.f32 %v300, %v301
  %v303 = vrot.slane %v302, 4
  %v304 = vadd.f32 %v302, %v303
  %v305 = vrot.slane %v304, 2
  %v306 = vadd.f32 %v304, %v305
  %v307 = vrot.slane %v306, 1
  %v308 = vadd.f32 %v306, %v307
  %v310 = vsel %vm38, %v294, 0
  %312 = vmatprep.subr.mxu0 0.0
  %313 = vmatpush1.msra.mxu0 %v32
  %314 = vmatprep.subr.mxu0 0.0
  %315 = vmatpush1.msra.mxu0 0.0
  %316 = vmatprep.subr.mxu0 0.0
  %317 = vmatpush1.msra.mxu0 0.0
  %318 = vmatprep.subr.mxu0 0.0
  %319 = vmatpush1.msra.mxu0 0.0
  %320 = vmatprep.subr.mxu0 0.0
  %321 = vmatpush1.msra.mxu0 0.0
  %322 = vmatprep.subr.mxu0 0.0
  %323 = vmatpush1.msra.mxu0 0.0
  %324 = vmatprep.subr.mxu0 0.0
  %325 = vmatpush1.msra.mxu0 0.0
  %326 = vmatprep.subr.mxu0 0.0
  %327 = vmatpush1.msra.mxu0 0.0
  %328 = vmatprep.subr.mxu0 0.0
  %329 = vmatpush1.msra.mxu0 0.0
  %330 = vmatprep.subr.mxu0 0.0
  %331 = vmatpush1.msra.mxu0 0.0
  %332 = vmatprep.subr.mxu0 0.0
  %333 = vmatpush1.msra.mxu0 0.0
  %334 = vmatprep.subr.mxu0 0.0
  %335 = vmatpush1.msra.mxu0 0.0
  %336 = vmatprep.subr.mxu0 0.0
  %337 = vmatpush1.msra.mxu0 0.0
  %338 = vmatprep.subr.mxu0 0.0
  %339 = vmatpush1.msra.mxu0 0.0
  %340 = vmatprep.subr.mxu0 0.0
  %341 = vmatpush1.msra.mxu0 0.0
  %342 = vmatprep.subr.mxu0 0.0
  %343 = vmatpush1.msra.mxu0 0.0
  %344 = vmatprep.subr.mxu0 0.0
  %345 = vmatpush1.msra.mxu0 0.0
  %346 = vmatprep.subr.mxu0 0.0
  %347 = vmatpush1.msra.mxu0 0.0
  %348 = vmatprep.subr.mxu0 0.0
  %349 = vmatpush1.msra.mxu0 0.0
  %350 = vmatprep.subr.mxu0 0.0
  %351 = vmatpush1.msra.mxu0 0.0
  %352 = vmatprep.subr.mxu0 0.0
  %353 = vmatpush1.msra.mxu0 0.0
  %354 = vmatprep.subr.mxu0 0.0
  %355 = vmatpush1.msra.mxu0 0.0
  %356 = vmatprep.subr.mxu0 0.0
  %357 = vmatpush1.msra.mxu0 0.0
  %358 = vmatprep.subr.mxu0 0.0
  %359 = vmatpush1.msra.mxu0 0.0
  %360 = vmatprep.subr.mxu0 0.0
  %361 = vmatpush1.msra.mxu0 0.0
  %362 = vmatprep.subr.mxu0 0.0
  %363 = vmatpush1.msra.mxu0 0.0
  %364 = vmatprep.subr.mxu0 0.0
  %365 = vmatpush1.msra.mxu0 0.0
  %366 = vmatprep.subr.mxu0 0.0
  %367 = vmatpush1.msra.mxu0 0.0
  %368 = vmatprep.subr.mxu0 0.0
  %369 = vmatpush1.msra.mxu0 0.0
  %370 = vmatprep.subr.mxu0 0.0
  %371 = vmatpush1.msra.mxu0 0.0
  %372 = vmatprep.subr.mxu0 0.0
  %373 = vmatpush1.msra.mxu0 0.0
  %374 = vmatprep.subr.mxu0 0.0
  %375 = vmatpush1.msra.mxu0 0.0
  %376 = vmatprep.mubr.f32.mxu0 0.0
  %377 = vmatmul.mubr.f32.gmra.mrb[0].mxu0 %v310
  %v378 = vpop.f32.mrb[0].mxu0
  %v379 = vadd.f32 0.0, %v378
  %v380 = vpop.f32.mrb[0].mxu0
  %381 = vdwg.mxu0
  %v383 = vsel %vm38, %v308, 0
  %385 = vmatprep.subr.mxu0 0.0
  %386 = vmatpush1.msra.mxu0 %v32
  %387 = vmatprep.subr.mxu0 0.0
  %388 = vmatpush1.msra.mxu0 0.0
  %389 = vmatprep.subr.mxu0 0.0
  %390 = vmatpush1.msra.mxu0 0.0
  %391 = vmatprep.subr.mxu0 0.0
  %392 = vmatpush1.msra.mxu0 0.0
  %393 = vmatprep.subr.mxu0 0.0
  %394 = vmatpush1.msra.mxu0 0.0
  %395 = vmatprep.subr.mxu0 0.0
  %396 = vmatpush1.msra.mxu0 0.0
  %397 = vmatprep.subr.mxu0 0.0
  %398 = vmatpush1.msra.mxu0 0.0
  %399 = vmatprep.subr.mxu0 0.0
  %400 = vmatpush1.msra.mxu0 0.0
  %401 = vmatprep.subr.mxu0 0.0
  %402 = vmatpush1.msra.mxu0 0.0
  %403 = vmatprep.subr.mxu0 0.0
  %404 = vmatpush1.msra.mxu0 0.0
  %405 = vmatprep.subr.mxu0 0.0
  %406 = vmatpush1.msra.mxu0 0.0
  %407 = vmatprep.subr.mxu0 0.0
  %408 = vmatpush1.msra.mxu0 0.0
  %409 = vmatprep.subr.mxu0 0.0
  %410 = vmatpush1.msra.mxu0 0.0
  %411 = vmatprep.subr.mxu0 0.0
  %412 = vmatpush1.msra.mxu0 0.0
  %413 = vmatprep.subr.mxu0 0.0
  %414 = vmatpush1.msra.mxu0 0.0
  %415 = vmatprep.subr.mxu0 0.0
  %416 = vmatpush1.msra.mxu0 0.0
  %417 = vmatprep.subr.mxu0 0.0
  %418 = vmatpush1.msra.mxu0 0.0
  %419 = vmatprep.subr.mxu0 0.0
  %420 = vmatpush1.msra.mxu0 0.0
  %421 = vmatprep.subr.mxu0 0.0
  %422 = vmatpush1.msra.mxu0 0.0
  %423 = vmatprep.subr.mxu0 0.0
  %424 = vmatpush1.msra.mxu0 0.0
  %425 = vmatprep.subr.mxu0 0.0
  %426 = vmatpush1.msra.mxu0 0.0
  %427 = vmatprep.subr.mxu0 0.0
  %428 = vmatpush1.msra.mxu0 0.0
  %429 = vmatprep.subr.mxu0 0.0
  %430 = vmatpush1.msra.mxu0 0.0
  %431 = vmatprep.subr.mxu0 0.0
  %432 = vmatpush1.msra.mxu0 0.0
  %433 = vmatprep.subr.mxu0 0.0
  %434 = vmatpush1.msra.mxu0 0.0
  %435 = vmatprep.subr.mxu0 0.0
  %436 = vmatpush1.msra.mxu0 0.0
  %437 = vmatprep.subr.mxu0 0.0
  %438 = vmatpush1.msra.mxu0 0.0
  %439 = vmatprep.subr.mxu0 0.0
  %440 = vmatpush1.msra.mxu0 0.0
  %441 = vmatprep.subr.mxu0 0.0
  %442 = vmatpush1.msra.mxu0 0.0
  %443 = vmatprep.subr.mxu0 0.0
  %444 = vmatpush1.msra.mxu0 0.0
  %445 = vmatprep.subr.mxu0 0.0
  %446 = vmatpush1.msra.mxu0 0.0
  %447 = vmatprep.subr.mxu0 0.0
  %448 = vmatpush1.msra.mxu0 0.0
  %449 = vmatprep.mubr.f32.mxu0 0.0
  %450 = vmatmul.mubr.f32.gmra.mrb[0].mxu0 %v383
  %v451 = vpop.f32.mrb[0].mxu0
  %v452 = vadd.f32 0.0, %v451
  %v453 = vpop.f32.mrb[0].mxu0
  %454 = vdwg.mxu0
  %v455 = vmul.f32 %v379, 0.029411765
  %v456 = vmul.f32 %v452, 0.029411765
  %v457 = vmul.f32 %v455, %v455
  %v458 = vsub.f32 %v456, %v457
  %v459 = vadd.f32 %v458, 1e-05
  %v460 = vrsqrt.pop %v459
  %v461 = vmul.f32 %v34, %v460
  %v462 = vmul.f32 %v455, %v461
  %v463 = vsub.f32 %v35, %v462
  %v465 = vlaneseq
  %v466 = vshrl.u32 %v465, 7
  %v467 = vsub.s32 0, %v466
  %v468 = vrot.slane %v461, %v467
  %v470 = vmul.f32 %v281, %v468
  %v471 = vmul.f32 %v282, %v468
  %v472 = vmul.f32 %v283, %v468
  %v474 = vlaneseq
  %v475 = vshrl.u32 %v474, 7
  %v476 = vsub.s32 0, %v475
  %v477 = vrot.slane %v463, %v476
  %v479 = vadd.f32 %v470, %v477
  %v480 = vadd.f32 %v471, %v477
  %v481 = vadd.f32 %v472, %v477
  %v482 = vmax.f32 %v479, 0.0
  %v483 = vmax.f32 %v480, 0.0
  %v484 = vmax.f32 %v481, 0.0
  %485 = vst.msk [vmem:[#allocation2] sm:$0xff] %vm38, 0.0
  %486 = vst.msk [vmem:[#allocation2 + $0x8] sm:$0xff] %vm38, 0.0
  %487 = vst.msk [vmem:[#allocation2 + $0x10] sm:$0xff] %vm38, 0.0
  %488 = vst.msk [vmem:[#allocation2 + $0x18] sm:$0xff] %vm38, 0.0
  %vm489 = vcmask 59392
  %490 = vst.msk [vmem:[#allocation2 + $0x20] sm:$0x7] %vm489, 0.0
  %v491 = vld [vmem:[%s1] sm:$0xff]
  %v493 = vsel %vm38, %v482, 0
  %v496 = vsel %vm38, %v483, 0
  %v499 = vsel %vm38, %v484, 0
  %501 = vmatprep.subr.mxu0 0.0
  %502 = vmatpush1.msra.mxu0 %v491
  %503 = vmatprep.subr.mxu0 0.0
  %504 = vmatpush1.msra.mxu0 0.0
  %505 = vmatprep.subr.mxu0 0.0
  %506 = vmatpush1.msra.mxu0 0.0
  %507 = vmatprep.subr.mxu0 0.0
  %508 = vmatpush1.msra.mxu0 0.0
  %509 = vmatprep.subr.mxu0 0.0
  %510 = vmatpush1.msra.mxu0 0.0
  %511 = vmatprep.subr.mxu0 0.0
  %512 = vmatpush1.msra.mxu0 0.0
  %513 = vmatprep.subr.mxu0 0.0
  %514 = vmatpush1.msra.mxu0 0.0
  %515 = vmatprep.subr.mxu0 0.0
  %516 = vmatpush1.msra.mxu0 0.0
  %517 = vmatprep.subr.mxu0 0.0
  %518 = vmatpush1.msra.mxu0 0.0
  %519 = vmatprep.subr.mxu0 0.0
  %520 = vmatpush1.msra.mxu0 0.0
  %521 = vmatprep.subr.mxu0 0.0
  %522 = vmatpush1.msra.mxu0 0.0
  %523 = vmatprep.subr.mxu0 0.0
  %524 = vmatpush1.msra.mxu0 0.0
  %525 = vmatprep.subr.mxu0 0.0
  %526 = vmatpush1.msra.mxu0 0.0
  %527 = vmatprep.subr.mxu0 0.0
  %528 = vmatpush1.msra.mxu0 0.0
  %529 = vmatprep.subr.mxu0 0.0
  %530 = vmatpush1.msra.mxu0 0.0
  %531 = vmatprep.subr.mxu0 0.0
  %532 = vmatpush1.msra.mxu0 0.0
  %533 = vmatprep.subr.mxu0 0.0
  %534 = vmatpush1.msra.mxu0 0.0
  %535 = vmatprep.subr.mxu0 0.0
  %536 = vmatpush1.msra.mxu0 0.0
  %537 = vmatprep.subr.mxu0 0.0
  %538 = vmatpush1.msra.mxu0 0.0
  %539 = vmatprep.subr.mxu0 0.0
  %540 = vmatpush1.msra.mxu0 0.0
  %541 = vmatprep.subr.mxu0 0.0
  %542 = vmatpush1.msra.mxu0 0.0
  %543 = vmatprep.subr.mxu0 0.0
  %544 = vmatpush1.msra.mxu0 0.0
  %545 = vmatprep.subr.mxu0 0.0
  %546 = vmatpush1.msra.mxu0 0.0
  %547 = vmatprep.subr.mxu0 0.0
  %548 = vmatpush1.msra.mxu0 0.0
  %549 = vmatprep.subr.mxu0 0.0
  %550 = vmatpush1.msra.mxu0 0.0
  %551 = vmatprep.subr.mxu0 0.0
  %552 = vmatpush1.msra.mxu0 0.0
  %553 = vmatprep.subr.mxu0 0.0
  %554 = vmatpush1.msra.mxu0 0.0
  %555 = vmatprep.subr.mxu0 0.0
  %556 = vmatpush1.msra.mxu0 0.0
  %557 = vmatprep.subr.mxu0 0.0
  %558 = vmatpush1.msra.mxu0 0.0
  %559 = vmatprep.subr.mxu0 0.0
  %560 = vmatpush1.msra.mxu0 0.0
  %561 = vmatprep.subr.mxu0 0.0
  %562 = vmatpush1.msra.mxu0 0.0
  %563 = vmatprep.subr.mxu0 0.0
  %564 = vmatpush1.msra.mxu0 0.0
  %565 = vmatprep.mubr.f32.mxu0 0.0
  %566 = vmatmul.mubr.f32.gmra.mrb[0].mxu0 %v493
  %v567 = vpop.f32.mrb[0].mxu0
  %v568 = vadd.f32 0.0, %v567
  %v569 = vpop.f32.mrb[0].mxu0
  %570 = vmatprep.mubr.f32.mxu0 0.0
  %571 = vmatmul.mubr.f32.gmra.mrb[0].mxu0 %v496
  %v572 = vpop.f32.mrb[0].mxu0
  %v573 = vadd.f32 0.0, %v572
  %v574 = vpop.f32.mrb[0].mxu0
  %575 = vmatprep.mubr.f32.mxu0 0.0
  %576 = vmatmul.mubr.f32.gmra.mrb[0].mxu0 %v499
  %v577 = vpop.f32.mrb[0].mxu0
  %v578 = vadd.f32 0.0, %v577
  %v579 = vpop.f32.mrb[0].mxu0
  %580 = vdwg.mxu0
  %v581 = vld [vmem:[#allocation2] ss:$2 sm:$0xff]
  %s582 = scalar_lea.vmem [#allocation2], 16
  %v583 = vld [vmem:[%s582] ss:$2 sm:$0xff]
  %s584 = scalar_lea.vmem [#allocation2], 32
  %v585 = vld [vmem:[%s584] ss:$2 sm:$0x1]
  %v586 = vadd.f32 %v581, %v568
  %v587 = vadd.f32 %v583, %v573
  %v588 = vadd.f32 %v585, %v578
  %589 = vst [vmem:[#allocation2] ss:$2 sm:$0xff] %v586
  %590 = vst [vmem:[%s582] ss:$2 sm:$0xff] %v587
  %591 = vst [vmem:[%s584] ss:$2 sm:$0x1] %v588
  %v592 = vld [vmem:[%s120] sm:$0xff]
  %593 = vmatprep.subr.mxu0 0.0
  %594 = vmatpush1.msra.mxu0 %v592
  %595 = vmatprep.subr.mxu0 0.0
  %596 = vmatpush1.msra.mxu0 0.0
  %597 = vmatprep.subr.mxu0 0.0
  %598 = vmatpush1.msra.mxu0 0.0
  %599 = vmatprep.subr.mxu0 0.0
  %600 = vmatpush1.msra.mxu0 0.0
  %601 = vmatprep.subr.mxu0 0.0
  %602 = vmatpush1.msra.mxu0 0.0
  %603 = vmatprep.subr.mxu0 0.0
  %604 = vmatpush1.msra.mxu0 0.0
  %605 = vmatprep.subr.mxu0 0.0
  %606 = vmatpush1.msra.mxu0 0.0
  %607 = vmatprep.subr.mxu0 0.0
  %608 = vmatpush1.msra.mxu0 0.0
  %609 = vmatprep.subr.mxu0 0.0
  %610 = vmatpush1.msra.mxu0 0.0
  %611 = vmatprep.subr.mxu0 0.0
  %612 = vmatpush1.msra.mxu0 0.0
  %613 = vmatprep.subr.mxu0 0.0
  %614 = vmatpush1.msra.mxu0 0.0
  %615 = vmatprep.subr.mxu0 0.0
  %616 = vmatpush1.msra.mxu0 0.0
  %617 = vmatprep.subr.mxu0 0.0
  %618 = vmatpush1.msra.mxu0 0.0
  %619 = vmatprep.subr.mxu0 0.0
  %620 = vmatpush1.msra.mxu0 0.0
  %621 = vmatprep.subr.mxu0 0.0
  %622 = vmatpush1.msra.mxu0 0.0
  %623 = vmatprep.subr.mxu0 0.0
  %624 = vmatpush1.msra.mxu0 0.0
  %625 = vmatprep.subr.mxu0 0.0
  %626 = vmatpush1.msra.mxu0 0.0
  %627 = vmatprep.subr.mxu0 0.0
  %628 = vmatpush1.msra.mxu0 0.0
  %629 = vmatprep.subr.mxu0 0.0
  %630 = vmatpush1.msra.mxu0 0.0
  %631 = vmatprep.subr.mxu0 0.0
  %632 = vmatpush1.msra.mxu0 0.0
  %633 = vmatprep.subr.mxu0 0.0
  %634 = vmatpush1.msra.mxu0 0.0
  %635 = vmatprep.subr.mxu0 0.0
  %636 = vmatpush1.msra.mxu0 0.0
  %637 = vmatprep.subr.mxu0 0.0
  %638 = vmatpush1.msra.mxu0 0.0
  %639 = vmatprep.subr.mxu0 0.0
  %640 = vmatpush1.msra.mxu0 0.0
  %641 = vmatprep.subr.mxu0 0.0
  %642 = vmatpush1.msra.mxu0 0.0
  %643 = vmatprep.subr.mxu0 0.0
  %644 = vmatpush1.msra.mxu0 0.0
  %645 = vmatprep.subr.mxu0 0.0
  %646 = vmatpush1.msra.mxu0 0.0
  %647 = vmatprep.subr.mxu0 0.0
  %648 = vmatpush1.msra.mxu0 0.0
  %649 = vmatprep.subr.mxu0 0.0
  %650 = vmatpush1.msra.mxu0 0.0
  %651 = vmatprep.subr.mxu0 0.0
  %652 = vmatpush1.msra.mxu0 0.0
  %653 = vmatprep.subr.mxu0 0.0
  %654 = vmatpush1.msra.mxu0 0.0
  %655 = vmatprep.subr.mxu0 0.0
  %656 = vmatpush1.msra.mxu0 0.0
  %657 = vmatprep.mubr.f32.mxu0 0.0
  %658 = vmatmul.mubr.f32.gmra.mrb[0].mxu0 %v493
  %v659 = vpop.f32.mrb[0].mxu0
  %v660 = vadd.f32 0.0, %v659
  %v661 = vpop.f32.mrb[0].mxu0
  %662 = vmatprep.mubr.f32.mxu0 0.0
  %663 = vmatmul.mubr.f32.gmra.mrb[0].mxu0 %v496
  %v664 = vpop.f32.mrb[0].mxu0
  %v665 = vadd.f32 0.0, %v664
  %v666 = vpop.f32.mrb[0].mxu0
  %667 = vmatprep.mubr.f32.mxu0 0.0
  %668 = vmatmul.mubr.f32.gmra.mrb[0].mxu0 %v499
  %v669 = vpop.f32.mrb[0].mxu0
  %v670 = vadd.f32 0.0, %v669
  %v671 = vpop.f32.mrb[0].mxu0
  %672 = vdwg.mxu0
  %v673 = vld [vmem:[%s192] ss:$2 sm:$0xff]
  %s674 = scalar_lea.vmem [#allocation2], 17
  %v675 = vld [vmem:[%s674] ss:$2 sm:$0xff]
  %s676 = scalar_lea.vmem [#allocation2], 33
  %v677 = vld [vmem:[%s676] ss:$2 sm:$0x1]
  %v678 = vadd.f32 %v673, %v660
  %v679 = vadd.f32 %v675, %v665
  %v680 = vadd.f32 %v677, %v670
  %681 = vst [vmem:[%s192] ss:$2 sm:$0xff] %v678
  %682 = vst [vmem:[%s674] ss:$2 sm:$0xff] %v679
  %683 = vst [vmem:[%s676] ss:$2 sm:$0x1] %v680
  %v684 = vld [vmem:[%s196] sm:$0xff]
  %685 = vmatprep.subr.mxu0 0.0
  %686 = vmatpush1.msra.mxu0 %v684
  %687 = vmatprep.subr.mxu0 0.0
  %688 = vmatpush1.msra.mxu0 0.0
  %689 = vmatprep.subr.mxu0 0.0
  %690 = vmatpush1.msra.mxu0 0.0
  %691 = vmatprep.subr.mxu0 0.0
  %692 = vmatpush1.msra.mxu0 0.0
  %693 = vmatprep.subr.mxu0 0.0
  %694 = vmatpush1.msra.mxu0 0.0
  %695 = vmatprep.subr.mxu0 0.0
  %696 = vmatpush1.msra.mxu0 0.0
  %697 = vmatprep.subr.mxu0 0.0
  %698 = vmatpush1.msra.mxu0 0.0
  %699 = vmatprep.subr.mxu0 0.0
  %700 = vmatpush1.msra.mxu0 0.0
  %701 = vmatprep.subr.mxu0 0.0
  %702 = vmatpush1.msra.mxu0 0.0
  %703 = vmatprep.subr.mxu0 0.0
  %704 = vmatpush1.msra.mxu0 0.0
  %705 = vmatprep.subr.mxu0 0.0
  %706 = vmatpush1.msra.mxu0 0.0
  %707 = vmatprep.subr.mxu0 0.0
  %708 = vmatpush1.msra.mxu0 0.0
  %709 = vmatprep.subr.mxu0 0.0
  %710 = vmatpush1.msra.mxu0 0.0
  %711 = vmatprep.subr.mxu0 0.0
  %712 = vmatpush1.msra.mxu0 0.0
  %713 = vmatprep.subr.mxu0 0.0
  %714 = vmatpush1.msra.mxu0 0.0
  %715 = vmatprep.subr.mxu0 0.0
  %716 = vmatpush1.msra.mxu0 0.0
  %717 = vmatprep.subr.mxu0 0.0
  %718 = vmatpush1.msra.mxu0 0.0
  %719 = vmatprep.subr.mxu0 0.0
  %720 = vmatpush1.msra.mxu0 0.0
  %721 = vmatprep.subr.mxu0 0.0
  %722 = vmatpush1.msra.mxu0 0.0
  %723 = vmatprep.subr.mxu0 0.0
  %724 = vmatpush1.msra.mxu0 0.0
  %725 = vmatprep.subr.mxu0 0.0
  %726 = vmatpush1.msra.mxu0 0.0
  %727 = vmatprep.subr.mxu0 0.0
  %728 = vmatpush1.msra.mxu0 0.0
  %729 = vmatprep.subr.mxu0 0.0
  %730 = vmatpush1.msra.mxu0 0.0
  %731 = vmatprep.subr.mxu0 0.0
  %732 = vmatpush1.msra.mxu0 0.0
  %733 = vmatprep.subr.mxu0 0.0
  %734 = vmatpush1.msra.mxu0 0.0
  %735 = vmatprep.subr.mxu0 0.0
  %736 = vmatpush1.msra.mxu0 0.0
  %737 = vmatprep.subr.mxu0 0.0
  %738 = vmatpush1.msra.mxu0 0.0
  %739 = vmatprep.subr.mxu0 0.0
  %740 = vmatpush1.msra.mxu0 0.0
  %741 = vmatprep.subr.mxu0 0.0
  %742 = vmatpush1.msra.mxu0 0.0
  %743 = vmatprep.subr.mxu0 0.0
  %744 = vmatpush1.msra.mxu0 0.0
  %745 = vmatprep.subr.mxu0 0.0
  %746 = vmatpush1.msra.mxu0 0.0
  %747 = vmatprep.subr.mxu0 0.0
  %748 = vmatpush1.msra.mxu0 0.0
  %749 = vmatprep.mubr.f32.mxu0 0.0
  %750 = vmatmul.mubr.f32.gmra.mrb[0].mxu0 %v493
  %v751 = vpop.f32.mrb[0].mxu0
  %v752 = vadd.f32 0.0, %v751
  %v753 = vpop.f32.mrb[0].mxu0
  %754 = vmatprep.mubr.f32.mxu0 0.0
  %755 = vmatmul.mubr.f32.gmra.mrb[0].mxu0 %v496
  %v756 = vpop.f32.mrb[0].mxu0
  %v757 = vadd.f32 0.0, %v756
  %v758 = vpop.f32.mrb[0].mxu0
  %759 = vmatprep.mubr.f32.mxu0 0.0
  %760 = vmatmul.mubr.f32.gmra.mrb[0].mxu0 %v499
  %v761 = vpop.f32.mrb[0].mxu0
  %v762 = vadd.f32 0.0, %v761
  %v763 = vpop.f32.mrb[0].mxu0
  %764 = vdwg.mxu0
  %v765 = vld [vmem:[%s268] ss:$2 sm:$0xff]
  %s766 = scalar_lea.vmem [#allocation2], 18
  %v767 = vld [vmem:[%s766] ss:$2 sm:$0xff]
  %s768 = scalar_lea.vmem [#allocation2], 34
  %v769 = vld [vmem:[%s768] ss:$2 sm:$0x1]
  %v770 = vadd.f32 %v765, %v752
  %v771 = vadd.f32 %v767, %v757
  %v772 = vadd.f32 %v769, %v762
  %773 = vst [vmem:[%s268] ss:$2 sm:$0xff] %v770
  %774 = vst [vmem:[%s766] ss:$2 sm:$0xff] %v771
  %775 = vst [vmem:[%s768] ss:$2 sm:$0x1] %v772
  %v776 = vld [vmem:[#allocation2] sm:$0xff]
  %v777 = vld [vmem:[#allocation2 + $0x8] sm:$0xff]
  %v778 = vld [vmem:[#allocation2 + $0x10] sm:$0xff]
  %v779 = vld [vmem:[#allocation2 + $0x18] sm:$0xff]
  %v780 = vld [vmem:[#allocation2 + $0x20] sm:$0x7]
  %v781 = vadd.f32 %v776, %v279
  %v782 = vadd.f32 %v777, %v279
  %v783 = vadd.f32 %v778, %v279
  %v784 = vadd.f32 %v779, %v279
  %v785 = vadd.f32 %v780, %v279
  %v786 = vsel %vm38, %v781, 0.0
  %v787 = vsel %vm38, %v782, 0.0
  %v788 = vadd.f32 %v786, %v787
  %v789 = vsel %vm38, %v783, 0.0
  %v790 = vadd.f32 %v788, %v789
  %v791 = vsel %vm38, %v784, 0.0
  %v792 = vadd.f32 %v790, %v791
  %v793 = vsel %vm489, %v785, 0.0
  %v794 = vadd.f32 %v792, %v793
  %v795 = vrot.slane %v794, 4
  %v796 = vadd.f32 %v794, %v795
  %v797 = vrot.slane %v796, 2
  %v798 = vadd.f32 %v796, %v797
  %v799 = vrot.slane %v798, 1
  %v800 = vadd.f32 %v798, %v799
  %v801 = vmul.f32 %v781, %v781
  %v802 = vmul.f32 %v782, %v782
  %v803 = vmul.f32 %v783, %v783
  %v804 = vmul.f32 %v784, %v784
  %v805 = vmul.f32 %v785, %v785
  %v806 = vsel %vm38, %v801, 0.0
  %v807 = vsel %vm38, %v802, 0.0
  %v808 = vadd.f32 %v806, %v807
  %v809 = vsel %vm38, %v803, 0.0
  %v810 = vadd.f32 %v808, %v809
  %v811 = vsel %vm38, %v804, 0.0
  %v812 = vadd.f32 %v810, %v811
  %v813 = vsel %vm489, %v805, 0.0
  %v814 = vadd.f32 %v812, %v813
  %v815 = vrot.slane %v814, 4
  %v816 = vadd.f32 %v814, %v815
  %v817 = vrot.slane %v816, 2
  %v818 = vadd.f32 %v816, %v817
  %v819 = vrot.slane %v818, 1
  %v820 = vadd.f32 %v818, %v819
  %v822 = vsel %vm38, %v800, 0
  %824 = vmatprep.subr.mxu0 0.0
  %825 = vmatpush1.msra.mxu0 %v32
  %826 = vmatprep.subr.mxu0 0.0
  %827 = vmatpush1.msra.mxu0 0.0
  %828 = vmatprep.subr.mxu0 0.0
  %829 = vmatpush1.msra.mxu0 0.0
  %830 = vmatprep.subr.mxu0 0.0
  %831 = vmatpush1.msra.mxu0 0.0
  %832 = vmatprep.subr.mxu0 0.0
  %833 = vmatpush1.msra.mxu0 0.0
  %834 = vmatprep.subr.mxu0 0.0
  %835 = vmatpush1.msra.mxu0 0.0
  %836 = vmatprep.subr.mxu0 0.0
  %837 = vmatpush1.msra.mxu0 0.0
  %838 = vmatprep.subr.mxu0 0.0
  %839 = vmatpush1.msra.mxu0 0.0
  %840 = vmatprep.subr.mxu0 0.0
  %841 = vmatpush1.msra.mxu0 0.0
  %842 = vmatprep.subr.mxu0 0.0
  %843 = vmatpush1.msra.mxu0 0.0
  %844 = vmatprep.subr.mxu0 0.0
  %845 = vmatpush1.msra.mxu0 0.0
  %846 = vmatprep.subr.mxu0 0.0
  %847 = vmatpush1.msra.mxu0 0.0
  %848 = vmatprep.subr.mxu0 0.0
  %849 = vmatpush1.msra.mxu0 0.0
  %850 = vmatprep.subr.mxu0 0.0
  %851 = vmatpush1.msra.mxu0 0.0
  %852 = vmatprep.subr.mxu0 0.0
  %853 = vmatpush1.msra.mxu0 0.0
  %854 = vmatprep.subr.mxu0 0.0
  %855 = vmatpush1.msra.mxu0 0.0
  %856 = vmatprep.subr.mxu0 0.0
  %857 = vmatpush1.msra.mxu0 0.0
  %858 = vmatprep.subr.mxu0 0.0
  %859 = vmatpush1.msra.mxu0 0.0
  %860 = vmatprep.subr.mxu0 0.0
  %861 = vmatpush1.msra.mxu0 0.0
  %862 = vmatprep.subr.mxu0 0.0
  %863 = vmatpush1.msra.mxu0 0.0
  %864 = vmatprep.subr.mxu0 0.0
  %865 = vmatpush1.msra.mxu0 0.0
  %866 = vmatprep.subr.mxu0 0.0
  %867 = vmatpush1.msra.mxu0 0.0
  %868 = vmatprep.subr.mxu0 0.0
  %869 = vmatpush1.msra.mxu0 0.0
  %870 = vmatprep.subr.mxu0 0.0
  %871 = vmatpush1.msra.mxu0 0.0
  %872 = vmatprep.subr.mxu0 0.0
  %873 = vmatpush1.msra.mxu0 0.0
  %874 = vmatprep.subr.mxu0 0.0
  %875 = vmatpush1.msra.mxu0 0.0
  %876 = vmatprep.subr.mxu0 0.0
  %877 = vmatpush1.msra.mxu0 0.0
  %878 = vmatprep.subr.mxu0 0.0
  %879 = vmatpush1.msra.mxu0 0.0
  %880 = vmatprep.subr.mxu0 0.0
  %881 = vmatpush1.msra.mxu0 0.0
  %882 = vmatprep.subr.mxu0 0.0
  %883 = vmatpush1.msra.mxu0 0.0
  %884 = vmatprep.subr.mxu0 0.0
  %885 = vmatpush1.msra.mxu0 0.0
  %886 = vmatprep.subr.mxu0 0.0
  %887 = vmatpush1.msra.mxu0 0.0
  %888 = vmatprep.mubr.f32.mxu0 0.0
  %889 = vmatmul.mubr.f32.gmra.mrb[0].mxu0 %v822
  %v890 = vpop.f32.mrb[0].mxu0
  %v891 = vadd.f32 0.0, %v890
  %v892 = vpop.f32.mrb[0].mxu0
  %893 = vdwg.mxu0
  %v895 = vsel %vm38, %v820, 0
  %897 = vmatprep.subr.mxu0 0.0
  %898 = vmatpush1.msra.mxu0 %v32
  %899 = vmatprep.subr.mxu0 0.0
  %900 = vmatpush1.msra.mxu0 0.0
  %901 = vmatprep.subr.mxu0 0.0
  %902 = vmatpush1.msra.mxu0 0.0
  %903 = vmatprep.subr.mxu0 0.0
  %904 = vmatpush1.msra.mxu0 0.0
  %905 = vmatprep.subr.mxu0 0.0
  %906 = vmatpush1.msra.mxu0 0.0
  %907 = vmatprep.subr.mxu0 0.0
  %908 = vmatpush1.msra.mxu0 0.0
  %909 = vmatprep.subr.mxu0 0.0
  %910 = vmatpush1.msra.mxu0 0.0
  %911 = vmatprep.subr.mxu0 0.0
  %912 = vmatpush1.msra.mxu0 0.0
  %913 = vmatprep.subr.mxu0 0.0
  %914 = vmatpush1.msra.mxu0 0.0
  %915 = vmatprep.subr.mxu0 0.0
  %916 = vmatpush1.msra.mxu0 0.0
  %917 = vmatprep.subr.mxu0 0.0
  %918 = vmatpush1.msra.mxu0 0.0
  %919 = vmatprep.subr.mxu0 0.0
  %920 = vmatpush1.msra.mxu0 0.0
  %921 = vmatprep.subr.mxu0 0.0
  %922 = vmatpush1.msra.mxu0 0.0
  %923 = vmatprep.subr.mxu0 0.0
  %924 = vmatpush1.msra.mxu0 0.0
  %925 = vmatprep.subr.mxu0 0.0
  %926 = vmatpush1.msra.mxu0 0.0
  %927 = vmatprep.subr.mxu0 0.0
  %928 = vmatpush1.msra.mxu0 0.0
  %929 = vmatprep.subr.mxu0 0.0
  %930 = vmatpush1.msra.mxu0 0.0
  %931 = vmatprep.subr.mxu0 0.0
  %932 = vmatpush1.msra.mxu0 0.0
  %933 = vmatprep.subr.mxu0 0.0
  %934 = vmatpush1.msra.mxu0 0.0
  %935 = vmatprep.subr.mxu0 0.0
  %936 = vmatpush1.msra.mxu0 0.0
  %937 = vmatprep.subr.mxu0 0.0
  %938 = vmatpush1.msra.mxu0 0.0
  %939 = vmatprep.subr.mxu0 0.0
  %940 = vmatpush1.msra.mxu0 0.0
  %941 = vmatprep.subr.mxu0 0.0
  %942 = vmatpush1.msra.mxu0 0.0
  %943 = vmatprep.subr.mxu0 0.0
  %944 = vmatpush1.msra.mxu0 0.0
  %945 = vmatprep.subr.mxu0 0.0
  %946 = vmatpush1.msra.mxu0 0.0
  %947 = vmatprep.subr.mxu0 0.0
  %948 = vmatpush1.msra.mxu0 0.0
  %949 = vmatprep.subr.mxu0 0.0
  %950 = vmatpush1.msra.mxu0 0.0
  %951 = vmatprep.subr.mxu0 0.0
  %952 = vmatpush1.msra.mxu0 0.0
  %953 = vmatprep.subr.mxu0 0.0
  %954 = vmatpush1.msra.mxu0 0.0
  %955 = vmatprep.subr.mxu0 0.0
  %956 = vmatpush1.msra.mxu0 0.0
  %957 = vmatprep.subr.mxu0 0.0
  %958 = vmatpush1.msra.mxu0 0.0
  %959 = vmatprep.subr.mxu0 0.0
  %960 = vmatpush1.msra.mxu0 0.0
  %961 = vmatprep.mubr.f32.mxu0 0.0
  %962 = vmatmul.mubr.f32.gmra.mrb[0].mxu0 %v895
  %v963 = vpop.f32.mrb[0].mxu0
  %v964 = vadd.f32 0.0, %v963
  %v965 = vpop.f32.mrb[0].mxu0
  %966 = vdwg.mxu0
  %v967 = vmul.f32 %v891, 0.014285714
  %v968 = vmul.f32 %v964, 0.014285714
  %v969 = vmul.f32 %v967, %v967
  %v970 = vsub.f32 %v968, %v969
  %v971 = vadd.f32 %v970, 1e-05
  %v972 = vrsqrt.pop %v971
  %v973 = vmul.f32 %v34, %v972
  %v974 = vmul.f32 %v967, %v973
  %v975 = vsub.f32 %v35, %v974
  %v977 = vlaneseq
  %v978 = vshrl.u32 %v977, 7
  %v979 = vsub.s32 0, %v978
  %v980 = vrot.slane %v973, %v979
  %v982 = vmul.f32 %v781, %v980
  %v983 = vmul.f32 %v782, %v980
  %v984 = vmul.f32 %v783, %v980
  %v985 = vmul.f32 %v784, %v980
  %v986 = vmul.f32 %v785, %v980
  %v988 = vlaneseq
  %v989 = vshrl.u32 %v988, 7
  %v990 = vsub.s32 0, %v989
  %v991 = vrot.slane %v975, %v990
  %v993 = vadd.f32 %v982, %v991
  %v994 = vadd.f32 %v983, %v991
  %v995 = vadd.f32 %v984, %v991
  %v996 = vadd.f32 %v985, %v991
  %v997 = vadd.f32 %v986, %v991
  %v998 = vmax.f32 %v993, 0.0
  %v999 = vmax.f32 %v994, 0.0
  %v1000 = vmax.f32 %v995, 0.0
  %v1001 = vmax.f32 %v996, 0.0
  %v1002 = vmax.f32 %v997, 0.0
  %1003 = vst.msk [vmem:[#allocation2] sm:$0xff] %vm38, %v998
  %1004 = vst.msk [vmem:[#allocation2 + $0x8] sm:$0xff] %vm38, %v999
  %1005 = vst.msk [vmem:[#allocation2 + $0x10] sm:$0xff] %vm38, %v1000
  %1006 = vst.msk [vmem:[#allocation2 + $0x18] sm:$0xff] %vm38, %v1001
  %1007 = vst.msk [vmem:[#allocation2 + $0x20] sm:$0x7] %vm489, %v1002
  %s1008 = scalar_lea.vmem %s2, 8
  %v1009 = vld [vmem:[%s1008] sm:$0xff]
  %v1010 = vld [vmem:[#allocation2 + $0x1] sm:$0xff]
  %v1011 = vld [vmem:[#allocation2 + $0x9] sm:$0xff]
  %v1012 = vld [vmem:[#allocation2 + $0x11] sm:$0xff]
  %v1013 = vld [vmem:[#allocation2 + $0x19] sm:$0xff]
  %v1014 = vld [vmem:[#allocation2 + $0x21] sm:$0x3]
  %v1015 = vld [vmem:[%s2] sm:$0xff]
  %v1017 = vsel %vm38, %v1010, 0
  %v1020 = vsel %vm38, %v1011, 0
  %v1023 = vsel %vm38, %v1012, 0
  %v1026 = vsel %vm38, %v1013, 0
  %v1029 = vsel %vm38, %v1014, 0
  %1031 = vmatprep.subr.mxu0 0.0
  %1032 = vmatpush1.msra.mxu0 %v1015
  %1033 = vmatprep.subr.mxu0 0.0
  %1034 = vmatpush1.msra.mxu0 0.0
  %1035 = vmatprep.subr.mxu0 0.0
  %1036 = vmatpush1.msra.mxu0 0.0
  %1037 = vmatprep.subr.mxu0 0.0
  %1038 = vmatpush1.msra.mxu0 0.0
  %1039 = vmatprep.subr.mxu0 0.0
  %1040 = vmatpush1.msra.mxu0 0.0
  %1041 = vmatprep.subr.mxu0 0.0
  %1042 = vmatpush1.msra.mxu0 0.0
  %1043 = vmatprep.subr.mxu0 0.0
  %1044 = vmatpush1.msra.mxu0 0.0
  %1045 = vmatprep.subr.mxu0 0.0
  %1046 = vmatpush1.msra.mxu0 0.0
  %1047 = vmatprep.subr.mxu0 0.0
  %1048 = vmatpush1.msra.mxu0 0.0
  %1049 = vmatprep.subr.mxu0 0.0
  %1050 = vmatpush1.msra.mxu0 0.0
  %1051 = vmatprep.subr.mxu0 0.0
  %1052 = vmatpush1.msra.mxu0 0.0
  %1053 = vmatprep.subr.mxu0 0.0
  %1054 = vmatpush1.msra.mxu0 0.0
  %1055 = vmatprep.subr.mxu0 0.0
  %1056 = vmatpush1.msra.mxu0 0.0
  %1057 = vmatprep.subr.mxu0 0.0
  %1058 = vmatpush1.msra.mxu0 0.0
  %1059 = vmatprep.subr.mxu0 0.0
  %1060 = vmatpush1.msra.mxu0 0.0
  %1061 = vmatprep.subr.mxu0 0.0
  %1062 = vmatpush1.msra.mxu0 0.0
  %1063 = vmatprep.subr.mxu0 0.0
  %1064 = vmatpush1.msra.mxu0 0.0
  %1065 = vmatprep.subr.mxu0 0.0
  %1066 = vmatpush1.msra.mxu0 0.0
  %1067 = vmatprep.subr.mxu0 0.0
  %1068 = vmatpush1.msra.mxu0 0.0
  %1069 = vmatprep.subr.mxu0 0.0
  %1070 = vmatpush1.msra.mxu0 0.0
  %1071 = vmatprep.subr.mxu0 0.0
  %1072 = vmatpush1.msra.mxu0 0.0
  %1073 = vmatprep.subr.mxu0 0.0
  %1074 = vmatpush1.msra.mxu0 0.0
  %1075 = vmatprep.subr.mxu0 0.0
  %1076 = vmatpush1.msra.mxu0 0.0
  %1077 = vmatprep.subr.mxu0 0.0
  %1078 = vmatpush1.msra.mxu0 0.0
  %1079 = vmatprep.subr.mxu0 0.0
  %1080 = vmatpush1.msra.mxu0 0.0
  %1081 = vmatprep.subr.mxu0 0.0
  %1082 = vmatpush1.msra.mxu0 0.0
  %1083 = vmatprep.subr.mxu0 0.0
  %1084 = vmatpush1.msra.mxu0 0.0
  %1085 = vmatprep.subr.mxu0 0.0
  %1086 = vmatpush1.msra.mxu0 0.0
  %1087 = vmatprep.subr.mxu0 0.0
  %1088 = vmatpush1.msra.mxu0 0.0
  %1089 = vmatprep.subr.mxu0 0.0
  %1090 = vmatpush1.msra.mxu0 0.0
  %1091 = vmatprep.subr.mxu0 0.0
  %1092 = vmatpush1.msra.mxu0 0.0
  %1093 = vmatprep.subr.mxu0 0.0
  %1094 = vmatpush1.msra.mxu0 0.0
  %1095 = vmatprep.mubr.f32.mxu0 0.0
  %1096 = vmatmul.mubr.f32.gmra.mrb[0].mxu0 %v1017
  %v1097 = vpop.f32.mrb[0].mxu0
  %v1098 = vadd.f32 0.0, %v1097
  %v1099 = vpop.f32.mrb[0].mxu0
  %1100 = vmatprep.mubr.f32.mxu0 0.0
  %1101 = vmatmul.mubr.f32.gmra.mrb[0].mxu0 %v1020
  %v1102 = vpop.f32.mrb[0].mxu0
  %v1103 = vadd.f32 0.0, %v1102
  %v1104 = vpop.f32.mrb[0].mxu0
  %1105 = vmatprep.mubr.f32.mxu0 0.0
  %1106 = vmatmul.mubr.f32.gmra.mrb[0].mxu0 %v1023
  %v1107 = vpop.f32.mrb[0].mxu0
  %v1108 = vadd.f32 0.0, %v1107
  %v1109 = vpop.f32.mrb[0].mxu0
  %1110 = vmatprep.mubr.f32.mxu0 0.0
  %1111 = vmatmul.mubr.f32.gmra.mrb[0].mxu0 %v1026
  %v1112 = vpop.f32.mrb[0].mxu0
  %v1113 = vadd.f32 0.0, %v1112
  %v1114 = vpop.f32.mrb[0].mxu0
  %1115 = vmatprep.mubr.f32.mxu0 0.0
  %1116 = vmatmul.mubr.f32.gmra.mrb[0].mxu0 %v1029
  %v1117 = vpop.f32.mrb[0].mxu0
  %v1118 = vadd.f32 0.0, %v1117
  %v1119 = vpop.f32.mrb[0].mxu0
  %1120 = vdwg.mxu0
  %v1121 = vld [vmem:[#allocation2] sm:$0xff]
  %v1122 = vld [vmem:[#allocation2 + $0x8] sm:$0xff]
  %v1123 = vld [vmem:[#allocation2 + $0x10] sm:$0xff]
  %v1124 = vld [vmem:[#allocation2 + $0x18] sm:$0xff]
  %v1125 = vld [vmem:[#allocation2 + $0x20] sm:$0x3]
  %s1126 = scalar_lea.vmem %s2, 16
  %v1127 = vld [vmem:[%s1126] sm:$0xff]
  %v1129 = vsel %vm38, %v1121, 0
  %v1132 = vsel %vm38, %v1122, 0
  %v1135 = vsel %vm38, %v1123, 0
  %v1138 = vsel %vm38, %v1124, 0
  %v1141 = vsel %vm38, %v1125, 0
  %1143 = vmatprep.subr.mxu0 0.0
  %1144 = vmatpush1.msra.mxu0 %v1127
  %1145 = vmatprep.subr.mxu0 0.0
  %1146 = vmatpush1.msra.mxu0 0.0
  %1147 = vmatprep.subr.mxu0 0.0
  %1148 = vmatpush1.msra.mxu0 0.0
  %1149 = vmatprep.subr.mxu0 0.0
  %1150 = vmatpush1.msra.mxu0 0.0
  %1151 = vmatprep.subr.mxu0 0.0
  %1152 = vmatpush1.msra.mxu0 0.0
  %1153 = vmatprep.subr.mxu0 0.0
  %1154 = vmatpush1.msra.mxu0 0.0
  %1155 = vmatprep.subr.mxu0 0.0
  %1156 = vmatpush1.msra.mxu0 0.0
  %1157 = vmatprep.subr.mxu0 0.0
  %1158 = vmatpush1.msra.mxu0 0.0
  %1159 = vmatprep.subr.mxu0 0.0
  %1160 = vmatpush1.msra.mxu0 0.0
  %1161 = vmatprep.subr.mxu0 0.0
  %1162 = vmatpush1.msra.mxu0 0.0
  %1163 = vmatprep.subr.mxu0 0.0
  %1164 = vmatpush1.msra.mxu0 0.0
  %1165 = vmatprep.subr.mxu0 0.0
  %1166 = vmatpush1.msra.mxu0 0.0
  %1167 = vmatprep.subr.mxu0 0.0
  %1168 = vmatpush1.msra.mxu0 0.0
  %1169 = vmatprep.subr.mxu0 0.0
  %1170 = vmatpush1.msra.mxu0 0.0
  %1171 = vmatprep.subr.mxu0 0.0
  %1172 = vmatpush1.msra.mxu0 0.0
  %1173 = vmatprep.subr.mxu0 0.0
  %1174 = vmatpush1.msra.mxu0 0.0
  %1175 = vmatprep.subr.mxu0 0.0
  %1176 = vmatpush1.msra.mxu0 0.0
  %1177 = vmatprep.subr.mxu0 0.0
  %1178 = vmatpush1.msra.mxu0 0.0
  %1179 = vmatprep.subr.mxu0 0.0
  %1180 = vmatpush1.msra.mxu0 0.0
  %1181 = vmatprep.subr.mxu0 0.0
  %1182 = vmatpush1.msra.mxu0 0.0
  %1183 = vmatprep.subr.mxu0 0.0
  %1184 = vmatpush1.msra.mxu0 0.0
  %1185 = vmatprep.subr.mxu0 0.0
  %1186 = vmatpush1.msra.mxu0 0.0
  %1187 = vmatprep.subr.mxu0 0.0
  %1188 = vmatpush1.msra.mxu0 0.0
  %1189 = vmatprep.subr.mxu0 0.0
  %1190 = vmatpush1.msra.mxu0 0.0
  %1191 = vmatprep.subr.mxu0 0.0
  %1192 = vmatpush1.msra.mxu0 0.0
  %1193 = vmatprep.subr.mxu0 0.0
  %1194 = vmatpush1.msra.mxu0 0.0
  %1195 = vmatprep.subr.mxu0 0.0
  %1196 = vmatpush1.msra.mxu0 0.0
  %1197 = vmatprep.subr.mxu0 0.0
  %1198 = vmatpush1.msra.mxu0 0.0
  %1199 = vmatprep.subr.mxu0 0.0
  %1200 = vmatpush1.msra.mxu0 0.0
  %1201 = vmatprep.subr.mxu0 0.0
  %1202 = vmatpush1.msra.mxu0 0.0
  %1203 = vmatprep.subr.mxu0 0.0
  %1204 = vmatpush1.msra.mxu0 0.0
  %1205 = vmatprep.subr.mxu0 0.0
  %1206 = vmatpush1.msra.mxu0 0.0
  %1207 = vmatprep.mubr.f32.mxu0 0.0
  %1208 = vmatmul.mubr.f32.gmra.mrb[0].mxu0 %v1129
  %v1209 = vpop.f32.mrb[0].mxu0
  %v1210 = vadd.f32 0.0, %v1209
  %v1211 = vpop.f32.mrb[0].mxu0
  %1212 = vmatprep.mubr.f32.mxu0 0.0
  %1213 = vmatmul.mubr.f32.gmra.mrb[0].mxu0 %v1132
  %v1214 = vpop.f32.mrb[0].mxu0
  %v1215 = vadd.f32 0.0, %v1214
  %v1216 = vpop.f32.mrb[0].mxu0
  %1217 = vmatprep.mubr.f32.mxu0 0.0
  %1218 = vmatmul.mubr.f32.gmra.mrb[0].mxu0 %v1135
  %v1219 = vpop.f32.mrb[0].mxu0
  %v1220 = vadd.f32 0.0, %v1219
  %v1221 = vpop.f32.mrb[0].mxu0
  %1222 = vmatprep.mubr.f32.mxu0 0.0
  %1223 = vmatmul.mubr.f32.gmra.mrb[0].mxu0 %v1138
  %v1224 = vpop.f32.mrb[0].mxu0
  %v1225 = vadd.f32 0.0, %v1224
  %v1226 = vpop.f32.mrb[0].mxu0
  %1227 = vmatprep.mubr.f32.mxu0 0.0
  %1228 = vmatmul.mubr.f32.gmra.mrb[0].mxu0 %v1141
  %v1229 = vpop.f32.mrb[0].mxu0
  %v1230 = vadd.f32 0.0, %v1229
  %v1231 = vpop.f32.mrb[0].mxu0
  %1232 = vdwg.mxu0
  %v1234 = vlaneseq
  %v1235 = vshrl.u32 %v1234, 7
  %v1236 = vsub.s32 0, %v1235
  %v1237 = vrot.slane %v36, %v1236
  %v1240 = vsel %vm38, %v998, 0
  %v1243 = vsel %vm38, %v999, 0
  %v1246 = vsel %vm38, %v1000, 0
  %v1249 = vsel %vm38, %v1001, 0
  %v1252 = vsel %vm38, %v1002, 0
  %1254 = vmatprep.subr.mxu0 0.0
  %1255 = vmatpush1.msra.mxu0 %v1009
  %1256 = vmatprep.subr.mxu0 0.0
  %1257 = vmatpush1.msra.mxu0 0.0
  %1258 = vmatprep.subr.mxu0 0.0
  %1259 = vmatpush1.msra.mxu0 0.0
  %1260 = vmatprep.subr.mxu0 0.0
  %1261 = vmatpush1.msra.mxu0 0.0
  %1262 = vmatprep.subr.mxu0 0.0
  %1263 = vmatpush1.msra.mxu0 0.0
  %1264 = vmatprep.subr.mxu0 0.0
  %1265 = vmatpush1.msra.mxu0 0.0
  %1266 = vmatprep.subr.mxu0 0.0
  %1267 = vmatpush1.msra.mxu0 0.0
  %1268 = vmatprep.subr.mxu0 0.0
  %1269 = vmatpush1.msra.mxu0 0.0
  %1270 = vmatprep.subr.mxu0 0.0
  %1271 = vmatpush1.msra.mxu0 0.0
  %1272 = vmatprep.subr.mxu0 0.0
  %1273 = vmatpush1.msra.mxu0 0.0
  %1274 = vmatprep.subr.mxu0 0.0
  %1275 = vmatpush1.msra.mxu0 0.0
  %1276 = vmatprep.subr.mxu0 0.0
  %1277 = vmatpush1.msra.mxu0 0.0
  %1278 = vmatprep.subr.mxu0 0.0
  %1279 = vmatpush1.msra.mxu0 0.0
  %1280 = vmatprep.subr.mxu0 0.0
  %1281 = vmatpush1.msra.mxu0 0.0
  %1282 = vmatprep.subr.mxu0 0.0
  %1283 = vmatpush1.msra.mxu0 0.0
  %1284 = vmatprep.subr.mxu0 0.0
  %1285 = vmatpush1.msra.mxu0 0.0
  %1286 = vmatprep.subr.mxu0 0.0
  %1287 = vmatpush1.msra.mxu0 0.0
  %1288 = vmatprep.subr.mxu0 0.0
  %1289 = vmatpush1.msra.mxu0 0.0
  %1290 = vmatprep.subr.mxu0 0.0
  %1291 = vmatpush1.msra.mxu0 0.0
  %1292 = vmatprep.subr.mxu0 0.0
  %1293 = vmatpush1.msra.mxu0 0.0
  %1294 = vmatprep.subr.mxu0 0.0
  %1295 = vmatpush1.msra.mxu0 0.0
  %1296 = vmatprep.subr.mxu0 0.0
  %1297 = vmatpush1.msra.mxu0 0.0
  %1298 = vmatprep.subr.mxu0 0.0
  %1299 = vmatpush1.msra.mxu0 0.0
  %1300 = vmatprep.subr.mxu0 0.0
  %1301 = vmatpush1.msra.mxu0 0.0
  %1302 = vmatprep.subr.mxu0 0.0
  %1303 = vmatpush1.msra.mxu0 0.0
  %1304 = vmatprep.subr.mxu0 0.0
  %1305 = vmatpush1.msra.mxu0 0.0
  %1306 = vmatprep.subr.mxu0 0.0
  %1307 = vmatpush1.msra.mxu0 0.0
  %1308 = vmatprep.subr.mxu0 0.0
  %1309 = vmatpush1.msra.mxu0 0.0
  %1310 = vmatprep.subr.mxu0 0.0
  %1311 = vmatpush1.msra.mxu0 0.0
  %1312 = vmatprep.subr.mxu0 0.0
  %1313 = vmatpush1.msra.mxu0 0.0
  %1314 = vmatprep.subr.mxu0 0.0
  %1315 = vmatpush1.msra.mxu0 0.0
  %1316 = vmatprep.subr.mxu0 0.0
  %1317 = vmatpush1.msra.mxu0 0.0
  %1318 = vmatprep.mubr.f32.mxu0 0.0
  %1319 = vmatmul.mubr.f32.gmra.mrb[0].mxu0 %v1240
  %v1320 = vpop.f32.mrb[0].mxu0
  %v1321 = vadd.f32 %v1237, %v1320
  %v1322 = vpop.f32.mrb[0].mxu0
  %1323 = vmatprep.mubr.f32.mxu0 0.0
  %1324 = vmatmul.mubr.f32.gmra.mrb[0].mxu0 %v1243
  %v1325 = vpop.f32.mrb[0].mxu0
  %v1326 = vadd.f32 %v1237, %v1325
  %v1327 = vpop.f32.mrb[0].mxu0
  %1328 = vmatprep.mubr.f32.mxu0 0.0
  %1329 = vmatmul.mubr.f32.gmra.mrb[0].mxu0 %v1246
  %v1330 = vpop.f32.mrb[0].mxu0
  %v1331 = vadd.f32 %v1237, %v1330
  %v1332 = vpop.f32.mrb[0].mxu0
  %1333 = vmatprep.mubr.f32.mxu0 0.0
  %1334 = vmatmul.mubr.f32.gmra.mrb[0].mxu0 %v1249
  %v1335 = vpop.f32.mrb[0].mxu0
  %v1336 = vadd.f32 %v1237, %v1335
  %v1337 = vpop.f32.mrb[0].mxu0
  %1338 = vmatprep.mubr.f32.mxu0 0.0
  %1339 = vmatmul.mubr.f32.gmra.mrb[0].mxu0 %v1252
  %v1340 = vpop.f32.mrb[0].mxu0
  %v1341 = vadd.f32 %v1237, %v1340
  %v1342 = vpop.f32.mrb[0].mxu0
  %1343 = vdwg.mxu0
  %vm1344 = vcmask 31744
  %1345 = vst.msk [vmem:[%s8] sm:$0xff] %vm1344, %v1321
  %1346 = vst.msk [vmem:[%s8 + $0x8] sm:$0xff] %vm1344, %v1326
  %1347 = vst.msk [vmem:[%s8 + $0x10] sm:$0xff] %vm1344, %v1331
  %1348 = vst.msk [vmem:[%s8 + $0x18] sm:$0xff] %vm1344, %v1336
  %vm1349 = vcmask 26624
  %1350 = vst.msk [vmem:[%s8 + $0x20] sm:$0x7] %vm1349, %v1341
  %v1351 = vld [vmem:[%s8] sm:$0xff]
  %v1352 = vld [vmem:[%s8 + $0x8] sm:$0xff]
  %v1353 = vld [vmem:[%s8 + $0x10] sm:$0xff]
  %v1354 = vld [vmem:[%s8 + $0x18] sm:$0xff]
  %v1355 = vld [vmem:[%s8 + $0x20] sm:$0x3]
  %v1356 = vadd.f32 %v1351, %v1098
  %v1357 = vadd.f32 %v1352, %v1103
  %v1358 = vadd.f32 %v1353, %v1108
  %v1359 = vadd.f32 %v1354, %v1113
  %v1360 = vadd.f32 %v1355, %v1118
  %1361 = vst.msk [vmem:[%s8] sm:$0xff] %vm1344, %v1356
  %1362 = vst.msk [vmem:[%s8 + $0x8] sm:$0xff] %vm1344, %v1357
  %1363 = vst.msk [vmem:[%s8 + $0x10] sm:$0xff] %vm1344, %v1358
  %1364 = vst.msk [vmem:[%s8 + $0x18] sm:$0xff] %vm1344, %v1359
  %vm1365 = vcmask 25600
  %1366 = vst.msk [vmem:[%s8 + $0x20] sm:$0x3] %vm1365, %v1360
  %v1367 = vld [vmem:[%s8 + $0x1] sm:$0xff]
  %v1368 = vld [vmem:[%s8 + $0x9] sm:$0xff]
  %v1369 = vld [vmem:[%s8 + $0x11] sm:$0xff]
  %v1370 = vld [vmem:[%s8 + $0x19] sm:$0xff]
  %v1371 = vld [vmem:[%s8 + $0x21] sm:$0x3]
  %v1372 = vadd.f32 %v1367, %v1210
  %v1373 = vadd.f32 %v1368, %v1215
  %v1374 = vadd.f32 %v1369, %v1220
  %v1375 = vadd.f32 %v1370, %v1225
  %v1376 = vadd.f32 %v1371, %v1230
  %1377 = vst.msk [vmem:[%s8 + $0x1] sm:$0xff] %vm1344, %v1372
  %1378 = vst.msk [vmem:[%s8 + $0x9] sm:$0xff] %vm1344, %v1373
  %1379 = vst.msk [vmem:[%s8 + $0x11] sm:$0xff] %vm1344, %v1374
  %1380 = vst.msk [vmem:[%s8 + $0x19] sm:$0xff] %vm1344, %v1375
  %1381 = vst.msk [vmem:[%s8 + $0x21] sm:$0x3] %vm1365, %v1376
  %1382 = vst.msk [vmem:[#allocation2] sm:$0xff] %vm38, 0.0
  %1383 = vst.msk [vmem:[#allocation2 + $0x8] sm:$0xff] %vm38, 0.0
  %1384 = vst.msk [vmem:[#allocation2 + $0x10] sm:$0xff] %vm38, 0.0
  %1385 = vst.msk [vmem:[#allocation2 + $0x18] sm:$0xff] %vm38, 0.0
  %1386 = vst.msk [vmem:[#allocation2 + $0x20] sm:$0xff] %vm38, 0.0
  %1387 = vst.msk [vmem:[#allocation2 + $0x28] sm:$0xff] %vm38, 0.0
  %1388 = vst.msk [vmem:[#allocation2 + $0x30] sm:$0xff] %vm38, 0.0
  %1389 = vst.msk [vmem:[#allocation2 + $0x38] sm:$0xff] %vm38, 0.0
  %vm1390 = vcmask 63488
  %1391 = vst.msk [vmem:[#allocation2 + $0x40] sm:$0x7f] %vm1390, 0.0
  %v1392 = vld [vmem:[%s1] sm:$0xff]
  %1393 = vmatprep.subr.mxu0 0.0
  %1394 = vmatpush1.msra.mxu0 %v1392
  %1395 = vmatprep.subr.mxu0 0.0
  %1396 = vmatpush1.msra.mxu0 0.0
  %1397 = vmatprep.subr.mxu0 0.0
  %1398 = vmatpush1.msra.mxu0 0.0
  %1399 = vmatprep.subr.mxu0 0.0
  %1400 = vmatpush1.msra.mxu0 0.0
  %1401 = vmatprep.subr.mxu0 0.0
  %1402 = vmatpush1.msra.mxu0 0.0
  %1403 = vmatprep.subr.mxu0 0.0
  %1404 = vmatpush1.msra.mxu0 0.0
  %1405 = vmatprep.subr.mxu0 0.0
  %1406 = vmatpush1.msra.mxu0 0.0
  %1407 = vmatprep.subr.mxu0 0.0
  %1408 = vmatpush1.msra.mxu0 0.0
  %1409 = vmatprep.subr.mxu0 0.0
  %1410 = vmatpush1.msra.mxu0 0.0
  %1411 = vmatprep.subr.mxu0 0.0
  %1412 = vmatpush1.msra.mxu0 0.0
  %1413 = vmatprep.subr.mxu0 0.0
  %1414 = vmatpush1.msra.mxu0 0.0
  %1415 = vmatprep.subr.mxu0 0.0
  %1416 = vmatpush1.msra.mxu0 0.0
  %1417 = vmatprep.subr.mxu0 0.0
  %1418 = vmatpush1.msra.mxu0 0.0
  %1419 = vmatprep.subr.mxu0 0.0
  %1420 = vmatpush1.msra.mxu0 0.0
  %1421 = vmatprep.subr.mxu0 0.0
  %1422 = vmatpush1.msra.mxu0 0.0
  %1423 = vmatprep.subr.mxu0 0.0
  %1424 = vmatpush1.msra.mxu0 0.0
  %1425 = vmatprep.subr.mxu0 0.0
  %1426 = vmatpush1.msra.mxu0 0.0
  %1427 = vmatprep.subr.mxu0 0.0
  %1428 = vmatpush1.msra.mxu0 0.0
  %1429 = vmatprep.subr.mxu0 0.0
  %1430 = vmatpush1.msra.mxu0 0.0
  %1431 = vmatprep.subr.mxu0 0.0
  %1432 = vmatpush1.msra.mxu0 0.0
  %1433 = vmatprep.subr.mxu0 0.0
  %1434 = vmatpush1.msra.mxu0 0.0
  %1435 = vmatprep.subr.mxu0 0.0
  %1436 = vmatpush1.msra.mxu0 0.0
  %1437 = vmatprep.subr.mxu0 0.0
  %1438 = vmatpush1.msra.mxu0 0.0
  %1439 = vmatprep.subr.mxu0 0.0
  %1440 = vmatpush1.msra.mxu0 0.0
  %1441 = vmatprep.subr.mxu0 0.0
  %1442 = vmatpush1.msra.mxu0 0.0
  %1443 = vmatprep.subr.mxu0 0.0
  %1444 = vmatpush1.msra.mxu0 0.0
  %1445 = vmatprep.subr.mxu0 0.0
  %1446 = vmatpush1.msra.mxu0 0.0
  %1447 = vmatprep.subr.mxu0 0.0
  %1448 = vmatpush1.msra.mxu0 0.0
  %1449 = vmatprep.subr.mxu0 0.0
  %1450 = vmatpush1.msra.mxu0 0.0
  %1451 = vmatprep.subr.mxu0 0.0
  %1452 = vmatpush1.msra.mxu0 0.0
  %1453 = vmatprep.subr.mxu0 0.0
  %1454 = vmatpush1.msra.mxu0 0.0
  %1455 = vmatprep.subr.mxu0 0.0
  %1456 = vmatpush1.msra.mxu0 0.0
  %1457 = vmatprep.mubr.f32.mxu0 0.0
  %1458 = vmatmul.mubr.f32.gmra.mrb[0].mxu0 %v1240
  %v1459 = vpop.f32.mrb[0].mxu0
  %v1460 = vadd.f32 0.0, %v1459
  %v1461 = vpop.f32.mrb[0].mxu0
  %1462 = vmatprep.mubr.f32.mxu0 0.0
  %1463 = vmatmul.mubr.f32.gmra.mrb[0].mxu0 %v1243
  %v1464 = vpop.f32.mrb[0].mxu0
  %v1465 = vadd.f32 0.0, %v1464
  %v1466 = vpop.f32.mrb[0].mxu0
  %1467 = vmatprep.mubr.f32.mxu0 0.0
  %1468 = vmatmul.mubr.f32.gmra.mrb[0].mxu0 %v1246
  %v1469 = vpop.f32.mrb[0].mxu0
  %v1470 = vadd.f32 0.0, %v1469
  %v1471 = vpop.f32.mrb[0].mxu0
  %1472 = vmatprep.mubr.f32.mxu0 0.0
  %1473 = vmatmul.mubr.f32.gmra.mrb[0].mxu0 %v1249
  %v1474 = vpop.f32.mrb[0].mxu0
  %v1475 = vadd.f32 0.0, %v1474
  %v1476 = vpop.f32.mrb[0].mxu0
  %1477 = vmatprep.mubr.f32.mxu0 0.0
  %1478 = vmatmul.mubr.f32.gmra.mrb[0].mxu0 %v1252
  %v1479 = vpop.f32.mrb[0].mxu0
  %v1480 = vadd.f32 0.0, %v1479
  %v1481 = vpop.f32.mrb[0].mxu0
  %1482 = vdwg.mxu0
  %v1483 = vld [vmem:[#allocation2] ss:$2 sm:$0xff]
  %v1484 = vld [vmem:[%s582] ss:$2 sm:$0xff]
  %v1485 = vld [vmem:[%s584] ss:$2 sm:$0xff]
  %s1486 = scalar_lea.vmem [#allocation2], 48
  %v1487 = vld [vmem:[%s1486] ss:$2 sm:$0xff]
  %s1488 = scalar_lea.vmem [#allocation2], 64
  %v1489 = vld [vmem:[%s1488] ss:$2 sm:$0x7]
  %v1490 = vadd.f32 %v1483, %v1460
  %v1491 = vadd.f32 %v1484, %v1465
  %v1492 = vadd.f32 %v1485, %v1470
  %v1493 = vadd.f32 %v1487, %v1475
  %v1494 = vadd.f32 %v1489, %v1480
  %1495 = vst [vmem:[#allocation2] ss:$2 sm:$0xff] %v1490
  %1496 = vst [vmem:[%s582] ss:$2 sm:$0xff] %v1491
  %1497 = vst [vmem:[%s584] ss:$2 sm:$0xff] %v1492
  %1498 = vst [vmem:[%s1486] ss:$2 sm:$0xff] %v1493
  %1499 = vst [vmem:[%s1488] ss:$2 sm:$0x7] %v1494
  %v1500 = vld [vmem:[%s120] sm:$0xff]
  %1501 = vmatprep.subr.mxu0 0.0
  %1502 = vmatpush1.msra.mxu0 %v1500
  %1503 = vmatprep.subr.mxu0 0.0
  %1504 = vmatpush1.msra.mxu0 0.0
  %1505 = vmatprep.subr.mxu0 0.0
  %1506 = vmatpush1.msra.mxu0 0.0
  %1507 = vmatprep.subr.mxu0 0.0
  %1508 = vmatpush1.msra.mxu0 0.0
  %1509 = vmatprep.subr.mxu0 0.0
  %1510 = vmatpush1.msra.mxu0 0.0
  %1511 = vmatprep.subr.mxu0 0.0
  %1512 = vmatpush1.msra.mxu0 0.0
  %1513 = vmatprep.subr.mxu0 0.0
  %1514 = vmatpush1.msra.mxu0 0.0
  %1515 = vmatprep.subr.mxu0 0.0
  %1516 = vmatpush1.msra.mxu0 0.0
  %1517 = vmatprep.subr.mxu0 0.0
  %1518 = vmatpush1.msra.mxu0 0.0
  %1519 = vmatprep.subr.mxu0 0.0
  %1520 = vmatpush1.msra.mxu0 0.0
  %1521 = vmatprep.subr.mxu0 0.0
  %1522 = vmatpush1.msra.mxu0 0.0
  %1523 = vmatprep.subr.mxu0 0.0
  %1524 = vmatpush1.msra.mxu0 0.0
  %1525 = vmatprep.subr.mxu0 0.0
  %1526 = vmatpush1.msra.mxu0 0.0
  %1527 = vmatprep.subr.mxu0 0.0
  %1528 = vmatpush1.msra.mxu0 0.0
  %1529 = vmatprep.subr.mxu0 0.0
  %1530 = vmatpush1.msra.mxu0 0.0
  %1531 = vmatprep.subr.mxu0 0.0
  %1532 = vmatpush1.msra.mxu0 0.0
  %1533 = vmatprep.subr.mxu0 0.0
  %1534 = vmatpush1.msra.mxu0 0.0
  %1535 = vmatprep.subr.mxu0 0.0
  %1536 = vmatpush1.msra.mxu0 0.0
  %1537 = vmatprep.subr.mxu0 0.0
  %1538 = vmatpush1.msra.mxu0 0.0
  %1539 = vmatprep.subr.mxu0 0.0
  %1540 = vmatpush1.msra.mxu0 0.0
  %1541 = vmatprep.subr.mxu0 0.0
  %1542 = vmatpush1.msra.mxu0 0.0
  %1543 = vmatprep.subr.mxu0 0.0
  %1544 = vmatpush1.msra.mxu0 0.0
  %1545 = vmatprep.subr.mxu0 0.0
  %1546 = vmatpush1.msra.mxu0 0.0
  %1547 = vmatprep.subr.mxu0 0.0
  %1548 = vmatpush1.msra.mxu0 0.0
  %1549 = vmatprep.subr.mxu0 0.0
  %1550 = vmatpush1.msra.mxu0 0.0
  %1551 = vmatprep.subr.mxu0 0.0
  %1552 = vmatpush1.msra.mxu0 0.0
  %1553 = vmatprep.subr.mxu0 0.0
  %1554 = vmatpush1.msra.mxu0 0.0
  %1555 = vmatprep.subr.mxu0 0.0
  %1556 = vmatpush1.msra.mxu0 0.0
  %1557 = vmatprep.subr.mxu0 0.0
  %1558 = vmatpush1.msra.mxu0 0.0
  %1559 = vmatprep.subr.mxu0 0.0
  %1560 = vmatpush1.msra.mxu0 0.0
  %1561 = vmatprep.subr.mxu0 0.0
  %1562 = vmatpush1.msra.mxu0 0.0
  %1563 = vmatprep.subr.mxu0 0.0
  %1564 = vmatpush1.msra.mxu0 0.0
  %1565 = vmatprep.mubr.f32.mxu0 0.0
  %1566 = vmatmul.mubr.f32.gmra.mrb[0].mxu0 %v1240
  %v1567 = vpop.f32.mrb[0].mxu0
  %v1568 = vadd.f32 0.0, %v1567
  %v1569 = vpop.f32.mrb[0].mxu0
  %1570 = vmatprep.mubr.f32.mxu0 0.0
  %1571 = vmatmul.mubr.f32.gmra.mrb[0].mxu0 %v1243
  %v1572 = vpop.f32.mrb[0].mxu0
  %v1573 = vadd.f32 0.0, %v1572
  %v1574 = vpop.f32.mrb[0].mxu0
  %1575 = vmatprep.mubr.f32.mxu0 0.0
  %1576 = vmatmul.mubr.f32.gmra.mrb[0].mxu0 %v1246
  %v1577 = vpop.f32.mrb[0].mxu0
  %v1578 = vadd.f32 0.0, %v1577
  %v1579 = vpop.f32.mrb[0].mxu0
  %1580 = vmatprep.mubr.f32.mxu0 0.0
  %1581 = vmatmul.mubr.f32.gmra.mrb[0].mxu0 %v1249
  %v1582 = vpop.f32.mrb[0].mxu0
  %v1583 = vadd.f32 0.0, %v1582
  %v1584 = vpop.f32.mrb[0].mxu0
  %1585 = vmatprep.mubr.f32.mxu0 0.0
  %1586 = vmatmul.mubr.f32.gmra.mrb[0].mxu0 %v1252
  %v1587 = vpop.f32.mrb[0].mxu0
  %v1588 = vadd.f32 0.0, %v1587
  %v1589 = vpop.f32.mrb[0].mxu0
  %1590 = vdwg.mxu0
  %v1591 = vld [vmem:[%s192] ss:$2 sm:$0xff]
  %v1592 = vld [vmem:[%s674] ss:$2 sm:$0xff]
  %v1593 = vld [vmem:[%s676] ss:$2 sm:$0xff]
  %s1594 = scalar_lea.vmem [#allocation2], 49
  %v1595 = vld [vmem:[%s1594] ss:$2 sm:$0xff]
  %s1596 = scalar_lea.vmem [#allocation2], 65
  %v1597 = vld [vmem:[%s1596] ss:$2 sm:$0x7]
  %v1598 = vadd.f32 %v1591, %v1568
  %v1599 = vadd.f32 %v1592, %v1573
  %v1600 = vadd.f32 %v1593, %v1578
  %v1601 = vadd.f32 %v1595, %v1583
  %v1602 = vadd.f32 %v1597, %v1588
  %1603 = vst [vmem:[%s192] ss:$2 sm:$0xff] %v1598
  %1604 = vst [vmem:[%s674] ss:$2 sm:$0xff] %v1599
  %1605 = vst [vmem:[%s676] ss:$2 sm:$0xff] %v1600
  %1606 = vst [vmem:[%s1594] ss:$2 sm:$0xff] %v1601
  %1607 = vst [vmem:[%s1596] ss:$2 sm:$0x7] %v1602
  %v1608 = vld [vmem:[%s196] sm:$0xff]
  %1609 = vmatprep.subr.mxu0 0.0
  %1610 = vmatpush1.msra.mxu0 %v1608
  %1611 = vmatprep.subr.mxu0 0.0
  %1612 = vmatpush1.msra.mxu0 0.0
  %1613 = vmatprep.subr.mxu0 0.0
  %1614 = vmatpush1.msra.mxu0 0.0
  %1615 = vmatprep.subr.mxu0 0.0
  %1616 = vmatpush1.msra.mxu0 0.0
  %1617 = vmatprep.subr.mxu0 0.0
  %1618 = vmatpush1.msra.mxu0 0.0
  %1619 = vmatprep.subr.mxu0 0.0
  %1620 = vmatpush1.msra.mxu0 0.0
  %1621 = vmatprep.subr.mxu0 0.0
  %1622 = vmatpush1.msra.mxu0 0.0
  %1623 = vmatprep.subr.mxu0 0.0
  %1624 = vmatpush1.msra.mxu0 0.0
  %1625 = vmatprep.subr.mxu0 0.0
  %1626 = vmatpush1.msra.mxu0 0.0
  %1627 = vmatprep.subr.mxu0 0.0
  %1628 = vmatpush1.msra.mxu0 0.0
  %1629 = vmatprep.subr.mxu0 0.0
  %1630 = vmatpush1.msra.mxu0 0.0
  %1631 = vmatprep.subr.mxu0 0.0
  %1632 = vmatpush1.msra.mxu0 0.0
  %1633 = vmatprep.subr.mxu0 0.0
  %1634 = vmatpush1.msra.mxu0 0.0
  %1635 = vmatprep.subr.mxu0 0.0
  %1636 = vmatpush1.msra.mxu0 0.0
  %1637 = vmatprep.subr.mxu0 0.0
  %1638 = vmatpush1.msra.mxu0 0.0
  %1639 = vmatprep.subr.mxu0 0.0
  %1640 = vmatpush1.msra.mxu0 0.0
  %1641 = vmatprep.subr.mxu0 0.0
  %1642 = vmatpush1.msra.mxu0 0.0
  %1643 = vmatprep.subr.mxu0 0.0
  %1644 = vmatpush1.msra.mxu0 0.0
  %1645 = vmatprep.subr.mxu0 0.0
  %1646 = vmatpush1.msra.mxu0 0.0
  %1647 = vmatprep.subr.mxu0 0.0
  %1648 = vmatpush1.msra.mxu0 0.0
  %1649 = vmatprep.subr.mxu0 0.0
  %1650 = vmatpush1.msra.mxu0 0.0
  %1651 = vmatprep.subr.mxu0 0.0
  %1652 = vmatpush1.msra.mxu0 0.0
  %1653 = vmatprep.subr.mxu0 0.0
  %1654 = vmatpush1.msra.mxu0 0.0
  %1655 = vmatprep.subr.mxu0 0.0
  %1656 = vmatpush1.msra.mxu0 0.0
  %1657 = vmatprep.subr.mxu0 0.0
  %1658 = vmatpush1.msra.mxu0 0.0
  %1659 = vmatprep.subr.mxu0 0.0
  %1660 = vmatpush1.msra.mxu0 0.0
  %1661 = vmatprep.subr.mxu0 0.0
  %1662 = vmatpush1.msra.mxu0 0.0
  %1663 = vmatprep.subr.mxu0 0.0
  %1664 = vmatpush1.msra.mxu0 0.0
  %1665 = vmatprep.subr.mxu0 0.0
  %1666 = vmatpush1.msra.mxu0 0.0
  %1667 = vmatprep.subr.mxu0 0.0
  %1668 = vmatpush1.msra.mxu0 0.0
  %1669 = vmatprep.subr.mxu0 0.0
  %1670 = vmatpush1.msra.mxu0 0.0
  %1671 = vmatprep.subr.mxu0 0.0
  %1672 = vmatpush1.msra.mxu0 0.0
  %1673 = vmatprep.mubr.f32.mxu0 0.0
  %1674 = vmatmul.mubr.f32.gmra.mrb[0].mxu0 %v1240
  %v1675 = vpop.f32.mrb[0].mxu0
  %v1676 = vadd.f32 0.0, %v1675
  %v1677 = vpop.f32.mrb[0].mxu0
  %1678 = vmatprep.mubr.f32.mxu0 0.0
  %1679 = vmatmul.mubr.f32.gmra.mrb[0].mxu0 %v1243
  %v1680 = vpop.f32.mrb[0].mxu0
  %v1681 = vadd.f32 0.0, %v1680
  %v1682 = vpop.f32.mrb[0].mxu0
  %1683 = vmatprep.mubr.f32.mxu0 0.0
  %1684 = vmatmul.mubr.f32.gmra.mrb[0].mxu0 %v1246
  %v1685 = vpop.f32.mrb[0].mxu0
  %v1686 = vadd.f32 0.0, %v1685
  %v1687 = vpop.f32.mrb[0].mxu0
  %1688 = vmatprep.mubr.f32.mxu0 0.0
  %1689 = vmatmul.mubr.f32.gmra.mrb[0].mxu0 %v1249
  %v1690 = vpop.f32.mrb[0].mxu0
  %v1691 = vadd.f32 0.0, %v1690
  %v1692 = vpop.f32.mrb[0].mxu0
  %1693 = vmatprep.mubr.f32.mxu0 0.0
  %1694 = vmatmul.mubr.f32.gmra.mrb[0].mxu0 %v1252
  %v1695 = vpop.f32.mrb[0].mxu0
  %v1696 = vadd.f32 0.0, %v1695
  %v1697 = vpop.f32.mrb[0].mxu0
  %1698 = vdwg.mxu0
  %v1699 = vld [vmem:[%s268] ss:$2 sm:$0xff]
  %v1700 = vld [vmem:[%s766] ss:$2 sm:$0xff]
  %v1701 = vld [vmem:[%s768] ss:$2 sm:$0xff]
  %s1702 = scalar_lea.vmem [#allocation2], 50
  %v1703 = vld [vmem:[%s1702] ss:$2 sm:$0xff]
  %s1704 = scalar_lea.vmem [#allocation2], 66
  %v1705 = vld [vmem:[%s1704] ss:$2 sm:$0x7]
  %v1706 = vadd.f32 %v1699, %v1676
  %v1707 = vadd.f32 %v1700, %v1681
  %v1708 = vadd.f32 %v1701, %v1686
  %v1709 = vadd.f32 %v1703, %v1691
  %v1710 = vadd.f32 %v1705, %v1696
  %1711 = vst [vmem:[%s268] ss:$2 sm:$0xff] %v1706
  %1712 = vst [vmem:[%s766] ss:$2 sm:$0xff] %v1707
  %1713 = vst [vmem:[%s768] ss:$2 sm:$0xff] %v1708
  %1714 = vst [vmem:[%s1702] ss:$2 sm:$0xff] %v1709
  %1715 = vst [vmem:[%s1704] ss:$2 sm:$0x7] %v1710
  %v1716 = vld [vmem:[#allocation2] sm:$0xff]
  %v1717 = vld [vmem:[#allocation2 + $0x8] sm:$0xff]
  %v1718 = vld [vmem:[#allocation2 + $0x10] sm:$0xff]
  %v1719 = vld [vmem:[#allocation2 + $0x18] sm:$0xff]
  %v1720 = vld [vmem:[#allocation2 + $0x20] sm:$0xff]
  %v1721 = vld [vmem:[#allocation2 + $0x28] sm:$0xff]
  %v1722 = vld [vmem:[#allocation2 + $0x30] sm:$0xff]
  %v1723 = vld [vmem:[#allocation2 + $0x38] sm:$0xff]
  %v1724 = vld [vmem:[#allocation2 + $0x40] sm:$0x7f]
  %v1725 = vadd.f32 %v1716, %v279
  %v1726 = vadd.f32 %v1717, %v279
  %v1727 = vadd.f32 %v1718, %v279
  %v1728 = vadd.f32 %v1719, %v279
  %v1729 = vadd.f32 %v1720, %v279
  %v1730 = vadd.f32 %v1721, %v279
  %v1731 = vadd.f32 %v1722, %v279
  %v1732 = vadd.f32 %v1723, %v279
  %v1733 = vadd.f32 %v1724, %v279
  %v1734 = vsel %vm38, %v1725, 0.0
  %v1735 = vsel %vm38, %v1726, 0.0
  %v1736 = vadd.f32 %v1734, %v1735
  %v1737 = vsel %vm38, %v1727, 0.0
  %v1738 = vadd.f32 %v1736, %v1737
  %v1739 = vsel %vm38, %v1728, 0.0
  %v1740 = vadd.f32 %v1738, %v1739
  %v1741 = vsel %vm38, %v1729, 0.0
  %v1742 = vadd.f32 %v1740, %v1741
  %v1743 = vsel %vm38, %v1730, 0.0
  %v1744 = vadd.f32 %v1742, %v1743
  %v1745 = vsel %vm38, %v1731, 0.0
  %v1746 = vadd.f32 %v1744, %v1745
  %v1747 = vsel %vm38, %v1732, 0.0
  %v1748 = vadd.f32 %v1746, %v1747
  %v1749 = vsel %vm1390, %v1733, 0.0
  %v1750 = vadd.f32 %v1748, %v1749
  %v1751 = vrot.slane %v1750, 4
  %v1752 = vadd.f32 %v1750, %v1751
  %v1753 = vrot.slane %v1752, 2
  %v1754 = vadd.f32 %v1752, %v1753
  %v1755 = vrot.slane %v1754, 1
  %v1756 = vadd.f32 %v1754, %v1755
  %v1757 = vmul.f32 %v1725, %v1725
  %v1758 = vmul.f32 %v1726, %v1726
  %v1759 = vmul.f32 %v1727, %v1727
  %v1760 = vmul.f32 %v1728, %v1728
  %v1761 = vmul.f32 %v1729, %v1729
  %v1762 = vmul.f32 %v1730, %v1730
  %v1763 = vmul.f32 %v1731, %v1731
  %v1764 = vmul.f32 %v1732, %v1732
  %v1765 = vmul.f32 %v1733, %v1733
  %v1766 = vsel %vm38, %v1757, 0.0
  %v1767 = vsel %vm38, %v1758, 0.0
  %v1768 = vadd.f32 %v1766, %v1767
  %v1769 = vsel %vm38, %v1759, 0.0
  %v1770 = vadd.f32 %v1768, %v1769
  %v1771 = vsel %vm38, %v1760, 0.0
  %v1772 = vadd.f32 %v1770, %v1771
  %v1773 = vsel %vm38, %v1761, 0.0
  %v1774 = vadd.f32 %v1772, %v1773
  %v1775 = vsel %vm38, %v1762, 0.0
  %v1776 = vadd.f32 %v1774, %v1775
  %v1777 = vsel %vm38, %v1763, 0.0
  %v1778 = vadd.f32 %v1776, %v1777
  %v1779 = vsel %vm38, %v1764, 0.0
  %v1780 = vadd.f32 %v1778, %v1779
  %v1781 = vsel %vm1390, %v1765, 0.0
  %v1782 = vadd.f32 %v1780, %v1781
  %v1783 = vrot.slane %v1782, 4
  %v1784 = vadd.f32 %v1782, %v1783
  %v1785 = vrot.slane %v1784, 2
  %v1786 = vadd.f32 %v1784, %v1785
  %v1787 = vrot.slane %v1786, 1
  %v1788 = vadd.f32 %v1786, %v1787
  %v1790 = vsel %vm38, %v1756, 0
  %1792 = vmatprep.subr.mxu0 0.0
  %1793 = vmatpush1.msra.mxu0 %v32
  %1794 = vmatprep.subr.mxu0 0.0
  %1795 = vmatpush1.msra.mxu0 0.0
  %1796 = vmatprep.subr.mxu0 0.0
  %1797 = vmatpush1.msra.mxu0 0.0
  %1798 = vmatprep.subr.mxu0 0.0
  %1799 = vmatpush1.msra.mxu0 0.0
  %1800 = vmatprep.subr.mxu0 0.0
  %1801 = vmatpush1.msra.mxu0 0.0
  %1802 = vmatprep.subr.mxu0 0.0
  %1803 = vmatpush1.msra.mxu0 0.0
  %1804 = vmatprep.subr.mxu0 0.0
  %1805 = vmatpush1.msra.mxu0 0.0
  %1806 = vmatprep.subr.mxu0 0.0
  %1807 = vmatpush1.msra.mxu0 0.0
  %1808 = vmatprep.subr.mxu0 0.0
  %1809 = vmatpush1.msra.mxu0 0.0
  %1810 = vmatprep.subr.mxu0 0.0
  %1811 = vmatpush1.msra.mxu0 0.0
  %1812 = vmatprep.subr.mxu0 0.0
  %1813 = vmatpush1.msra.mxu0 0.0
  %1814 = vmatprep.subr.mxu0 0.0
  %1815 = vmatpush1.msra.mxu0 0.0
  %1816 = vmatprep.subr.mxu0 0.0
  %1817 = vmatpush1.msra.mxu0 0.0
  %1818 = vmatprep.subr.mxu0 0.0
  %1819 = vmatpush1.msra.mxu0 0.0
  %1820 = vmatprep.subr.mxu0 0.0
  %1821 = vmatpush1.msra.mxu0 0.0
  %1822 = vmatprep.subr.mxu0 0.0
  %1823 = vmatpush1.msra.mxu0 0.0
  %1824 = vmatprep.subr.mxu0 0.0
  %1825 = vmatpush1.msra.mxu0 0.0
  %1826 = vmatprep.subr.mxu0 0.0
  %1827 = vmatpush1.msra.mxu0 0.0
  %1828 = vmatprep.subr.mxu0 0.0
  %1829 = vmatpush1.msra.mxu0 0.0
  %1830 = vmatprep.subr.mxu0 0.0
  %1831 = vmatpush1.msra.mxu0 0.0
  %1832 = vmatprep.subr.mxu0 0.0
  %1833 = vmatpush1.msra.mxu0 0.0
  %1834 = vmatprep.subr.mxu0 0.0
  %1835 = vmatpush1.msra.mxu0 0.0
  %1836 = vmatprep.subr.mxu0 0.0
  %1837 = vmatpush1.msra.mxu0 0.0
  %1838 = vmatprep.subr.mxu0 0.0
  %1839 = vmatpush1.msra.mxu0 0.0
  %1840 = vmatprep.subr.mxu0 0.0
  %1841 = vmatpush1.msra.mxu0 0.0
  %1842 = vmatprep.subr.mxu0 0.0
  %1843 = vmatpush1.msra.mxu0 0.0
  %1844 = vmatprep.subr.mxu0 0.0
  %1845 = vmatpush1.msra.mxu0 0.0
  %1846 = vmatprep.subr.mxu0 0.0
  %1847 = vmatpush1.msra.mxu0 0.0
  %1848 = vmatprep.subr.mxu0 0.0
  %1849 = vmatpush1.msra.mxu0 0.0
  %1850 = vmatprep.subr.mxu0 0.0
  %1851 = vmatpush1.msra.mxu0 0.0
  %1852 = vmatprep.subr.mxu0 0.0
  %1853 = vmatpush1.msra.mxu0 0.0
  %1854 = vmatprep.subr.mxu0 0.0
  %1855 = vmatpush1.msra.mxu0 0.0
  %1856 = vmatprep.mubr.f32.mxu0 0.0
  %1857 = vmatmul.mubr.f32.gmra.mrb[0].mxu0 %v1790
  %v1858 = vpop.f32.mrb[0].mxu0
  %v1859 = vadd.f32 0.0, %v1858
  %v1860 = vpop.f32.mrb[0].mxu0
  %1861 = vdwg.mxu0
  %v1863 = vsel %vm38, %v1788, 0
  %1865 = vmatprep.subr.mxu0 0.0
  %1866 = vmatpush1.msra.mxu0 %v32
  %1867 = vmatprep.subr.mxu0 0.0
  %1868 = vmatpush1.msra.mxu0 0.0
  %1869 = vmatprep.subr.mxu0 0.0
  %1870 = vmatpush1.msra.mxu0 0.0
  %1871 = vmatprep.subr.mxu0 0.0
  %1872 = vmatpush1.msra.mxu0 0.0
  %1873 = vmatprep.subr.mxu0 0.0
  %1874 = vmatpush1.msra.mxu0 0.0
  %1875 = vmatprep.subr.mxu0 0.0
  %1876 = vmatpush1.msra.mxu0 0.0
  %1877 = vmatprep.subr.mxu0 0.0
  %1878 = vmatpush1.msra.mxu0 0.0
  %1879 = vmatprep.subr.mxu0 0.0
  %1880 = vmatpush1.msra.mxu0 0.0
  %1881 = vmatprep.subr.mxu0 0.0
  %1882 = vmatpush1.msra.mxu0 0.0
  %1883 = vmatprep.subr.mxu0 0.0
  %1884 = vmatpush1.msra.mxu0 0.0
  %1885 = vmatprep.subr.mxu0 0.0
  %1886 = vmatpush1.msra.mxu0 0.0
  %1887 = vmatprep.subr.mxu0 0.0
  %1888 = vmatpush1.msra.mxu0 0.0
  %1889 = vmatprep.subr.mxu0 0.0
  %1890 = vmatpush1.msra.mxu0 0.0
  %1891 = vmatprep.subr.mxu0 0.0
  %1892 = vmatpush1.msra.mxu0 0.0
  %1893 = vmatprep.subr.mxu0 0.0
  %1894 = vmatpush1.msra.mxu0 0.0
  %1895 = vmatprep.subr.mxu0 0.0
  %1896 = vmatpush1.msra.mxu0 0.0
  %1897 = vmatprep.subr.mxu0 0.0
  %1898 = vmatpush1.msra.mxu0 0.0
  %1899 = vmatprep.subr.mxu0 0.0
  %1900 = vmatpush1.msra.mxu0 0.0
  %1901 = vmatprep.subr.mxu0 0.0
  %1902 = vmatpush1.msra.mxu0 0.0
  %1903 = vmatprep.subr.mxu0 0.0
  %1904 = vmatpush1.msra.mxu0 0.0
  %1905 = vmatprep.subr.mxu0 0.0
  %1906 = vmatpush1.msra.mxu0 0.0
  %1907 = vmatprep.subr.mxu0 0.0
  %1908 = vmatpush1.msra.mxu0 0.0
  %1909 = vmatprep.subr.mxu0 0.0
  %1910 = vmatpush1.msra.mxu0 0.0
  %1911 = vmatprep.subr.mxu0 0.0
  %1912 = vmatpush1.msra.mxu0 0.0
  %1913 = vmatprep.subr.mxu0 0.0
  %1914 = vmatpush1.msra.mxu0 0.0
  %1915 = vmatprep.subr.mxu0 0.0
  %1916 = vmatpush1.msra.mxu0 0.0
  %1917 = vmatprep.subr.mxu0 0.0
  %1918 = vmatpush1.msra.mxu0 0.0
  %1919 = vmatprep.subr.mxu0 0.0
  %1920 = vmatpush1.msra.mxu0 0.0
  %1921 = vmatprep.subr.mxu0 0.0
  %1922 = vmatpush1.msra.mxu0 0.0
  %1923 = vmatprep.subr.mxu0 0.0
  %1924 = vmatpush1.msra.mxu0 0.0
  %1925 = vmatprep.subr.mxu0 0.0
  %1926 = vmatpush1.msra.mxu0 0.0
  %1927 = vmatprep.subr.mxu0 0.0
  %1928 = vmatpush1.msra.mxu0 0.0
  %1929 = vmatprep.mubr.f32.mxu0 0.0
  %1930 = vmatmul.mubr.f32.gmra.mrb[0].mxu0 %v1863
  %v1931 = vpop.f32.mrb[0].mxu0
  %v1932 = vadd.f32 0.0, %v1931
  %v1933 = vpop.f32.mrb[0].mxu0
  %1934 = vdwg.mxu0
  %v1935 = vmul.f32 %v1859, 0.0070422534
  %v1936 = vmul.f32 %v1932, 0.0070422534
  %v1937 = vmul.f32 %v1935, %v1935
  %v1938 = vsub.f32 %v1936, %v1937
  %v1939 = vadd.f32 %v1938, 1e-05
  %v1940 = vrsqrt.pop %v1939
  %v1941 = vmul.f32 %v34, %v1940
  %v1942 = vmul.f32 %v1935, %v1941
  %v1943 = vsub.f32 %v35, %v1942
  %v1945 = vlaneseq
  %v1946 = vshrl.u32 %v1945, 7
  %v1947 = vsub.s32 0, %v1946
  %v1948 = vrot.slane %v1941, %v1947
  %v1950 = vmul.f32 %v1725, %v1948
  %v1951 = vmul.f32 %v1726, %v1948
  %v1952 = vmul.f32 %v1727, %v1948
  %v1953 = vmul.f32 %v1728, %v1948
  %v1954 = vmul.f32 %v1729, %v1948
  %v1955 = vmul.f32 %v1730, %v1948
  %v1956 = vmul.f32 %v1731, %v1948
  %v1957 = vmul.f32 %v1732, %v1948
  %v1958 = vmul.f32 %v1733, %v1948
  %v1960 = vlaneseq
  %v1961 = vshrl.u32 %v1960, 7
  %v1962 = vsub.s32 0, %v1961
  %v1963 = vrot.slane %v1943, %v1962
  %v1965 = vadd.f32 %v1950, %v1963
  %v1966 = vadd.f32 %v1951, %v1963
  %v1967 = vadd.f32 %v1952, %v1963
  %v1968 = vadd.f32 %v1953, %v1963
  %v1969 = vadd.f32 %v1954, %v1963
  %v1970 = vadd.f32 %v1955, %v1963
  %v1971 = vadd.f32 %v1956, %v1963
  %v1972 = vadd.f32 %v1957, %v1963
  %v1973 = vadd.f32 %v1958, %v1963
  %v1974 = vmax.f32 %v1965, 0.0
  %v1975 = vmax.f32 %v1966, 0.0
  %v1976 = vmax.f32 %v1967, 0.0
  %v1977 = vmax.f32 %v1968, 0.0
  %v1978 = vmax.f32 %v1969, 0.0
  %v1979 = vmax.f32 %v1970, 0.0
  %v1980 = vmax.f32 %v1971, 0.0
  %v1981 = vmax.f32 %v1972, 0.0
  %v1982 = vmax.f32 %v1973, 0.0
  %1983 = vst.msk [vmem:[#allocation2] sm:$0xff] %vm38, 0.0
  %1984 = vst.msk [vmem:[#allocation2 + $0x8] sm:$0xff] %vm38, 0.0
  %1985 = vst.msk [vmem:[#allocation2 + $0x10] sm:$0xff] %vm38, 0.0
  %1986 = vst.msk [vmem:[#allocation2 + $0x18] sm:$0xff] %vm38, 0.0
  %1987 = vst.msk [vmem:[#allocation2 + $0x20] sm:$0xff] %vm38, 0.0
  %1988 = vst.msk [vmem:[#allocation2 + $0x28] sm:$0xff] %vm38, 0.0
  %1989 = vst.msk [vmem:[#allocation2 + $0x30] sm:$0xff] %vm38, 0.0
  %1990 = vst.msk [vmem:[#allocation2 + $0x38] sm:$0xff] %vm38, 0.0
  %1991 = vst.msk [vmem:[#allocation2 + $0x40] sm:$0xff] %vm38, 0.0
  %1992 = vst.msk [vmem:[#allocation2 + $0x48] sm:$0xff] %vm38, 0.0
  %1993 = vst.msk [vmem:[#allocation2 + $0x50] sm:$0xff] %vm38, 0.0
  %1994 = vst.msk [vmem:[#allocation2 + $0x58] sm:$0xff] %vm38, 0.0
  %1995 = vst.msk [vmem:[#allocation2 + $0x60] sm:$0xff] %vm38, 0.0
  %1996 = vst.msk [vmem:[#allocation2 + $0x68] sm:$0xff] %vm38, 0.0
  %1997 = vst.msk [vmem:[#allocation2 + $0x70] sm:$0xff] %vm38, 0.0
  %1998 = vst.msk [vmem:[#allocation2 + $0x78] sm:$0xff] %vm38, 0.0
  %1999 = vst.msk [vmem:[#allocation2 + $0x80] sm:$0xff] %vm38, 0.0
  %2000 = vst.msk [vmem:[#allocation2 + $0x88] sm:$0x7f] %vm1390, 0.0
  %v2001 = vld [vmem:[%s1] sm:$0xff]
  %v2003 = vsel %vm38, %v1974, 0
  %v2006 = vsel %vm38, %v1975, 0
  %v2009 = vsel %vm38, %v1976, 0
  %v2012 = vsel %vm38, %v1977, 0
  %v2015 = vsel %vm38, %v1978, 0
  %v2018 = vsel %vm38, %v1979, 0
  %v2021 = vsel %vm38, %v1980, 0
  %v2024 = vsel %vm38, %v1981, 0
  %v2027 = vsel %vm38, %v1982, 0
  %2029 = vmatprep.subr.mxu0 0.0
  %2030 = vmatpush1.msra.mxu0 %v2001
  %2031 = vmatprep.subr.mxu0 0.0
  %2032 = vmatpush1.msra.mxu0 0.0
  %2033 = vmatprep.subr.mxu0 0.0
  %2034 = vmatpush1.msra.mxu0 0.0
  %2035 = vmatprep.subr.mxu0 0.0
  %2036 = vmatpush1.msra.mxu0 0.0
  %2037 = vmatprep.subr.mxu0 0.0
  %2038 = vmatpush1.msra.mxu0 0.0
  %2039 = vmatprep.subr.mxu0 0.0
  %2040 = vmatpush1.msra.mxu0 0.0
  %2041 = vmatprep.subr.mxu0 0.0
  %2042 = vmatpush1.msra.mxu0 0.0
  %2043 = vmatprep.subr.mxu0 0.0
  %2044 = vmatpush1.msra.mxu0 0.0
  %2045 = vmatprep.subr.mxu0 0.0
  %2046 = vmatpush1.msra.mxu0 0.0
  %2047 = vmatprep.subr.mxu0 0.0
  %2048 = vmatpush1.msra.mxu0 0.0
  %2049 = vmatprep.subr.mxu0 0.0
  %2050 = vmatpush1.msra.mxu0 0.0
  %2051 = vmatprep.subr.mxu0 0.0
  %2052 = vmatpush1.msra.mxu0 0.0
  %2053 = vmatprep.subr.mxu0 0.0
  %2054 = vmatpush1.msra.mxu0 0.0
  %2055 = vmatprep.subr.mxu0 0.0
  %2056 = vmatpush1.msra.mxu0 0.0
  %2057 = vmatprep.subr.mxu0 0.0
  %2058 = vmatpush1.msra.mxu0 0.0
  %2059 = vmatprep.subr.mxu0 0.0
  %2060 = vmatpush1.msra.mxu0 0.0
  %2061 = vmatprep.subr.mxu0 0.0
  %2062 = vmatpush1.msra.mxu0 0.0
  %2063 = vmatprep.subr.mxu0 0.0
  %2064 = vmatpush1.msra.mxu0 0.0
  %2065 = vmatprep.subr.mxu0 0.0
  %2066 = vmatpush1.msra.mxu0 0.0
  %2067 = vmatprep.subr.mxu0 0.0
  %2068 = vmatpush1.msra.mxu0 0.0
  %2069 = vmatprep.subr.mxu0 0.0
  %2070 = vmatpush1.msra.mxu0 0.0
  %2071 = vmatprep.subr.mxu0 0.0
  %2072 = vmatpush1.msra.mxu0 0.0
  %2073 = vmatprep.subr.mxu0 0.0
  %2074 = vmatpush1.msra.mxu0 0.0
  %2075 = vmatprep.subr.mxu0 0.0
  %2076 = vmatpush1.msra.mxu0 0.0
  %2077 = vmatprep.subr.mxu0 0.0
  %2078 = vmatpush1.msra.mxu0 0.0
  %2079 = vmatprep.subr.mxu0 0.0
  %2080 = vmatpush1.msra.mxu0 0.0
  %2081 = vmatprep.subr.mxu0 0.0
  %2082 = vmatpush1.msra.mxu0 0.0
  %2083 = vmatprep.subr.mxu0 0.0
  %2084 = vmatpush1.msra.mxu0 0.0
  %2085 = vmatprep.subr.mxu0 0.0
  %2086 = vmatpush1.msra.mxu0 0.0
  %2087 = vmatprep.subr.mxu0 0.0
  %2088 = vmatpush1.msra.mxu0 0.0
  %2089 = vmatprep.subr.mxu0 0.0
  %2090 = vmatpush1.msra.mxu0 0.0
  %2091 = vmatprep.subr.mxu0 0.0
  %2092 = vmatpush1.msra.mxu0 0.0
  %2093 = vmatprep.mubr.f32.mxu0 0.0
  %2094 = vmatmul.mubr.f32.gmra.mrb[0].mxu0 %v2003
  %v2095 = vpop.f32.mrb[0].mxu0
  %v2096 = vadd.f32 0.0, %v2095
  %v2097 = vpop.f32.mrb[0].mxu0
  %2098 = vmatprep.mubr.f32.mxu0 0.0
  %2099 = vmatmul.mubr.f32.gmra.mrb[0].mxu0 %v2006
  %v2100 = vpop.f32.mrb[0].mxu0
  %v2101 = vadd.f32 0.0, %v2100
  %v2102 = vpop.f32.mrb[0].mxu0
  %2103 = vmatprep.mubr.f32.mxu0 0.0
  %2104 = vmatmul.mubr.f32.gmra.mrb[0].mxu0 %v2009
  %v2105 = vpop.f32.mrb[0].mxu0
  %v2106 = vadd.f32 0.0, %v2105
  %v2107 = vpop.f32.mrb[0].mxu0
  %2108 = vmatprep.mubr.f32.mxu0 0.0
  %2109 = vmatmul.mubr.f32.gmra.mrb[0].mxu0 %v2012
  %v2110 = vpop.f32.mrb[0].mxu0
  %v2111 = vadd.f32 0.0, %v2110
  %v2112 = vpop.f32.mrb[0].mxu0
  %2113 = vmatprep.mubr.f32.mxu0 0.0
  %2114 = vmatmul.mubr.f32.gmra.mrb[0].mxu0 %v2015
  %v2115 = vpop.f32.mrb[0].mxu0
  %v2116 = vadd.f32 0.0, %v2115
  %v2117 = vpop.f32.mrb[0].mxu0
  %2118 = vmatprep.mubr.f32.mxu0 0.0
  %2119 = vmatmul.mubr.f32.gmra.mrb[0].mxu0 %v2018
  %v2120 = vpop.f32.mrb[0].mxu0
  %v2121 = vadd.f32 0.0, %v2120
  %v2122 = vpop.f32.mrb[0].mxu0
  %2123 = vmatprep.mubr.f32.mxu0 0.0
  %2124 = vmatmul.mubr.f32.gmra.mrb[0].mxu0 %v2021
  %v2125 = vpop.f32.mrb[0].mxu0
  %v2126 = vadd.f32 0.0, %v2125
  %v2127 = vpop.f32.mrb[0].mxu0
  %2128 = vmatprep.mubr.f32.mxu0 0.0
  %2129 = vmatmul.mubr.f32.gmra.mrb[0].mxu0 %v2024
  %v2130 = vpop.f32.mrb[0].mxu0
  %v2131 = vadd.f32 0.0, %v2130
  %v2132 = vpop.f32.mrb[0].mxu0
  %2133 = vmatprep.mubr.f32.mxu0 0.0
  %2134 = vmatmul.mubr.f32.gmra.mrb[0].mxu0 %v2027
  %v2135 = vpop.f32.mrb[0].mxu0
  %v2136 = vadd.f32 0.0, %v2135
  %v2137 = vpop.f32.mrb[0].mxu0
  %2138 = vdwg.mxu0
  %v2139 = vld [vmem:[#allocation2] ss:$2 sm:$0xff]
  %v2140 = vld [vmem:[%s582] ss:$2 sm:$0xff]
  %v2141 = vld [vmem:[%s584] ss:$2 sm:$0xff]
  %v2142 = vld [vmem:[%s1486] ss:$2 sm:$0xff]
  %v2143 = vld [vmem:[%s1488] ss:$2 sm:$0xff]
  %s2144 = scalar_lea.vmem [#allocation2], 80
  %v2145 = vld [vmem:[%s2144] ss:$2 sm:$0xff]
  %s2146 = scalar_lea.vmem [#allocation2], 96
  %v2147 = vld [vmem:[%s2146] ss:$2 sm:$0xff]
  %s2148 = scalar_lea.vmem [#allocation2], 112
  %v2149 = vld [vmem:[%s2148] ss:$2 sm:$0xff]
  %s2150 = scalar_lea.vmem [#allocation2], 128
  %v2151 = vld [vmem:[%s2150] ss:$2 sm:$0x7f]
  %v2152 = vadd.f32 %v2139, %v2096
  %v2153 = vadd.f32 %v2140, %v2101
  %v2154 = vadd.f32 %v2141, %v2106
  %v2155 = vadd.f32 %v2142, %v2111
  %v2156 = vadd.f32 %v2143, %v2116
  %v2157 = vadd.f32 %v2145, %v2121
  %v2158 = vadd.f32 %v2147, %v2126
  %v2159 = vadd.f32 %v2149, %v2131
  %v2160 = vadd.f32 %v2151, %v2136
  %2161 = vst [vmem:[#allocation2] ss:$2 sm:$0xff] %v2152
  %2162 = vst [vmem:[%s582] ss:$2 sm:$0xff] %v2153
  %2163 = vst [vmem:[%s584] ss:$2 sm:$0xff] %v2154
  %2164 = vst [vmem:[%s1486] ss:$2 sm:$0xff] %v2155
  %2165 = vst [vmem:[%s1488] ss:$2 sm:$0xff] %v2156
  %2166 = vst [vmem:[%s2144] ss:$2 sm:$0xff] %v2157
  %2167 = vst [vmem:[%s2146] ss:$2 sm:$0xff] %v2158
  %2168 = vst [vmem:[%s2148] ss:$2 sm:$0xff] %v2159
  %2169 = vst [vmem:[%s2150] ss:$2 sm:$0x7f] %v2160
  %v2170 = vld [vmem:[%s120] sm:$0xff]
  %2171 = vmatprep.subr.mxu0 0.0
  %2172 = vmatpush1.msra.mxu0 %v2170
  %2173 = vmatprep.subr.mxu0 0.0
  %2174 = vmatpush1.msra.mxu0 0.0
  %2175 = vmatprep.subr.mxu0 0.0
  %2176 = vmatpush1.msra.mxu0 0.0
  %2177 = vmatprep.subr.mxu0 0.0
  %2178 = vmatpush1.msra.mxu0 0.0
  %2179 = vmatprep.subr.mxu0 0.0
  %2180 = vmatpush1.msra.mxu0 0.0
  %2181 = vmatprep.subr.mxu0 0.0
  %2182 = vmatpush1.msra.mxu0 0.0
  %2183 = vmatprep.subr.mxu0 0.0
  %2184 = vmatpush1.msra.mxu0 0.0
  %2185 = vmatprep.subr.mxu0 0.0
  %2186 = vmatpush1.msra.mxu0 0.0
  %2187 = vmatprep.subr.mxu0 0.0
  %2188 = vmatpush1.msra.mxu0 0.0
  %2189 = vmatprep.subr.mxu0 0.0
  %2190 = vmatpush1.msra.mxu0 0.0
  %2191 = vmatprep.subr.mxu0 0.0
  %2192 = vmatpush1.msra.mxu0 0.0
  %2193 = vmatprep.subr.mxu0 0.0
  %2194 = vmatpush1.msra.mxu0 0.0
  %2195 = vmatprep.subr.mxu0 0.0
  %2196 = vmatpush1.msra.mxu0 0.0
  %2197 = vmatprep.subr.mxu0 0.0
  %2198 = vmatpush1.msra.mxu0 0.0
  %2199 = vmatprep.subr.mxu0 0.0
  %2200 = vmatpush1.msra.mxu0 0.0
  %2201 = vmatprep.subr.mxu0 0.0
  %2202 = vmatpush1.msra.mxu0 0.0
  %2203 = vmatprep.subr.mxu0 0.0
  %2204 = vmatpush1.msra.mxu0 0.0
  %2205 = vmatprep.subr.mxu0 0.0
  %2206 = vmatpush1.msra.mxu0 0.0
  %2207 = vmatprep.subr.mxu0 0.0
  %2208 = vmatpush1.msra.mxu0 0.0
  %2209 = vmatprep.subr.mxu0 0.0
  %2210 = vmatpush1.msra.mxu0 0.0
  %2211 = vmatprep.subr.mxu0 0.0
  %2212 = vmatpush1.msra.mxu0 0.0
  %2213 = vmatprep.subr.mxu0 0.0
  %2214 = vmatpush1.msra.mxu0 0.0
  %2215 = vmatprep.subr.mxu0 0.0
  %2216 = vmatpush1.msra.mxu0 0.0
  %2217 = vmatprep.subr.mxu0 0.0
  %2218 = vmatpush1.msra.mxu0 0.0
  %2219 = vmatprep.subr.mxu0 0.0
  %2220 = vmatpush1.msra.mxu0 0.0
  %2221 = vmatprep.subr.mxu0 0.0
  %2222 = vmatpush1.msra.mxu0 0.0
  %2223 = vmatprep.subr.mxu0 0.0
  %2224 = vmatpush1.msra.mxu0 0.0
  %2225 = vmatprep.subr.mxu0 0.0
  %2226 = vmatpush1.msra.mxu0 0.0
  %2227 = vmatprep.subr.mxu0 0.0
  %2228 = vmatpush1.msra.mxu0 0.0
  %2229 = vmatprep.subr.mxu0 0.0
  %2230 = vmatpush1.msra.mxu0 0.0
  %2231 = vmatprep.subr.mxu0 0.0
  %2232 = vmatpush1.msra.mxu0 0.0
  %2233 = vmatprep.subr.mxu0 0.0
  %2234 = vmatpush1.msra.mxu0 0.0
  %2235 = vmatprep.mubr.f32.mxu0 0.0
  %2236 = vmatmul.mubr.f32.gmra.mrb[0].mxu0 %v2003
  %v2237 = vpop.f32.mrb[0].mxu0
  %v2238 = vadd.f32 0.0, %v2237
  %v2239 = vpop.f32.mrb[0].mxu0
  %2240 = vmatprep.mubr.f32.mxu0 0.0
  %2241 = vmatmul.mubr.f32.gmra.mrb[0].mxu0 %v2006
  %v2242 = vpop.f32.mrb[0].mxu0
  %v2243 = vadd.f32 0.0, %v2242
  %v2244 = vpop.f32.mrb[0].mxu0
  %2245 = vmatprep.mubr.f32.mxu0 0.0
  %2246 = vmatmul.mubr.f32.gmra.mrb[0].mxu0 %v2009
  %v2247 = vpop.f32.mrb[0].mxu0
  %v2248 = vadd.f32 0.0, %v2247
  %v2249 = vpop.f32.mrb[0].mxu0
  %2250 = vmatprep.mubr.f32.mxu0 0.0
  %2251 = vmatmul.mubr.f32.gmra.mrb[0].mxu0 %v2012
  %v2252 = vpop.f32.mrb[0].mxu0
  %v2253 = vadd.f32 0.0, %v2252
  %v2254 = vpop.f32.mrb[0].mxu0
  %2255 = vmatprep.mubr.f32.mxu0 0.0
  %2256 = vmatmul.mubr.f32.gmra.mrb[0].mxu0 %v2015
  %v2257 = vpop.f32.mrb[0].mxu0
  %v2258 = vadd.f32 0.0, %v2257
  %v2259 = vpop.f32.mrb[0].mxu0
  %2260 = vmatprep.mubr.f32.mxu0 0.0
  %2261 = vmatmul.mubr.f32.gmra.mrb[0].mxu0 %v2018
  %v2262 = vpop.f32.mrb[0].mxu0
  %v2263 = vadd.f32 0.0, %v2262
  %v2264 = vpop.f32.mrb[0].mxu0
  %2265 = vmatprep.mubr.f32.mxu0 0.0
  %2266 = vmatmul.mubr.f32.gmra.mrb[0].mxu0 %v2021
  %v2267 = vpop.f32.mrb[0].mxu0
  %v2268 = vadd.f32 0.0, %v2267
  %v2269 = vpop.f32.mrb[0].mxu0
  %2270 = vmatprep.mubr.f32.mxu0 0.0
  %2271 = vmatmul.mubr.f32.gmra.mrb[0].mxu0 %v2024
  %v2272 = vpop.f32.mrb[0].mxu0
  %v2273 = vadd.f32 0.0, %v2272
  %v2274 = vpop.f32.mrb[0].mxu0
  %2275 = vmatprep.mubr.f32.mxu0 0.0
  %2276 = vmatmul.mubr.f32.gmra.mrb[0].mxu0 %v2027
  %v2277 = vpop.f32.mrb[0].mxu0
  %v2278 = vadd.f32 0.0, %v2277
  %v2279 = vpop.f32.mrb[0].mxu0
  %2280 = vdwg.mxu0
  %v2281 = vld [vmem:[%s192] ss:$2 sm:$0xff]
  %v2282 = vld [vmem:[%s674] ss:$2 sm:$0xff]
  %v2283 = vld [vmem:[%s676] ss:$2 sm:$0xff]
  %v2284 = vld [vmem:[%s1594] ss:$2 sm:$0xff]
  %v2285 = vld [vmem:[%s1596] ss:$2 sm:$0xff]
  %s2286 = scalar_lea.vmem [#allocation2], 81
  %v2287 = vld [vmem:[%s2286] ss:$2 sm:$0xff]
  %s2288 = scalar_lea.vmem [#allocation2], 97
  %v2289 = vld [vmem:[%s2288] ss:$2 sm:$0xff]
  %s2290 = scalar_lea.vmem [#allocation2], 113
  %v2291 = vld [vmem:[%s2290] ss:$2 sm:$0xff]
  %s2292 = scalar_lea.vmem [#allocation2], 129
  %v2293 = vld [vmem:[%s2292] ss:$2 sm:$0x7f]
  %v2294 = vadd.f32 %v2281, %v2238
  %v2295 = vadd.f32 %v2282, %v2243
  %v2296 = vadd.f32 %v2283, %v2248
  %v2297 = vadd.f32 %v2284, %v2253
  %v2298 = vadd.f32 %v2285, %v2258
  %v2299 = vadd.f32 %v2287, %v2263
  %v2300 = vadd.f32 %v2289, %v2268
  %v2301 = vadd.f32 %v2291, %v2273
  %v2302 = vadd.f32 %v2293, %v2278
  %2303 = vst [vmem:[%s192] ss:$2 sm:$0xff] %v2294
  %2304 = vst [vmem:[%s674] ss:$2 sm:$0xff] %v2295
  %2305 = vst [vmem:[%s676] ss:$2 sm:$0xff] %v2296
  %2306 = vst [vmem:[%s1594] ss:$2 sm:$0xff] %v2297
  %2307 = vst [vmem:[%s1596] ss:$2 sm:$0xff] %v2298
  %2308 = vst [vmem:[%s2286] ss:$2 sm:$0xff] %v2299
  %2309 = vst [vmem:[%s2288] ss:$2 sm:$0xff] %v2300
  %2310 = vst [vmem:[%s2290] ss:$2 sm:$0xff] %v2301
  %2311 = vst [vmem:[%s2292] ss:$2 sm:$0x7f] %v2302
  %v2312 = vld [vmem:[%s196] sm:$0xff]
  %2313 = vmatprep.subr.mxu0 0.0
  %2314 = vmatpush1.msra.mxu0 %v2312
  %2315 = vmatprep.subr.mxu0 0.0
  %2316 = vmatpush1.msra.mxu0 0.0
  %2317 = vmatprep.subr.mxu0 0.0
  %2318 = vmatpush1.msra.mxu0 0.0
  %2319 = vmatprep.subr.mxu0 0.0
  %2320 = vmatpush1.msra.mxu0 0.0
  %2321 = vmatprep.subr.mxu0 0.0
  %2322 = vmatpush1.msra.mxu0 0.0
  %2323 = vmatprep.subr.mxu0 0.0
  %2324 = vmatpush1.msra.mxu0 0.0
  %2325 = vmatprep.subr.mxu0 0.0
  %2326 = vmatpush1.msra.mxu0 0.0
  %2327 = vmatprep.subr.mxu0 0.0
  %2328 = vmatpush1.msra.mxu0 0.0
  %2329 = vmatprep.subr.mxu0 0.0
  %2330 = vmatpush1.msra.mxu0 0.0
  %2331 = vmatprep.subr.mxu0 0.0
  %2332 = vmatpush1.msra.mxu0 0.0
  %2333 = vmatprep.subr.mxu0 0.0
  %2334 = vmatpush1.msra.mxu0 0.0
  %2335 = vmatprep.subr.mxu0 0.0
  %2336 = vmatpush1.msra.mxu0 0.0
  %2337 = vmatprep.subr.mxu0 0.0
  %2338 = vmatpush1.msra.mxu0 0.0
  %2339 = vmatprep.subr.mxu0 0.0
  %2340 = vmatpush1.msra.mxu0 0.0
  %2341 = vmatprep.subr.mxu0 0.0
  %2342 = vmatpush1.msra.mxu0 0.0
  %2343 = vmatprep.subr.mxu0 0.0
  %2344 = vmatpush1.msra.mxu0 0.0
  %2345 = vmatprep.subr.mxu0 0.0
  %2346 = vmatpush1.msra.mxu0 0.0
  %2347 = vmatprep.subr.mxu0 0.0
  %2348 = vmatpush1.msra.mxu0 0.0
  %2349 = vmatprep.subr.mxu0 0.0
  %2350 = vmatpush1.msra.mxu0 0.0
  %2351 = vmatprep.subr.mxu0 0.0
  %2352 = vmatpush1.msra.mxu0 0.0
  %2353 = vmatprep.subr.mxu0 0.0
  %2354 = vmatpush1.msra.mxu0 0.0
  %2355 = vmatprep.subr.mxu0 0.0
  %2356 = vmatpush1.msra.mxu0 0.0
  %2357 = vmatprep.subr.mxu0 0.0
  %2358 = vmatpush1.msra.mxu0 0.0
  %2359 = vmatprep.subr.mxu0 0.0
  %2360 = vmatpush1.msra.mxu0 0.0
  %2361 = vmatprep.subr.mxu0 0.0
  %2362 = vmatpush1.msra.mxu0 0.0
  %2363 = vmatprep.subr.mxu0 0.0
  %2364 = vmatpush1.msra.mxu0 0.0
  %2365 = vmatprep.subr.mxu0 0.0
  %2366 = vmatpush1.msra.mxu0 0.0
  %2367 = vmatprep.subr.mxu0 0.0
  %2368 = vmatpush1.msra.mxu0 0.0
  %2369 = vmatprep.subr.mxu0 0.0
  %2370 = vmatpush1.msra.mxu0 0.0
  %2371 = vmatprep.subr.mxu0 0.0
  %2372 = vmatpush1.msra.mxu0 0.0
  %2373 = vmatprep.subr.mxu0 0.0
  %2374 = vmatpush1.msra.mxu0 0.0
  %2375 = vmatprep.subr.mxu0 0.0
  %2376 = vmatpush1.msra.mxu0 0.0
  %2377 = vmatprep.mubr.f32.mxu0 0.0
  %2378 = vmatmul.mubr.f32.gmra.mrb[0].mxu0 %v2003
  %v2379 = vpop.f32.mrb[0].mxu0
  %v2380 = vadd.f32 0.0, %v2379
  %v2381 = vpop.f32.mrb[0].mxu0
  %2382 = vmatprep.mubr.f32.mxu0 0.0
  %2383 = vmatmul.mubr.f32.gmra.mrb[0].mxu0 %v2006
  %v2384 = vpop.f32.mrb[0].mxu0
  %v2385 = vadd.f32 0.0, %v2384
  %v2386 = vpop.f32.mrb[0].mxu0
  %2387 = vmatprep.mubr.f32.mxu0 0.0
  %2388 = vmatmul.mubr.f32.gmra.mrb[0].mxu0 %v2009
  %v2389 = vpop.f32.mrb[0].mxu0
  %v2390 = vadd.f32 0.0, %v2389
  %v2391 = vpop.f32.mrb[0].mxu0
  %2392 = vmatprep.mubr.f32.mxu0 0.0
  %2393 = vmatmul.mubr.f32.gmra.mrb[0].mxu0 %v2012
  %v2394 = vpop.f32.mrb[0].mxu0
  %v2395 = vadd.f32 0.0, %v2394
  %v2396 = vpop.f32.mrb[0].mxu0
  %2397 = vmatprep.mubr.f32.mxu0 0.0
  %2398 = vmatmul.mubr.f32.gmra.mrb[0].mxu0 %v2015
  %v2399 = vpop.f32.mrb[0].mxu0
  %v2400 = vadd.f32 0.0, %v2399
  %v2401 = vpop.f32.mrb[0].mxu0
  %2402 = vmatprep.mubr.f32.mxu0 0.0
  %2403 = vmatmul.mubr.f32.gmra.mrb[0].mxu0 %v2018
  %v2404 = vpop.f32.mrb[0].mxu0
  %v2405 = vadd.f32 0.0, %v2404
  %v2406 = vpop.f32.mrb[0].mxu0
  %2407 = vmatprep.mubr.f32.mxu0 0.0
  %2408 = vmatmul.mubr.f32.gmra.mrb[0].mxu0 %v2021
  %v2409 = vpop.f32.mrb[0].mxu0
  %v2410 = vadd.f32 0.0, %v2409
  %v2411 = vpop.f32.mrb[0].mxu0
  %2412 = vmatprep.mubr.f32.mxu0 0.0
  %2413 = vmatmul.mubr.f32.gmra.mrb[0].mxu0 %v2024
  %v2414 = vpop.f32.mrb[0].mxu0
  %v2415 = vadd.f32 0.0, %v2414
  %v2416 = vpop.f32.mrb[0].mxu0
  %2417 = vmatprep.mubr.f32.mxu0 0.0
  %2418 = vmatmul.mubr.f32.gmra.mrb[0].mxu0 %v2027
  %v2419 = vpop.f32.mrb[0].mxu0
  %v2420 = vadd.f32 0.0, %v2419
  %v2421 = vpop.f32.mrb[0].mxu0
  %2422 = vdwg.mxu0
  %v2423 = vld [vmem:[%s268] ss:$2 sm:$0xff]
  %v2424 = vld [vmem:[%s766] ss:$2 sm:$0xff]
  %v2425 = vld [vmem:[%s768] ss:$2 sm:$0xff]
  %v2426 = vld [vmem:[%s1702] ss:$2 sm:$0xff]
  %v2427 = vld [vmem:[%s1704] ss:$2 sm:$0xff]
  %s2428 = scalar_lea.vmem [#allocation2], 82
  %v2429 = vld [vmem:[%s2428] ss:$2 sm:$0xff]
  %s2430 = scalar_lea.vmem [#allocation2], 98
  %v2431 = vld [vmem:[%s2430] ss:$2 sm:$0xff]
  %s2432 = scalar_lea.vmem [#allocation2], 114
  %v2433 = vld [vmem:[%s2432] ss:$2 sm:$0xff]
  %s2434 = scalar_lea.vmem [#allocation2], 130
  %v2435 = vld [vmem:[%s2434] ss:$2 sm:$0x7f]
  %v2436 = vadd.f32 %v2423, %v2380
  %v2437 = vadd.f32 %v2424, %v2385
  %v2438 = vadd.f32 %v2425, %v2390
  %v2439 = vadd.f32 %v2426, %v2395
  %v2440 = vadd.f32 %v2427, %v2400
  %v2441 = vadd.f32 %v2429, %v2405
  %v2442 = vadd.f32 %v2431, %v2410
  %v2443 = vadd.f32 %v2433, %v2415
  %v2444 = vadd.f32 %v2435, %v2420
  %2445 = vst [vmem:[%s268] ss:$2 sm:$0xff] %v2436
  %2446 = vst [vmem:[%s766] ss:$2 sm:$0xff] %v2437
  %2447 = vst [vmem:[%s768] ss:$2 sm:$0xff] %v2438
  %2448 = vst [vmem:[%s1702] ss:$2 sm:$0xff] %v2439
  %2449 = vst [vmem:[%s1704] ss:$2 sm:$0xff] %v2440
  %2450 = vst [vmem:[%s2428] ss:$2 sm:$0xff] %v2441
  %2451 = vst [vmem:[%s2430] ss:$2 sm:$0xff] %v2442
  %2452 = vst [vmem:[%s2432] ss:$2 sm:$0xff] %v2443
  %2453 = vst [vmem:[%s2434] ss:$2 sm:$0x7f] %v2444
  %v2454 = vld [vmem:[#allocation2] sm:$0xff]
  %v2455 = vld [vmem:[#allocation2 + $0x8] sm:$0xff]
  %v2456 = vld [vmem:[#allocation2 + $0x10] sm:$0xff]
  %v2457 = vld [vmem:[#allocation2 + $0x18] sm:$0xff]
  %v2458 = vld [vmem:[#allocation2 + $0x20] sm:$0xff]
  %v2459 = vld [vmem:[#allocation2 + $0x28] sm:$0xff]
  %v2460 = vld [vmem:[#allocation2 + $0x30] sm:$0xff]
  %v2461 = vld [vmem:[#allocation2 + $0x38] sm:$0xff]
  %v2462 = vld [vmem:[#allocation2 + $0x40] sm:$0xff]
  %v2463 = vld [vmem:[#allocation2 + $0x48] sm:$0xff]
  %v2464 = vld [vmem:[#allocation2 + $0x50] sm:$0xff]
  %v2465 = vld [vmem:[#allocation2 + $0x58] sm:$0xff]
  %v2466 = vld [vmem:[#allocation2 + $0x60] sm:$0xff]
  %v2467 = vld [vmem:[#allocation2 + $0x68] sm:$0xff]
  %v2468 = vld [vmem:[#allocation2 + $0x70] sm:$0xff]
  %v2469 = vld [vmem:[#allocation2 + $0x78] sm:$0xff]
  %v2470 = vld [vmem:[#allocation2 + $0x80] sm:$0xff]
  %v2471 = vld [vmem:[#allocation2 + $0x88] sm:$0x7f]
  %v2472 = vadd.f32 %v2454, %v279
  %v2473 = vadd.f32 %v2455, %v279
  %v2474 = vadd.f32 %v2456, %v279
  %v2475 = vadd.f32 %v2457, %v279
  %v2476 = vadd.f32 %v2458, %v279
  %v2477 = vadd.f32 %v2459, %v279
  %v2478 = vadd.f32 %v2460, %v279
  %v2479 = vadd.f32 %v2461, %v279
  %v2480 = vadd.f32 %v2462, %v279
  %v2481 = vadd.f32 %v2463, %v279
  %v2482 = vadd.f32 %v2464, %v279
  %v2483 = vadd.f32 %v2465, %v279
  %v2484 = vadd.f32 %v2466, %v279
  %v2485 = vadd.f32 %v2467, %v279
  %v2486 = vadd.f32 %v2468, %v279
  %v2487 = vadd.f32 %v2469, %v279
  %v2488 = vadd.f32 %v2470, %v279
  %v2489 = vadd.f32 %v2471, %v279
  %v2490 = vsel %vm38, %v2472, 0.0
  %v2491 = vsel %vm38, %v2473, 0.0
  %v2492 = vadd.f32 %v2490, %v2491
  %v2493 = vsel %vm38, %v2474, 0.0
  %v2494 = vadd.f32 %v2492, %v2493
  %v2495 = vsel %vm38, %v2475, 0.0
  %v2496 = vadd.f32 %v2494, %v2495
  %v2497 = vsel %vm38, %v2476, 0.0
  %v2498 = vadd.f32 %v2496, %v2497
  %v2499 = vsel %vm38, %v2477, 0.0
  %v2500 = vadd.f32 %v2498, %v2499
  %v2501 = vsel %vm38, %v2478, 0.0
  %v2502 = vadd.f32 %v2500, %v2501
  %v2503 = vsel %vm38, %v2479, 0.0
  %v2504 = vadd.f32 %v2502, %v2503
  %v2505 = vsel %vm38, %v2480, 0.0
  %v2506 = vadd.f32 %v2504, %v2505
  %v2507 = vsel %vm38, %v2481, 0.0
  %v2508 = vadd.f32 %v2506, %v2507
  %v2509 = vsel %vm38, %v2482, 0.0
  %v2510 = vadd.f32 %v2508, %v2509
  %v2511 = vsel %vm38, %v2483, 0.0
  %v2512 = vadd.f32 %v2510, %v2511
  %v2513 = vsel %vm38, %v2484, 0.0
  %v2514 = vadd.f32 %v2512, %v2513
  %v2515 = vsel %vm38, %v2485, 0.0
  %v2516 = vadd.f32 %v2514, %v2515
  %v2517 = vsel %vm38, %v2486, 0.0
  %v2518 = vadd.f32 %v2516, %v2517
  %v2519 = vsel %vm38, %v2487, 0.0
  %v2520 = vadd.f32 %v2518, %v2519
  %v2521 = vsel %vm38, %v2488, 0.0
  %v2522 = vadd.f32 %v2520, %v2521
  %v2523 = vsel %vm1390, %v2489, 0.0
  %v2524 = vadd.f32 %v2522, %v2523
  %v2525 = vrot.slane %v2524, 4
  %v2526 = vadd.f32 %v2524, %v2525
  %v2527 = vrot.slane %v2526, 2
  %v2528 = vadd.f32 %v2526, %v2527
  %v2529 = vrot.slane %v2528, 1
  %v2530 = vadd.f32 %v2528, %v2529
  %v2531 = vmul.f32 %v2472, %v2472
  %v2532 = vmul.f32 %v2473, %v2473
  %v2533 = vmul.f32 %v2474, %v2474
  %v2534 = vmul.f32 %v2475, %v2475
  %v2535 = vmul.f32 %v2476, %v2476
  %v2536 = vmul.f32 %v2477, %v2477
  %v2537 = vmul.f32 %v2478, %v2478
  %v2538 = vmul.f32 %v2479, %v2479
  %v2539 = vmul.f32 %v2480, %v2480
  %v2540 = vmul.f32 %v2481, %v2481
  %v2541 = vmul.f32 %v2482, %v2482
  %v2542 = vmul.f32 %v2483, %v2483
  %v2543 = vmul.f32 %v2484, %v2484
  %v2544 = vmul.f32 %v2485, %v2485
  %v2545 = vmul.f32 %v2486, %v2486
  %v2546 = vmul.f32 %v2487, %v2487
  %v2547 = vmul.f32 %v2488, %v2488
  %v2548 = vmul.f32 %v2489, %v2489
  %v2549 = vsel %vm38, %v2531, 0.0
  %v2550 = vsel %vm38, %v2532, 0.0
  %v2551 = vadd.f32 %v2549, %v2550
  %v2552 = vsel %vm38, %v2533, 0.0
  %v2553 = vadd.f32 %v2551, %v2552
  %v2554 = vsel %vm38, %v2534, 0.0
  %v2555 = vadd.f32 %v2553, %v2554
  %v2556 = vsel %vm38, %v2535, 0.0
  %v2557 = vadd.f32 %v2555, %v2556
  %v2558 = vsel %vm38, %v2536, 0.0
  %v2559 = vadd.f32 %v2557, %v2558
  %v2560 = vsel %vm38, %v2537, 0.0
  %v2561 = vadd.f32 %v2559, %v2560
  %v2562 = vsel %vm38, %v2538, 0.0
  %v2563 = vadd.f32 %v2561, %v2562
  %v2564 = vsel %vm38, %v2539, 0.0
  %v2565 = vadd.f32 %v2563, %v2564
  %v2566 = vsel %vm38, %v2540, 0.0
  %v2567 = vadd.f32 %v2565, %v2566
  %v2568 = vsel %vm38, %v2541, 0.0
  %v2569 = vadd.f32 %v2567, %v2568
  %v2570 = vsel %vm38, %v2542, 0.0
  %v2571 = vadd.f32 %v2569, %v2570
  %v2572 = vsel %vm38, %v2543, 0.0
  %v2573 = vadd.f32 %v2571, %v2572
  %v2574 = vsel %vm38, %v2544, 0.0
  %v2575 = vadd.f32 %v2573, %v2574
  %v2576 = vsel %vm38, %v2545, 0.0
  %v2577 = vadd.f32 %v2575, %v2576
  %v2578 = vsel %vm38, %v2546, 0.0
  %v2579 = vadd.f32 %v2577, %v2578
  %v2580 = vsel %vm38, %v2547, 0.0
  %v2581 = vadd.f32 %v2579, %v2580
  %v2582 = vsel %vm1390, %v2548, 0.0
  %v2583 = vadd.f32 %v2581, %v2582
  %v2584 = vrot.slane %v2583, 4
  %v2585 = vadd.f32 %v2583, %v2584
  %v2586 = vrot.slane %v2585, 2
  %v2587 = vadd.f32 %v2585, %v2586
  %v2588 = vrot.slane %v2587, 1
  %v2589 = vadd.f32 %v2587, %v2588
  %v2591 = vsel %vm38, %v2530, 0
  %2593 = vmatprep.subr.mxu0 0.0
  %2594 = vmatpush1.msra.mxu0 %v32
  %2595 = vmatprep.subr.mxu0 0.0
  %2596 = vmatpush1.msra.mxu0 0.0
  %2597 = vmatprep.subr.mxu0 0.0
  %2598 = vmatpush1.msra.mxu0 0.0
  %2599 = vmatprep.subr.mxu0 0.0
  %2600 = vmatpush1.msra.mxu0 0.0
  %2601 = vmatprep.subr.mxu0 0.0
  %2602 = vmatpush1.msra.mxu0 0.0
  %2603 = vmatprep.subr.mxu0 0.0
  %2604 = vmatpush1.msra.mxu0 0.0
  %2605 = vmatprep.subr.mxu0 0.0
  %2606 = vmatpush1.msra.mxu0 0.0
  %2607 = vmatprep.subr.mxu0 0.0
  %2608 = vmatpush1.msra.mxu0 0.0
  %2609 = vmatprep.subr.mxu0 0.0
  %2610 = vmatpush1.msra.mxu0 0.0
  %2611 = vmatprep.subr.mxu0 0.0
  %2612 = vmatpush1.msra.mxu0 0.0
  %2613 = vmatprep.subr.mxu0 0.0
  %2614 = vmatpush1.msra.mxu0 0.0
  %2615 = vmatprep.subr.mxu0 0.0
  %2616 = vmatpush1.msra.mxu0 0.0
  %2617 = vmatprep.subr.mxu0 0.0
  %2618 = vmatpush1.msra.mxu0 0.0
  %2619 = vmatprep.subr.mxu0 0.0
  %2620 = vmatpush1.msra.mxu0 0.0
  %2621 = vmatprep.subr.mxu0 0.0
  %2622 = vmatpush1.msra.mxu0 0.0
  %2623 = vmatprep.subr.mxu0 0.0
  %2624 = vmatpush1.msra.mxu0 0.0
  %2625 = vmatprep.subr.mxu0 0.0
  %2626 = vmatpush1.msra.mxu0 0.0
  %2627 = vmatprep.subr.mxu0 0.0
  %2628 = vmatpush1.msra.mxu0 0.0
  %2629 = vmatprep.subr.mxu0 0.0
  %2630 = vmatpush1.msra.mxu0 0.0
  %2631 = vmatprep.subr.mxu0 0.0
  %2632 = vmatpush1.msra.mxu0 0.0
  %2633 = vmatprep.subr.mxu0 0.0
  %2634 = vmatpush1.msra.mxu0 0.0
  %2635 = vmatprep.subr.mxu0 0.0
  %2636 = vmatpush1.msra.mxu0 0.0
  %2637 = vmatprep.subr.mxu0 0.0
  %2638 = vmatpush1.msra.mxu0 0.0
  %2639 = vmatprep.subr.mxu0 0.0
  %2640 = vmatpush1.msra.mxu0 0.0
  %2641 = vmatprep.subr.mxu0 0.0
  %2642 = vmatpush1.msra.mxu0 0.0
  %2643 = vmatprep.subr.mxu0 0.0
  %2644 = vmatpush1.msra.mxu0 0.0
  %2645 = vmatprep.subr.mxu0 0.0
  %2646 = vmatpush1.msra.mxu0 0.0
  %2647 = vmatprep.subr.mxu0 0.0
  %2648 = vmatpush1.msra.mxu0 0.0
  %2649 = vmatprep.subr.mxu0 0.0
  %2650 = vmatpush1.msra.mxu0 0.0
  %2651 = vmatprep.subr.mxu0 0.0
  %2652 = vmatpush1.msra.mxu0 0.0
  %2653 = vmatprep.subr.mxu0 0.0
  %2654 = vmatpush1.msra.mxu0 0.0
  %2655 = vmatprep.subr.mxu0 0.0
  %2656 = vmatpush1.msra.mxu0 0.0
  %2657 = vmatprep.mubr.f32.mxu0 0.0
  %2658 = vmatmul.mubr.f32.gmra.mrb[0].mxu0 %v2591
  %v2659 = vpop.f32.mrb[0].mxu0
  %v2660 = vadd.f32 0.0, %v2659
  %v2661 = vpop.f32.mrb[0].mxu0
  %2662 = vdwg.mxu0
  %v2664 = vsel %vm38, %v2589, 0
  %2666 = vmatprep.subr.mxu0 0.0
  %2667 = vmatpush1.msra.mxu0 %v32
  %2668 = vmatprep.subr.mxu0 0.0
  %2669 = vmatpush1.msra.mxu0 0.0
  %2670 = vmatprep.subr.mxu0 0.0
  %2671 = vmatpush1.msra.mxu0 0.0
  %2672 = vmatprep.subr.mxu0 0.0
  %2673 = vmatpush1.msra.mxu0 0.0
  %2674 = vmatprep.subr.mxu0 0.0
  %2675 = vmatpush1.msra.mxu0 0.0
  %2676 = vmatprep.subr.mxu0 0.0
  %2677 = vmatpush1.msra.mxu0 0.0
  %2678 = vmatprep.subr.mxu0 0.0
  %2679 = vmatpush1.msra.mxu0 0.0
  %2680 = vmatprep.subr.mxu0 0.0
  %2681 = vmatpush1.msra.mxu0 0.0
  %2682 = vmatprep.subr.mxu0 0.0
  %2683 = vmatpush1.msra.mxu0 0.0
  %2684 = vmatprep.subr.mxu0 0.0
  %2685 = vmatpush1.msra.mxu0 0.0
  %2686 = vmatprep.subr.mxu0 0.0
  %2687 = vmatpush1.msra.mxu0 0.0
  %2688 = vmatprep.subr.mxu0 0.0
  %2689 = vmatpush1.msra.mxu0 0.0
  %2690 = vmatprep.subr.mxu0 0.0
  %2691 = vmatpush1.msra.mxu0 0.0
  %2692 = vmatprep.subr.mxu0 0.0
  %2693 = vmatpush1.msra.mxu0 0.0
  %2694 = vmatprep.subr.mxu0 0.0
  %2695 = vmatpush1.msra.mxu0 0.0
  %2696 = vmatprep.subr.mxu0 0.0
  %2697 = vmatpush1.msra.mxu0 0.0
  %2698 = vmatprep.subr.mxu0 0.0
  %2699 = vmatpush1.msra.mxu0 0.0
  %2700 = vmatprep.subr.mxu0 0.0
  %2701 = vmatpush1.msra.mxu0 0.0
  %2702 = vmatprep.subr.mxu0 0.0
  %2703 = vmatpush1.msra.mxu0 0.0
  %2704 = vmatprep.subr.mxu0 0.0
  %2705 = vmatpush1.msra.mxu0 0.0
  %2706 = vmatprep.subr.mxu0 0.0
  %2707 = vmatpush1.msra.mxu0 0.0
  %2708 = vmatprep.subr.mxu0 0.0
  %2709 = vmatpush1.msra.mxu0 0.0
  %2710 = vmatprep.subr.mxu0 0.0
  %2711 = vmatpush1.msra.mxu0 0.0
  %2712 = vmatprep.subr.mxu0 0.0
  %2713 = vmatpush1.msra.mxu0 0.0
  %2714 = vmatprep.subr.mxu0 0.0
  %2715 = vmatpush1.msra.mxu0 0.0
  %2716 = vmatprep.subr.mxu0 0.0
  %2717 = vmatpush1.msra.mxu0 0.0
  %2718 = vmatprep.subr.mxu0 0.0
  %2719 = vmatpush1.msra.mxu0 0.0
  %2720 = vmatprep.subr.mxu0 0.0
  %2721 = vmatpush1.msra.mxu0 0.0
  %2722 = vmatprep.subr.mxu0 0.0
  %2723 = vmatpush1.msra.mxu0 0.0
  %2724 = vmatprep.subr.mxu0 0.0
  %2725 = vmatpush1.msra.mxu0 0.0
  %2726 = vmatprep.subr.mxu0 0.0
  %2727 = vmatpush1.msra.mxu0 0.0
  %2728 = vmatprep.subr.mxu0 0.0
  %2729 = vmatpush1.msra.mxu0 0.0
  %2730 = vmatprep.mubr.f32.mxu0 0.0
  %2731 = vmatmul.mubr.f32.gmra.mrb[0].mxu0 %v2664
  %v2732 = vpop.f32.mrb[0].mxu0
  %v2733 = vadd.f32 0.0, %v2732
  %v2734 = vpop.f32.mrb[0].mxu0
  %2735 = vdwg.mxu0
  %v2736 = vmul.f32 %v2660, 0.0034965035
  %v2737 = vmul.f32 %v2733, 0.0034965035
  %v2738 = vmul.f32 %v2736, %v2736
  %v2739 = vsub.f32 %v2737, %v2738
  %v2740 = vadd.f32 %v2739, 1e-05
  %v2741 = vrsqrt.pop %v2740
  %v2742 = vmul.f32 %v34, %v2741
  %v2743 = vmul.f32 %v2736, %v2742
  %v2744 = vsub.f32 %v35, %v2743
  %v2746 = vlaneseq
  %v2747 = vshrl.u32 %v2746, 7
  %v2748 = vsub.s32 0, %v2747
  %v2749 = vrot.slane %v2742, %v2748
  %v2751 = vmul.f32 %v2472, %v2749
  %v2752 = vmul.f32 %v2473, %v2749
  %v2753 = vmul.f32 %v2474, %v2749
  %v2754 = vmul.f32 %v2475, %v2749
  %v2755 = vmul.f32 %v2476, %v2749
  %v2756 = vmul.f32 %v2477, %v2749
  %v2757 = vmul.f32 %v2478, %v2749
  %v2758 = vmul.f32 %v2479, %v2749
  %v2759 = vmul.f32 %v2480, %v2749
  %v2760 = vmul.f32 %v2481, %v2749
  %v2761 = vmul.f32 %v2482, %v2749
  %v2762 = vmul.f32 %v2483, %v2749
  %v2763 = vmul.f32 %v2484, %v2749
  %v2764 = vmul.f32 %v2485, %v2749
  %v2765 = vmul.f32 %v2486, %v2749
  %v2766 = vmul.f32 %v2487, %v2749
  %v2767 = vmul.f32 %v2488, %v2749
  %v2768 = vmul.f32 %v2489, %v2749
  %v2770 = vlaneseq
  %v2771 = vshrl.u32 %v2770, 7
  %v2772 = vsub.s32 0, %v2771
  %v2773 = vrot.slane %v2744, %v2772
  %v2775 = vadd.f32 %v2751, %v2773
  %v2776 = vadd.f32 %v2752, %v2773
  %v2777 = vadd.f32 %v2753, %v2773
  %v2778 = vadd.f32 %v2754, %v2773
  %v2779 = vadd.f32 %v2755, %v2773
  %v2780 = vadd.f32 %v2756, %v2773
  %v2781 = vadd.f32 %v2757, %v2773
  %v2782 = vadd.f32 %v2758, %v2773
  %v2783 = vadd.f32 %v2759, %v2773
  %v2784 = vadd.f32 %v2760, %v2773
  %v2785 = vadd.f32 %v2761, %v2773
  %v2786 = vadd.f32 %v2762, %v2773
  %v2787 = vadd.f32 %v2763, %v2773
  %v2788 = vadd.f32 %v2764, %v2773
  %v2789 = vadd.f32 %v2765, %v2773
  %v2790 = vadd.f32 %v2766, %v2773
  %v2791 = vadd.f32 %v2767, %v2773
  %v2792 = vadd.f32 %v2768, %v2773
  %v2793 = vmax.f32 %v2775, 0.0
  %v2794 = vmax.f32 %v2776, 0.0
  %v2795 = vmax.f32 %v2777, 0.0
  %v2796 = vmax.f32 %v2778, 0.0
  %v2797 = vmax.f32 %v2779, 0.0
  %v2798 = vmax.f32 %v2780, 0.0
  %v2799 = vmax.f32 %v2781, 0.0
  %v2800 = vmax.f32 %v2782, 0.0
  %v2801 = vmax.f32 %v2783, 0.0
  %v2802 = vmax.f32 %v2784, 0.0
  %v2803 = vmax.f32 %v2785, 0.0
  %v2804 = vmax.f32 %v2786, 0.0
  %v2805 = vmax.f32 %v2787, 0.0
  %v2806 = vmax.f32 %v2788, 0.0
  %v2807 = vmax.f32 %v2789, 0.0
  %v2808 = vmax.f32 %v2790, 0.0
  %v2809 = vmax.f32 %v2791, 0.0
  %v2810 = vmax.f32 %v2792, 0.0
  %2811 = vst.msk [vmem:[#allocation2] sm:$0xff] %vm38, %v2793
  %2812 = vst.msk [vmem:[#allocation2 + $0x8] sm:$0xff] %vm38, %v2794
  %2813 = vst.msk [vmem:[#allocation2 + $0x10] sm:$0xff] %vm38, %v2795
  %2814 = vst.msk [vmem:[#allocation2 + $0x18] sm:$0xff] %vm38, %v2796
  %2815 = vst.msk [vmem:[#allocation2 + $0x20] sm:$0xff] %vm38, %v2797
  %2816 = vst.msk [vmem:[#allocation2 + $0x28] sm:$0xff] %vm38, %v2798
  %2817 = vst.msk [vmem:[#allocation2 + $0x30] sm:$0xff] %vm38, %v2799
  %2818 = vst.msk [vmem:[#allocation2 + $0x38] sm:$0xff] %vm38, %v2800
  %2819 = vst.msk [vmem:[#allocation2 + $0x40] sm:$0xff] %vm38, %v2801
  %2820 = vst.msk [vmem:[#allocation2 + $0x48] sm:$0xff] %vm38, %v2802
  %2821 = vst.msk [vmem:[#allocation2 + $0x50] sm:$0xff] %vm38, %v2803
  %2822 = vst.msk [vmem:[#allocation2 + $0x58] sm:$0xff] %vm38, %v2804
  %2823 = vst.msk [vmem:[#allocation2 + $0x60] sm:$0xff] %vm38, %v2805
  %2824 = vst.msk [vmem:[#allocation2 + $0x68] sm:$0xff] %vm38, %v2806
  %2825 = vst.msk [vmem:[#allocation2 + $0x70] sm:$0xff] %vm38, %v2807
  %2826 = vst.msk [vmem:[#allocation2 + $0x78] sm:$0xff] %vm38, %v2808
  %2827 = vst.msk [vmem:[#allocation2 + $0x80] sm:$0xff] %vm38, %v2809
  %2828 = vst.msk [vmem:[#allocation2 + $0x88] sm:$0x7f] %vm1390, %v2810
  %v2829 = vld [vmem:[%s1008] sm:$0xff]
  %v2830 = vld [vmem:[#allocation2 + $0x1] sm:$0xff]
  %v2831 = vld [vmem:[#allocation2 + $0x9] sm:$0xff]
  %v2832 = vld [vmem:[#allocation2 + $0x11] sm:$0xff]
  %v2833 = vld [vmem:[#allocation2 + $0x19] sm:$0xff]
  %v2834 = vld [vmem:[#allocation2 + $0x21] sm:$0xff]
  %v2835 = vld [vmem:[#allocation2 + $0x29] sm:$0xff]
  %v2836 = vld [vmem:[#allocation2 + $0x31] sm:$0xff]
  %v2837 = vld [vmem:[#allocation2 + $0x39] sm:$0xff]
  %v2838 = vld [vmem:[#allocation2 + $0x41] sm:$0xff]
  %v2839 = vld [vmem:[#allocation2 + $0x49] sm:$0xff]
  %v2840 = vld [vmem:[#allocation2 + $0x51] sm:$0xff]
  %v2841 = vld [vmem:[#allocation2 + $0x59] sm:$0xff]
  %v2842 = vld [vmem:[#allocation2 + $0x61] sm:$0xff]
  %v2843 = vld [vmem:[#allocation2 + $0x69] sm:$0xff]
  %v2844 = vld [vmem:[#allocation2 + $0x71] sm:$0xff]
  %v2845 = vld [vmem:[#allocation2 + $0x79] sm:$0xff]
  %v2846 = vld [vmem:[#allocation2 + $0x81] sm:$0xff]
  %v2847 = vld [vmem:[#allocation2 + $0x89] sm:$0x3f]
  %v2848 = vld [vmem:[%s2] sm:$0xff]
  %v2850 = vsel %vm38, %v2830, 0
  %v2853 = vsel %vm38, %v2831, 0
  %v2856 = vsel %vm38, %v2832, 0
  %v2859 = vsel %vm38, %v2833, 0
  %v2862 = vsel %vm38, %v2834, 0
  %v2865 = vsel %vm38, %v2835, 0
  %v2868 = vsel %vm38, %v2836, 0
  %v2871 = vsel %vm38, %v2837, 0
  %v2874 = vsel %vm38, %v2838, 0
  %v2877 = vsel %vm38, %v2839, 0
  %v2880 = vsel %vm38, %v2840, 0
  %v2883 = vsel %vm38, %v2841, 0
  %v2886 = vsel %vm38, %v2842, 0
  %v2889 = vsel %vm38, %v2843, 0
  %v2892 = vsel %vm38, %v2844, 0
  %v2895 = vsel %vm38, %v2845, 0
  %v2898 = vsel %vm38, %v2846, 0
  %v2901 = vsel %vm38, %v2847, 0
  %2903 = vmatprep.subr.mxu0 0.0
  %2904 = vmatpush1.msra.mxu0 %v2848
  %2905 = vmatprep.subr.mxu0 0.0
  %2906 = vmatpush1.msra.mxu0 0.0
  %2907 = vmatprep.subr.mxu0 0.0
  %2908 = vmatpush1.msra.mxu0 0.0
  %2909 = vmatprep.subr.mxu0 0.0
  %2910 = vmatpush1.msra.mxu0 0.0
  %2911 = vmatprep.subr.mxu0 0.0
  %2912 = vmatpush1.msra.mxu0 0.0
  %2913 = vmatprep.subr.mxu0 0.0
  %2914 = vmatpush1.msra.mxu0 0.0
  %2915 = vmatprep.subr.mxu0 0.0
  %2916 = vmatpush1.msra.mxu0 0.0
  %2917 = vmatprep.subr.mxu0 0.0
  %2918 = vmatpush1.msra.mxu0 0.0
  %2919 = vmatprep.subr.mxu0 0.0
  %2920 = vmatpush1.msra.mxu0 0.0
  %2921 = vmatprep.subr.mxu0 0.0
  %2922 = vmatpush1.msra.mxu0 0.0
  %2923 = vmatprep.subr.mxu0 0.0
  %2924 = vmatpush1.msra.mxu0 0.0
  %2925 = vmatprep.subr.mxu0 0.0
  %2926 = vmatpush1.msra.mxu0 0.0
  %2927 = vmatprep.subr.mxu0 0.0
  %2928 = vmatpush1.msra.mxu0 0.0
  %2929 = vmatprep.subr.mxu0 0.0
  %2930 = vmatpush1.msra.mxu0 0.0
  %2931 = vmatprep.subr.mxu0 0.0
  %2932 = vmatpush1.msra.mxu0 0.0
  %2933 = vmatprep.subr.mxu0 0.0
  %2934 = vmatpush1.msra.mxu0 0.0
  %2935 = vmatprep.subr.mxu0 0.0
  %2936 = vmatpush1.msra.mxu0 0.0
  %2937 = vmatprep.subr.mxu0 0.0
  %2938 = vmatpush1.msra.mxu0 0.0
  %2939 = vmatprep.subr.mxu0 0.0
  %2940 = vmatpush1.msra.mxu0 0.0
  %2941 = vmatprep.subr.mxu0 0.0
  %2942 = vmatpush1.msra.mxu0 0.0
  %2943 = vmatprep.subr.mxu0 0.0
  %2944 = vmatpush1.msra.mxu0 0.0
  %2945 = vmatprep.subr.mxu0 0.0
  %2946 = vmatpush1.msra.mxu0 0.0
  %2947 = vmatprep.subr.mxu0 0.0
  %2948 = vmatpush1.msra.mxu0 0.0
  %2949 = vmatprep.subr.mxu0 0.0
  %2950 = vmatpush1.msra.mxu0 0.0
  %2951 = vmatprep.subr.mxu0 0.0
  %2952 = vmatpush1.msra.mxu0 0.0
  %2953 = vmatprep.subr.mxu0 0.0
  %2954 = vmatpush1.msra.mxu0 0.0
  %2955 = vmatprep.subr.mxu0 0.0
  %2956 = vmatpush1.msra.mxu0 0.0
  %2957 = vmatprep.subr.mxu0 0.0
  %2958 = vmatpush1.msra.mxu0 0.0
  %2959 = vmatprep.subr.mxu0 0.0
  %2960 = vmatpush1.msra.mxu0 0.0
  %2961 = vmatprep.subr.mxu0 0.0
  %2962 = vmatpush1.msra.mxu0 0.0
  %2963 = vmatprep.subr.mxu0 0.0
  %2964 = vmatpush1.msra.mxu0 0.0
  %2965 = vmatprep.subr.mxu0 0.0
  %2966 = vmatpush1.msra.mxu0 0.0
  %2967 = vmatprep.mubr.f32.mxu0 0.0
  %2968 = vmatmul.mubr.f32.gmra.mrb[0].mxu0 %v2850
  %v2969 = vpop.f32.mrb[0].mxu0
  %v2970 = vadd.f32 0.0, %v2969
  %v2971 = vpop.f32.mrb[0].mxu0
  %2972 = vmatprep.mubr.f32.mxu0 0.0
  %2973 = vmatmul.mubr.f32.gmra.mrb[0].mxu0 %v2853
  %v2974 = vpop.f32.mrb[0].mxu0
  %v2975 = vadd.f32 0.0, %v2974
  %v2976 = vpop.f32.mrb[0].mxu0
  %2977 = vmatprep.mubr.f32.mxu0 0.0
  %2978 = vmatmul.mubr.f32.gmra.mrb[0].mxu0 %v2856
  %v2979 = vpop.f32.mrb[0].mxu0
  %v2980 = vadd.f32 0.0, %v2979
  %v2981 = vpop.f32.mrb[0].mxu0
  %2982 = vmatprep.mubr.f32.mxu0 0.0
  %2983 = vmatmul.mubr.f32.gmra.mrb[0].mxu0 %v2859
  %v2984 = vpop.f32.mrb[0].mxu0
  %v2985 = vadd.f32 0.0, %v2984
  %v2986 = vpop.f32.mrb[0].mxu0
  %2987 = vmatprep.mubr.f32.mxu0 0.0
  %2988 = vmatmul.mubr.f32.gmra.mrb[0].mxu0 %v2862
  %v2989 = vpop.f32.mrb[0].mxu0
  %v2990 = vadd.f32 0.0, %v2989
  %v2991 = vpop.f32.mrb[0].mxu0
  %2992 = vmatprep.mubr.f32.mxu0 0.0
  %2993 = vmatmul.mubr.f32.gmra.mrb[0].mxu0 %v2865
  %v2994 = vpop.f32.mrb[0].mxu0
  %v2995 = vadd.f32 0.0, %v2994
  %v2996 = vpop.f32.mrb[0].mxu0
  %2997 = vmatprep.mubr.f32.mxu0 0.0
  %2998 = vmatmul.mubr.f32.gmra.mrb[0].mxu0 %v2868
  %v2999 = vpop.f32.mrb[0].mxu0
  %v3000 = vadd.f32 0.0, %v2999
  %v3001 = vpop.f32.mrb[0].mxu0
  %3002 = vmatprep.mubr.f32.mxu0 0.0
  %3003 = vmatmul.mubr.f32.gmra.mrb[0].mxu0 %v2871
  %v3004 = vpop.f32.mrb[0].mxu0
  %v3005 = vadd.f32 0.0, %v3004
  %v3006 = vpop.f32.mrb[0].mxu0
  %3007 = vmatprep.mubr.f32.mxu0 0.0
  %3008 = vmatmul.mubr.f32.gmra.mrb[0].mxu0 %v2874
  %v3009 = vpop.f32.mrb[0].mxu0
  %v3010 = vadd.f32 0.0, %v3009
  %v3011 = vpop.f32.mrb[0].mxu0
  %3012 = vmatprep.mubr.f32.mxu0 0.0
  %3013 = vmatmul.mubr.f32.gmra.mrb[0].mxu0 %v2877
  %v3014 = vpop.f32.mrb[0].mxu0
  %v3015 = vadd.f32 0.0, %v3014
  %v3016 = vpop.f32.mrb[0].mxu0
  %3017 = vmatprep.mubr.f32.mxu0 0.0
  %3018 = vmatmul.mubr.f32.gmra.mrb[0].mxu0 %v2880
  %v3019 = vpop.f32.mrb[0].mxu0
  %v3020 = vadd.f32 0.0, %v3019
  %v3021 = vpop.f32.mrb[0].mxu0
  %3022 = vmatprep.mubr.f32.mxu0 0.0
  %3023 = vmatmul.mubr.f32.gmra.mrb[0].mxu0 %v2883
  %v3024 = vpop.f32.mrb[0].mxu0
  %v3025 = vadd.f32 0.0, %v3024
  %v3026 = vpop.f32.mrb[0].mxu0
  %3027 = vmatprep.mubr.f32.mxu0 0.0
  %3028 = vmatmul.mubr.f32.gmra.mrb[0].mxu0 %v2886
  %v3029 = vpop.f32.mrb[0].mxu0
  %v3030 = vadd.f32 0.0, %v3029
  %v3031 = vpop.f32.mrb[0].mxu0
  %3032 = vmatprep.mubr.f32.mxu0 0.0
  %3033 = vmatmul.mubr.f32.gmra.mrb[0].mxu0 %v2889
  %v3034 = vpop.f32.mrb[0].mxu0
  %v3035 = vadd.f32 0.0, %v3034
  %v3036 = vpop.f32.mrb[0].mxu0
  %3037 = vmatprep.mubr.f32.mxu0 0.0
  %3038 = vmatmul.mubr.f32.gmra.mrb[0].mxu0 %v2892
  %v3039 = vpop.f32.mrb[0].mxu0
  %v3040 = vadd.f32 0.0, %v3039
  %v3041 = vpop.f32.mrb[0].mxu0
  %3042 = vmatprep.mubr.f32.mxu0 0.0
  %3043 = vmatmul.mubr.f32.gmra.mrb[0].mxu0 %v2895
  %v3044 = vpop.f32.mrb[0].mxu0
  %v3045 = vadd.f32 0.0, %v3044
  %v3046 = vpop.f32.mrb[0].mxu0
  %3047 = vmatprep.mubr.f32.mxu0 0.0
  %3048 = vmatmul.mubr.f32.gmra.mrb[0].mxu0 %v2898
  %v3049 = vpop.f32.mrb[0].mxu0
  %v3050 = vadd.f32 0.0, %v3049
  %v3051 = vpop.f32.mrb[0].mxu0
  %3052 = vmatprep.mubr.f32.mxu0 0.0
  %3053 = vmatmul.mubr.f32.gmra.mrb[0].mxu0 %v2901
  %v3054 = vpop.f32.mrb[0].mxu0
  %v3055 = vadd.f32 0.0, %v3054
  %v3056 = vpop.f32.mrb[0].mxu0
  %3057 = vdwg.mxu0
  %v3058 = vld [vmem:[#allocation2] sm:$0xff]
  %v3059 = vld [vmem:[#allocation2 + $0x8] sm:$0xff]
  %v3060 = vld [vmem:[#allocation2 + $0x10] sm:$0xff]
  %v3061 = vld [vmem:[#allocation2 + $0x18] sm:$0xff]
  %v3062 = vld [vmem:[#allocation2 + $0x20] sm:$0xff]
  %v3063 = vld [vmem:[#allocation2 + $0x28] sm:$0xff]
  %v3064 = vld [vmem:[#allocation2 + $0x30] sm:$0xff]
  %v3065 = vld [vmem:[#allocation2 + $0x38] sm:$0xff]
  %v3066 = vld [vmem:[#allocation2 + $0x40] sm:$0xff]
  %v3067 = vld [vmem:[#allocation2 + $0x48] sm:$0xff]
  %v3068 = vld [vmem:[#allocation2 + $0x50] sm:$0xff]
  %v3069 = vld [vmem:[#allocation2 + $0x58] sm:$0xff]
  %v3070 = vld [vmem:[#allocation2 + $0x60] sm:$0xff]
  %v3071 = vld [vmem:[#allocation2 + $0x68] sm:$0xff]
  %v3072 = vld [vmem:[#allocation2 + $0x70] sm:$0xff]
  %v3073 = vld [vmem:[#allocation2 + $0x78] sm:$0xff]
  %v3074 = vld [vmem:[#allocation2 + $0x80] sm:$0xff]
  %v3075 = vld [vmem:[#allocation2 + $0x88] sm:$0x3f]
  %v3076 = vld [vmem:[%s1126] sm:$0xff]
  %v3078 = vsel %vm38, %v3058, 0
  %v3081 = vsel %vm38, %v3059, 0
  %v3084 = vsel %vm38, %v3060, 0
  %v3087 = vsel %vm38, %v3061, 0
  %v3090 = vsel %vm38, %v3062, 0
  %v3093 = vsel %vm38, %v3063, 0
  %v3096 = vsel %vm38, %v3064, 0
  %v3099 = vsel %vm38, %v3065, 0
  %v3102 = vsel %vm38, %v3066, 0
  %v3105 = vsel %vm38, %v3067, 0
  %v3108 = vsel %vm38, %v3068, 0
  %v3111 = vsel %vm38, %v3069, 0
  %v3114 = vsel %vm38, %v3070, 0
  %v3117 = vsel %vm38, %v3071, 0
  %v3120 = vsel %vm38, %v3072, 0
  %v3123 = vsel %vm38, %v3073, 0
  %v3126 = vsel %vm38, %v3074, 0
  %v3129 = vsel %vm38, %v3075, 0
  %3131 = vmatprep.subr.mxu0 0.0
  %3132 = vmatpush1.msra.mxu0 %v3076
  %3133 = vmatprep.subr.mxu0 0.0
  %3134 = vmatpush1.msra.mxu0 0.0
  %3135 = vmatprep.subr.mxu0 0.0
  %3136 = vmatpush1.msra.mxu0 0.0
  %3137 = vmatprep.subr.mxu0 0.0
  %3138 = vmatpush1.msra.mxu0 0.0
  %3139 = vmatprep.subr.mxu0 0.0
  %3140 = vmatpush1.msra.mxu0 0.0
  %3141 = vmatprep.subr.mxu0 0.0
  %3142 = vmatpush1.msra.mxu0 0.0
  %3143 = vmatprep.subr.mxu0 0.0
  %3144 = vmatpush1.msra.mxu0 0.0
  %3145 = vmatprep.subr.mxu0 0.0
  %3146 = vmatpush1.msra.mxu0 0.0
  %3147 = vmatprep.subr.mxu0 0.0
  %3148 = vmatpush1.msra.mxu0 0.0
  %3149 = vmatprep.subr.mxu0 0.0
  %3150 = vmatpush1.msra.mxu0 0.0
  %3151 = vmatprep.subr.mxu0 0.0
  %3152 = vmatpush1.msra.mxu0 0.0
  %3153 = vmatprep.subr.mxu0 0.0
  %3154 = vmatpush1.msra.mxu0 0.0
  %3155 = vmatprep.subr.mxu0 0.0
  %3156 = vmatpush1.msra.mxu0 0.0
  %3157 = vmatprep.subr.mxu0 0.0
  %3158 = vmatpush1.msra.mxu0 0.0
  %3159 = vmatprep.subr.mxu0 0.0
  %3160 = vmatpush1.msra.mxu0 0.0
  %3161 = vmatprep.subr.mxu0 0.0
  %3162 = vmatpush1.msra.mxu0 0.0
  %3163 = vmatprep.subr.mxu0 0.0
  %3164 = vmatpush1.msra.mxu0 0.0
  %3165 = vmatprep.subr.mxu0 0.0
  %3166 = vmatpush1.msra.mxu0 0.0
  %3167 = vmatprep.subr.mxu0 0.0
  %3168 = vmatpush1.msra.mxu0 0.0
  %3169 = vmatprep.subr.mxu0 0.0
  %3170 = vmatpush1.msra.mxu0 0.0
  %3171 = vmatprep.subr.mxu0 0.0
  %3172 = vmatpush1.msra.mxu0 0.0
  %3173 = vmatprep.subr.mxu0 0.0
  %3174 = vmatpush1.msra.mxu0 0.0
  %3175 = vmatprep.subr.mxu0 0.0
  %3176 = vmatpush1.msra.mxu0 0.0
  %3177 = vmatprep.subr.mxu0 0.0
  %3178 = vmatpush1.msra.mxu0 0.0
  %3179 = vmatprep.subr.mxu0 0.0
  %3180 = vmatpush1.msra.mxu0 0.0
  %3181 = vmatprep.subr.mxu0 0.0
  %3182 = vmatpush1.msra.mxu0 0.0
  %3183 = vmatprep.subr.mxu0 0.0
  %3184 = vmatpush1.msra.mxu0 0.0
  %3185 = vmatprep.subr.mxu0 0.0
  %3186 = vmatpush1.msra.mxu0 0.0
  %3187 = vmatprep.subr.mxu0 0.0
  %3188 = vmatpush1.msra.mxu0 0.0
  %3189 = vmatprep.subr.mxu0 0.0
  %3190 = vmatpush1.msra.mxu0 0.0
  %3191 = vmatprep.subr.mxu0 0.0
  %3192 = vmatpush1.msra.mxu0 0.0
  %3193 = vmatprep.subr.mxu0 0.0
  %3194 = vmatpush1.msra.mxu0 0.0
  %3195 = vmatprep.mubr.f32.mxu0 0.0
  %3196 = vmatmul.mubr.f32.gmra.mrb[0].mxu0 %v3078
  %v3197 = vpop.f32.mrb[0].mxu0
  %v3198 = vadd.f32 0.0, %v3197
  %v3199 = vpop.f32.mrb[0].mxu0
  %3200 = vmatprep.mubr.f32.mxu0 0.0
  %3201 = vmatmul.mubr.f32.gmra.mrb[0].mxu0 %v3081
  %v3202 = vpop.f32.mrb[0].mxu0
  %v3203 = vadd.f32 0.0, %v3202
  %v3204 = vpop.f32.mrb[0].mxu0
  %3205 = vmatprep.mubr.f32.mxu0 0.0
  %3206 = vmatmul.mubr.f32.gmra.mrb[0].mxu0 %v3084
  %v3207 = vpop.f32.mrb[0].mxu0
  %v3208 = vadd.f32 0.0, %v3207
  %v3209 = vpop.f32.mrb[0].mxu0
  %3210 = vmatprep.mubr.f32.mxu0 0.0
  %3211 = vmatmul.mubr.f32.gmra.mrb[0].mxu0 %v3087
  %v3212 = vpop.f32.mrb[0].mxu0
  %v3213 = vadd.f32 0.0, %v3212
  %v3214 = vpop.f32.mrb[0].mxu0
  %3215 = vmatprep.mubr.f32.mxu0 0.0
  %3216 = vmatmul.mubr.f32.gmra.mrb[0].mxu0 %v3090
  %v3217 = vpop.f32.mrb[0].mxu0
  %v3218 = vadd.f32 0.0, %v3217
  %v3219 = vpop.f32.mrb[0].mxu0
  %3220 = vmatprep.mubr.f32.mxu0 0.0
  %3221 = vmatmul.mubr.f32.gmra.mrb[0].mxu0 %v3093
  %v3222 = vpop.f32.mrb[0].mxu0
  %v3223 = vadd.f32 0.0, %v3222
  %v3224 = vpop.f32.mrb[0].mxu0
  %3225 = vmatprep.mubr.f32.mxu0 0.0
  %3226 = vmatmul.mubr.f32.gmra.mrb[0].mxu0 %v3096
  %v3227 = vpop.f32.mrb[0].mxu0
  %v3228 = vadd.f32 0.0, %v3227
  %v3229 = vpop.f32.mrb[0].mxu0
  %3230 = vmatprep.mubr.f32.mxu0 0.0
  %3231 = vmatmul.mubr.f32.gmra.mrb[0].mxu0 %v3099
  %v3232 = vpop.f32.mrb[0].mxu0
  %v3233 = vadd.f32 0.0, %v3232
  %v3234 = vpop.f32.mrb[0].mxu0
  %3235 = vmatprep.mubr.f32.mxu0 0.0
  %3236 = vmatmul.mubr.f32.gmra.mrb[0].mxu0 %v3102
  %v3237 = vpop.f32.mrb[0].mxu0
  %v3238 = vadd.f32 0.0, %v3237
  %v3239 = vpop.f32.mrb[0].mxu0
  %3240 = vmatprep.mubr.f32.mxu0 0.0
  %3241 = vmatmul.mubr.f32.gmra.mrb[0].mxu0 %v3105
  %v3242 = vpop.f32.mrb[0].mxu0
  %v3243 = vadd.f32 0.0, %v3242
  %v3244 = vpop.f32.mrb[0].mxu0
  %3245 = vmatprep.mubr.f32.mxu0 0.0
  %3246 = vmatmul.mubr.f32.gmra.mrb[0].mxu0 %v3108
  %v3247 = vpop.f32.mrb[0].mxu0
  %v3248 = vadd.f32 0.0, %v3247
  %v3249 = vpop.f32.mrb[0].mxu0
  %3250 = vmatprep.mubr.f32.mxu0 0.0
  %3251 = vmatmul.mubr.f32.gmra.mrb[0].mxu0 %v3111
  %v3252 = vpop.f32.mrb[0].mxu0
  %v3253 = vadd.f32 0.0, %v3252
  %v3254 = vpop.f32.mrb[0].mxu0
  %3255 = vmatprep.mubr.f32.mxu0 0.0
  %3256 = vmatmul.mubr.f32.gmra.mrb[0].mxu0 %v3114
  %v3257 = vpop.f32.mrb[0].mxu0
  %v3258 = vadd.f32 0.0, %v3257
  %v3259 = vpop.f32.mrb[0].mxu0
  %3260 = vmatprep.mubr.f32.mxu0 0.0
  %3261 = vmatmul.mubr.f32.gmra.mrb[0].mxu0 %v3117
  %v3262 = vpop.f32.mrb[0].mxu0
  %v3263 = vadd.f32 0.0, %v3262
  %v3264 = vpop.f32.mrb[0].mxu0
  %3265 = vmatprep.mubr.f32.mxu0 0.0
  %3266 = vmatmul.mubr.f32.gmra.mrb[0].mxu0 %v3120
  %v3267 = vpop.f32.mrb[0].mxu0
  %v3268 = vadd.f32 0.0, %v3267
  %v3269 = vpop.f32.mrb[0].mxu0
  %3270 = vmatprep.mubr.f32.mxu0 0.0
  %3271 = vmatmul.mubr.f32.gmra.mrb[0].mxu0 %v3123
  %v3272 = vpop.f32.mrb[0].mxu0
  %v3273 = vadd.f32 0.0, %v3272
  %v3274 = vpop.f32.mrb[0].mxu0
  %3275 = vmatprep.mubr.f32.mxu0 0.0
  %3276 = vmatmul.mubr.f32.gmra.mrb[0].mxu0 %v3126
  %v3277 = vpop.f32.mrb[0].mxu0
  %v3278 = vadd.f32 0.0, %v3277
  %v3279 = vpop.f32.mrb[0].mxu0
  %3280 = vmatprep.mubr.f32.mxu0 0.0
  %3281 = vmatmul.mubr.f32.gmra.mrb[0].mxu0 %v3129
  %v3282 = vpop.f32.mrb[0].mxu0
  %v3283 = vadd.f32 0.0, %v3282
  %v3284 = vpop.f32.mrb[0].mxu0
  %3285 = vdwg.mxu0
  %v3287 = vsel %vm38, %v2793, 0
  %v3290 = vsel %vm38, %v2794, 0
  %v3293 = vsel %vm38, %v2795, 0
  %v3296 = vsel %vm38, %v2796, 0
  %v3299 = vsel %vm38, %v2797, 0
  %v3302 = vsel %vm38, %v2798, 0
  %v3305 = vsel %vm38, %v2799, 0
  %v3308 = vsel %vm38, %v2800, 0
  %v3311 = vsel %vm38, %v2801, 0
  %v3314 = vsel %vm38, %v2802, 0
  %v3317 = vsel %vm38, %v2803, 0
  %v3320 = vsel %vm38, %v2804, 0
  %v3323 = vsel %vm38, %v2805, 0
  %v3326 = vsel %vm38, %v2806, 0
  %v3329 = vsel %vm38, %v2807, 0
  %v3332 = vsel %vm38, %v2808, 0
  %v3335 = vsel %vm38, %v2809, 0
  %v3338 = vsel %vm38, %v2810, 0
  %3340 = vmatprep.subr.mxu0 0.0
  %3341 = vmatpush1.msra.mxu0 %v2829
  %3342 = vmatprep.subr.mxu0 0.0
  %3343 = vmatpush1.msra.mxu0 0.0
  %3344 = vmatprep.subr.mxu0 0.0
  %3345 = vmatpush1.msra.mxu0 0.0
  %3346 = vmatprep.subr.mxu0 0.0
  %3347 = vmatpush1.msra.mxu0 0.0
  %3348 = vmatprep.subr.mxu0 0.0
  %3349 = vmatpush1.msra.mxu0 0.0
  %3350 = vmatprep.subr.mxu0 0.0
  %3351 = vmatpush1.msra.mxu0 0.0
  %3352 = vmatprep.subr.mxu0 0.0
  %3353 = vmatpush1.msra.mxu0 0.0
  %3354 = vmatprep.subr.mxu0 0.0
  %3355 = vmatpush1.msra.mxu0 0.0
  %3356 = vmatprep.subr.mxu0 0.0
  %3357 = vmatpush1.msra.mxu0 0.0
  %3358 = vmatprep.subr.mxu0 0.0
  %3359 = vmatpush1.msra.mxu0 0.0
  %3360 = vmatprep.subr.mxu0 0.0
  %3361 = vmatpush1.msra.mxu0 0.0
  %3362 = vmatprep.subr.mxu0 0.0
  %3363 = vmatpush1.msra.mxu0 0.0
  %3364 = vmatprep.subr.mxu0 0.0
  %3365 = vmatpush1.msra.mxu0 0.0
  %3366 = vmatprep.subr.mxu0 0.0
  %3367 = vmatpush1.msra.mxu0 0.0
  %3368 = vmatprep.subr.mxu0 0.0
  %3369 = vmatpush1.msra.mxu0 0.0
  %3370 = vmatprep.subr.mxu0 0.0
  %3371 = vmatpush1.msra.mxu0 0.0
  %3372 = vmatprep.subr.mxu0 0.0
  %3373 = vmatpush1.msra.mxu0 0.0
  %3374 = vmatprep.subr.mxu0 0.0
  %3375 = vmatpush1.msra.mxu0 0.0
  %3376 = vmatprep.subr.mxu0 0.0
  %3377 = vmatpush1.msra.mxu0 0.0
  %3378 = vmatprep.subr.mxu0 0.0
  %3379 = vmatpush1.msra.mxu0 0.0
  %3380 = vmatprep.subr.mxu0 0.0
  %3381 = vmatpush1.msra.mxu0 0.0
  %3382 = vmatprep.subr.mxu0 0.0
  %3383 = vmatpush1.msra.mxu0 0.0
  %3384 = vmatprep.subr.mxu0 0.0
  %3385 = vmatpush1.msra.mxu0 0.0
  %3386 = vmatprep.subr.mxu0 0.0
  %3387 = vmatpush1.msra.mxu0 0.0
  %3388 = vmatprep.subr.mxu0 0.0
  %3389 = vmatpush1.msra.mxu0 0.0
  %3390 = vmatprep.subr.mxu0 0.0
  %3391 = vmatpush1.msra.mxu0 0.0
  %3392 = vmatprep.subr.mxu0 0.0
  %3393 = vmatpush1.msra.mxu0 0.0
  %3394 = vmatprep.subr.mxu0 0.0
  %3395 = vmatpush1.msra.mxu0 0.0
  %3396 = vmatprep.subr.mxu0 0.0
  %3397 = vmatpush1.msra.mxu0 0.0
  %3398 = vmatprep.subr.mxu0 0.0
  %3399 = vmatpush1.msra.mxu0 0.0
  %3400 = vmatprep.subr.mxu0 0.0
  %3401 = vmatpush1.msra.mxu0 0.0
  %3402 = vmatprep.subr.mxu0 0.0
  %3403 = vmatpush1.msra.mxu0 0.0
  %3404 = vmatprep.mubr.f32.mxu0 0.0
  %3405 = vmatmul.mubr.f32.gmra.mrb[0].mxu0 %v3287
  %v3406 = vpop.f32.mrb[0].mxu0
  %v3407 = vadd.f32 %v1237, %v3406
  %v3408 = vpop.f32.mrb[0].mxu0
  %3409 = vmatprep.mubr.f32.mxu0 0.0
  %3410 = vmatmul.mubr.f32.gmra.mrb[0].mxu0 %v3290
  %v3411 = vpop.f32.mrb[0].mxu0
  %v3412 = vadd.f32 %v1237, %v3411
  %v3413 = vpop.f32.mrb[0].mxu0
  %3414 = vmatprep.mubr.f32.mxu0 0.0
  %3415 = vmatmul.mubr.f32.gmra.mrb[0].mxu0 %v3293
  %v3416 = vpop.f32.mrb[0].mxu0
  %v3417 = vadd.f32 %v1237, %v3416
  %v3418 = vpop.f32.mrb[0].mxu0
  %3419 = vmatprep.mubr.f32.mxu0 0.0
  %3420 = vmatmul.mubr.f32.gmra.mrb[0].mxu0 %v3296
  %v3421 = vpop.f32.mrb[0].mxu0
  %v3422 = vadd.f32 %v1237, %v3421
  %v3423 = vpop.f32.mrb[0].mxu0
  %3424 = vmatprep.mubr.f32.mxu0 0.0
  %3425 = vmatmul.mubr.f32.gmra.mrb[0].mxu0 %v3299
  %v3426 = vpop.f32.mrb[0].mxu0
  %v3427 = vadd.f32 %v1237, %v3426
  %v3428 = vpop.f32.mrb[0].mxu0
  %3429 = vmatprep.mubr.f32.mxu0 0.0
  %3430 = vmatmul.mubr.f32.gmra.mrb[0].mxu0 %v3302
  %v3431 = vpop.f32.mrb[0].mxu0
  %v3432 = vadd.f32 %v1237, %v3431
  %v3433 = vpop.f32.mrb[0].mxu0
  %3434 = vmatprep.mubr.f32.mxu0 0.0
  %3435 = vmatmul.mubr.f32.gmra.mrb[0].mxu0 %v3305
  %v3436 = vpop.f32.mrb[0].mxu0
  %v3437 = vadd.f32 %v1237, %v3436
  %v3438 = vpop.f32.mrb[0].mxu0
  %3439 = vmatprep.mubr.f32.mxu0 0.0
  %3440 = vmatmul.mubr.f32.gmra.mrb[0].mxu0 %v3308
  %v3441 = vpop.f32.mrb[0].mxu0
  %v3442 = vadd.f32 %v1237, %v3441
  %v3443 = vpop.f32.mrb[0].mxu0
  %3444 = vmatprep.mubr.f32.mxu0 0.0
  %3445 = vmatmul.mubr.f32.gmra.mrb[0].mxu0 %v3311
  %v3446 = vpop.f32.mrb[0].mxu0
  %v3447 = vadd.f32 %v1237, %v3446
  %v3448 = vpop.f32.mrb[0].mxu0
  %3449 = vmatprep.mubr.f32.mxu0 0.0
  %3450 = vmatmul.mubr.f32.gmra.mrb[0].mxu0 %v3314
  %v3451 = vpop.f32.mrb[0].mxu0
  %v3452 = vadd.f32 %v1237, %v3451
  %v3453 = vpop.f32.mrb[0].mxu0
  %3454 = vmatprep.mubr.f32.mxu0 0.0
  %3455 = vmatmul.mubr.f32.gmra.mrb[0].mxu0 %v3317
  %v3456 = vpop.f32.mrb[0].mxu0
  %v3457 = vadd.f32 %v1237, %v3456
  %v3458 = vpop.f32.mrb[0].mxu0
  %3459 = vmatprep.mubr.f32.mxu0 0.0
  %3460 = vmatmul.mubr.f32.gmra.mrb[0].mxu0 %v3320
  %v3461 = vpop.f32.mrb[0].mxu0
  %v3462 = vadd.f32 %v1237, %v3461
  %v3463 = vpop.f32.mrb[0].mxu0
  %3464 = vmatprep.mubr.f32.mxu0 0.0
  %3465 = vmatmul.mubr.f32.gmra.mrb[0].mxu0 %v3323
  %v3466 = vpop.f32.mrb[0].mxu0
  %v3467 = vadd.f32 %v1237, %v3466
  %v3468 = vpop.f32.mrb[0].mxu0
  %3469 = vmatprep.mubr.f32.mxu0 0.0
  %3470 = vmatmul.mubr.f32.gmra.mrb[0].mxu0 %v3326
  %v3471 = vpop.f32.mrb[0].mxu0
  %v3472 = vadd.f32 %v1237, %v3471
  %v3473 = vpop.f32.mrb[0].mxu0
  %3474 = vmatprep.mubr.f32.mxu0 0.0
  %3475 = vmatmul.mubr.f32.gmra.mrb[0].mxu0 %v3329
  %v3476 = vpop.f32.mrb[0].mxu0
  %v3477 = vadd.f32 %v1237, %v3476
  %v3478 = vpop.f32.mrb[0].mxu0
  %3479 = vmatprep.mubr.f32.mxu0 0.0
  %3480 = vmatmul.mubr.f32.gmra.mrb[0].mxu0 %v3332
  %v3481 = vpop.f32.mrb[0].mxu0
  %v3482 = vadd.f32 %v1237, %v3481
  %v3483 = vpop.f32.mrb[0].mxu0
  %3484 = vmatprep.mubr.f32.mxu0 0.0
  %3485 = vmatmul.mubr.f32.gmra.mrb[0].mxu0 %v3335
  %v3486 = vpop.f32.mrb[0].mxu0
  %v3487 = vadd.f32 %v1237, %v3486
  %v3488 = vpop.f32.mrb[0].mxu0
  %3489 = vmatprep.mubr.f32.mxu0 0.0
  %3490 = vmatmul.mubr.f32.gmra.mrb[0].mxu0 %v3338
  %v3491 = vpop.f32.mrb[0].mxu0
  %v3492 = vadd.f32 %v1237, %v3491
  %v3493 = vpop.f32.mrb[0].mxu0
  %3494 = vdwg.mxu0
  %3495 = vst.msk [vmem:[%s9] sm:$0xff] %vm1344, %v3407
  %3496 = vst.msk [vmem:[%s9 + $0x8] sm:$0xff] %vm1344, %v3412
  %3497 = vst.msk [vmem:[%s9 + $0x10] sm:$0xff] %vm1344, %v3417
  %3498 = vst.msk [vmem:[%s9 + $0x18] sm:$0xff] %vm1344, %v3422
  %3499 = vst.msk [vmem:[%s9 + $0x20] sm:$0xff] %vm1344, %v3427
  %3500 = vst.msk [vmem:[%s9 + $0x28] sm:$0xff] %vm1344, %v3432
  %3501 = vst.msk [vmem:[%s9 + $0x30] sm:$0xff] %vm1344, %v3437
  %3502 = vst.msk [vmem:[%s9 + $0x38] sm:$0xff] %vm1344, %v3442
  %3503 = vst.msk [vmem:[%s9 + $0x40] sm:$0xff] %vm1344, %v3447
  %3504 = vst.msk [vmem:[%s9 + $0x48] sm:$0xff] %vm1344, %v3452
  %3505 = vst.msk [vmem:[%s9 + $0x50] sm:$0xff] %vm1344, %v3457
  %3506 = vst.msk [vmem:[%s9 + $0x58] sm:$0xff] %vm1344, %v3462
  %3507 = vst.msk [vmem:[%s9 + $0x60] sm:$0xff] %vm1344, %v3467
  %3508 = vst.msk [vmem:[%s9 + $0x68] sm:$0xff] %vm1344, %v3472
  %3509 = vst.msk [vmem:[%s9 + $0x70] sm:$0xff] %vm1344, %v3477
  %3510 = vst.msk [vmem:[%s9 + $0x78] sm:$0xff] %vm1344, %v3482
  %3511 = vst.msk [vmem:[%s9 + $0x80] sm:$0xff] %vm1344, %v3487
  %vm3512 = vcmask 30720
  %3513 = vst.msk [vmem:[%s9 + $0x88] sm:$0x7f] %vm3512, %v3492
  %v3514 = vld [vmem:[%s9] sm:$0xff]
  %v3515 = vld [vmem:[%s9 + $0x8] sm:$0xff]
  %v3516 = vld [vmem:[%s9 + $0x10] sm:$0xff]
  %v3517 = vld [vmem:[%s9 + $0x18] sm:$0xff]
  %v3518 = vld [vmem:[%s9 + $0x20] sm:$0xff]
  %v3519 = vld [vmem:[%s9 + $0x28] sm:$0xff]
  %v3520 = vld [vmem:[%s9 + $0x30] sm:$0xff]
  %v3521 = vld [vmem:[%s9 + $0x38] sm:$0xff]
  %v3522 = vld [vmem:[%s9 + $0x40] sm:$0xff]
  %v3523 = vld [vmem:[%s9 + $0x48] sm:$0xff]
  %v3524 = vld [vmem:[%s9 + $0x50] sm:$0xff]
  %v3525 = vld [vmem:[%s9 + $0x58] sm:$0xff]
  %v3526 = vld [vmem:[%s9 + $0x60] sm:$0xff]
  %v3527 = vld [vmem:[%s9 + $0x68] sm:$0xff]
  %v3528 = vld [vmem:[%s9 + $0x70] sm:$0xff]
  %v3529 = vld [vmem:[%s9 + $0x78] sm:$0xff]
  %v3530 = vld [vmem:[%s9 + $0x80] sm:$0xff]
  %v3531 = vld [vmem:[%s9 + $0x88] sm:$0x3f]
  %v3532 = vadd.f32 %v3514, %v2970
  %v3533 = vadd.f32 %v3515, %v2975
  %v3534 = vadd.f32 %v3516, %v2980
  %v3535 = vadd.f32 %v3517, %v2985
  %v3536 = vadd.f32 %v3518, %v2990
  %v3537 = vadd.f32 %v3519, %v2995
  %v3538 = vadd.f32 %v3520, %v3000
  %v3539 = vadd.f32 %v3521, %v3005
  %v3540 = vadd.f32 %v3522, %v3010
  %v3541 = vadd.f32 %v3523, %v3015
  %v3542 = vadd.f32 %v3524, %v3020
  %v3543 = vadd.f32 %v3525, %v3025
  %v3544 = vadd.f32 %v3526, %v3030
  %v3545 = vadd.f32 %v3527, %v3035
  %v3546 = vadd.f32 %v3528, %v3040
  %v3547 = vadd.f32 %v3529, %v3045
  %v3548 = vadd.f32 %v3530, %v3050
  %v3549 = vadd.f32 %v3531, %v3055
  %3550 = vst.msk [vmem:[%s9] sm:$0xff] %vm1344, %v3532
  %3551 = vst.msk [vmem:[%s9 + $0x8] sm:$0xff] %vm1344, %v3533
  %3552 = vst.msk [vmem:[%s9 + $0x10] sm:$0xff] %vm1344, %v3534
  %3553 = vst.msk [vmem:[%s9 + $0x18] sm:$0xff] %vm1344, %v3535
  %3554 = vst.msk [vmem:[%s9 + $0x20] sm:$0xff] %vm1344, %v3536
  %3555 = vst.msk [vmem:[%s9 + $0x28] sm:$0xff] %vm1344, %v3537
  %3556 = vst.msk [vmem:[%s9 + $0x30] sm:$0xff] %vm1344, %v3538
  %3557 = vst.msk [vmem:[%s9 + $0x38] sm:$0xff] %vm1344, %v3539
  %3558 = vst.msk [vmem:[%s9 + $0x40] sm:$0xff] %vm1344, %v3540
  %3559 = vst.msk [vmem:[%s9 + $0x48] sm:$0xff] %vm1344, %v3541
  %3560 = vst.msk [vmem:[%s9 + $0x50] sm:$0xff] %vm1344, %v3542
  %3561 = vst.msk [vmem:[%s9 + $0x58] sm:$0xff] %vm1344, %v3543
  %3562 = vst.msk [vmem:[%s9 + $0x60] sm:$0xff] %vm1344, %v3544
  %3563 = vst.msk [vmem:[%s9 + $0x68] sm:$0xff] %vm1344, %v3545
  %3564 = vst.msk [vmem:[%s9 + $0x70] sm:$0xff] %vm1344, %v3546
  %3565 = vst.msk [vmem:[%s9 + $0x78] sm:$0xff] %vm1344, %v3547
  %3566 = vst.msk [vmem:[%s9 + $0x80] sm:$0xff] %vm1344, %v3548
  %vm3567 = vcmask 29696
  %3568 = vst.msk [vmem:[%s9 + $0x88] sm:$0x3f] %vm3567, %v3549
  %v3569 = vld [vmem:[%s9 + $0x1] sm:$0xff]
  %v3570 = vld [vmem:[%s9 + $0x9] sm:$0xff]
  %v3571 = vld [vmem:[%s9 + $0x11] sm:$0xff]
  %v3572 = vld [vmem:[%s9 + $0x19] sm:$0xff]
  %v3573 = vld [vmem:[%s9 + $0x21] sm:$0xff]
  %v3574 = vld [vmem:[%s9 + $0x29] sm:$0xff]
  %v3575 = vld [vmem:[%s9 + $0x31] sm:$0xff]
  %v3576 = vld [vmem:[%s9 + $0x39] sm:$0xff]
  %v3577 = vld [vmem:[%s9 + $0x41] sm:$0xff]
  %v3578 = vld [vmem:[%s9 + $0x49] sm:$0xff]
  %v3579 = vld [vmem:[%s9 + $0x51] sm:$0xff]
  %v3580 = vld [vmem:[%s9 + $0x59] sm:$0xff]
  %v3581 = vld [vmem:[%s9 + $0x61] sm:$0xff]
  %v3582 = vld [vmem:[%s9 + $0x69] sm:$0xff]
  %v3583 = vld [vmem:[%s9 + $0x71] sm:$0xff]
  %v3584 = vld [vmem:[%s9 + $0x79] sm:$0xff]
  %v3585 = vld [vmem:[%s9 + $0x81] sm:$0xff]
  %v3586 = vld [vmem:[%s9 + $0x89] sm:$0x3f]
  %v3587 = vadd.f32 %v3569, %v3198
  %v3588 = vadd.f32 %v3570, %v3203
  %v3589 = vadd.f32 %v3571, %v3208
  %v3590 = vadd.f32 %v3572, %v3213
  %v3591 = vadd.f32 %v3573, %v3218
  %v3592 = vadd.f32 %v3574, %v3223
  %v3593 = vadd.f32 %v3575, %v3228
  %v3594 = vadd.f32 %v3576, %v3233
  %v3595 = vadd.f32 %v3577, %v3238
  %v3596 = vadd.f32 %v3578, %v3243
  %v3597 = vadd.f32 %v3579, %v3248
  %v3598 = vadd.f32 %v3580, %v3253
  %v3599 = vadd.f32 %v3581, %v3258
  %v3600 = vadd.f32 %v3582, %v3263
  %v3601 = vadd.f32 %v3583, %v3268
  %v3602 = vadd.f32 %v3584, %v3273
  %v3603 = vadd.f32 %v3585, %v3278
  %v3604 = vadd.f32 %v3586, %v3283
  %3605 = vst.msk [vmem:[%s9 + $0x1] sm:$0xff] %vm1344, %v3587
  %3606 = vst.msk [vmem:[%s9 + $0x9] sm:$0xff] %vm1344, %v3588
  %3607 = vst.msk [vmem:[%s9 + $0x11] sm:$0xff] %vm1344, %v3589
  %3608 = vst.msk [vmem:[%s9 + $0x19] sm:$0xff] %vm1344, %v3590
  %3609 = vst.msk [vmem:[%s9 + $0x21] sm:$0xff] %vm1344, %v3591
  %3610 = vst.msk [vmem:[%s9 + $0x29] sm:$0xff] %vm1344, %v3592
  %3611 = vst.msk [vmem:[%s9 + $0x31] sm:$0xff] %vm1344, %v3593
  %3612 = vst.msk [vmem:[%s9 + $0x39] sm:$0xff] %vm1344, %v3594
  %3613 = vst.msk [vmem:[%s9 + $0x41] sm:$0xff] %vm1344, %v3595
  %3614 = vst.msk [vmem:[%s9 + $0x49] sm:$0xff] %vm1344, %v3596
  %3615 = vst.msk [vmem:[%s9 + $0x51] sm:$0xff] %vm1344, %v3597
  %3616 = vst.msk [vmem:[%s9 + $0x59] sm:$0xff] %vm1344, %v3598
  %3617 = vst.msk [vmem:[%s9 + $0x61] sm:$0xff] %vm1344, %v3599
  %3618 = vst.msk [vmem:[%s9 + $0x69] sm:$0xff] %vm1344, %v3600
  %3619 = vst.msk [vmem:[%s9 + $0x71] sm:$0xff] %vm1344, %v3601
  %3620 = vst.msk [vmem:[%s9 + $0x79] sm:$0xff] %vm1344, %v3602
  %3621 = vst.msk [vmem:[%s9 + $0x81] sm:$0xff] %vm1344, %v3603
  %3622 = vst.msk [vmem:[%s9 + $0x89] sm:$0x3f] %vm3567, %v3604
  %3623 = vst.msk [vmem:[#allocation2] sm:$0xff] %vm38, 0.0
  %3624 = vst.msk [vmem:[#allocation2 + $0x8] sm:$0xff] %vm38, 0.0
  %3625 = vst.msk [vmem:[#allocation2 + $0x10] sm:$0xff] %vm38, 0.0
  %3626 = vst.msk [vmem:[#allocation2 + $0x18] sm:$0xff] %vm38, 0.0
  %3627 = vst.msk [vmem:[#allocation2 + $0x20] sm:$0xff] %vm38, 0.0
  %3628 = vst.msk [vmem:[#allocation2 + $0x28] sm:$0xff] %vm38, 0.0
  %3629 = vst.msk [vmem:[#allocation2 + $0x30] sm:$0xff] %vm38, 0.0
  %3630 = vst.msk [vmem:[#allocation2 + $0x38] sm:$0xff] %vm38, 0.0
  %3631 = vst.msk [vmem:[#allocation2 + $0x40] sm:$0xff] %vm38, 0.0
  %3632 = vst.msk [vmem:[#allocation2 + $0x48] sm:$0xff] %vm38, 0.0
  %3633 = vst.msk [vmem:[#allocation2 + $0x50] sm:$0xff] %vm38, 0.0
  %3634 = vst.msk [vmem:[#allocation2 + $0x58] sm:$0xff] %vm38, 0.0
  %3635 = vst.msk [vmem:[#allocation2 + $0x60] sm:$0xff] %vm38, 0.0
  %3636 = vst.msk [vmem:[#allocation2 + $0x68] sm:$0xff] %vm38, 0.0
  %3637 = vst.msk [vmem:[#allocation2 + $0x70] sm:$0xff] %vm38, 0.0
  %3638 = vst.msk [vmem:[#allocation2 + $0x78] sm:$0xff] %vm38, 0.0
  %3639 = vst.msk [vmem:[#allocation2 + $0x80] sm:$0xff] %vm38, 0.0
  %3640 = vst.msk [vmem:[#allocation2 + $0x88] sm:$0xff] %vm38, 0.0
  %3641 = vst.msk [vmem:[#allocation2 + $0x90] sm:$0xff] %vm38, 0.0
  %3642 = vst.msk [vmem:[#allocation2 + $0x98] sm:$0xff] %vm38, 0.0
  %3643 = vst.msk [vmem:[#allocation2 + $0xa0] sm:$0xff] %vm38, 0.0
  %3644 = vst.msk [vmem:[#allocation2 + $0xa8] sm:$0xff] %vm38, 0.0
  %3645 = vst.msk [vmem:[#allocation2 + $0xb0] sm:$0xff] %vm38, 0.0
  %3646 = vst.msk [vmem:[#allocation2 + $0xb8] sm:$0xff] %vm38, 0.0
  %3647 = vst.msk [vmem:[#allocation2 + $0xc0] sm:$0xff] %vm38, 0.0
  %3648 = vst.msk [vmem:[#allocation2 + $0xc8] sm:$0xff] %vm38, 0.0
  %3649 = vst.msk [vmem:[#allocation2 + $0xd0] sm:$0xff] %vm38, 0.0
  %3650 = vst.msk [vmem:[#allocation2 + $0xd8] sm:$0xff] %vm38, 0.0
  %3651 = vst.msk [vmem:[#allocation2 + $0xe0] sm:$0xff] %vm38, 0.0
  %3652 = vst.msk [vmem:[#allocation2 + $0xe8] sm:$0xff] %vm38, 0.0
  %3653 = vst.msk [vmem:[#allocation2 + $0xf0] sm:$0xff] %vm38, 0.0
  %3654 = vst.msk [vmem:[#allocation2 + $0xf8] sm:$0xff] %vm38, 0.0
  %3655 = vst.msk [vmem:[#allocation2 + $0x100] sm:$0xff] %vm38, 0.0
  %3656 = vst.msk [vmem:[#allocation2 + $0x108] sm:$0xff] %vm38, 0.0
  %3657 = vst.msk [vmem:[#allocation2 + $0x110] sm:$0xff] %vm38, 0.0
  %3658 = vst.msk [vmem:[#allocation2 + $0x118] sm:$0x7f] %vm1390, 0.0
  %v3659 = vld [vmem:[%s1] sm:$0xff]
  %3660 = vmatprep.subr.mxu0 0.0
  %3661 = vmatpush1.msra.mxu0 %v3659
  %3662 = vmatprep.subr.mxu0 0.0
  %3663 = vmatpush1.msra.mxu0 0.0
  %3664 = vmatprep.subr.mxu0 0.0
  %3665 = vmatpush1.msra.mxu0 0.0
  %3666 = vmatprep.subr.mxu0 0.0
  %3667 = vmatpush1.msra.mxu0 0.0
  %3668 = vmatprep.subr.mxu0 0.0
  %3669 = vmatpush1.msra.mxu0 0.0
  %3670 = vmatprep.subr.mxu0 0.0
  %3671 = vmatpush1.msra.mxu0 0.0
  %3672 = vmatprep.subr.mxu0 0.0
  %3673 = vmatpush1.msra.mxu0 0.0
  %3674 = vmatprep.subr.mxu0 0.0
  %3675 = vmatpush1.msra.mxu0 0.0
  %3676 = vmatprep.subr.mxu0 0.0
  %3677 = vmatpush1.msra.mxu0 0.0
  %3678 = vmatprep.subr.mxu0 0.0
  %3679 = vmatpush1.msra.mxu0 0.0
  %3680 = vmatprep.subr.mxu0 0.0
  %3681 = vmatpush1.msra.mxu0 0.0
  %3682 = vmatprep.subr.mxu0 0.0
  %3683 = vmatpush1.msra.mxu0 0.0
  %3684 = vmatprep.subr.mxu0 0.0
  %3685 = vmatpush1.msra.mxu0 0.0
  %3686 = vmatprep.subr.mxu0 0.0
  %3687 = vmatpush1.msra.mxu0 0.0
  %3688 = vmatprep.subr.mxu0 0.0
  %3689 = vmatpush1.msra.mxu0 0.0
  %3690 = vmatprep.subr.mxu0 0.0
  %3691 = vmatpush1.msra.mxu0 0.0
  %3692 = vmatprep.subr.mxu0 0.0
  %3693 = vmatpush1.msra.mxu0 0.0
  %3694 = vmatprep.subr.mxu0 0.0
  %3695 = vmatpush1.msra.mxu0 0.0
  %3696 = vmatprep.subr.mxu0 0.0
  %3697 = vmatpush1.msra.mxu0 0.0
  %3698 = vmatprep.subr.mxu0 0.0
  %3699 = vmatpush1.msra.mxu0 0.0
  %3700 = vmatprep.subr.mxu0 0.0
  %3701 = vmatpush1.msra.mxu0 0.0
  %3702 = vmatprep.subr.mxu0 0.0
  %3703 = vmatpush1.msra.mxu0 0.0
  %3704 = vmatprep.subr.mxu0 0.0
  %3705 = vmatpush1.msra.mxu0 0.0
  %3706 = vmatprep.subr.mxu0 0.0
  %3707 = vmatpush1.msra.mxu0 0.0
  %3708 = vmatprep.subr.mxu0 0.0
  %3709 = vmatpush1.msra.mxu0 0.0
  %3710 = vmatprep.subr.mxu0 0.0
  %3711 = vmatpush1.msra.mxu0 0.0
  %3712 = vmatprep.subr.mxu0 0.0
  %3713 = vmatpush1.msra.mxu0 0.0
  %3714 = vmatprep.subr.mxu0 0.0
  %3715 = vmatpush1.msra.mxu0 0.0
  %3716 = vmatprep.subr.mxu0 0.0
  %3717 = vmatpush1.msra.mxu0 0.0
  %3718 = vmatprep.subr.mxu0 0.0
  %3719 = vmatpush1.msra.mxu0 0.0
  %3720 = vmatprep.subr.mxu0 0.0
  %3721 = vmatpush1.msra.mxu0 0.0
  %3722 = vmatprep.subr.mxu0 0.0
  %3723 = vmatpush1.msra.mxu0 0.0
  %3724 = vmatprep.mubr.f32.mxu0 0.0
  %3725 = vmatmul.mubr.f32.gmra.mrb[0].mxu0 %v3287
  %v3726 = vpop.f32.mrb[0].mxu0
  %v3727 = vadd.f32 0.0, %v3726
  %v3728 = vpop.f32.mrb[0].mxu0
  %3729 = vmatprep.mubr.f32.mxu0 0.0
  %3730 = vmatmul.mubr.f32.gmra.mrb[0].mxu0 %v3290
  %v3731 = vpop.f32.mrb[0].mxu0
  %v3732 = vadd.f32 0.0, %v3731
  %v3733 = vpop.f32.mrb[0].mxu0
  %3734 = vmatprep.mubr.f32.mxu0 0.0
  %3735 = vmatmul.mubr.f32.gmra.mrb[0].mxu0 %v3293
  %v3736 = vpop.f32.mrb[0].mxu0
  %v3737 = vadd.f32 0.0, %v3736
  %v3738 = vpop.f32.mrb[0].mxu0
  %3739 = vmatprep.mubr.f32.mxu0 0.0
  %3740 = vmatmul.mubr.f32.gmra.mrb[0].mxu0 %v3296
  %v3741 = vpop.f32.mrb[0].mxu0
  %v3742 = vadd.f32 0.0, %v3741
  %v3743 = vpop.f32.mrb[0].mxu0
  %3744 = vmatprep.mubr.f32.mxu0 0.0
  %3745 = vmatmul.mubr.f32.gmra.mrb[0].mxu0 %v3299
  %v3746 = vpop.f32.mrb[0].mxu0
  %v3747 = vadd.f32 0.0, %v3746
  %v3748 = vpop.f32.mrb[0].mxu0
  %3749 = vmatprep.mubr.f32.mxu0 0.0
  %3750 = vmatmul.mubr.f32.gmra.mrb[0].mxu0 %v3302
  %v3751 = vpop.f32.mrb[0].mxu0
  %v3752 = vadd.f32 0.0, %v3751
  %v3753 = vpop.f32.mrb[0].mxu0
  %3754 = vmatprep.mubr.f32.mxu0 0.0
  %3755 = vmatmul.mubr.f32.gmra.mrb[0].mxu0 %v3305
  %v3756 = vpop.f32.mrb[0].mxu0
  %v3757 = vadd.f32 0.0, %v3756
  %v3758 = vpop.f32.mrb[0].mxu0
  %3759 = vmatprep.mubr.f32.mxu0 0.0
  %3760 = vmatmul.mubr.f32.gmra.mrb[0].mxu0 %v3308
  %v3761 = vpop.f32.mrb[0].mxu0
  %v3762 = vadd.f32 0.0, %v3761
  %v3763 = vpop.f32.mrb[0].mxu0
  %3764 = vmatprep.mubr.f32.mxu0 0.0
  %3765 = vmatmul.mubr.f32.gmra.mrb[0].mxu0 %v3311
  %v3766 = vpop.f32.mrb[0].mxu0
  %v3767 = vadd.f32 0.0, %v3766
  %v3768 = vpop.f32.mrb[0].mxu0
  %3769 = vmatprep.mubr.f32.mxu0 0.0
  %3770 = vmatmul.mubr.f32.gmra.mrb[0].mxu0 %v3314
  %v3771 = vpop.f32.mrb[0].mxu0
  %v3772 = vadd.f32 0.0, %v3771
  %v3773 = vpop.f32.mrb[0].mxu0
  %3774 = vmatprep.mubr.f32.mxu0 0.0
  %3775 = vmatmul.mubr.f32.gmra.mrb[0].mxu0 %v3317
  %v3776 = vpop.f32.mrb[0].mxu0
  %v3777 = vadd.f32 0.0, %v3776
  %v3778 = vpop.f32.mrb[0].mxu0
  %3779 = vmatprep.mubr.f32.mxu0 0.0
  %3780 = vmatmul.mubr.f32.gmra.mrb[0].mxu0 %v3320
  %v3781 = vpop.f32.mrb[0].mxu0
  %v3782 = vadd.f32 0.0, %v3781
  %v3783 = vpop.f32.mrb[0].mxu0
  %3784 = vmatprep.mubr.f32.mxu0 0.0
  %3785 = vmatmul.mubr.f32.gmra.mrb[0].mxu0 %v3323
  %v3786 = vpop.f32.mrb[0].mxu0
  %v3787 = vadd.f32 0.0, %v3786
  %v3788 = vpop.f32.mrb[0].mxu0
  %3789 = vmatprep.mubr.f32.mxu0 0.0
  %3790 = vmatmul.mubr.f32.gmra.mrb[0].mxu0 %v3326
  %v3791 = vpop.f32.mrb[0].mxu0
  %v3792 = vadd.f32 0.0, %v3791
  %v3793 = vpop.f32.mrb[0].mxu0
  %3794 = vmatprep.mubr.f32.mxu0 0.0
  %3795 = vmatmul.mubr.f32.gmra.mrb[0].mxu0 %v3329
  %v3796 = vpop.f32.mrb[0].mxu0
  %v3797 = vadd.f32 0.0, %v3796
  %v3798 = vpop.f32.mrb[0].mxu0
  %3799 = vmatprep.mubr.f32.mxu0 0.0
  %3800 = vmatmul.mubr.f32.gmra.mrb[0].mxu0 %v3332
  %v3801 = vpop.f32.mrb[0].mxu0
  %v3802 = vadd.f32 0.0, %v3801
  %v3803 = vpop.f32.mrb[0].mxu0
  %3804 = vmatprep.mubr.f32.mxu0 0.0
  %3805 = vmatmul.mubr.f32.gmra.mrb[0].mxu0 %v3335
  %v3806 = vpop.f32.mrb[0].mxu0
  %v3807 = vadd.f32 0.0, %v3806
  %v3808 = vpop.f32.mrb[0].mxu0
  %3809 = vmatprep.mubr.f32.mxu0 0.0
  %3810 = vmatmul.mubr.f32.gmra.mrb[0].mxu0 %v3338
  %v3811 = vpop.f32.mrb[0].mxu0
  %v3812 = vadd.f32 0.0, %v3811
  %v3813 = vpop.f32.mrb[0].mxu0
  %3814 = vdwg.mxu0
  %v3815 = vld [vmem:[#allocation2] ss:$2 sm:$0xff]
  %v3816 = vld [vmem:[%s582] ss:$2 sm:$0xff]
  %v3817 = vld [vmem:[%s584] ss:$2 sm:$0xff]
  %v3818 = vld [vmem:[%s1486] ss:$2 sm:$0xff]
  %v3819 = vld [vmem:[%s1488] ss:$2 sm:$0xff]
  %v3820 = vld [vmem:[%s2144] ss:$2 sm:$0xff]
  %v3821 = vld [vmem:[%s2146] ss:$2 sm:$0xff]
  %v3822 = vld [vmem:[%s2148] ss:$2 sm:$0xff]
  %v3823 = vld [vmem:[%s2150] ss:$2 sm:$0xff]
  %s3824 = scalar_lea.vmem [#allocation2], 144
  %v3825 = vld [vmem:[%s3824] ss:$2 sm:$0xff]
  %s3826 = scalar_lea.vmem [#allocation2], 160
  %v3827 = vld [vmem:[%s3826] ss:$2 sm:$0xff]
  %s3828 = scalar_lea.vmem [#allocation2], 176
  %v3829 = vld [vmem:[%s3828] ss:$2 sm:$0xff]
  %s3830 = scalar_lea.vmem [#allocation2], 192
  %v3831 = vld [vmem:[%s3830] ss:$2 sm:$0xff]
  %s3832 = scalar_lea.vmem [#allocation2], 208
  %v3833 = vld [vmem:[%s3832] ss:$2 sm:$0xff]
  %s3834 = scalar_lea.vmem [#allocation2], 224
  %v3835 = vld [vmem:[%s3834] ss:$2 sm:$0xff]
  %s3836 = scalar_lea.vmem [#allocation2], 240
  %v3837 = vld [vmem:[%s3836] ss:$2 sm:$0xff]
  %s3838 = scalar_lea.vmem [#allocation2], 256
  %v3839 = vld [vmem:[%s3838] ss:$2 sm:$0xff]
  %s3840 = scalar_lea.vmem [#allocation2], 272
  %v3841 = vld [vmem:[%s3840] ss:$2 sm:$0x7f]
  %v3842 = vadd.f32 %v3815, %v3727
  %v3843 = vadd.f32 %v3816, %v3732
  %v3844 = vadd.f32 %v3817, %v3737
  %v3845 = vadd.f32 %v3818, %v3742
  %v3846 = vadd.f32 %v3819, %v3747
  %v3847 = vadd.f32 %v3820, %v3752
  %v3848 = vadd.f32 %v3821, %v3757
  %v3849 = vadd.f32 %v3822, %v3762
  %v3850 = vadd.f32 %v3823, %v3767
  %v3851 = vadd.f32 %v3825, %v3772
  %v3852 = vadd.f32 %v3827, %v3777
  %v3853 = vadd.f32 %v3829, %v3782
  %v3854 = vadd.f32 %v3831, %v3787
  %v3855 = vadd.f32 %v3833, %v3792
  %v3856 = vadd.f32 %v3835, %v3797
  %v3857 = vadd.f32 %v3837, %v3802
  %v3858 = vadd.f32 %v3839, %v3807
  %v3859 = vadd.f32 %v3841, %v3812
  %3860 = vst [vmem:[#allocation2] ss:$2 sm:$0xff] %v3842
  %3861 = vst [vmem:[%s582] ss:$2 sm:$0xff] %v3843
  %3862 = vst [vmem:[%s584] ss:$2 sm:$0xff] %v3844
  %3863 = vst [vmem:[%s1486] ss:$2 sm:$0xff] %v3845
  %3864 = vst [vmem:[%s1488] ss:$2 sm:$0xff] %v3846
  %3865 = vst [vmem:[%s2144] ss:$2 sm:$0xff] %v3847
  %3866 = vst [vmem:[%s2146] ss:$2 sm:$0xff] %v3848
  %3867 = vst [vmem:[%s2148] ss:$2 sm:$0xff] %v3849
  %3868 = vst [vmem:[%s2150] ss:$2 sm:$0xff] %v3850
  %3869 = vst [vmem:[%s3824] ss:$2 sm:$0xff] %v3851
  %3870 = vst [vmem:[%s3826] ss:$2 sm:$0xff] %v3852
  %3871 = vst [vmem:[%s3828] ss:$2 sm:$0xff] %v3853
  %3872 = vst [vmem:[%s3830] ss:$2 sm:$0xff] %v3854
  %3873 = vst [vmem:[%s3832] ss:$2 sm:$0xff] %v3855
  %3874 = vst [vmem:[%s3834] ss:$2 sm:$0xff] %v3856
  %3875 = vst [vmem:[%s3836] ss:$2 sm:$0xff] %v3857
  %3876 = vst [vmem:[%s3838] ss:$2 sm:$0xff] %v3858
  %3877 = vst [vmem:[%s3840] ss:$2 sm:$0x7f] %v3859
  %v3878 = vld [vmem:[%s120] sm:$0xff]
  %3879 = vmatprep.subr.mxu0 0.0
  %3880 = vmatpush1.msra.mxu0 %v3878
  %3881 = vmatprep.subr.mxu0 0.0
  %3882 = vmatpush1.msra.mxu0 0.0
  %3883 = vmatprep.subr.mxu0 0.0
  %3884 = vmatpush1.msra.mxu0 0.0
  %3885 = vmatprep.subr.mxu0 0.0
  %3886 = vmatpush1.msra.mxu0 0.0
  %3887 = vmatprep.subr.mxu0 0.0
  %3888 = vmatpush1.msra.mxu0 0.0
  %3889 = vmatprep.subr.mxu0 0.0
  %3890 = vmatpush1.msra.mxu0 0.0
  %3891 = vmatprep.subr.mxu0 0.0
  %3892 = vmatpush1.msra.mxu0 0.0
  %3893 = vmatprep.subr.mxu0 0.0
  %3894 = vmatpush1.msra.mxu0 0.0
  %3895 = vmatprep.subr.mxu0 0.0
  %3896 = vmatpush1.msra.mxu0 0.0
  %3897 = vmatprep.subr.mxu0 0.0
  %3898 = vmatpush1.msra.mxu0 0.0
  %3899 = vmatprep.subr.mxu0 0.0
  %3900 = vmatpush1.msra.mxu0 0.0
  %3901 = vmatprep.subr.mxu0 0.0
  %3902 = vmatpush1.msra.mxu0 0.0
  %3903 = vmatprep.subr.mxu0 0.0
  %3904 = vmatpush1.msra.mxu0 0.0
  %3905 = vmatprep.subr.mxu0 0.0
  %3906 = vmatpush1.msra.mxu0 0.0
  %3907 = vmatprep.subr.mxu0 0.0
  %3908 = vmatpush1.msra.mxu0 0.0
  %3909 = vmatprep.subr.mxu0 0.0
  %3910 = vmatpush1.msra.mxu0 0.0
  %3911 = vmatprep.subr.mxu0 0.0
  %3912 = vmatpush1.msra.mxu0 0.0
  %3913 = vmatprep.subr.mxu0 0.0
  %3914 = vmatpush1.msra.mxu0 0.0
  %3915 = vmatprep.subr.mxu0 0.0
  %3916 = vmatpush1.msra.mxu0 0.0
  %3917 = vmatprep.subr.mxu0 0.0
  %3918 = vmatpush1.msra.mxu0 0.0
  %3919 = vmatprep.subr.mxu0 0.0
  %3920 = vmatpush1.msra.mxu0 0.0
  %3921 = vmatprep.subr.mxu0 0.0
  %3922 = vmatpush1.msra.mxu0 0.0
  %3923 = vmatprep.subr.mxu0 0.0
  %3924 = vmatpush1.msra.mxu0 0.0
  %3925 = vmatprep.subr.mxu0 0.0
  %3926 = vmatpush1.msra.mxu0 0.0
  %3927 = vmatprep.subr.mxu0 0.0
  %3928 = vmatpush1.msra.mxu0 0.0
  %3929 = vmatprep.subr.mxu0 0.0
  %3930 = vmatpush1.msra.mxu0 0.0
  %3931 = vmatprep.subr.mxu0 0.0
  %3932 = vmatpush1.msra.mxu0 0.0
  %3933 = vmatprep.subr.mxu0 0.0
  %3934 = vmatpush1.msra.mxu0 0.0
  %3935 = vmatprep.subr.mxu0 0.0
  %3936 = vmatpush1.msra.mxu0 0.0
  %3937 = vmatprep.subr.mxu0 0.0
  %3938 = vmatpush1.msra.mxu0 0.0
  %3939 = vmatprep.subr.mxu0 0.0
  %3940 = vmatpush1.msra.mxu0 0.0
  %3941 = vmatprep.subr.mxu0 0.0
  %3942 = vmatpush1.msra.mxu0 0.0
  %3943 = vmatprep.mubr.f32.mxu0 0.0
  %3944 = vmatmul.mubr.f32.gmra.mrb[0].mxu0 %v3287
  %v3945 = vpop.f32.mrb[0].mxu0
  %v3946 = vadd.f32 0.0, %v3945
  %v3947 = vpop.f32.mrb[0].mxu0
  %3948 = vmatprep.mubr.f32.mxu0 0.0
  %3949 = vmatmul.mubr.f32.gmra.mrb[0].mxu0 %v3290
  %v3950 = vpop.f32.mrb[0].mxu0
  %v3951 = vadd.f32 0.0, %v3950
  %v3952 = vpop.f32.mrb[0].mxu0
  %3953 = vmatprep.mubr.f32.mxu0 0.0
  %3954 = vmatmul.mubr.f32.gmra.mrb[0].mxu0 %v3293
  %v3955 = vpop.f32.mrb[0].mxu0
  %v3956 = vadd.f32 0.0, %v3955
  %v3957 = vpop.f32.mrb[0].mxu0
  %3958 = vmatprep.mubr.f32.mxu0 0.0
  %3959 = vmatmul.mubr.f32.gmra.mrb[0].mxu0 %v3296
  %v3960 = vpop.f32.mrb[0].mxu0
  %v3961 = vadd.f32 0.0, %v3960
  %v3962 = vpop.f32.mrb[0].mxu0
  %3963 = vmatprep.mubr.f32.mxu0 0.0
  %3964 = vmatmul.mubr.f32.gmra.mrb[0].mxu0 %v3299
  %v3965 = vpop.f32.mrb[0].mxu0
  %v3966 = vadd.f32 0.0, %v3965
  %v3967 = vpop.f32.mrb[0].mxu0
  %3968 = vmatprep.mubr.f32.mxu0 0.0
  %3969 = vmatmul.mubr.f32.gmra.mrb[0].mxu0 %v3302
  %v3970 = vpop.f32.mrb[0].mxu0
  %v3971 = vadd.f32 0.0, %v3970
  %v3972 = vpop.f32.mrb[0].mxu0
  %3973 = vmatprep.mubr.f32.mxu0 0.0
  %3974 = vmatmul.mubr.f32.gmra.mrb[0].mxu0 %v3305
  %v3975 = vpop.f32.mrb[0].mxu0
  %v3976 = vadd.f32 0.0, %v3975
  %v3977 = vpop.f32.mrb[0].mxu0
  %3978 = vmatprep.mubr.f32.mxu0 0.0
  %3979 = vmatmul.mubr.f32.gmra.mrb[0].mxu0 %v3308
  %v3980 = vpop.f32.mrb[0].mxu0
  %v3981 = vadd.f32 0.0, %v3980
  %v3982 = vpop.f32.mrb[0].mxu0
  %3983 = vmatprep.mubr.f32.mxu0 0.0
  %3984 = vmatmul.mubr.f32.gmra.mrb[0].mxu0 %v3311
  %v3985 = vpop.f32.mrb[0].mxu0
  %v3986 = vadd.f32 0.0, %v3985
  %v3987 = vpop.f32.mrb[0].mxu0
  %3988 = vmatprep.mubr.f32.mxu0 0.0
  %3989 = vmatmul.mubr.f32.gmra.mrb[0].mxu0 %v3314
  %v3990 = vpop.f32.mrb[0].mxu0
  %v3991 = vadd.f32 0.0, %v3990
  %v3992 = vpop.f32.mrb[0].mxu0
  %3993 = vmatprep.mubr.f32.mxu0 0.0
  %3994 = vmatmul.mubr.f32.gmra.mrb[0].mxu0 %v3317
  %v3995 = vpop.f32.mrb[0].mxu0
  %v3996 = vadd.f32 0.0, %v3995
  %v3997 = vpop.f32.mrb[0].mxu0
  %3998 = vmatprep.mubr.f32.mxu0 0.0
  %3999 = vmatmul.mubr.f32.gmra.mrb[0].mxu0 %v3320
  %v4000 = vpop.f32.mrb[0].mxu0
  %v4001 = vadd.f32 0.0, %v4000
  %v4002 = vpop.f32.mrb[0].mxu0
  %4003 = vmatprep.mubr.f32.mxu0 0.0
  %4004 = vmatmul.mubr.f32.gmra.mrb[0].mxu0 %v3323
  %v4005 = vpop.f32.mrb[0].mxu0
  %v4006 = vadd.f32 0.0, %v4005
  %v4007 = vpop.f32.mrb[0].mxu0
  %4008 = vmatprep.mubr.f32.mxu0 0.0
  %4009 = vmatmul.mubr.f32.gmra.mrb[0].mxu0 %v3326
  %v4010 = vpop.f32.mrb[0].mxu0
  %v4011 = vadd.f32 0.0, %v4010
  %v4012 = vpop.f32.mrb[0].mxu0
  %4013 = vmatprep.mubr.f32.mxu0 0.0
  %4014 = vmatmul.mubr.f32.gmra.mrb[0].mxu0 %v3329
  %v4015 = vpop.f32.mrb[0].mxu0
  %v4016 = vadd.f32 0.0, %v4015
  %v4017 = vpop.f32.mrb[0].mxu0
  %4018 = vmatprep.mubr.f32.mxu0 0.0
  %4019 = vmatmul.mubr.f32.gmra.mrb[0].mxu0 %v3332
  %v4020 = vpop.f32.mrb[0].mxu0
  %v4021 = vadd.f32 0.0, %v4020
  %v4022 = vpop.f32.mrb[0].mxu0
  %4023 = vmatprep.mubr.f32.mxu0 0.0
  %4024 = vmatmul.mubr.f32.gmra.mrb[0].mxu0 %v3335
  %v4025 = vpop.f32.mrb[0].mxu0
  %v4026 = vadd.f32 0.0, %v4025
  %v4027 = vpop.f32.mrb[0].mxu0
  %4028 = vmatprep.mubr.f32.mxu0 0.0
  %4029 = vmatmul.mubr.f32.gmra.mrb[0].mxu0 %v3338
  %v4030 = vpop.f32.mrb[0].mxu0
  %v4031 = vadd.f32 0.0, %v4030
  %v4032 = vpop.f32.mrb[0].mxu0
  %4033 = vdwg.mxu0
  %v4034 = vld [vmem:[%s192] ss:$2 sm:$0xff]
  %v4035 = vld [vmem:[%s674] ss:$2 sm:$0xff]
  %v4036 = vld [vmem:[%s676] ss:$2 sm:$0xff]
  %v4037 = vld [vmem:[%s1594] ss:$2 sm:$0xff]
  %v4038 = vld [vmem:[%s1596] ss:$2 sm:$0xff]
  %v4039 = vld [vmem:[%s2286] ss:$2 sm:$0xff]
  %v4040 = vld [vmem:[%s2288] ss:$2 sm:$0xff]
  %v4041 = vld [vmem:[%s2290] ss:$2 sm:$0xff]
  %v4042 = vld [vmem:[%s2292] ss:$2 sm:$0xff]
  %s4043 = scalar_lea.vmem [#allocation2], 145
  %v4044 = vld [vmem:[%s4043] ss:$2 sm:$0xff]
  %s4045 = scalar_lea.vmem [#allocation2], 161
  %v4046 = vld [vmem:[%s4045] ss:$2 sm:$0xff]
  %s4047 = scalar_lea.vmem [#allocation2], 177
  %v4048 = vld [vmem:[%s4047] ss:$2 sm:$0xff]
  %s4049 = scalar_lea.vmem [#allocation2], 193
  %v4050 = vld [vmem:[%s4049] ss:$2 sm:$0xff]
  %s4051 = scalar_lea.vmem [#allocation2], 209
  %v4052 = vld [vmem:[%s4051] ss:$2 sm:$0xff]
  %s4053 = scalar_lea.vmem [#allocation2], 225
  %v4054 = vld [vmem:[%s4053] ss:$2 sm:$0xff]
  %s4055 = scalar_lea.vmem [#allocation2], 241
  %v4056 = vld [vmem:[%s4055] ss:$2 sm:$0xff]
  %s4057 = scalar_lea.vmem [#allocation2], 257
  %v4058 = vld [vmem:[%s4057] ss:$2 sm:$0xff]
  %s4059 = scalar_lea.vmem [#allocation2], 273
  %v4060 = vld [vmem:[%s4059] ss:$2 sm:$0x7f]
  %v4061 = vadd.f32 %v4034, %v3946
  %v4062 = vadd.f32 %v4035, %v3951
  %v4063 = vadd.f32 %v4036, %v3956
  %v4064 = vadd.f32 %v4037, %v3961
  %v4065 = vadd.f32 %v4038, %v3966
  %v4066 = vadd.f32 %v4039, %v3971
  %v4067 = vadd.f32 %v4040, %v3976
  %v4068 = vadd.f32 %v4041, %v3981
  %v4069 = vadd.f32 %v4042, %v3986
  %v4070 = vadd.f32 %v4044, %v3991
  %v4071 = vadd.f32 %v4046, %v3996
  %v4072 = vadd.f32 %v4048, %v4001
  %v4073 = vadd.f32 %v4050, %v4006
  %v4074 = vadd.f32 %v4052, %v4011
  %v4075 = vadd.f32 %v4054, %v4016
  %v4076 = vadd.f32 %v4056, %v4021
  %v4077 = vadd.f32 %v4058, %v4026
  %v4078 = vadd.f32 %v4060, %v4031
  %4079 = vst [vmem:[%s192] ss:$2 sm:$0xff] %v4061
  %4080 = vst [vmem:[%s674] ss:$2 sm:$0xff] %v4062
  %4081 = vst [vmem:[%s676] ss:$2 sm:$0xff] %v4063
  %4082 = vst [vmem:[%s1594] ss:$2 sm:$0xff] %v4064
  %4083 = vst [vmem:[%s1596] ss:$2 sm:$0xff] %v4065
  %4084 = vst [vmem:[%s2286] ss:$2 sm:$0xff] %v4066
  %4085 = vst [vmem:[%s2288] ss:$2 sm:$0xff] %v4067
  %4086 = vst [vmem:[%s2290] ss:$2 sm:$0xff] %v4068
  %4087 = vst [vmem:[%s2292] ss:$2 sm:$0xff] %v4069
  %4088 = vst [vmem:[%s4043] ss:$2 sm:$0xff] %v4070
  %4089 = vst [vmem:[%s4045] ss:$2 sm:$0xff] %v4071
  %4090 = vst [vmem:[%s4047] ss:$2 sm:$0xff] %v4072
  %4091 = vst [vmem:[%s4049] ss:$2 sm:$0xff] %v4073
  %4092 = vst [vmem:[%s4051] ss:$2 sm:$0xff] %v4074
  %4093 = vst [vmem:[%s4053] ss:$2 sm:$0xff] %v4075
  %4094 = vst [vmem:[%s4055] ss:$2 sm:$0xff] %v4076
  %4095 = vst [vmem:[%s4057] ss:$2 sm:$0xff] %v4077
  %4096 = vst [vmem:[%s4059] ss:$2 sm:$0x7f] %v4078
  %v4097 = vld [vmem:[%s196] sm:$0xff]
  %4098 = vmatprep.subr.mxu0 0.0
  %4099 = vmatpush1.msra.mxu0 %v4097
  %4100 = vmatprep.subr.mxu0 0.0
  %4101 = vmatpush1.msra.mxu0 0.0
  %4102 = vmatprep.subr.mxu0 0.0
  %4103 = vmatpush1.msra.mxu0 0.0
  %4104 = vmatprep.subr.mxu0 0.0
  %4105 = vmatpush1.msra.mxu0 0.0
  %4106 = vmatprep.subr.mxu0 0.0
  %4107 = vmatpush1.msra.mxu0 0.0
  %4108 = vmatprep.subr.mxu0 0.0
  %4109 = vmatpush1.msra.mxu0 0.0
  %4110 = vmatprep.subr.mxu0 0.0
  %4111 = vmatpush1.msra.mxu0 0.0
  %4112 = vmatprep.subr.mxu0 0.0
  %4113 = vmatpush1.msra.mxu0 0.0
  %4114 = vmatprep.subr.mxu0 0.0
  %4115 = vmatpush1.msra.mxu0 0.0
  %4116 = vmatprep.subr.mxu0 0.0
  %4117 = vmatpush1.msra.mxu0 0.0
  %4118 = vmatprep.subr.mxu0 0.0
  %4119 = vmatpush1.msra.mxu0 0.0
  %4120 = vmatprep.subr.mxu0 0.0
  %4121 = vmatpush1.msra.mxu0 0.0
  %4122 = vmatprep.subr.mxu0 0.0
  %4123 = vmatpush1.msra.mxu0 0.0
  %4124 = vmatprep.subr.mxu0 0.0
  %4125 = vmatpush1.msra.mxu0 0.0
  %4126 = vmatprep.subr.mxu0 0.0
  %4127 = vmatpush1.msra.mxu0 0.0
  %4128 = vmatprep.subr.mxu0 0.0
  %4129 = vmatpush1.msra.mxu0 0.0
  %4130 = vmatprep.subr.mxu0 0.0
  %4131 = vmatpush1.msra.mxu0 0.0
  %4132 = vmatprep.subr.mxu0 0.0
  %4133 = vmatpush1.msra.mxu0 0.0
  %4134 = vmatprep.subr.mxu0 0.0
  %4135 = vmatpush1.msra.mxu0 0.0
  %4136 = vmatprep.subr.mxu0 0.0
  %4137 = vmatpush1.msra.mxu0 0.0
  %4138 = vmatprep.subr.mxu0 0.0
  %4139 = vmatpush1.msra.mxu0 0.0
  %4140 = vmatprep.subr.mxu0 0.0
  %4141 = vmatpush1.msra.mxu0 0.0
  %4142 = vmatprep.subr.mxu0 0.0
  %4143 = vmatpush1.msra.mxu0 0.0
  %4144 = vmatprep.subr.mxu0 0.0
  %4145 = vmatpush1.msra.mxu0 0.0
  %4146 = vmatprep.subr.mxu0 0.0
  %4147 = vmatpush1.msra.mxu0 0.0
  %4148 = vmatprep.subr.mxu0 0.0
  %4149 = vmatpush1.msra.mxu0 0.0
  %4150 = vmatprep.subr.mxu0 0.0
  %4151 = vmatpush1.msra.mxu0 0.0
  %4152 = vmatprep.subr.mxu0 0.0
  %4153 = vmatpush1.msra.mxu0 0.0
  %4154 = vmatprep.subr.mxu0 0.0
  %4155 = vmatpush1.msra.mxu0 0.0
  %4156 = vmatprep.subr.mxu0 0.0
  %4157 = vmatpush1.msra.mxu0 0.0
  %4158 = vmatprep.subr.mxu0 0.0
  %4159 = vmatpush1.msra.mxu0 0.0
  %4160 = vmatprep.subr.mxu0 0.0
  %4161 = vmatpush1.msra.mxu0 0.0
  %4162 = vmatprep.mubr.f32.mxu0 0.0
  %4163 = vmatmul.mubr.f32.gmra.mrb[0].mxu0 %v3287
  %v4164 = vpop.f32.mrb[0].mxu0
  %v4165 = vadd.f32 0.0, %v4164
  %v4166 = vpop.f32.mrb[0].mxu0
  %4167 = vmatprep.mubr.f32.mxu0 0.0
  %4168 = vmatmul.mubr.f32.gmra.mrb[0].mxu0 %v3290
  %v4169 = vpop.f32.mrb[0].mxu0
  %v4170 = vadd.f32 0.0, %v4169
  %v4171 = vpop.f32.mrb[0].mxu0
  %4172 = vmatprep.mubr.f32.mxu0 0.0
  %4173 = vmatmul.mubr.f32.gmra.mrb[0].mxu0 %v3293
  %v4174 = vpop.f32.mrb[0].mxu0
  %v4175 = vadd.f32 0.0, %v4174
  %v4176 = vpop.f32.mrb[0].mxu0
  %4177 = vmatprep.mubr.f32.mxu0 0.0
  %4178 = vmatmul.mubr.f32.gmra.mrb[0].mxu0 %v3296
  %v4179 = vpop.f32.mrb[0].mxu0
  %v4180 = vadd.f32 0.0, %v4179
  %v4181 = vpop.f32.mrb[0].mxu0
  %4182 = vmatprep.mubr.f32.mxu0 0.0
  %4183 = vmatmul.mubr.f32.gmra.mrb[0].mxu0 %v3299
  %v4184 = vpop.f32.mrb[0].mxu0
  %v4185 = vadd.f32 0.0, %v4184
  %v4186 = vpop.f32.mrb[0].mxu0
  %4187 = vmatprep.mubr.f32.mxu0 0.0
  %4188 = vmatmul.mubr.f32.gmra.mrb[0].mxu0 %v3302
  %v4189 = vpop.f32.mrb[0].mxu0
  %v4190 = vadd.f32 0.0, %v4189
  %v4191 = vpop.f32.mrb[0].mxu0
  %4192 = vmatprep.mubr.f32.mxu0 0.0
  %4193 = vmatmul.mubr.f32.gmra.mrb[0].mxu0 %v3305
  %v4194 = vpop.f32.mrb[0].mxu0
  %v4195 = vadd.f32 0.0, %v4194
  %v4196 = vpop.f32.mrb[0].mxu0
  %4197 = vmatprep.mubr.f32.mxu0 0.0
  %4198 = vmatmul.mubr.f32.gmra.mrb[0].mxu0 %v3308
  %v4199 = vpop.f32.mrb[0].mxu0
  %v4200 = vadd.f32 0.0, %v4199
  %v4201 = vpop.f32.mrb[0].mxu0
  %4202 = vmatprep.mubr.f32.mxu0 0.0
  %4203 = vmatmul.mubr.f32.gmra.mrb[0].mxu0 %v3311
  %v4204 = vpop.f32.mrb[0].mxu0
  %v4205 = vadd.f32 0.0, %v4204
  %v4206 = vpop.f32.mrb[0].mxu0
  %4207 = vmatprep.mubr.f32.mxu0 0.0
  %4208 = vmatmul.mubr.f32.gmra.mrb[0].mxu0 %v3314
  %v4209 = vpop.f32.mrb[0].mxu0
  %v4210 = vadd.f32 0.0, %v4209
  %v4211 = vpop.f32.mrb[0].mxu0
  %4212 = vmatprep.mubr.f32.mxu0 0.0
  %4213 = vmatmul.mubr.f32.gmra.mrb[0].mxu0 %v3317
  %v4214 = vpop.f32.mrb[0].mxu0
  %v4215 = vadd.f32 0.0, %v4214
  %v4216 = vpop.f32.mrb[0].mxu0
  %4217 = vmatprep.mubr.f32.mxu0 0.0
  %4218 = vmatmul.mubr.f32.gmra.mrb[0].mxu0 %v3320
  %v4219 = vpop.f32.mrb[0].mxu0
  %v4220 = vadd.f32 0.0, %v4219
  %v4221 = vpop.f32.mrb[0].mxu0
  %4222 = vmatprep.mubr.f32.mxu0 0.0
  %4223 = vmatmul.mubr.f32.gmra.mrb[0].mxu0 %v3323
  %v4224 = vpop.f32.mrb[0].mxu0
  %v4225 = vadd.f32 0.0, %v4224
  %v4226 = vpop.f32.mrb[0].mxu0
  %4227 = vmatprep.mubr.f32.mxu0 0.0
  %4228 = vmatmul.mubr.f32.gmra.mrb[0].mxu0 %v3326
  %v4229 = vpop.f32.mrb[0].mxu0
  %v4230 = vadd.f32 0.0, %v4229
  %v4231 = vpop.f32.mrb[0].mxu0
  %4232 = vmatprep.mubr.f32.mxu0 0.0
  %4233 = vmatmul.mubr.f32.gmra.mrb[0].mxu0 %v3329
  %v4234 = vpop.f32.mrb[0].mxu0
  %v4235 = vadd.f32 0.0, %v4234
  %v4236 = vpop.f32.mrb[0].mxu0
  %4237 = vmatprep.mubr.f32.mxu0 0.0
  %4238 = vmatmul.mubr.f32.gmra.mrb[0].mxu0 %v3332
  %v4239 = vpop.f32.mrb[0].mxu0
  %v4240 = vadd.f32 0.0, %v4239
  %v4241 = vpop.f32.mrb[0].mxu0
  %4242 = vmatprep.mubr.f32.mxu0 0.0
  %4243 = vmatmul.mubr.f32.gmra.mrb[0].mxu0 %v3335
  %v4244 = vpop.f32.mrb[0].mxu0
  %v4245 = vadd.f32 0.0, %v4244
  %v4246 = vpop.f32.mrb[0].mxu0
  %4247 = vmatprep.mubr.f32.mxu0 0.0
  %4248 = vmatmul.mubr.f32.gmra.mrb[0].mxu0 %v3338
  %v4249 = vpop.f32.mrb[0].mxu0
  %v4250 = vadd.f32 0.0, %v4249
  %v4251 = vpop.f32.mrb[0].mxu0
  %4252 = vdwg.mxu0
  %v4253 = vld [vmem:[%s268] ss:$2 sm:$0xff]
  %v4254 = vld [vmem:[%s766] ss:$2 sm:$0xff]
  %v4255 = vld [vmem:[%s768] ss:$2 sm:$0xff]
  %v4256 = vld [vmem:[%s1702] ss:$2 sm:$0xff]
  %v4257 = vld [vmem:[%s1704] ss:$2 sm:$0xff]
  %v4258 = vld [vmem:[%s2428] ss:$2 sm:$0xff]
  %v4259 = vld [vmem:[%s2430] ss:$2 sm:$0xff]
  %v4260 = vld [vmem:[%s2432] ss:$2 sm:$0xff]
  %v4261 = vld [vmem:[%s2434] ss:$2 sm:$0xff]
  %s4262 = scalar_lea.vmem [#allocation2], 146
  %v4263 = vld [vmem:[%s4262] ss:$2 sm:$0xff]
  %s4264 = scalar_lea.vmem [#allocation2], 162
  %v4265 = vld [vmem:[%s4264] ss:$2 sm:$0xff]
  %s4266 = scalar_lea.vmem [#allocation2], 178
  %v4267 = vld [vmem:[%s4266] ss:$2 sm:$0xff]
  %s4268 = scalar_lea.vmem [#allocation2], 194
  %v4269 = vld [vmem:[%s4268] ss:$2 sm:$0xff]
  %s4270 = scalar_lea.vmem [#allocation2], 210
  %v4271 = vld [vmem:[%s4270] ss:$2 sm:$0xff]
  %s4272 = scalar_lea.vmem [#allocation2], 226
  %v4273 = vld [vmem:[%s4272] ss:$2 sm:$0xff]
  %s4274 = scalar_lea.vmem [#allocation2], 242
  %v4275 = vld [vmem:[%s4274] ss:$2 sm:$0xff]
  %s4276 = scalar_lea.vmem [#allocation2], 258
  %v4277 = vld [vmem:[%s4276] ss:$2 sm:$0xff]
  %s4278 = scalar_lea.vmem [#allocation2], 274
  %v4279 = vld [vmem:[%s4278] ss:$2 sm:$0x7f]
  %v4280 = vadd.f32 %v4253, %v4165
  %v4281 = vadd.f32 %v4254, %v4170
  %v4282 = vadd.f32 %v4255, %v4175
  %v4283 = vadd.f32 %v4256, %v4180
  %v4284 = vadd.f32 %v4257, %v4185
  %v4285 = vadd.f32 %v4258, %v4190
  %v4286 = vadd.f32 %v4259, %v4195
  %v4287 = vadd.f32 %v4260, %v4200
  %v4288 = vadd.f32 %v4261, %v4205
  %v4289 = vadd.f32 %v4263, %v4210
  %v4290 = vadd.f32 %v4265, %v4215
  %v4291 = vadd.f32 %v4267, %v4220
  %v4292 = vadd.f32 %v4269, %v4225
  %v4293 = vadd.f32 %v4271, %v4230
  %v4294 = vadd.f32 %v4273, %v4235
  %v4295 = vadd.f32 %v4275, %v4240
  %v4296 = vadd.f32 %v4277, %v4245
  %v4297 = vadd.f32 %v4279, %v4250
  %4298 = vst [vmem:[%s268] ss:$2 sm:$0xff] %v4280
  %4299 = vst [vmem:[%s766] ss:$2 sm:$0xff] %v4281
  %4300 = vst [vmem:[%s768] ss:$2 sm:$0xff] %v4282
  %4301 = vst [vmem:[%s1702] ss:$2 sm:$0xff] %v4283
  %4302 = vst [vmem:[%s1704] ss:$2 sm:$0xff] %v4284
  %4303 = vst [vmem:[%s2428] ss:$2 sm:$0xff] %v4285
  %4304 = vst [vmem:[%s2430] ss:$2 sm:$0xff] %v4286
  %4305 = vst [vmem:[%s2432] ss:$2 sm:$0xff] %v4287
  %4306 = vst [vmem:[%s2434] ss:$2 sm:$0xff] %v4288
  %4307 = vst [vmem:[%s4262] ss:$2 sm:$0xff] %v4289
  %4308 = vst [vmem:[%s4264] ss:$2 sm:$0xff] %v4290
  %4309 = vst [vmem:[%s4266] ss:$2 sm:$0xff] %v4291
  %4310 = vst [vmem:[%s4268] ss:$2 sm:$0xff] %v4292
  %4311 = vst [vmem:[%s4270] ss:$2 sm:$0xff] %v4293
  %4312 = vst [vmem:[%s4272] ss:$2 sm:$0xff] %v4294
  %4313 = vst [vmem:[%s4274] ss:$2 sm:$0xff] %v4295
  %4314 = vst [vmem:[%s4276] ss:$2 sm:$0xff] %v4296
  %4315 = vst [vmem:[%s4278] ss:$2 sm:$0x7f] %v4297
  %v4316 = vld [vmem:[#allocation2] sm:$0xff]
  %v4317 = vld [vmem:[#allocation2 + $0x8] sm:$0xff]
  %v4318 = vld [vmem:[#allocation2 + $0x10] sm:$0xff]
  %v4319 = vld [vmem:[#allocation2 + $0x18] sm:$0xff]
  %v4320 = vld [vmem:[#allocation2 + $0x20] sm:$0xff]
  %v4321 = vld [vmem:[#allocation2 + $0x28] sm:$0xff]
  %v4322 = vld [vmem:[#allocation2 + $0x30] sm:$0xff]
  %v4323 = vld [vmem:[#allocation2 + $0x38] sm:$0xff]
  %v4324 = vld [vmem:[#allocation2 + $0x40] sm:$0xff]
  %v4325 = vld [vmem:[#allocation2 + $0x48] sm:$0xff]
  %v4326 = vld [vmem:[#allocation2 + $0x50] sm:$0xff]
  %v4327 = vld [vmem:[#allocation2 + $0x58] sm:$0xff]
  %v4328 = vld [vmem:[#allocation2 + $0x60] sm:$0xff]
  %v4329 = vld [vmem:[#allocation2 + $0x68] sm:$0xff]
  %v4330 = vld [vmem:[#allocation2 + $0x70] sm:$0xff]
  %v4331 = vld [vmem:[#allocation2 + $0x78] sm:$0xff]
  %v4332 = vld [vmem:[#allocation2 + $0x80] sm:$0xff]
  %v4333 = vld [vmem:[#allocation2 + $0x88] sm:$0xff]
  %v4334 = vld [vmem:[#allocation2 + $0x90] sm:$0xff]
  %v4335 = vld [vmem:[#allocation2 + $0x98] sm:$0xff]
  %v4336 = vld [vmem:[#allocation2 + $0xa0] sm:$0xff]
  %v4337 = vld [vmem:[#allocation2 + $0xa8] sm:$0xff]
  %v4338 = vld [vmem:[#allocation2 + $0xb0] sm:$0xff]
  %v4339 = vld [vmem:[#allocation2 + $0xb8] sm:$0xff]
  %v4340 = vld [vmem:[#allocation2 + $0xc0] sm:$0xff]
  %v4341 = vld [vmem:[#allocation2 + $0xc8] sm:$0xff]
  %v4342 = vld [vmem:[#allocation2 + $0xd0] sm:$0xff]
  %v4343 = vld [vmem:[#allocation2 + $0xd8] sm:$0xff]
  %v4344 = vld [vmem:[#allocation2 + $0xe0] sm:$0xff]
  %v4345 = vld [vmem:[#allocation2 + $0xe8] sm:$0xff]
  %v4346 = vld [vmem:[#allocation2 + $0xf0] sm:$0xff]
  %v4347 = vld [vmem:[#allocation2 + $0xf8] sm:$0xff]
  %v4348 = vld [vmem:[#allocation2 + $0x100] sm:$0xff]
  %v4349 = vld [vmem:[#allocation2 + $0x108] sm:$0xff]
  %v4350 = vld [vmem:[#allocation2 + $0x110] sm:$0xff]
  %v4351 = vld [vmem:[#allocation2 + $0x118] sm:$0x7f]
  %v4352 = vadd.f32 %v4316, %v279
  %v4353 = vadd.f32 %v4317, %v279
  %v4354 = vadd.f32 %v4318, %v279
  %v4355 = vadd.f32 %v4319, %v279
  %v4356 = vadd.f32 %v4320, %v279
  %v4357 = vadd.f32 %v4321, %v279
  %v4358 = vadd.f32 %v4322, %v279
  %v4359 = vadd.f32 %v4323, %v279
  %v4360 = vadd.f32 %v4324, %v279
  %v4361 = vadd.f32 %v4325, %v279
  %v4362 = vadd.f32 %v4326, %v279
  %v4363 = vadd.f32 %v4327, %v279
  %v4364 = vadd.f32 %v4328, %v279
  %v4365 = vadd.f32 %v4329, %v279
  %v4366 = vadd.f32 %v4330, %v279
  %v4367 = vadd.f32 %v4331, %v279
  %v4368 = vadd.f32 %v4332, %v279
  %v4369 = vadd.f32 %v4333, %v279
  %v4370 = vadd.f32 %v4334, %v279
  %v4371 = vadd.f32 %v4335, %v279
  %v4372 = vadd.f32 %v4336, %v279
  %v4373 = vadd.f32 %v4337, %v279
  %v4374 = vadd.f32 %v4338, %v279
  %v4375 = vadd.f32 %v4339, %v279
  %v4376 = vadd.f32 %v4340, %v279
  %v4377 = vadd.f32 %v4341, %v279
  %v4378 = vadd.f32 %v4342, %v279
  %v4379 = vadd.f32 %v4343, %v279
  %v4380 = vadd.f32 %v4344, %v279
  %v4381 = vadd.f32 %v4345, %v279
  %v4382 = vadd.f32 %v4346, %v279
  %v4383 = vadd.f32 %v4347, %v279
  %v4384 = vadd.f32 %v4348, %v279
  %v4385 = vadd.f32 %v4349, %v279
  %v4386 = vadd.f32 %v4350, %v279
  %v4387 = vadd.f32 %v4351, %v279
  %v4388 = vsel %vm38, %v4352, 0.0
  %v4389 = vsel %vm38, %v4353, 0.0
  %v4390 = vadd.f32 %v4388, %v4389
  %v4391 = vsel %vm38, %v4354, 0.0
  %v4392 = vadd.f32 %v4390, %v4391
  %v4393 = vsel %vm38, %v4355, 0.0
  %v4394 = vadd.f32 %v4392, %v4393
  %v4395 = vsel %vm38, %v4356, 0.0
  %v4396 = vadd.f32 %v4394, %v4395
  %v4397 = vsel %vm38, %v4357, 0.0
  %v4398 = vadd.f32 %v4396, %v4397
  %v4399 = vsel %vm38, %v4358, 0.0
  %v4400 = vadd.f32 %v4398, %v4399
  %v4401 = vsel %vm38, %v4359, 0.0
  %v4402 = vadd.f32 %v4400, %v4401
  %v4403 = vsel %vm38, %v4360, 0.0
  %v4404 = vadd.f32 %v4402, %v4403
  %v4405 = vsel %vm38, %v4361, 0.0
  %v4406 = vadd.f32 %v4404, %v4405
  %v4407 = vsel %vm38, %v4362, 0.0
  %v4408 = vadd.f32 %v4406, %v4407
  %v4409 = vsel %vm38, %v4363, 0.0
  %v4410 = vadd.f32 %v4408, %v4409
  %v4411 = vsel %vm38, %v4364, 0.0
  %v4412 = vadd.f32 %v4410, %v4411
  %v4413 = vsel %vm38, %v4365, 0.0
  %v4414 = vadd.f32 %v4412, %v4413
  %v4415 = vsel %vm38, %v4366, 0.0
  %v4416 = vadd.f32 %v4414, %v4415
  %v4417 = vsel %vm38, %v4367, 0.0
  %v4418 = vadd.f32 %v4416, %v4417
  %v4419 = vsel %vm38, %v4368, 0.0
  %v4420 = vadd.f32 %v4418, %v4419
  %v4421 = vsel %vm38, %v4369, 0.0
  %v4422 = vadd.f32 %v4420, %v4421
  %v4423 = vsel %vm38, %v4370, 0.0
  %v4424 = vadd.f32 %v4422, %v4423
  %v4425 = vsel %vm38, %v4371, 0.0
  %v4426 = vadd.f32 %v4424, %v4425
  %v4427 = vsel %vm38, %v4372, 0.0
  %v4428 = vadd.f32 %v4426, %v4427
  %v4429 = vsel %vm38, %v4373, 0.0
  %v4430 = vadd.f32 %v4428, %v4429
  %v4431 = vsel %vm38, %v4374, 0.0
  %v4432 = vadd.f32 %v4430, %v4431
  %v4433 = vsel %vm38, %v4375, 0.0
  %v4434 = vadd.f32 %v4432, %v4433
  %v4435 = vsel %vm38, %v4376, 0.0
  %v4436 = vadd.f32 %v4434, %v4435
  %v4437 = vsel %vm38, %v4377, 0.0
  %v4438 = vadd.f32 %v4436, %v4437
  %v4439 = vsel %vm38, %v4378, 0.0
  %v4440 = vadd.f32 %v4438, %v4439
  %v4441 = vsel %vm38, %v4379, 0.0
  %v4442 = vadd.f32 %v4440, %v4441
  %v4443 = vsel %vm38, %v4380, 0.0
  %v4444 = vadd.f32 %v4442, %v4443
  %v4445 = vsel %vm38, %v4381, 0.0
  %v4446 = vadd.f32 %v4444, %v4445
  %v4447 = vsel %vm38, %v4382, 0.0
  %v4448 = vadd.f32 %v4446, %v4447
  %v4449 = vsel %vm38, %v4383, 0.0
  %v4450 = vadd.f32 %v4448, %v4449
  %v4451 = vsel %vm38, %v4384, 0.0
  %v4452 = vadd.f32 %v4450, %v4451
  %v4453 = vsel %vm38, %v4385, 0.0
  %v4454 = vadd.f32 %v4452, %v4453
  %v4455 = vsel %vm38, %v4386, 0.0
  %v4456 = vadd.f32 %v4454, %v4455
  %v4457 = vsel %vm1390, %v4387, 0.0
  %v4458 = vadd.f32 %v4456, %v4457
  %v4459 = vrot.slane %v4458, 4
  %v4460 = vadd.f32 %v4458, %v4459
  %v4461 = vrot.slane %v4460, 2
  %v4462 = vadd.f32 %v4460, %v4461
  %v4463 = vrot.slane %v4462, 1
  %v4464 = vadd.f32 %v4462, %v4463
  %v4465 = vmul.f32 %v4352, %v4352
  %v4466 = vmul.f32 %v4353, %v4353
  %v4467 = vmul.f32 %v4354, %v4354
  %v4468 = vmul.f32 %v4355, %v4355
  %v4469 = vmul.f32 %v4356, %v4356
  %v4470 = vmul.f32 %v4357, %v4357
  %v4471 = vmul.f32 %v4358, %v4358
  %v4472 = vmul.f32 %v4359, %v4359
  %v4473 = vmul.f32 %v4360, %v4360
  %v4474 = vmul.f32 %v4361, %v4361
  %v4475 = vmul.f32 %v4362, %v4362
  %v4476 = vmul.f32 %v4363, %v4363
  %v4477 = vmul.f32 %v4364, %v4364
  %v4478 = vmul.f32 %v4365, %v4365
  %v4479 = vmul.f32 %v4366, %v4366
  %v4480 = vmul.f32 %v4367, %v4367
  %v4481 = vmul.f32 %v4368, %v4368
  %v4482 = vmul.f32 %v4369, %v4369
  %v4483 = vmul.f32 %v4370, %v4370
  %v4484 = vmul.f32 %v4371, %v4371
  %v4485 = vmul.f32 %v4372, %v4372
  %v4486 = vmul.f32 %v4373, %v4373
  %v4487 = vmul.f32 %v4374, %v4374
  %v4488 = vmul.f32 %v4375, %v4375
  %v4489 = vmul.f32 %v4376, %v4376
  %v4490 = vmul.f32 %v4377, %v4377
  %v4491 = vmul.f32 %v4378, %v4378
  %v4492 = vmul.f32 %v4379, %v4379
  %v4493 = vmul.f32 %v4380, %v4380
  %v4494 = vmul.f32 %v4381, %v4381
  %v4495 = vmul.f32 %v4382, %v4382
  %v4496 = vmul.f32 %v4383, %v4383
  %v4497 = vmul.f32 %v4384, %v4384
  %v4498 = vmul.f32 %v4385, %v4385
  %v4499 = vmul.f32 %v4386, %v4386
  %v4500 = vmul.f32 %v4387, %v4387
  %v4501 = vsel %vm38, %v4465, 0.0
  %v4502 = vsel %vm38, %v4466, 0.0
  %v4503 = vadd.f32 %v4501, %v4502
  %v4504 = vsel %vm38, %v4467, 0.0
  %v4505 = vadd.f32 %v4503, %v4504
  %v4506 = vsel %vm38, %v4468, 0.0
  %v4507 = vadd.f32 %v4505, %v4506
  %v4508 = vsel %vm38, %v4469, 0.0
  %v4509 = vadd.f32 %v4507, %v4508
  %v4510 = vsel %vm38, %v4470, 0.0
  %v4511 = vadd.f32 %v4509, %v4510
  %v4512 = vsel %vm38, %v4471, 0.0
  %v4513 = vadd.f32 %v4511, %v4512
  %v4514 = vsel %vm38, %v4472, 0.0
  %v4515 = vadd.f32 %v4513, %v4514
  %v4516 = vsel %vm38, %v4473, 0.0
  %v4517 = vadd.f32 %v4515, %v4516
  %v4518 = vsel %vm38, %v4474, 0.0
  %v4519 = vadd.f32 %v4517, %v4518
  %v4520 = vsel %vm38, %v4475, 0.0
  %v4521 = vadd.f32 %v4519, %v4520
  %v4522 = vsel %vm38, %v4476, 0.0
  %v4523 = vadd.f32 %v4521, %v4522
  %v4524 = vsel %vm38, %v4477, 0.0
  %v4525 = vadd.f32 %v4523, %v4524
  %v4526 = vsel %vm38, %v4478, 0.0
  %v4527 = vadd.f32 %v4525, %v4526
  %v4528 = vsel %vm38, %v4479, 0.0
  %v4529 = vadd.f32 %v4527, %v4528
  %v4530 = vsel %vm38, %v4480, 0.0
  %v4531 = vadd.f32 %v4529, %v4530
  %v4532 = vsel %vm38, %v4481, 0.0
  %v4533 = vadd.f32 %v4531, %v4532
  %v4534 = vsel %vm38, %v4482, 0.0
  %v4535 = vadd.f32 %v4533, %v4534
  %v4536 = vsel %vm38, %v4483, 0.0
  %v4537 = vadd.f32 %v4535, %v4536
  %v4538 = vsel %vm38, %v4484, 0.0
  %v4539 = vadd.f32 %v4537, %v4538
  %v4540 = vsel %vm38, %v4485, 0.0
  %v4541 = vadd.f32 %v4539, %v4540
  %v4542 = vsel %vm38, %v4486, 0.0
  %v4543 = vadd.f32 %v4541, %v4542
  %v4544 = vsel %vm38, %v4487, 0.0
  %v4545 = vadd.f32 %v4543, %v4544
  %v4546 = vsel %vm38, %v4488, 0.0
  %v4547 = vadd.f32 %v4545, %v4546
  %v4548 = vsel %vm38, %v4489, 0.0
  %v4549 = vadd.f32 %v4547, %v4548
  %v4550 = vsel %vm38, %v4490, 0.0
  %v4551 = vadd.f32 %v4549, %v4550
  %v4552 = vsel %vm38, %v4491, 0.0
  %v4553 = vadd.f32 %v4551, %v4552
  %v4554 = vsel %vm38, %v4492, 0.0
  %v4555 = vadd.f32 %v4553, %v4554
  %v4556 = vsel %vm38, %v4493, 0.0
  %v4557 = vadd.f32 %v4555, %v4556
  %v4558 = vsel %vm38, %v4494, 0.0
  %v4559 = vadd.f32 %v4557, %v4558
  %v4560 = vsel %vm38, %v4495, 0.0
  %v4561 = vadd.f32 %v4559, %v4560
  %v4562 = vsel %vm38, %v4496, 0.0
  %v4563 = vadd.f32 %v4561, %v4562
  %v4564 = vsel %vm38, %v4497, 0.0
  %v4565 = vadd.f32 %v4563, %v4564
  %v4566 = vsel %vm38, %v4498, 0.0
  %v4567 = vadd.f32 %v4565, %v4566
  %v4568 = vsel %vm38, %v4499, 0.0
  %v4569 = vadd.f32 %v4567, %v4568
  %v4570 = vsel %vm1390, %v4500, 0.0
  %v4571 = vadd.f32 %v4569, %v4570
  %v4572 = vrot.slane %v4571, 4
  %v4573 = vadd.f32 %v4571, %v4572
  %v4574 = vrot.slane %v4573, 2
  %v4575 = vadd.f32 %v4573, %v4574
  %v4576 = vrot.slane %v4575, 1
  %v4577 = vadd.f32 %v4575, %v4576
  %v4579 = vsel %vm38, %v4464, 0
  %4581 = vmatprep.subr.mxu0 0.0
  %4582 = vmatpush1.msra.mxu0 %v32
  %4583 = vmatprep.subr.mxu0 0.0
  %4584 = vmatpush1.msra.mxu0 0.0
  %4585 = vmatprep.subr.mxu0 0.0
  %4586 = vmatpush1.msra.mxu0 0.0
  %4587 = vmatprep.subr.mxu0 0.0
  %4588 = vmatpush1.msra.mxu0 0.0
  %4589 = vmatprep.subr.mxu0 0.0
  %4590 = vmatpush1.msra.mxu0 0.0
  %4591 = vmatprep.subr.mxu0 0.0
  %4592 = vmatpush1.msra.mxu0 0.0
  %4593 = vmatprep.subr.mxu0 0.0
  %4594 = vmatpush1.msra.mxu0 0.0
  %4595 = vmatprep.subr.mxu0 0.0
  %4596 = vmatpush1.msra.mxu0 0.0
  %4597 = vmatprep.subr.mxu0 0.0
  %4598 = vmatpush1.msra.mxu0 0.0
  %4599 = vmatprep.subr.mxu0 0.0
  %4600 = vmatpush1.msra.mxu0 0.0
  %4601 = vmatprep.subr.mxu0 0.0
  %4602 = vmatpush1.msra.mxu0 0.0
  %4603 = vmatprep.subr.mxu0 0.0
  %4604 = vmatpush1.msra.mxu0 0.0
  %4605 = vmatprep.subr.mxu0 0.0
  %4606 = vmatpush1.msra.mxu0 0.0
  %4607 = vmatprep.subr.mxu0 0.0
  %4608 = vmatpush1.msra.mxu0 0.0
  %4609 = vmatprep.subr.mxu0 0.0
  %4610 = vmatpush1.msra.mxu0 0.0
  %4611 = vmatprep.subr.mxu0 0.0
  %4612 = vmatpush1.msra.mxu0 0.0
  %4613 = vmatprep.subr.mxu0 0.0
  %4614 = vmatpush1.msra.mxu0 0.0
  %4615 = vmatprep.subr.mxu0 0.0
  %4616 = vmatpush1.msra.mxu0 0.0
  %4617 = vmatprep.subr.mxu0 0.0
  %4618 = vmatpush1.msra.mxu0 0.0
  %4619 = vmatprep.subr.mxu0 0.0
  %4620 = vmatpush1.msra.mxu0 0.0
  %4621 = vmatprep.subr.mxu0 0.0
  %4622 = vmatpush1.msra.mxu0 0.0
  %4623 = vmatprep.subr.mxu0 0.0
  %4624 = vmatpush1.msra.mxu0 0.0
  %4625 = vmatprep.subr.mxu0 0.0
  %4626 = vmatpush1.msra.mxu0 0.0
  %4627 = vmatprep.subr.mxu0 0.0
  %4628 = vmatpush1.msra.mxu0 0.0
  %4629 = vmatprep.subr.mxu0 0.0
  %4630 = vmatpush1.msra.mxu0 0.0
  %4631 = vmatprep.subr.mxu0 0.0
  %4632 = vmatpush1.msra.mxu0 0.0
  %4633 = vmatprep.subr.mxu0 0.0
  %4634 = vmatpush1.msra.mxu0 0.0
  %4635 = vmatprep.subr.mxu0 0.0
  %4636 = vmatpush1.msra.mxu0 0.0
  %4637 = vmatprep.subr.mxu0 0.0
  %4638 = vmatpush1.msra.mxu0 0.0
  %4639 = vmatprep.subr.mxu0 0.0
  %4640 = vmatpush1.msra.mxu0 0.0
  %4641 = vmatprep.subr.mxu0 0.0
  %4642 = vmatpush1.msra.mxu0 0.0
  %4643 = vmatprep.subr.mxu0 0.0
  %4644 = vmatpush1.msra.mxu0 0.0
  %4645 = vmatprep.mubr.f32.mxu0 0.0
  %4646 = vmatmul.mubr.f32.gmra.mrb[0].mxu0 %v4579
  %v4647 = vpop.f32.mrb[0].mxu0
  %v4648 = vadd.f32 0.0, %v4647
  %v4649 = vpop.f32.mrb[0].mxu0
  %4650 = vdwg.mxu0
  %v4652 = vsel %vm38, %v4577, 0
  %4654 = vmatprep.subr.mxu0 0.0
  %4655 = vmatpush1.msra.mxu0 %v32
  %4656 = vmatprep.subr.mxu0 0.0
  %4657 = vmatpush1.msra.mxu0 0.0
  %4658 = vmatprep.subr.mxu0 0.0
  %4659 = vmatpush1.msra.mxu0 0.0
  %4660 = vmatprep.subr.mxu0 0.0
  %4661 = vmatpush1.msra.mxu0 0.0
  %4662 = vmatprep.subr.mxu0 0.0
  %4663 = vmatpush1.msra.mxu0 0.0
  %4664 = vmatprep.subr.mxu0 0.0
  %4665 = vmatpush1.msra.mxu0 0.0
  %4666 = vmatprep.subr.mxu0 0.0
  %4667 = vmatpush1.msra.mxu0 0.0
  %4668 = vmatprep.subr.mxu0 0.0
  %4669 = vmatpush1.msra.mxu0 0.0
  %4670 = vmatprep.subr.mxu0 0.0
  %4671 = vmatpush1.msra.mxu0 0.0
  %4672 = vmatprep.subr.mxu0 0.0
  %4673 = vmatpush1.msra.mxu0 0.0
  %4674 = vmatprep.subr.mxu0 0.0
  %4675 = vmatpush1.msra.mxu0 0.0
  %4676 = vmatprep.subr.mxu0 0.0
  %4677 = vmatpush1.msra.mxu0 0.0
  %4678 = vmatprep.subr.mxu0 0.0
  %4679 = vmatpush1.msra.mxu0 0.0
  %4680 = vmatprep.subr.mxu0 0.0
  %4681 = vmatpush1.msra.mxu0 0.0
  %4682 = vmatprep.subr.mxu0 0.0
  %4683 = vmatpush1.msra.mxu0 0.0
  %4684 = vmatprep.subr.mxu0 0.0
  %4685 = vmatpush1.msra.mxu0 0.0
  %4686 = vmatprep.subr.mxu0 0.0
  %4687 = vmatpush1.msra.mxu0 0.0
  %4688 = vmatprep.subr.mxu0 0.0
  %4689 = vmatpush1.msra.mxu0 0.0
  %4690 = vmatprep.subr.mxu0 0.0
  %4691 = vmatpush1.msra.mxu0 0.0
  %4692 = vmatprep.subr.mxu0 0.0
  %4693 = vmatpush1.msra.mxu0 0.0
  %4694 = vmatprep.subr.mxu0 0.0
  %4695 = vmatpush1.msra.mxu0 0.0
  %4696 = vmatprep.subr.mxu0 0.0
  %4697 = vmatpush1.msra.mxu0 0.0
  %4698 = vmatprep.subr.mxu0 0.0
  %4699 = vmatpush1.msra.mxu0 0.0
  %4700 = vmatprep.subr.mxu0 0.0
  %4701 = vmatpush1.msra.mxu0 0.0
  %4702 = vmatprep.subr.mxu0 0.0
  %4703 = vmatpush1.msra.mxu0 0.0
  %4704 = vmatprep.subr.mxu0 0.0
  %4705 = vmatpush1.msra.mxu0 0.0
  %4706 = vmatprep.subr.mxu0 0.0
  %4707 = vmatpush1.msra.mxu0 0.0
  %4708 = vmatprep.subr.mxu0 0.0
  %4709 = vmatpush1.msra.mxu0 0.0
  %4710 = vmatprep.subr.mxu0 0.0
  %4711 = vmatpush1.msra.mxu0 0.0
  %4712 = vmatprep.subr.mxu0 0.0
  %4713 = vmatpush1.msra.mxu0 0.0
  %4714 = vmatprep.subr.mxu0 0.0
  %4715 = vmatpush1.msra.mxu0 0.0
  %4716 = vmatprep.subr.mxu0 0.0
  %4717 = vmatpush1.msra.mxu0 0.0
  %4718 = vmatprep.mubr.f32.mxu0 0.0
  %4719 = vmatmul.mubr.f32.gmra.mrb[0].mxu0 %v4652
  %v4720 = vpop.f32.mrb[0].mxu0
  %v4721 = vadd.f32 0.0, %v4720
  %v4722 = vpop.f32.mrb[0].mxu0
  %4723 = vdwg.mxu0
  %v4724 = vmul.f32 %v4648, 0.0017421603
  %v4725 = vmul.f32 %v4721, 0.0017421603
  %v4726 = vmul.f32 %v4724, %v4724
  %v4727 = vsub.f32 %v4725, %v4726
  %v4728 = vadd.f32 %v4727, 1e-05
  %v4729 = vrsqrt.pop %v4728
  %v4730 = vmul.f32 %v34, %v4729
  %v4731 = vmul.f32 %v4724, %v4730
  %v4732 = vsub.f32 %v35, %v4731
  %v4734 = vlaneseq
  %v4735 = vshrl.u32 %v4734, 7
  %v4736 = vsub.s32 0, %v4735
  %v4737 = vrot.slane %v4730, %v4736
  %v4739 = vmul.f32 %v4352, %v4737
  %v4740 = vmul.f32 %v4353, %v4737
  %v4741 = vmul.f32 %v4354, %v4737
  %v4742 = vmul.f32 %v4355, %v4737
  %v4743 = vmul.f32 %v4356, %v4737
  %v4744 = vmul.f32 %v4357, %v4737
  %v4745 = vmul.f32 %v4358, %v4737
  %v4746 = vmul.f32 %v4359, %v4737
  %v4747 = vmul.f32 %v4360, %v4737
  %v4748 = vmul.f32 %v4361, %v4737
  %v4749 = vmul.f32 %v4362, %v4737
  %v4750 = vmul.f32 %v4363, %v4737
  %v4751 = vmul.f32 %v4364, %v4737
  %v4752 = vmul.f32 %v4365, %v4737
  %v4753 = vmul.f32 %v4366, %v4737
  %v4754 = vmul.f32 %v4367, %v4737
  %v4755 = vmul.f32 %v4368, %v4737
  %v4756 = vmul.f32 %v4369, %v4737
  %v4757 = vmul.f32 %v4370, %v4737
  %v4758 = vmul.f32 %v4371, %v4737
  %v4759 = vmul.f32 %v4372, %v4737
  %v4760 = vmul.f32 %v4373, %v4737
  %v4761 = vmul.f32 %v4374, %v4737
  %v4762 = vmul.f32 %v4375, %v4737
  %v4763 = vmul.f32 %v4376, %v4737
  %v4764 = vmul.f32 %v4377, %v4737
  %v4765 = vmul.f32 %v4378, %v4737
  %v4766 = vmul.f32 %v4379, %v4737
  %v4767 = vmul.f32 %v4380, %v4737
  %v4768 = vmul.f32 %v4381, %v4737
  %v4769 = vmul.f32 %v4382, %v4737
  %v4770 = vmul.f32 %v4383, %v4737
  %v4771 = vmul.f32 %v4384, %v4737
  %v4772 = vmul.f32 %v4385, %v4737
  %v4773 = vmul.f32 %v4386, %v4737
  %v4774 = vmul.f32 %v4387, %v4737
  %v4776 = vlaneseq
  %v4777 = vshrl.u32 %v4776, 7
  %v4778 = vsub.s32 0, %v4777
  %v4779 = vrot.slane %v4732, %v4778
  %v4781 = vadd.f32 %v4739, %v4779
  %v4782 = vadd.f32 %v4740, %v4779
  %v4783 = vadd.f32 %v4741, %v4779
  %v4784 = vadd.f32 %v4742, %v4779
  %v4785 = vadd.f32 %v4743, %v4779
  %v4786 = vadd.f32 %v4744, %v4779
  %v4787 = vadd.f32 %v4745, %v4779
  %v4788 = vadd.f32 %v4746, %v4779
  %v4789 = vadd.f32 %v4747, %v4779
  %v4790 = vadd.f32 %v4748, %v4779
  %v4791 = vadd.f32 %v4749, %v4779
  %v4792 = vadd.f32 %v4750, %v4779
  %v4793 = vadd.f32 %v4751, %v4779
  %v4794 = vadd.f32 %v4752, %v4779
  %v4795 = vadd.f32 %v4753, %v4779
  %v4796 = vadd.f32 %v4754, %v4779
  %v4797 = vadd.f32 %v4755, %v4779
  %v4798 = vadd.f32 %v4756, %v4779
  %v4799 = vadd.f32 %v4757, %v4779
  %v4800 = vadd.f32 %v4758, %v4779
  %v4801 = vadd.f32 %v4759, %v4779
  %v4802 = vadd.f32 %v4760, %v4779
  %v4803 = vadd.f32 %v4761, %v4779
  %v4804 = vadd.f32 %v4762, %v4779
  %v4805 = vadd.f32 %v4763, %v4779
  %v4806 = vadd.f32 %v4764, %v4779
  %v4807 = vadd.f32 %v4765, %v4779
  %v4808 = vadd.f32 %v4766, %v4779
  %v4809 = vadd.f32 %v4767, %v4779
  %v4810 = vadd.f32 %v4768, %v4779
  %v4811 = vadd.f32 %v4769, %v4779
  %v4812 = vadd.f32 %v4770, %v4779
  %v4813 = vadd.f32 %v4771, %v4779
  %v4814 = vadd.f32 %v4772, %v4779
  %v4815 = vadd.f32 %v4773, %v4779
  %v4816 = vadd.f32 %v4774, %v4779
  %v4817 = vmax.f32 %v4781, 0.0
  %v4818 = vmax.f32 %v4782, 0.0
  %v4819 = vmax.f32 %v4783, 0.0
  %v4820 = vmax.f32 %v4784, 0.0
  %v4821 = vmax.f32 %v4785, 0.0
  %v4822 = vmax.f32 %v4786, 0.0
  %v4823 = vmax.f32 %v4787, 0.0
  %v4824 = vmax.f32 %v4788, 0.0
  %v4825 = vmax.f32 %v4789, 0.0
  %v4826 = vmax.f32 %v4790, 0.0
  %v4827 = vmax.f32 %v4791, 0.0
  %v4828 = vmax.f32 %v4792, 0.0
  %v4829 = vmax.f32 %v4793, 0.0
  %v4830 = vmax.f32 %v4794, 0.0
  %v4831 = vmax.f32 %v4795, 0.0
  %v4832 = vmax.f32 %v4796, 0.0
  %v4833 = vmax.f32 %v4797, 0.0
  %v4834 = vmax.f32 %v4798, 0.0
  %v4835 = vmax.f32 %v4799, 0.0
  %v4836 = vmax.f32 %v4800, 0.0
  %v4837 = vmax.f32 %v4801, 0.0
  %v4838 = vmax.f32 %v4802, 0.0
  %v4839 = vmax.f32 %v4803, 0.0
  %v4840 = vmax.f32 %v4804, 0.0
  %v4841 = vmax.f32 %v4805, 0.0
  %v4842 = vmax.f32 %v4806, 0.0
  %v4843 = vmax.f32 %v4807, 0.0
  %v4844 = vmax.f32 %v4808, 0.0
  %v4845 = vmax.f32 %v4809, 0.0
  %v4846 = vmax.f32 %v4810, 0.0
  %v4847 = vmax.f32 %v4811, 0.0
  %v4848 = vmax.f32 %v4812, 0.0
  %v4849 = vmax.f32 %v4813, 0.0
  %v4850 = vmax.f32 %v4814, 0.0
  %v4851 = vmax.f32 %v4815, 0.0
  %v4852 = vmax.f32 %v4816, 0.0
  %4853 = vst.msk [vmem:[#allocation2] sm:$0xff] %vm38, 0.0
  %4854 = vst.msk [vmem:[#allocation2 + $0x8] sm:$0xff] %vm38, 0.0
  %4855 = vst.msk [vmem:[#allocation2 + $0x10] sm:$0xff] %vm38, 0.0
  %4856 = vst.msk [vmem:[#allocation2 + $0x18] sm:$0xff] %vm38, 0.0
  %4857 = vst.msk [vmem:[#allocation2 + $0x20] sm:$0xff] %vm38, 0.0
  %4858 = vst.msk [vmem:[#allocation2 + $0x28] sm:$0xff] %vm38, 0.0
  %4859 = vst.msk [vmem:[#allocation2 + $0x30] sm:$0xff] %vm38, 0.0
  %4860 = vst.msk [vmem:[#allocation2 + $0x38] sm:$0xff] %vm38, 0.0
  %4861 = vst.msk [vmem:[#allocation2 + $0x40] sm:$0xff] %vm38, 0.0
  %4862 = vst.msk [vmem:[#allocation2 + $0x48] sm:$0xff] %vm38, 0.0
  %4863 = vst.msk [vmem:[#allocation2 + $0x50] sm:$0xff] %vm38, 0.0
  %4864 = vst.msk [vmem:[#allocation2 + $0x58] sm:$0xff] %vm38, 0.0
  %4865 = vst.msk [vmem:[#allocation2 + $0x60] sm:$0xff] %vm38, 0.0
  %4866 = vst.msk [vmem:[#allocation2 + $0x68] sm:$0xff] %vm38, 0.0
  %4867 = vst.msk [vmem:[#allocation2 + $0x70] sm:$0xff] %vm38, 0.0
  %4868 = vst.msk [vmem:[#allocation2 + $0x78] sm:$0xff] %vm38, 0.0
  %4869 = vst.msk [vmem:[#allocation2 + $0x80] sm:$0xff] %vm38, 0.0
  %4870 = vst.msk [vmem:[#allocation2 + $0x88] sm:$0xff] %vm38, 0.0
  %4871 = vst.msk [vmem:[#allocation2 + $0x90] sm:$0xff] %vm38, 0.0
  %4872 = vst.msk [vmem:[#allocation2 + $0x98] sm:$0xff] %vm38, 0.0
  %4873 = vst.msk [vmem:[#allocation2 + $0xa0] sm:$0xff] %vm38, 0.0
  %4874 = vst.msk [vmem:[#allocation2 + $0xa8] sm:$0xff] %vm38, 0.0
  %4875 = vst.msk [vmem:[#allocation2 + $0xb0] sm:$0xff] %vm38, 0.0
  %4876 = vst.msk [vmem:[#allocation2 + $0xb8] sm:$0xff] %vm38, 0.0
  %4877 = vst.msk [vmem:[#allocation2 + $0xc0] sm:$0xff] %vm38, 0.0
  %4878 = vst.msk [vmem:[#allocation2 + $0xc8] sm:$0xff] %vm38, 0.0
  %4879 = vst.msk [vmem:[#allocation2 + $0xd0] sm:$0xff] %vm38, 0.0
  %4880 = vst.msk [vmem:[#allocation2 + $0xd8] sm:$0xff] %vm38, 0.0
  %4881 = vst.msk [vmem:[#allocation2 + $0xe0] sm:$0xff] %vm38, 0.0
  %4882 = vst.msk [vmem:[#allocation2 + $0xe8] sm:$0xff] %vm38, 0.0
  %4883 = vst.msk [vmem:[#allocation2 + $0xf0] sm:$0xff] %vm38, 0.0
  %4884 = vst.msk [vmem:[#allocation2 + $0xf8] sm:$0xff] %vm38, 0.0
  %4885 = vst.msk [vmem:[#allocation2 + $0x100] sm:$0xff] %vm38, 0.0
  %4886 = vst.msk [vmem:[#allocation2 + $0x108] sm:$0xff] %vm38, 0.0
  %4887 = vst.msk [vmem:[#allocation2 + $0x110] sm:$0xff] %vm38, 0.0
  %4888 = vst.msk [vmem:[#allocation2 + $0x118] sm:$0xff] %vm38, 0.0
  %4889 = vst.msk [vmem:[#allocation2 + $0x120] sm:$0xff] %vm38, 0.0
  %4890 = vst.msk [vmem:[#allocation2 + $0x128] sm:$0xff] %vm38, 0.0
  %4891 = vst.msk [vmem:[#allocation2 + $0x130] sm:$0xff] %vm38, 0.0
  %4892 = vst.msk [vmem:[#allocation2 + $0x138] sm:$0xff] %vm38, 0.0
  %4893 = vst.msk [vmem:[#allocation2 + $0x140] sm:$0xff] %vm38, 0.0
  %4894 = vst.msk [vmem:[#allocation2 + $0x148] sm:$0xff] %vm38, 0.0
  %4895 = vst.msk [vmem:[#allocation2 + $0x150] sm:$0xff] %vm38, 0.0
  %4896 = vst.msk [vmem:[#allocation2 + $0x158] sm:$0xff] %vm38, 0.0
  %4897 = vst.msk [vmem:[#allocation2 + $0x160] sm:$0xff] %vm38, 0.0
  %4898 = vst.msk [vmem:[#allocation2 + $0x168] sm:$0xff] %vm38, 0.0
  %4899 = vst.msk [vmem:[#allocation2 + $0x170] sm:$0xff] %vm38, 0.0
  %4900 = vst.msk [vmem:[#allocation2 + $0x178] sm:$0xff] %vm38, 0.0
  %4901 = vst.msk [vmem:[#allocation2 + $0x180] sm:$0xff] %vm38, 0.0
  %4902 = vst.msk [vmem:[#allocation2 + $0x188] sm:$0xff] %vm38, 0.0
  %4903 = vst.msk [vmem:[#allocation2 + $0x190] sm:$0xff] %vm38, 0.0
  %4904 = vst.msk [vmem:[#allocation2 + $0x198] sm:$0xff] %vm38, 0.0
  %4905 = vst.msk [vmem:[#allocation2 + $0x1a0] sm:$0xff] %vm38, 0.0
  %4906 = vst.msk [vmem:[#allocation2 + $0x1a8] sm:$0xff] %vm38, 0.0
  %4907 = vst.msk [vmem:[#allocation2 + $0x1b0] sm:$0xff] %vm38, 0.0
  %4908 = vst.msk [vmem:[#allocation2 + $0x1b8] sm:$0xff] %vm38, 0.0
  %4909 = vst.msk [vmem:[#allocation2 + $0x1c0] sm:$0xff] %vm38, 0.0
  %4910 = vst.msk [vmem:[#allocation2 + $0x1c8] sm:$0xff] %vm38, 0.0
  %4911 = vst.msk [vmem:[#allocation2 + $0x1d0] sm:$0xff] %vm38, 0.0
  %4912 = vst.msk [vmem:[#allocation2 + $0x1d8] sm:$0xff] %vm38, 0.0
  %4913 = vst.msk [vmem:[#allocation2 + $0x1e0] sm:$0xff] %vm38, 0.0
  %4914 = vst.msk [vmem:[#allocation2 + $0x1e8] sm:$0xff] %vm38, 0.0
  %4915 = vst.msk [vmem:[#allocation2 + $0x1f0] sm:$0xff] %vm38, 0.0
  %4916 = vst.msk [vmem:[#allocation2 + $0x1f8] sm:$0xff] %vm38, 0.0
  %4917 = vst.msk [vmem:[#allocation2 + $0x200] sm:$0xff] %vm38, 0.0
  %4918 = vst.msk [vmem:[#allocation2 + $0x208] sm:$0xff] %vm38, 0.0
  %4919 = vst.msk [vmem:[#allocation2 + $0x210] sm:$0xff] %vm38, 0.0
  %4920 = vst.msk [vmem:[#allocation2 + $0x218] sm:$0xff] %vm38, 0.0
  %4921 = vst.msk [vmem:[#allocation2 + $0x220] sm:$0xff] %vm38, 0.0
  %4922 = vst.msk [vmem:[#allocation2 + $0x228] sm:$0xff] %vm38, 0.0
  %4923 = vst.msk [vmem:[#allocation2 + $0x230] sm:$0xff] %vm38, 0.0
  %4924 = vst.msk [vmem:[#allocation2 + $0x238] sm:$0x7f] %vm1390, 0.0
  %v4925 = vld [vmem:[%s1] sm:$0xff]
  %v4927 = vsel %vm38, %v4817, 0
  %v4930 = vsel %vm38, %v4818, 0
  %v4933 = vsel %vm38, %v4819, 0
  %v4936 = vsel %vm38, %v4820, 0
  %v4939 = vsel %vm38, %v4821, 0
  %v4942 = vsel %vm38, %v4822, 0
  %v4945 = vsel %vm38, %v4823, 0
  %v4948 = vsel %vm38, %v4824, 0
  %v4951 = vsel %vm38, %v4825, 0
  %v4954 = vsel %vm38, %v4826, 0
  %v4957 = vsel %vm38, %v4827, 0
  %v4960 = vsel %vm38, %v4828, 0
  %v4963 = vsel %vm38, %v4829, 0
  %v4966 = vsel %vm38, %v4830, 0
  %v4969 = vsel %vm38, %v4831, 0
  %v4972 = vsel %vm38, %v4832, 0
  %v4975 = vsel %vm38, %v4833, 0
  %v4978 = vsel %vm38, %v4834, 0
  %v4981 = vsel %vm38, %v4835, 0
  %v4984 = vsel %vm38, %v4836, 0
  %v4987 = vsel %vm38, %v4837, 0
  %v4990 = vsel %vm38, %v4838, 0
  %v4993 = vsel %vm38, %v4839, 0
  %v4996 = vsel %vm38, %v4840, 0
  %v4999 = vsel %vm38, %v4841, 0
  %v5002 = vsel %vm38, %v4842, 0
  %v5005 = vsel %vm38, %v4843, 0
  %v5008 = vsel %vm38, %v4844, 0
  %v5011 = vsel %vm38, %v4845, 0
  %v5014 = vsel %vm38, %v4846, 0
  %v5017 = vsel %vm38, %v4847, 0
  %v5020 = vsel %vm38, %v4848, 0
  %v5023 = vsel %vm38, %v4849, 0
  %v5026 = vsel %vm38, %v4850, 0
  %v5029 = vsel %vm38, %v4851, 0
  %v5032 = vsel %vm38, %v4852, 0
  %5034 = vmatprep.subr.mxu0 0.0
  %5035 = vmatpush1.msra.mxu0 %v4925
  %5036 = vmatprep.subr.mxu0 0.0
  %5037 = vmatpush1.msra.mxu0 0.0
  %5038 = vmatprep.subr.mxu0 0.0
  %5039 = vmatpush1.msra.mxu0 0.0
  %5040 = vmatprep.subr.mxu0 0.0
  %5041 = vmatpush1.msra.mxu0 0.0
  %5042 = vmatprep.subr.mxu0 0.0
  %5043 = vmatpush1.msra.mxu0 0.0
  %5044 = vmatprep.subr.mxu0 0.0
  %5045 = vmatpush1.msra.mxu0 0.0
  %5046 = vmatprep.subr.mxu0 0.0
  %5047 = vmatpush1.msra.mxu0 0.0
  %5048 = vmatprep.subr.mxu0 0.0
  %5049 = vmatpush1.msra.mxu0 0.0
  %5050 = vmatprep.subr.mxu0 0.0
  %5051 = vmatpush1.msra.mxu0 0.0
  %5052 = vmatprep.subr.mxu0 0.0
  %5053 = vmatpush1.msra.mxu0 0.0
  %5054 = vmatprep.subr.mxu0 0.0
  %5055 = vmatpush1.msra.mxu0 0.0
  %5056 = vmatprep.subr.mxu0 0.0
  %5057 = vmatpush1.msra.mxu0 0.0
  %5058 = vmatprep.subr.mxu0 0.0
  %5059 = vmatpush1.msra.mxu0 0.0
  %5060 = vmatprep.subr.mxu0 0.0
  %5061 = vmatpush1.msra.mxu0 0.0
  %5062 = vmatprep.subr.mxu0 0.0
  %5063 = vmatpush1.msra.mxu0 0.0
  %5064 = vmatprep.subr.mxu0 0.0
  %5065 = vmatpush1.msra.mxu0 0.0
  %5066 = vmatprep.subr.mxu0 0.0
  %5067 = vmatpush1.msra.mxu0 0.0
  %5068 = vmatprep.subr.mxu0 0.0
  %5069 = vmatpush1.msra.mxu0 0.0
  %5070 = vmatprep.subr.mxu0 0.0
  %5071 = vmatpush1.msra.mxu0 0.0
  %5072 = vmatprep.subr.mxu0 0.0
  %5073 = vmatpush1.msra.mxu0 0.0
  %5074 = vmatprep.subr.mxu0 0.0
  %5075 = vmatpush1.msra.mxu0 0.0
  %5076 = vmatprep.subr.mxu0 0.0
  %5077 = vmatpush1.msra.mxu0 0.0
  %5078 = vmatprep.subr.mxu0 0.0
  %5079 = vmatpush1.msra.mxu0 0.0
  %5080 = vmatprep.subr.mxu0 0.0
  %5081 = vmatpush1.msra.mxu0 0.0
  %5082 = vmatprep.subr.mxu0 0.0
  %5083 = vmatpush1.msra.mxu0 0.0
  %5084 = vmatprep.subr.mxu0 0.0
  %5085 = vmatpush1.msra.mxu0 0.0
  %5086 = vmatprep.subr.mxu0 0.0
  %5087 = vmatpush1.msra.mxu0 0.0
  %5088 = vmatprep.subr.mxu0 0.0
  %5089 = vmatpush1.msra.mxu0 0.0
  %5090 = vmatprep.subr.mxu0 0.0
  %5091 = vmatpush1.msra.mxu0 0.0
  %5092 = vmatprep.subr.mxu0 0.0
  %5093 = vmatpush1.msra.mxu0 0.0
  %5094 = vmatprep.subr.mxu0 0.0
  %5095 = vmatpush1.msra.mxu0 0.0
  %5096 = vmatprep.subr.mxu0 0.0
  %5097 = vmatpush1.msra.mxu0 0.0
  %5098 = vmatprep.mubr.f32.mxu0 0.0
  %5099 = vmatmul.mubr.f32.gmra.mrb[0].mxu0 %v4927
  %v5100 = vpop.f32.mrb[0].mxu0
  %v5101 = vadd.f32 0.0, %v5100
  %v5102 = vpop.f32.mrb[0].mxu0
  %5103 = vmatprep.mubr.f32.mxu0 0.0
  %5104 = vmatmul.mubr.f32.gmra.mrb[0].mxu0 %v4930
  %v5105 = vpop.f32.mrb[0].mxu0
  %v5106 = vadd.f32 0.0, %v5105
  %v5107 = vpop.f32.mrb[0].mxu0
  %5108 = vmatprep.mubr.f32.mxu0 0.0
  %5109 = vmatmul.mubr.f32.gmra.mrb[0].mxu0 %v4933
  %v5110 = vpop.f32.mrb[0].mxu0
  %v5111 = vadd.f32 0.0, %v5110
  %v5112 = vpop.f32.mrb[0].mxu0
  %5113 = vmatprep.mubr.f32.mxu0 0.0
  %5114 = vmatmul.mubr.f32.gmra.mrb[0].mxu0 %v4936
  %v5115 = vpop.f32.mrb[0].mxu0
  %v5116 = vadd.f32 0.0, %v5115
  %v5117 = vpop.f32.mrb[0].mxu0
  %5118 = vmatprep.mubr.f32.mxu0 0.0
  %5119 = vmatmul.mubr.f32.gmra.mrb[0].mxu0 %v4939
  %v5120 = vpop.f32.mrb[0].mxu0
  %v5121 = vadd.f32 0.0, %v5120
  %v5122 = vpop.f32.mrb[0].mxu0
  %5123 = vmatprep.mubr.f32.mxu0 0.0
  %5124 = vmatmul.mubr.f32.gmra.mrb[0].mxu0 %v4942
  %v5125 = vpop.f32.mrb[0].mxu0
  %v5126 = vadd.f32 0.0, %v5125
  %v5127 = vpop.f32.mrb[0].mxu0
  %5128 = vmatprep.mubr.f32.mxu0 0.0
  %5129 = vmatmul.mubr.f32.gmra.mrb[0].mxu0 %v4945
  %v5130 = vpop.f32.mrb[0].mxu0
  %v5131 = vadd.f32 0.0, %v5130
  %v5132 = vpop.f32.mrb[0].mxu0
  %5133 = vmatprep.mubr.f32.mxu0 0.0
  %5134 = vmatmul.mubr.f32.gmra.mrb[0].mxu0 %v4948
  %v5135 = vpop.f32.mrb[0].mxu0
  %v5136 = vadd.f32 0.0, %v5135
  %v5137 = vpop.f32.mrb[0].mxu0
  %5138 = vmatprep.mubr.f32.mxu0 0.0
  %5139 = vmatmul.mubr.f32.gmra.mrb[0].mxu0 %v4951
  %v5140 = vpop.f32.mrb[0].mxu0
  %v5141 = vadd.f32 0.0, %v5140
  %v5142 = vpop.f32.mrb[0].mxu0
  %5143 = vmatprep.mubr.f32.mxu0 0.0
  %5144 = vmatmul.mubr.f32.gmra.mrb[0].mxu0 %v4954
  %v5145 = vpop.f32.mrb[0].mxu0
  %v5146 = vadd.f32 0.0, %v5145
  %v5147 = vpop.f32.mrb[0].mxu0
  %5148 = vmatprep.mubr.f32.mxu0 0.0
  %5149 = vmatmul.mubr.f32.gmra.mrb[0].mxu0 %v4957
  %v5150 = vpop.f32.mrb[0].mxu0
  %v5151 = vadd.f32 0.0, %v5150
  %v5152 = vpop.f32.mrb[0].mxu0
  %5153 = vmatprep.mubr.f32.mxu0 0.0
  %5154 = vmatmul.mubr.f32.gmra.mrb[0].mxu0 %v4960
  %v5155 = vpop.f32.mrb[0].mxu0
  %v5156 = vadd.f32 0.0, %v5155
  %v5157 = vpop.f32.mrb[0].mxu0
  %5158 = vmatprep.mubr.f32.mxu0 0.0
  %5159 = vmatmul.mubr.f32.gmra.mrb[0].mxu0 %v4963
  %v5160 = vpop.f32.mrb[0].mxu0
  %v5161 = vadd.f32 0.0, %v5160
  %v5162 = vpop.f32.mrb[0].mxu0
  %5163 = vmatprep.mubr.f32.mxu0 0.0
  %5164 = vmatmul.mubr.f32.gmra.mrb[0].mxu0 %v4966
  %v5165 = vpop.f32.mrb[0].mxu0
  %v5166 = vadd.f32 0.0, %v5165
  %v5167 = vpop.f32.mrb[0].mxu0
  %5168 = vmatprep.mubr.f32.mxu0 0.0
  %5169 = vmatmul.mubr.f32.gmra.mrb[0].mxu0 %v4969
  %v5170 = vpop.f32.mrb[0].mxu0
  %v5171 = vadd.f32 0.0, %v5170
  %v5172 = vpop.f32.mrb[0].mxu0
  %5173 = vmatprep.mubr.f32.mxu0 0.0
  %5174 = vmatmul.mubr.f32.gmra.mrb[0].mxu0 %v4972
  %v5175 = vpop.f32.mrb[0].mxu0
  %v5176 = vadd.f32 0.0, %v5175
  %v5177 = vpop.f32.mrb[0].mxu0
  %5178 = vmatprep.mubr.f32.mxu0 0.0
  %5179 = vmatmul.mubr.f32.gmra.mrb[0].mxu0 %v4975
  %v5180 = vpop.f32.mrb[0].mxu0
  %v5181 = vadd.f32 0.0, %v5180
  %v5182 = vpop.f32.mrb[0].mxu0
  %5183 = vmatprep.mubr.f32.mxu0 0.0
  %5184 = vmatmul.mubr.f32.gmra.mrb[0].mxu0 %v4978
  %v5185 = vpop.f32.mrb[0].mxu0
  %v5186 = vadd.f32 0.0, %v5185
  %v5187 = vpop.f32.mrb[0].mxu0
  %5188 = vmatprep.mubr.f32.mxu0 0.0
  %5189 = vmatmul.mubr.f32.gmra.mrb[0].mxu0 %v4981
  %v5190 = vpop.f32.mrb[0].mxu0
  %v5191 = vadd.f32 0.0, %v5190
  %v5192 = vpop.f32.mrb[0].mxu0
  %5193 = vmatprep.mubr.f32.mxu0 0.0
  %5194 = vmatmul.mubr.f32.gmra.mrb[0].mxu0 %v4984
  %v5195 = vpop.f32.mrb[0].mxu0
  %v5196 = vadd.f32 0.0, %v5195
  %v5197 = vpop.f32.mrb[0].mxu0
  %5198 = vmatprep.mubr.f32.mxu0 0.0
  %5199 = vmatmul.mubr.f32.gmra.mrb[0].mxu0 %v4987
  %v5200 = vpop.f32.mrb[0].mxu0
  %v5201 = vadd.f32 0.0, %v5200
  %v5202 = vpop.f32.mrb[0].mxu0
  %5203 = vmatprep.mubr.f32.mxu0 0.0
  %5204 = vmatmul.mubr.f32.gmra.mrb[0].mxu0 %v4990
  %v5205 = vpop.f32.mrb[0].mxu0
  %v5206 = vadd.f32 0.0, %v5205
  %v5207 = vpop.f32.mrb[0].mxu0
  %5208 = vmatprep.mubr.f32.mxu0 0.0
  %5209 = vmatmul.mubr.f32.gmra.mrb[0].mxu0 %v4993
  %v5210 = vpop.f32.mrb[0].mxu0
  %v5211 = vadd.f32 0.0, %v5210
  %v5212 = vpop.f32.mrb[0].mxu0
  %5213 = vmatprep.mubr.f32.mxu0 0.0
  %5214 = vmatmul.mubr.f32.gmra.mrb[0].mxu0 %v4996
  %v5215 = vpop.f32.mrb[0].mxu0
  %v5216 = vadd.f32 0.0, %v5215
  %v5217 = vpop.f32.mrb[0].mxu0
  %5218 = vmatprep.mubr.f32.mxu0 0.0
  %5219 = vmatmul.mubr.f32.gmra.mrb[0].mxu0 %v4999
  %v5220 = vpop.f32.mrb[0].mxu0
  %v5221 = vadd.f32 0.0, %v5220
  %v5222 = vpop.f32.mrb[0].mxu0
  %5223 = vmatprep.mubr.f32.mxu0 0.0
  %5224 = vmatmul.mubr.f32.gmra.mrb[0].mxu0 %v5002
  %v5225 = vpop.f32.mrb[0].mxu0
  %v5226 = vadd.f32 0.0, %v5225
  %v5227 = vpop.f32.mrb[0].mxu0
  %5228 = vmatprep.mubr.f32.mxu0 0.0
  %5229 = vmatmul.mubr.f32.gmra.mrb[0].mxu0 %v5005
  %v5230 = vpop.f32.mrb[0].mxu0
  %v5231 = vadd.f32 0.0, %v5230
  %v5232 = vpop.f32.mrb[0].mxu0
  %5233 = vmatprep.mubr.f32.mxu0 0.0
  %5234 = vmatmul.mubr.f32.gmra.mrb[0].mxu0 %v5008
  %v5235 = vpop.f32.mrb[0].mxu0
  %v5236 = vadd.f32 0.0, %v5235
  %v5237 = vpop.f32.mrb[0].mxu0
  %5238 = vmatprep.mubr.f32.mxu0 0.0
  %5239 = vmatmul.mubr.f32.gmra.mrb[0].mxu0 %v5011
  %v5240 = vpop.f32.mrb[0].mxu0
  %v5241 = vadd.f32 0.0, %v5240
  %v5242 = vpop.f32.mrb[0].mxu0
  %5243 = vmatprep.mubr.f32.mxu0 0.0
  %5244 = vmatmul.mubr.f32.gmra.mrb[0].mxu0 %v5014
  %v5245 = vpop.f32.mrb[0].mxu0
  %v5246 = vadd.f32 0.0, %v5245
  %v5247 = vpop.f32.mrb[0].mxu0
  %5248 = vmatprep.mubr.f32.mxu0 0.0
  %5249 = vmatmul.mubr.f32.gmra.mrb[0].mxu0 %v5017
  %v5250 = vpop.f32.mrb[0].mxu0
  %v5251 = vadd.f32 0.0, %v5250
  %v5252 = vpop.f32.mrb[0].mxu0
  %5253 = vmatprep.mubr.f32.mxu0 0.0
  %5254 = vmatmul.mubr.f32.gmra.mrb[0].mxu0 %v5020
  %v5255 = vpop.f32.mrb[0].mxu0
  %v5256 = vadd.f32 0.0, %v5255
  %v5257 = vpop.f32.mrb[0].mxu0
  %5258 = vmatprep.mubr.f32.mxu0 0.0
  %5259 = vmatmul.mubr.f32.gmra.mrb[0].mxu0 %v5023
  %v5260 = vpop.f32.mrb[0].mxu0
  %v5261 = vadd.f32 0.0, %v5260
  %v5262 = vpop.f32.mrb[0].mxu0
  %5263 = vmatprep.mubr.f32.mxu0 0.0
  %5264 = vmatmul.mubr.f32.gmra.mrb[0].mxu0 %v5026
  %v5265 = vpop.f32.mrb[0].mxu0
  %v5266 = vadd.f32 0.0, %v5265
  %v5267 = vpop.f32.mrb[0].mxu0
  %5268 = vmatprep.mubr.f32.mxu0 0.0
  %5269 = vmatmul.mubr.f32.gmra.mrb[0].mxu0 %v5029
  %v5270 = vpop.f32.mrb[0].mxu0
  %v5271 = vadd.f32 0.0, %v5270
  %v5272 = vpop.f32.mrb[0].mxu0
  %5273 = vmatprep.mubr.f32.mxu0 0.0
  %5274 = vmatmul.mubr.f32.gmra.mrb[0].mxu0 %v5032
  %v5275 = vpop.f32.mrb[0].mxu0
  %v5276 = vadd.f32 0.0, %v5275
  %v5277 = vpop.f32.mrb[0].mxu0
  %5278 = vdwg.mxu0
  %v5279 = vld [vmem:[#allocation2] ss:$2 sm:$0xff]
  %v5280 = vld [vmem:[%s582] ss:$2 sm:$0xff]
  %v5281 = vld [vmem:[%s584] ss:$2 sm:$0xff]
  %v5282 = vld [vmem:[%s1486] ss:$2 sm:$0xff]
  %v5283 = vld [vmem:[%s1488] ss:$2 sm:$0xff]
  %v5284 = vld [vmem:[%s2144] ss:$2 sm:$0xff]
  %v5285 = vld [vmem:[%s2146] ss:$2 sm:$0xff]
  %v5286 = vld [vmem:[%s2148] ss:$2 sm:$0xff]
  %v5287 = vld [vmem:[%s2150] ss:$2 sm:$0xff]
  %v5288 = vld [vmem:[%s3824] ss:$2 sm:$0xff]
  %v5289 = vld [vmem:[%s3826] ss:$2 sm:$0xff]
  %v5290 = vld [vmem:[%s3828] ss:$2 sm:$0xff]
  %v5291 = vld [vmem:[%s3830] ss:$2 sm:$0xff]
  %v5292 = vld [vmem:[%s3832] ss:$2 sm:$0xff]
  %v5293 = vld [vmem:[%s3834] ss:$2 sm:$0xff]
  %v5294 = vld [vmem:[%s3836] ss:$2 sm:$0xff]
  %v5295 = vld [vmem:[%s3838] ss:$2 sm:$0xff]
  %v5296 = vld [vmem:[%s3840] ss:$2 sm:$0xff]
  %s5297 = scalar_lea.vmem [#allocation2], 288
  %v5298 = vld [vmem:[%s5297] ss:$2 sm:$0xff]
  %s5299 = scalar_lea.vmem [#allocation2], 304
  %v5300 = vld [vmem:[%s5299] ss:$2 sm:$0xff]
  %s5301 = scalar_lea.vmem [#allocation2], 320
  %v5302 = vld [vmem:[%s5301] ss:$2 sm:$0xff]
  %s5303 = scalar_lea.vmem [#allocation2], 336
  %v5304 = vld [vmem:[%s5303] ss:$2 sm:$0xff]
  %s5305 = scalar_lea.vmem [#allocation2], 352
  %v5306 = vld [vmem:[%s5305] ss:$2 sm:$0xff]
  %s5307 = scalar_lea.vmem [#allocation2], 368
  %v5308 = vld [vmem:[%s5307] ss:$2 sm:$0xff]
  %s5309 = scalar_lea.vmem [#allocation2], 384
  %v5310 = vld [vmem:[%s5309] ss:$2 sm:$0xff]
  %s5311 = scalar_lea.vmem [#allocation2], 400
  %v5312 = vld [vmem:[%s5311] ss:$2 sm:$0xff]
  %s5313 = scalar_lea.vmem [#allocation2], 416
  %v5314 = vld [vmem:[%s5313] ss:$2 sm:$0xff]
  %s5315 = scalar_lea.vmem [#allocation2], 432
  %v5316 = vld [vmem:[%s5315] ss:$2 sm:$0xff]
  %s5317 = scalar_lea.vmem [#allocation2], 448
  %v5318 = vld [vmem:[%s5317] ss:$2 sm:$0xff]
  %s5319 = scalar_lea.vmem [#allocation2], 464
  %v5320 = vld [vmem:[%s5319] ss:$2 sm:$0xff]
  %s5321 = scalar_lea.vmem [#allocation2], 480
  %v5322 = vld [vmem:[%s5321] ss:$2 sm:$0xff]
  %s5323 = scalar_lea.vmem [#allocation2], 496
  %v5324 = vld [vmem:[%s5323] ss:$2 sm:$0xff]
  %s5325 = scalar_lea.vmem [#allocation2], 512
  %v5326 = vld [vmem:[%s5325] ss:$2 sm:$0xff]
  %s5327 = scalar_lea.vmem [#allocation2], 528
  %v5328 = vld [vmem:[%s5327] ss:$2 sm:$0xff]
  %s5329 = scalar_lea.vmem [#allocation2], 544
  %v5330 = vld [vmem:[%s5329] ss:$2 sm:$0xff]
  %s5331 = scalar_lea.vmem [#allocation2], 560
  %v5332 = vld [vmem:[%s5331] ss:$2 sm:$0x7f]
  %v5333 = vadd.f32 %v5279, %v5101
  %v5334 = vadd.f32 %v5280, %v5106
  %v5335 = vadd.f32 %v5281, %v5111
  %v5336 = vadd.f32 %v5282, %v5116
  %v5337 = vadd.f32 %v5283, %v5121
  %v5338 = vadd.f32 %v5284, %v5126
  %v5339 = vadd.f32 %v5285, %v5131
  %v5340 = vadd.f32 %v5286, %v5136
  %v5341 = vadd.f32 %v5287, %v5141
  %v5342 = vadd.f32 %v5288, %v5146
  %v5343 = vadd.f32 %v5289, %v5151
  %v5344 = vadd.f32 %v5290, %v5156
  %v5345 = vadd.f32 %v5291, %v5161
  %v5346 = vadd.f32 %v5292, %v5166
  %v5347 = vadd.f32 %v5293, %v5171
  %v5348 = vadd.f32 %v5294, %v5176
  %v5349 = vadd.f32 %v5295, %v5181
  %v5350 = vadd.f32 %v5296, %v5186
  %v5351 = vadd.f32 %v5298, %v5191
  %v5352 = vadd.f32 %v5300, %v5196
  %v5353 = vadd.f32 %v5302, %v5201
  %v5354 = vadd.f32 %v5304, %v5206
  %v5355 = vadd.f32 %v5306, %v5211
  %v5356 = vadd.f32 %v5308, %v5216
  %v5357 = vadd.f32 %v5310, %v5221
  %v5358 = vadd.f32 %v5312, %v5226
  %v5359 = vadd.f32 %v5314, %v5231
  %v5360 = vadd.f32 %v5316, %v5236
  %v5361 = vadd.f32 %v5318, %v5241
  %v5362 = vadd.f32 %v5320, %v5246
  %v5363 = vadd.f32 %v5322, %v5251
  %v5364 = vadd.f32 %v5324, %v5256
  %v5365 = vadd.f32 %v5326, %v5261
  %v5366 = vadd.f32 %v5328, %v5266
  %v5367 = vadd.f32 %v5330, %v5271
  %v5368 = vadd.f32 %v5332, %v5276
  %5369 = vst [vmem:[#allocation2] ss:$2 sm:$0xff] %v5333
  %5370 = vst [vmem:[%s582] ss:$2 sm:$0xff] %v5334
  %5371 = vst [vmem:[%s584] ss:$2 sm:$0xff] %v5335
  %5372 = vst [vmem:[%s1486] ss:$2 sm:$0xff] %v5336
  %5373 = vst [vmem:[%s1488] ss:$2 sm:$0xff] %v5337
  %5374 = vst [vmem:[%s2144] ss:$2 sm:$0xff] %v5338
  %5375 = vst [vmem:[%s2146] ss:$2 sm:$0xff] %v5339
  %5376 = vst [vmem:[%s2148] ss:$2 sm:$0xff] %v5340
  %5377 = vst [vmem:[%s2150] ss:$2 sm:$0xff] %v5341
  %5378 = vst [vmem:[%s3824] ss:$2 sm:$0xff] %v5342
  %5379 = vst [vmem:[%s3826] ss:$2 sm:$0xff] %v5343
  %5380 = vst [vmem:[%s3828] ss:$2 sm:$0xff] %v5344
  %5381 = vst [vmem:[%s3830] ss:$2 sm:$0xff] %v5345
  %5382 = vst [vmem:[%s3832] ss:$2 sm:$0xff] %v5346
  %5383 = vst [vmem:[%s3834] ss:$2 sm:$0xff] %v5347
  %5384 = vst [vmem:[%s3836] ss:$2 sm:$0xff] %v5348
  %5385 = vst [vmem:[%s3838] ss:$2 sm:$0xff] %v5349
  %5386 = vst [vmem:[%s3840] ss:$2 sm:$0xff] %v5350
  %5387 = vst [vmem:[%s5297] ss:$2 sm:$0xff] %v5351
  %5388 = vst [vmem:[%s5299] ss:$2 sm:$0xff] %v5352
  %5389 = vst [vmem:[%s5301] ss:$2 sm:$0xff] %v5353
  %5390 = vst [vmem:[%s5303] ss:$2 sm:$0xff] %v5354
  %5391 = vst [vmem:[%s5305] ss:$2 sm:$0xff] %v5355
  %5392 = vst [vmem:[%s5307] ss:$2 sm:$0xff] %v5356
  %5393 = vst [vmem:[%s5309] ss:$2 sm:$0xff] %v5357
  %5394 = vst [vmem:[%s5311] ss:$2 sm:$0xff] %v5358
  %5395 = vst [vmem:[%s5313] ss:$2 sm:$0xff] %v5359
  %5396 = vst [vmem:[%s5315] ss:$2 sm:$0xff] %v5360
  %5397 = vst [vmem:[%s5317] ss:$2 sm:$0xff] %v5361
  %5398 = vst [vmem:[%s5319] ss:$2 sm:$0xff] %v5362
  %5399 = vst [vmem:[%s5321] ss:$2 sm:$0xff] %v5363
  %5400 = vst [vmem:[%s5323] ss:$2 sm:$0xff] %v5364
  %5401 = vst [vmem:[%s5325] ss:$2 sm:$0xff] %v5365
  %5402 = vst [vmem:[%s5327] ss:$2 sm:$0xff] %v5366
  %5403 = vst [vmem:[%s5329] ss:$2 sm:$0xff] %v5367
  %5404 = vst [vmem:[%s5331] ss:$2 sm:$0x7f] %v5368
  %v5405 = vld [vmem:[%s120] sm:$0xff]
  %5406 = vmatprep.subr.mxu0 0.0
  %5407 = vmatpush1.msra.mxu0 %v5405
  %5408 = vmatprep.subr.mxu0 0.0
  %5409 = vmatpush1.msra.mxu0 0.0
  %5410 = vmatprep.subr.mxu0 0.0
  %5411 = vmatpush1.msra.mxu0 0.0
  %5412 = vmatprep.subr.mxu0 0.0
  %5413 = vmatpush1.msra.mxu0 0.0
  %5414 = vmatprep.subr.mxu0 0.0
  %5415 = vmatpush1.msra.mxu0 0.0
  %5416 = vmatprep.subr.mxu0 0.0
  %5417 = vmatpush1.msra.mxu0 0.0
  %5418 = vmatprep.subr.mxu0 0.0
  %5419 = vmatpush1.msra.mxu0 0.0
  %5420 = vmatprep.subr.mxu0 0.0
  %5421 = vmatpush1.msra.mxu0 0.0
  %5422 = vmatprep.subr.mxu0 0.0
  %5423 = vmatpush1.msra.mxu0 0.0
  %5424 = vmatprep.subr.mxu0 0.0
  %5425 = vmatpush1.msra.mxu0 0.0
  %5426 = vmatprep.subr.mxu0 0.0
  %5427 = vmatpush1.msra.mxu0 0.0
  %5428 = vmatprep.subr.mxu0 0.0
  %5429 = vmatpush1.msra.mxu0 0.0
  %5430 = vmatprep.subr.mxu0 0.0
  %5431 = vmatpush1.msra.mxu0 0.0
  %5432 = vmatprep.subr.mxu0 0.0
  %5433 = vmatpush1.msra.mxu0 0.0
  %5434 = vmatprep.subr.mxu0 0.0
  %5435 = vmatpush1.msra.mxu0 0.0
  %5436 = vmatprep.subr.mxu0 0.0
  %5437 = vmatpush1.msra.mxu0 0.0
  %5438 = vmatprep.subr.mxu0 0.0
  %5439 = vmatpush1.msra.mxu0 0.0
  %5440 = vmatprep.subr.mxu0 0.0
  %5441 = vmatpush1.msra.mxu0 0.0
  %5442 = vmatprep.subr.mxu0 0.0
  %5443 = vmatpush1.msra.mxu0 0.0
  %5444 = vmatprep.subr.mxu0 0.0
  %5445 = vmatpush1.msra.mxu0 0.0
  %5446 = vmatprep.subr.mxu0 0.0
  %5447 = vmatpush1.msra.mxu0 0.0
  %5448 = vmatprep.subr.mxu0 0.0
  %5449 = vmatpush1.msra.mxu0 0.0
  %5450 = vmatprep.subr.mxu0 0.0
  %5451 = vmatpush1.msra.mxu0 0.0
  %5452 = vmatprep.subr.mxu0 0.0
  %5453 = vmatpush1.msra.mxu0 0.0
  %5454 = vmatprep.subr.mxu0 0.0
  %5455 = vmatpush1.msra.mxu0 0.0
  %5456 = vmatprep.subr.mxu0 0.0
  %5457 = vmatpush1.msra.mxu0 0.0
  %5458 = vmatprep.subr.mxu0 0.0
  %5459 = vmatpush1.msra.mxu0 0.0
  %5460 = vmatprep.subr.mxu0 0.0
  %5461 = vmatpush1.msra.mxu0 0.0
  %5462 = vmatprep.subr.mxu0 0.0
  %5463 = vmatpush1.msra.mxu0 0.0
  %5464 = vmatprep.subr.mxu0 0.0
  %5465 = vmatpush1.msra.mxu0 0.0
  %5466 = vmatprep.subr.mxu0 0.0
  %5467 = vmatpush1.msra.mxu0 0.0
  %5468 = vmatprep.subr.mxu0 0.0
  %5469 = vmatpush1.msra.mxu0 0.0
  %5470 = vmatprep.mubr.f32.mxu0 0.0
  %5471 = vmatmul.mubr.f32.gmra.mrb[0].mxu0 %v4927
  %v5472 = vpop.f32.mrb[0].mxu0
  %v5473 = vadd.f32 0.0, %v5472
  %v5474 = vpop.f32.mrb[0].mxu0
  %5475 = vmatprep.mubr.f32.mxu0 0.0
  %5476 = vmatmul.mubr.f32.gmra.mrb[0].mxu0 %v4930
  %v5477 = vpop.f32.mrb[0].mxu0
  %v5478 = vadd.f32 0.0, %v5477
  %v5479 = vpop.f32.mrb[0].mxu0
  %5480 = vmatprep.mubr.f32.mxu0 0.0
  %5481 = vmatmul.mubr.f32.gmra.mrb[0].mxu0 %v4933
  %v5482 = vpop.f32.mrb[0].mxu0
  %v5483 = vadd.f32 0.0, %v5482
  %v5484 = vpop.f32.mrb[0].mxu0
  %5485 = vmatprep.mubr.f32.mxu0 0.0
  %5486 = vmatmul.mubr.f32.gmra.mrb[0].mxu0 %v4936
  %v5487 = vpop.f32.mrb[0].mxu0
  %v5488 = vadd.f32 0.0, %v5487
  %v5489 = vpop.f32.mrb[0].mxu0
  %5490 = vmatprep.mubr.f32.mxu0 0.0
  %5491 = vmatmul.mubr.f32.gmra.mrb[0].mxu0 %v4939
  %v5492 = vpop.f32.mrb[0].mxu0
  %v5493 = vadd.f32 0.0, %v5492
  %v5494 = vpop.f32.mrb[0].mxu0
  %5495 = vmatprep.mubr.f32.mxu0 0.0
  %5496 = vmatmul.mubr.f32.gmra.mrb[0].mxu0 %v4942
  %v5497 = vpop.f32.mrb[0].mxu0
  %v5498 = vadd.f32 0.0, %v5497
  %v5499 = vpop.f32.mrb[0].mxu0
  %5500 = vmatprep.mubr.f32.mxu0 0.0
  %5501 = vmatmul.mubr.f32.gmra.mrb[0].mxu0 %v4945
  %v5502 = vpop.f32.mrb[0].mxu0
  %v5503 = vadd.f32 0.0, %v5502
  %v5504 = vpop.f32.mrb[0].mxu0
  %5505 = vmatprep.mubr.f32.mxu0 0.0
  %5506 = vmatmul.mubr.f32.gmra.mrb[0].mxu0 %v4948
  %v5507 = vpop.f32.mrb[0].mxu0
  %v5508 = vadd.f32 0.0, %v5507
  %v5509 = vpop.f32.mrb[0].mxu0
  %5510 = vmatprep.mubr.f32.mxu0 0.0
  %5511 = vmatmul.mubr.f32.gmra.mrb[0].mxu0 %v4951
  %v5512 = vpop.f32.mrb[0].mxu0
  %v5513 = vadd.f32 0.0, %v5512
  %v5514 = vpop.f32.mrb[0].mxu0
  %5515 = vmatprep.mubr.f32.mxu0 0.0
  %5516 = vmatmul.mubr.f32.gmra.mrb[0].mxu0 %v4954
  %v5517 = vpop.f32.mrb[0].mxu0
  %v5518 = vadd.f32 0.0, %v5517
  %v5519 = vpop.f32.mrb[0].mxu0
  %5520 = vmatprep.mubr.f32.mxu0 0.0
  %5521 = vmatmul.mubr.f32.gmra.mrb[0].mxu0 %v4957
  %v5522 = vpop.f32.mrb[0].mxu0
  %v5523 = vadd.f32 0.0, %v5522
  %v5524 = vpop.f32.mrb[0].mxu0
  %5525 = vmatprep.mubr.f32.mxu0 0.0
  %5526 = vmatmul.mubr.f32.gmra.mrb[0].mxu0 %v4960
  %v5527 = vpop.f32.mrb[0].mxu0
  %v5528 = vadd.f32 0.0, %v5527
  %v5529 = vpop.f32.mrb[0].mxu0
  %5530 = vmatprep.mubr.f32.mxu0 0.0
  %5531 = vmatmul.mubr.f32.gmra.mrb[0].mxu0 %v4963
  %v5532 = vpop.f32.mrb[0].mxu0
  %v5533 = vadd.f32 0.0, %v5532
  %v5534 = vpop.f32.mrb[0].mxu0
  %5535 = vmatprep.mubr.f32.mxu0 0.0
  %5536 = vmatmul.mubr.f32.gmra.mrb[0].mxu0 %v4966
  %v5537 = vpop.f32.mrb[0].mxu0
  %v5538 = vadd.f32 0.0, %v5537
  %v5539 = vpop.f32.mrb[0].mxu0
  %5540 = vmatprep.mubr.f32.mxu0 0.0
  %5541 = vmatmul.mubr.f32.gmra.mrb[0].mxu0 %v4969
  %v5542 = vpop.f32.mrb[0].mxu0
  %v5543 = vadd.f32 0.0, %v5542
  %v5544 = vpop.f32.mrb[0].mxu0
  %5545 = vmatprep.mubr.f32.mxu0 0.0
  %5546 = vmatmul.mubr.f32.gmra.mrb[0].mxu0 %v4972
  %v5547 = vpop.f32.mrb[0].mxu0
  %v5548 = vadd.f32 0.0, %v5547
  %v5549 = vpop.f32.mrb[0].mxu0
  %5550 = vmatprep.mubr.f32.mxu0 0.0
  %5551 = vmatmul.mubr.f32.gmra.mrb[0].mxu0 %v4975
  %v5552 = vpop.f32.mrb[0].mxu0
  %v5553 = vadd.f32 0.0, %v5552
  %v5554 = vpop.f32.mrb[0].mxu0
  %5555 = vmatprep.mubr.f32.mxu0 0.0
  %5556 = vmatmul.mubr.f32.gmra.mrb[0].mxu0 %v4978
  %v5557 = vpop.f32.mrb[0].mxu0
  %v5558 = vadd.f32 0.0, %v5557
  %v5559 = vpop.f32.mrb[0].mxu0
  %5560 = vmatprep.mubr.f32.mxu0 0.0
  %5561 = vmatmul.mubr.f32.gmra.mrb[0].mxu0 %v4981
  %v5562 = vpop.f32.mrb[0].mxu0
  %v5563 = vadd.f32 0.0, %v5562
  %v5564 = vpop.f32.mrb[0].mxu0
  %5565 = vmatprep.mubr.f32.mxu0 0.0
  %5566 = vmatmul.mubr.f32.gmra.mrb[0].mxu0 %v4984
  %v5567 = vpop.f32.mrb[0].mxu0
  %v5568 = vadd.f32 0.0, %v5567
  %v5569 = vpop.f32.mrb[0].mxu0
  %5570 = vmatprep.mubr.f32.mxu0 0.0
  %5571 = vmatmul.mubr.f32.gmra.mrb[0].mxu0 %v4987
  %v5572 = vpop.f32.mrb[0].mxu0
  %v5573 = vadd.f32 0.0, %v5572
  %v5574 = vpop.f32.mrb[0].mxu0
  %5575 = vmatprep.mubr.f32.mxu0 0.0
  %5576 = vmatmul.mubr.f32.gmra.mrb[0].mxu0 %v4990
  %v5577 = vpop.f32.mrb[0].mxu0
  %v5578 = vadd.f32 0.0, %v5577
  %v5579 = vpop.f32.mrb[0].mxu0
  %5580 = vmatprep.mubr.f32.mxu0 0.0
  %5581 = vmatmul.mubr.f32.gmra.mrb[0].mxu0 %v4993
  %v5582 = vpop.f32.mrb[0].mxu0
  %v5583 = vadd.f32 0.0, %v5582
  %v5584 = vpop.f32.mrb[0].mxu0
  %5585 = vmatprep.mubr.f32.mxu0 0.0
  %5586 = vmatmul.mubr.f32.gmra.mrb[0].mxu0 %v4996
  %v5587 = vpop.f32.mrb[0].mxu0
  %v5588 = vadd.f32 0.0, %v5587
  %v5589 = vpop.f32.mrb[0].mxu0
  %5590 = vmatprep.mubr.f32.mxu0 0.0
  %5591 = vmatmul.mubr.f32.gmra.mrb[0].mxu0 %v4999
  %v5592 = vpop.f32.mrb[0].mxu0
  %v5593 = vadd.f32 0.0, %v5592
  %v5594 = vpop.f32.mrb[0].mxu0
  %5595 = vmatprep.mubr.f32.mxu0 0.0
  %5596 = vmatmul.mubr.f32.gmra.mrb[0].mxu0 %v5002
  %v5597 = vpop.f32.mrb[0].mxu0
  %v5598 = vadd.f32 0.0, %v5597
  %v5599 = vpop.f32.mrb[0].mxu0
  %5600 = vmatprep.mubr.f32.mxu0 0.0
  %5601 = vmatmul.mubr.f32.gmra.mrb[0].mxu0 %v5005
  %v5602 = vpop.f32.mrb[0].mxu0
  %v5603 = vadd.f32 0.0, %v5602
  %v5604 = vpop.f32.mrb[0].mxu0
  %5605 = vmatprep.mubr.f32.mxu0 0.0
  %5606 = vmatmul.mubr.f32.gmra.mrb[0].mxu0 %v5008
  %v5607 = vpop.f32.mrb[0].mxu0
  %v5608 = vadd.f32 0.0, %v5607
  %v5609 = vpop.f32.mrb[0].mxu0
  %5610 = vmatprep.mubr.f32.mxu0 0.0
  %5611 = vmatmul.mubr.f32.gmra.mrb[0].mxu0 %v5011
  %v5612 = vpop.f32.mrb[0].mxu0
  %v5613 = vadd.f32 0.0, %v5612
  %v5614 = vpop.f32.mrb[0].mxu0
  %5615 = vmatprep.mubr.f32.mxu0 0.0
  %5616 = vmatmul.mubr.f32.gmra.mrb[0].mxu0 %v5014
  %v5617 = vpop.f32.mrb[0].mxu0
  %v5618 = vadd.f32 0.0, %v5617
  %v5619 = vpop.f32.mrb[0].mxu0
  %5620 = vmatprep.mubr.f32.mxu0 0.0
  %5621 = vmatmul.mubr.f32.gmra.mrb[0].mxu0 %v5017
  %v5622 = vpop.f32.mrb[0].mxu0
  %v5623 = vadd.f32 0.0, %v5622
  %v5624 = vpop.f32.mrb[0].mxu0
  %5625 = vmatprep.mubr.f32.mxu0 0.0
  %5626 = vmatmul.mubr.f32.gmra.mrb[0].mxu0 %v5020
  %v5627 = vpop.f32.mrb[0].mxu0
  %v5628 = vadd.f32 0.0, %v5627
  %v5629 = vpop.f32.mrb[0].mxu0
  %5630 = vmatprep.mubr.f32.mxu0 0.0
  %5631 = vmatmul.mubr.f32.gmra.mrb[0].mxu0 %v5023
  %v5632 = vpop.f32.mrb[0].mxu0
  %v5633 = vadd.f32 0.0, %v5632
  %v5634 = vpop.f32.mrb[0].mxu0
  %5635 = vmatprep.mubr.f32.mxu0 0.0
  %5636 = vmatmul.mubr.f32.gmra.mrb[0].mxu0 %v5026
  %v5637 = vpop.f32.mrb[0].mxu0
  %v5638 = vadd.f32 0.0, %v5637
  %v5639 = vpop.f32.mrb[0].mxu0
  %5640 = vmatprep.mubr.f32.mxu0 0.0
  %5641 = vmatmul.mubr.f32.gmra.mrb[0].mxu0 %v5029
  %v5642 = vpop.f32.mrb[0].mxu0
  %v5643 = vadd.f32 0.0, %v5642
  %v5644 = vpop.f32.mrb[0].mxu0
  %5645 = vmatprep.mubr.f32.mxu0 0.0
  %5646 = vmatmul.mubr.f32.gmra.mrb[0].mxu0 %v5032
  %v5647 = vpop.f32.mrb[0].mxu0
  %v5648 = vadd.f32 0.0, %v5647
  %v5649 = vpop.f32.mrb[0].mxu0
  %5650 = vdwg.mxu0
  %v5651 = vld [vmem:[%s192] ss:$2 sm:$0xff]
  %v5652 = vld [vmem:[%s674] ss:$2 sm:$0xff]
  %v5653 = vld [vmem:[%s676] ss:$2 sm:$0xff]
  %v5654 = vld [vmem:[%s1594] ss:$2 sm:$0xff]
  %v5655 = vld [vmem:[%s1596] ss:$2 sm:$0xff]
  %v5656 = vld [vmem:[%s2286] ss:$2 sm:$0xff]
  %v5657 = vld [vmem:[%s2288] ss:$2 sm:$0xff]
  %v5658 = vld [vmem:[%s2290] ss:$2 sm:$0xff]
  %v5659 = vld [vmem:[%s2292] ss:$2 sm:$0xff]
  %v5660 = vld [vmem:[%s4043] ss:$2 sm:$0xff]
  %v5661 = vld [vmem:[%s4045] ss:$2 sm:$0xff]
  %v5662 = vld [vmem:[%s4047] ss:$2 sm:$0xff]
  %v5663 = vld [vmem:[%s4049] ss:$2 sm:$0xff]
  %v5664 = vld [vmem:[%s4051] ss:$2 sm:$0xff]
  %v5665 = vld [vmem:[%s4053] ss:$2 sm:$0xff]
  %v5666 = vld [vmem:[%s4055] ss:$2 sm:$0xff]
  %v5667 = vld [vmem:[%s4057] ss:$2 sm:$0xff]
  %v5668 = vld [vmem:[%s4059] ss:$2 sm:$0xff]
  %s5669 = scalar_lea.vmem [#allocation2], 289
  %v5670 = vld [vmem:[%s5669] ss:$2 sm:$0xff]
  %s5671 = scalar_lea.vmem [#allocation2], 305
  %v5672 = vld [vmem:[%s5671] ss:$2 sm:$0xff]
  %s5673 = scalar_lea.vmem [#allocation2], 321
  %v5674 = vld [vmem:[%s5673] ss:$2 sm:$0xff]
  %s5675 = scalar_lea.vmem [#allocation2], 337
  %v5676 = vld [vmem:[%s5675] ss:$2 sm:$0xff]
  %s5677 = scalar_lea.vmem [#allocation2], 353
  %v5678 = vld [vmem:[%s5677] ss:$2 sm:$0xff]
  %s5679 = scalar_lea.vmem [#allocation2], 369
  %v5680 = vld [vmem:[%s5679] ss:$2 sm:$0xff]
  %s5681 = scalar_lea.vmem [#allocation2], 385
  %v5682 = vld [vmem:[%s5681] ss:$2 sm:$0xff]
  %s5683 = scalar_lea.vmem [#allocation2], 401
  %v5684 = vld [vmem:[%s5683] ss:$2 sm:$0xff]
  %s5685 = scalar_lea.vmem [#allocation2], 417
  %v5686 = vld [vmem:[%s5685] ss:$2 sm:$0xff]
  %s5687 = scalar_lea.vmem [#allocation2], 433
  %v5688 = vld [vmem:[%s5687] ss:$2 sm:$0xff]
  %s5689 = scalar_lea.vmem [#allocation2], 449
  %v5690 = vld [vmem:[%s5689] ss:$2 sm:$0xff]
  %s5691 = scalar_lea.vmem [#allocation2], 465
  %v5692 = vld [vmem:[%s5691] ss:$2 sm:$0xff]
  %s5693 = scalar_lea.vmem [#allocation2], 481
  %v5694 = vld [vmem:[%s5693] ss:$2 sm:$0xff]
  %s5695 = scalar_lea.vmem [#allocation2], 497
  %v5696 = vld [vmem:[%s5695] ss:$2 sm:$0xff]
  %s5697 = scalar_lea.vmem [#allocation2], 513
  %v5698 = vld [vmem:[%s5697] ss:$2 sm:$0xff]
  %s5699 = scalar_lea.vmem [#allocation2], 529
  %v5700 = vld [vmem:[%s5699] ss:$2 sm:$0xff]
  %s5701 = scalar_lea.vmem [#allocation2], 545
  %v5702 = vld [vmem:[%s5701] ss:$2 sm:$0xff]
  %s5703 = scalar_lea.vmem [#allocation2], 561
  %v5704 = vld [vmem:[%s5703] ss:$2 sm:$0x7f]
  %v5705 = vadd.f32 %v5651, %v5473
  %v5706 = vadd.f32 %v5652, %v5478
  %v5707 = vadd.f32 %v5653, %v5483
  %v5708 = vadd.f32 %v5654, %v5488
  %v5709 = vadd.f32 %v5655, %v5493
  %v5710 = vadd.f32 %v5656, %v5498
  %v5711 = vadd.f32 %v5657, %v5503
  %v5712 = vadd.f32 %v5658, %v5508
  %v5713 = vadd.f32 %v5659, %v5513
  %v5714 = vadd.f32 %v5660, %v5518
  %v5715 = vadd.f32 %v5661, %v5523
  %v5716 = vadd.f32 %v5662, %v5528
  %v5717 = vadd.f32 %v5663, %v5533
  %v5718 = vadd.f32 %v5664, %v5538
  %v5719 = vadd.f32 %v5665, %v5543
  %v5720 = vadd.f32 %v5666, %v5548
  %v5721 = vadd.f32 %v5667, %v5553
  %v5722 = vadd.f32 %v5668, %v5558
  %v5723 = vadd.f32 %v5670, %v5563
  %v5724 = vadd.f32 %v5672, %v5568
  %v5725 = vadd.f32 %v5674, %v5573
  %v5726 = vadd.f32 %v5676, %v5578
  %v5727 = vadd.f32 %v5678, %v5583
  %v5728 = vadd.f32 %v5680, %v5588
  %v5729 = vadd.f32 %v5682, %v5593
  %v5730 = vadd.f32 %v5684, %v5598
  %v5731 = vadd.f32 %v5686, %v5603
  %v5732 = vadd.f32 %v5688, %v5608
  %v5733 = vadd.f32 %v5690, %v5613
  %v5734 = vadd.f32 %v5692, %v5618
  %v5735 = vadd.f32 %v5694, %v5623
  %v5736 = vadd.f32 %v5696, %v5628
  %v5737 = vadd.f32 %v5698, %v5633
  %v5738 = vadd.f32 %v5700, %v5638
  %v5739 = vadd.f32 %v5702, %v5643
  %v5740 = vadd.f32 %v5704, %v5648
  %5741 = vst [vmem:[%s192] ss:$2 sm:$0xff] %v5705
  %5742 = vst [vmem:[%s674] ss:$2 sm:$0xff] %v5706
  %5743 = vst [vmem:[%s676] ss:$2 sm:$0xff] %v5707
  %5744 = vst [vmem:[%s1594] ss:$2 sm:$0xff] %v5708
  %5745 = vst [vmem:[%s1596] ss:$2 sm:$0xff] %v5709
  %5746 = vst [vmem:[%s2286] ss:$2 sm:$0xff] %v5710
  %5747 = vst [vmem:[%s2288] ss:$2 sm:$0xff] %v5711
  %5748 = vst [vmem:[%s2290] ss:$2 sm:$0xff] %v5712
  %5749 = vst [vmem:[%s2292] ss:$2 sm:$0xff] %v5713
  %5750 = vst [vmem:[%s4043] ss:$2 sm:$0xff] %v5714
  %5751 = vst [vmem:[%s4045] ss:$2 sm:$0xff] %v5715
  %5752 = vst [vmem:[%s4047] ss:$2 sm:$0xff] %v5716
  %5753 = vst [vmem:[%s4049] ss:$2 sm:$0xff] %v5717
  %5754 = vst [vmem:[%s4051] ss:$2 sm:$0xff] %v5718
  %5755 = vst [vmem:[%s4053] ss:$2 sm:$0xff] %v5719
  %5756 = vst [vmem:[%s4055] ss:$2 sm:$0xff] %v5720
  %5757 = vst [vmem:[%s4057] ss:$2 sm:$0xff] %v5721
  %5758 = vst [vmem:[%s4059] ss:$2 sm:$0xff] %v5722
  %5759 = vst [vmem:[%s5669] ss:$2 sm:$0xff] %v5723
  %5760 = vst [vmem:[%s5671] ss:$2 sm:$0xff] %v5724
  %5761 = vst [vmem:[%s5673] ss:$2 sm:$0xff] %v5725
  %5762 = vst [vmem:[%s5675] ss:$2 sm:$0xff] %v5726
  %5763 = vst [vmem:[%s5677] ss:$2 sm:$0xff] %v5727
  %5764 = vst [vmem:[%s5679] ss:$2 sm:$0xff] %v5728
  %5765 = vst [vmem:[%s5681] ss:$2 sm:$0xff] %v5729
  %5766 = vst [vmem:[%s5683] ss:$2 sm:$0xff] %v5730
  %5767 = vst [vmem:[%s5685] ss:$2 sm:$0xff] %v5731
  %5768 = vst [vmem:[%s5687] ss:$2 sm:$0xff] %v5732
  %5769 = vst [vmem:[%s5689] ss:$2 sm:$0xff] %v5733
  %5770 = vst [vmem:[%s5691] ss:$2 sm:$0xff] %v5734
  %5771 = vst [vmem:[%s5693] ss:$2 sm:$0xff] %v5735
  %5772 = vst [vmem:[%s5695] ss:$2 sm:$0xff] %v5736
  %5773 = vst [vmem:[%s5697] ss:$2 sm:$0xff] %v5737
  %5774 = vst [vmem:[%s5699] ss:$2 sm:$0xff] %v5738
  %5775 = vst [vmem:[%s5701] ss:$2 sm:$0xff] %v5739
  %5776 = vst [vmem:[%s5703] ss:$2 sm:$0x7f] %v5740
  %v5777 = vld [vmem:[%s196] sm:$0xff]
  %5778 = vmatprep.subr.mxu0 0.0
  %5779 = vmatpush1.msra.mxu0 %v5777
  %5780 = vmatprep.subr.mxu0 0.0
  %5781 = vmatpush1.msra.mxu0 0.0
  %5782 = vmatprep.subr.mxu0 0.0
  %5783 = vmatpush1.msra.mxu0 0.0
  %5784 = vmatprep.subr.mxu0 0.0
  %5785 = vmatpush1.msra.mxu0 0.0
  %5786 = vmatprep.subr.mxu0 0.0
  %5787 = vmatpush1.msra.mxu0 0.0
  %5788 = vmatprep.subr.mxu0 0.0
  %5789 = vmatpush1.msra.mxu0 0.0
  %5790 = vmatprep.subr.mxu0 0.0
  %5791 = vmatpush1.msra.mxu0 0.0
  %5792 = vmatprep.subr.mxu0 0.0
  %5793 = vmatpush1.msra.mxu0 0.0
  %5794 = vmatprep.subr.mxu0 0.0
  %5795 = vmatpush1.msra.mxu0 0.0
  %5796 = vmatprep.subr.mxu0 0.0
  %5797 = vmatpush1.msra.mxu0 0.0
  %5798 = vmatprep.subr.mxu0 0.0
  %5799 = vmatpush1.msra.mxu0 0.0
  %5800 = vmatprep.subr.mxu0 0.0
  %5801 = vmatpush1.msra.mxu0 0.0
  %5802 = vmatprep.subr.mxu0 0.0
  %5803 = vmatpush1.msra.mxu0 0.0
  %5804 = vmatprep.subr.mxu0 0.0
  %5805 = vmatpush1.msra.mxu0 0.0
  %5806 = vmatprep.subr.mxu0 0.0
  %5807 = vmatpush1.msra.mxu0 0.0
  %5808 = vmatprep.subr.mxu0 0.0
  %5809 = vmatpush1.msra.mxu0 0.0
  %5810 = vmatprep.subr.mxu0 0.0
  %5811 = vmatpush1.msra.mxu0 0.0
  %5812 = vmatprep.subr.mxu0 0.0
  %5813 = vmatpush1.msra.mxu0 0.0
  %5814 = vmatprep.subr.mxu0 0.0
  %5815 = vmatpush1.msra.mxu0 0.0
  %5816 = vmatprep.subr.mxu0 0.0
  %5817 = vmatpush1.msra.mxu0 0.0
  %5818 = vmatprep.subr.mxu0 0.0
  %5819 = vmatpush1.msra.mxu0 0.0
  %5820 = vmatprep.subr.mxu0 0.0
  %5821 = vmatpush1.msra.mxu0 0.0
  %5822 = vmatprep.subr.mxu0 0.0
  %5823 = vmatpush1.msra.mxu0 0.0
  %5824 = vmatprep.subr.mxu0 0.0
  %5825 = vmatpush1.msra.mxu0 0.0
  %5826 = vmatprep.subr.mxu0 0.0
  %5827 = vmatpush1.msra.mxu0 0.0
  %5828 = vmatprep.subr.mxu0 0.0
  %5829 = vmatpush1.msra.mxu0 0.0
  %5830 = vmatprep.subr.mxu0 0.0
  %5831 = vmatpush1.msra.mxu0 0.0
  %5832 = vmatprep.subr.mxu0 0.0
  %5833 = vmatpush1.msra.mxu0 0.0
  %5834 = vmatprep.subr.mxu0 0.0
  %5835 = vmatpush1.msra.mxu0 0.0
  %5836 = vmatprep.subr.mxu0 0.0
  %5837 = vmatpush1.msra.mxu0 0.0
  %5838 = vmatprep.subr.mxu0 0.0
  %5839 = vmatpush1.msra.mxu0 0.0
  %5840 = vmatprep.subr.mxu0 0.0
  %5841 = vmatpush1.msra.mxu0 0.0
  %5842 = vmatprep.mubr.f32.mxu0 0.0
  %5843 = vmatmul.mubr.f32.gmra.mrb[0].mxu0 %v4927
  %v5844 = vpop.f32.mrb[0].mxu0
  %v5845 = vadd.f32 0.0, %v5844
  %v5846 = vpop.f32.mrb[0].mxu0
  %5847 = vmatprep.mubr.f32.mxu0 0.0
  %5848 = vmatmul.mubr.f32.gmra.mrb[0].mxu0 %v4930
  %v5849 = vpop.f32.mrb[0].mxu0
  %v5850 = vadd.f32 0.0, %v5849
  %v5851 = vpop.f32.mrb[0].mxu0
  %5852 = vmatprep.mubr.f32.mxu0 0.0
  %5853 = vmatmul.mubr.f32.gmra.mrb[0].mxu0 %v4933
  %v5854 = vpop.f32.mrb[0].mxu0
  %v5855 = vadd.f32 0.0, %v5854
  %v5856 = vpop.f32.mrb[0].mxu0
  %5857 = vmatprep.mubr.f32.mxu0 0.0
  %5858 = vmatmul.mubr.f32.gmra.mrb[0].mxu0 %v4936
  %v5859 = vpop.f32.mrb[0].mxu0
  %v5860 = vadd.f32 0.0, %v5859
  %v5861 = vpop.f32.mrb[0].mxu0
  %5862 = vmatprep.mubr.f32.mxu0 0.0
  %5863 = vmatmul.mubr.f32.gmra.mrb[0].mxu0 %v4939
  %v5864 = vpop.f32.mrb[0].mxu0
  %v5865 = vadd.f32 0.0, %v5864
  %v5866 = vpop.f32.mrb[0].mxu0
  %5867 = vmatprep.mubr.f32.mxu0 0.0
  %5868 = vmatmul.mubr.f32.gmra.mrb[0].mxu0 %v4942
  %v5869 = vpop.f32.mrb[0].mxu0
  %v5870 = vadd.f32 0.0, %v5869
  %v5871 = vpop.f32.mrb[0].mxu0
  %5872 = vmatprep.mubr.f32.mxu0 0.0
  %5873 = vmatmul.mubr.f32.gmra.mrb[0].mxu0 %v4945
  %v5874 = vpop.f32.mrb[0].mxu0
  %v5875 = vadd.f32 0.0, %v5874
  %v5876 = vpop.f32.mrb[0].mxu0
  %5877 = vmatprep.mubr.f32.mxu0 0.0
  %5878 = vmatmul.mubr.f32.gmra.mrb[0].mxu0 %v4948
  %v5879 = vpop.f32.mrb[0].mxu0
  %v5880 = vadd.f32 0.0, %v5879
  %v5881 = vpop.f32.mrb[0].mxu0
  %5882 = vmatprep.mubr.f32.mxu0 0.0
  %5883 = vmatmul.mubr.f32.gmra.mrb[0].mxu0 %v4951
  %v5884 = vpop.f32.mrb[0].mxu0
  %v5885 = vadd.f32 0.0, %v5884
  %v5886 = vpop.f32.mrb[0].mxu0
  %5887 = vmatprep.mubr.f32.mxu0 0.0
  %5888 = vmatmul.mubr.f32.gmra.mrb[0].mxu0 %v4954
  %v5889 = vpop.f32.mrb[0].mxu0
  %v5890 = vadd.f32 0.0, %v5889
  %v5891 = vpop.f32.mrb[0].mxu0
  %5892 = vmatprep.mubr.f32.mxu0 0.0
  %5893 = vmatmul.mubr.f32.gmra.mrb[0].mxu0 %v4957
  %v5894 = vpop.f32.mrb[0].mxu0
  %v5895 = vadd.f32 0.0, %v5894
  %v5896 = vpop.f32.mrb[0].mxu0
  %5897 = vmatprep.mubr.f32.mxu0 0.0
  %5898 = vmatmul.mubr.f32.gmra.mrb[0].mxu0 %v4960
  %v5899 = vpop.f32.mrb[0].mxu0
  %v5900 = vadd.f32 0.0, %v5899
  %v5901 = vpop.f32.mrb[0].mxu0
  %5902 = vmatprep.mubr.f32.mxu0 0.0
  %5903 = vmatmul.mubr.f32.gmra.mrb[0].mxu0 %v4963
  %v5904 = vpop.f32.mrb[0].mxu0
  %v5905 = vadd.f32 0.0, %v5904
  %v5906 = vpop.f32.mrb[0].mxu0
  %5907 = vmatprep.mubr.f32.mxu0 0.0
  %5908 = vmatmul.mubr.f32.gmra.mrb[0].mxu0 %v4966
  %v5909 = vpop.f32.mrb[0].mxu0
  %v5910 = vadd.f32 0.0, %v5909
  %v5911 = vpop.f32.mrb[0].mxu0
  %5912 = vmatprep.mubr.f32.mxu0 0.0
  %5913 = vmatmul.mubr.f32.gmra.mrb[0].mxu0 %v4969
  %v5914 = vpop.f32.mrb[0].mxu0
  %v5915 = vadd.f32 0.0, %v5914
  %v5916 = vpop.f32.mrb[0].mxu0
  %5917 = vmatprep.mubr.f32.mxu0 0.0
  %5918 = vmatmul.mubr.f32.gmra.mrb[0].mxu0 %v4972
  %v5919 = vpop.f32.mrb[0].mxu0
  %v5920 = vadd.f32 0.0, %v5919
  %v5921 = vpop.f32.mrb[0].mxu0
  %5922 = vmatprep.mubr.f32.mxu0 0.0
  %5923 = vmatmul.mubr.f32.gmra.mrb[0].mxu0 %v4975
  %v5924 = vpop.f32.mrb[0].mxu0
  %v5925 = vadd.f32 0.0, %v5924
  %v5926 = vpop.f32.mrb[0].mxu0
  %5927 = vmatprep.mubr.f32.mxu0 0.0
  %5928 = vmatmul.mubr.f32.gmra.mrb[0].mxu0 %v4978
  %v5929 = vpop.f32.mrb[0].mxu0
  %v5930 = vadd.f32 0.0, %v5929
  %v5931 = vpop.f32.mrb[0].mxu0
  %5932 = vmatprep.mubr.f32.mxu0 0.0
  %5933 = vmatmul.mubr.f32.gmra.mrb[0].mxu0 %v4981
  %v5934 = vpop.f32.mrb[0].mxu0
  %v5935 = vadd.f32 0.0, %v5934
  %v5936 = vpop.f32.mrb[0].mxu0
  %5937 = vmatprep.mubr.f32.mxu0 0.0
  %5938 = vmatmul.mubr.f32.gmra.mrb[0].mxu0 %v4984
  %v5939 = vpop.f32.mrb[0].mxu0
  %v5940 = vadd.f32 0.0, %v5939
  %v5941 = vpop.f32.mrb[0].mxu0
  %5942 = vmatprep.mubr.f32.mxu0 0.0
  %5943 = vmatmul.mubr.f32.gmra.mrb[0].mxu0 %v4987
  %v5944 = vpop.f32.mrb[0].mxu0
  %v5945 = vadd.f32 0.0, %v5944
  %v5946 = vpop.f32.mrb[0].mxu0
  %5947 = vmatprep.mubr.f32.mxu0 0.0
  %5948 = vmatmul.mubr.f32.gmra.mrb[0].mxu0 %v4990
  %v5949 = vpop.f32.mrb[0].mxu0
  %v5950 = vadd.f32 0.0, %v5949
  %v5951 = vpop.f32.mrb[0].mxu0
  %5952 = vmatprep.mubr.f32.mxu0 0.0
  %5953 = vmatmul.mubr.f32.gmra.mrb[0].mxu0 %v4993
  %v5954 = vpop.f32.mrb[0].mxu0
  %v5955 = vadd.f32 0.0, %v5954
  %v5956 = vpop.f32.mrb[0].mxu0
  %5957 = vmatprep.mubr.f32.mxu0 0.0
  %5958 = vmatmul.mubr.f32.gmra.mrb[0].mxu0 %v4996
  %v5959 = vpop.f32.mrb[0].mxu0
  %v5960 = vadd.f32 0.0, %v5959
  %v5961 = vpop.f32.mrb[0].mxu0
  %5962 = vmatprep.mubr.f32.mxu0 0.0
  %5963 = vmatmul.mubr.f32.gmra.mrb[0].mxu0 %v4999
  %v5964 = vpop.f32.mrb[0].mxu0
  %v5965 = vadd.f32 0.0, %v5964
  %v5966 = vpop.f32.mrb[0].mxu0
  %5967 = vmatprep.mubr.f32.mxu0 0.0
  %5968 = vmatmul.mubr.f32.gmra.mrb[0].mxu0 %v5002
  %v5969 = vpop.f32.mrb[0].mxu0
  %v5970 = vadd.f32 0.0, %v5969
  %v5971 = vpop.f32.mrb[0].mxu0
  %5972 = vmatprep.mubr.f32.mxu0 0.0
  %5973 = vmatmul.mubr.f32.gmra.mrb[0].mxu0 %v5005
  %v5974 = vpop.f32.mrb[0].mxu0
  %v5975 = vadd.f32 0.0, %v5974
  %v5976 = vpop.f32.mrb[0].mxu0
  %5977 = vmatprep.mubr.f32.mxu0 0.0
  %5978 = vmatmul.mubr.f32.gmra.mrb[0].mxu0 %v5008
  %v5979 = vpop.f32.mrb[0].mxu0
  %v5980 = vadd.f32 0.0, %v5979
  %v5981 = vpop.f32.mrb[0].mxu0
  %5982 = vmatprep.mubr.f32.mxu0 0.0
  %5983 = vmatmul.mubr.f32.gmra.mrb[0].mxu0 %v5011
  %v5984 = vpop.f32.mrb[0].mxu0
  %v5985 = vadd.f32 0.0, %v5984
  %v5986 = vpop.f32.mrb[0].mxu0
  %5987 = vmatprep.mubr.f32.mxu0 0.0
  %5988 = vmatmul.mubr.f32.gmra.mrb[0].mxu0 %v5014
  %v5989 = vpop.f32.mrb[0].mxu0
  %v5990 = vadd.f32 0.0, %v5989
  %v5991 = vpop.f32.mrb[0].mxu0
  %5992 = vmatprep.mubr.f32.mxu0 0.0
  %5993 = vmatmul.mubr.f32.gmra.mrb[0].mxu0 %v5017
  %v5994 = vpop.f32.mrb[0].mxu0
  %v5995 = vadd.f32 0.0, %v5994
  %v5996 = vpop.f32.mrb[0].mxu0
  %5997 = vmatprep.mubr.f32.mxu0 0.0
  %5998 = vmatmul.mubr.f32.gmra.mrb[0].mxu0 %v5020
  %v5999 = vpop.f32.mrb[0].mxu0
  %v6000 = vadd.f32 0.0, %v5999
  %v6001 = vpop.f32.mrb[0].mxu0
  %6002 = vmatprep.mubr.f32.mxu0 0.0
  %6003 = vmatmul.mubr.f32.gmra.mrb[0].mxu0 %v5023
  %v6004 = vpop.f32.mrb[0].mxu0
  %v6005 = vadd.f32 0.0, %v6004
  %v6006 = vpop.f32.mrb[0].mxu0
  %6007 = vmatprep.mubr.f32.mxu0 0.0
  %6008 = vmatmul.mubr.f32.gmra.mrb[0].mxu0 %v5026
  %v6009 = vpop.f32.mrb[0].mxu0
  %v6010 = vadd.f32 0.0, %v6009
  %v6011 = vpop.f32.mrb[0].mxu0
  %6012 = vmatprep.mubr.f32.mxu0 0.0
  %6013 = vmatmul.mubr.f32.gmra.mrb[0].mxu0 %v5029
  %v6014 = vpop.f32.mrb[0].mxu0
  %v6015 = vadd.f32 0.0, %v6014
  %v6016 = vpop.f32.mrb[0].mxu0
  %6017 = vmatprep.mubr.f32.mxu0 0.0
  %6018 = vmatmul.mubr.f32.gmra.mrb[0].mxu0 %v5032
  %v6019 = vpop.f32.mrb[0].mxu0
  %v6020 = vadd.f32 0.0, %v6019
  %v6021 = vpop.f32.mrb[0].mxu0
  %6022 = vdwg.mxu0
  %v6023 = vld [vmem:[%s268] ss:$2 sm:$0xff]
  %v6024 = vld [vmem:[%s766] ss:$2 sm:$0xff]
  %v6025 = vld [vmem:[%s768] ss:$2 sm:$0xff]
  %v6026 = vld [vmem:[%s1702] ss:$2 sm:$0xff]
  %v6027 = vld [vmem:[%s1704] ss:$2 sm:$0xff]
  %v6028 = vld [vmem:[%s2428] ss:$2 sm:$0xff]
  %v6029 = vld [vmem:[%s2430] ss:$2 sm:$0xff]
  %v6030 = vld [vmem:[%s2432] ss:$2 sm:$0xff]
  %v6031 = vld [vmem:[%s2434] ss:$2 sm:$0xff]
  %v6032 = vld [vmem:[%s4262] ss:$2 sm:$0xff]
  %v6033 = vld [vmem:[%s4264] ss:$2 sm:$0xff]
  %v6034 = vld [vmem:[%s4266] ss:$2 sm:$0xff]
  %v6035 = vld [vmem:[%s4268] ss:$2 sm:$0xff]
  %v6036 = vld [vmem:[%s4270] ss:$2 sm:$0xff]
  %v6037 = vld [vmem:[%s4272] ss:$2 sm:$0xff]
  %v6038 = vld [vmem:[%s4274] ss:$2 sm:$0xff]
  %v6039 = vld [vmem:[%s4276] ss:$2 sm:$0xff]
  %v6040 = vld [vmem:[%s4278] ss:$2 sm:$0xff]
  %s6041 = scalar_lea.vmem [#allocation2], 290
  %v6042 = vld [vmem:[%s6041] ss:$2 sm:$0xff]
  %s6043 = scalar_lea.vmem [#allocation2], 306
  %v6044 = vld [vmem:[%s6043] ss:$2 sm:$0xff]
  %s6045 = scalar_lea.vmem [#allocation2], 322
  %v6046 = vld [vmem:[%s6045] ss:$2 sm:$0xff]
  %s6047 = scalar_lea.vmem [#allocation2], 338
  %v6048 = vld [vmem:[%s6047] ss:$2 sm:$0xff]
  %s6049 = scalar_lea.vmem [#allocation2], 354
  %v6050 = vld [vmem:[%s6049] ss:$2 sm:$0xff]
  %s6051 = scalar_lea.vmem [#allocation2], 370
  %v6052 = vld [vmem:[%s6051] ss:$2 sm:$0xff]
  %s6053 = scalar_lea.vmem [#allocation2], 386
  %v6054 = vld [vmem:[%s6053] ss:$2 sm:$0xff]
  %s6055 = scalar_lea.vmem [#allocation2], 402
  %v6056 = vld [vmem:[%s6055] ss:$2 sm:$0xff]
  %s6057 = scalar_lea.vmem [#allocation2], 418
  %v6058 = vld [vmem:[%s6057] ss:$2 sm:$0xff]
  %s6059 = scalar_lea.vmem [#allocation2], 434
  %v6060 = vld [vmem:[%s6059] ss:$2 sm:$0xff]
  %s6061 = scalar_lea.vmem [#allocation2], 450
  %v6062 = vld [vmem:[%s6061] ss:$2 sm:$0xff]
  %s6063 = scalar_lea.vmem [#allocation2], 466
  %v6064 = vld [vmem:[%s6063] ss:$2 sm:$0xff]
  %s6065 = scalar_lea.vmem [#allocation2], 482
  %v6066 = vld [vmem:[%s6065] ss:$2 sm:$0xff]
  %s6067 = scalar_lea.vmem [#allocation2], 498
  %v6068 = vld [vmem:[%s6067] ss:$2 sm:$0xff]
  %s6069 = scalar_lea.vmem [#allocation2], 514
  %v6070 = vld [vmem:[%s6069] ss:$2 sm:$0xff]
  %s6071 = scalar_lea.vmem [#allocation2], 530
  %v6072 = vld [vmem:[%s6071] ss:$2 sm:$0xff]
  %s6073 = scalar_lea.vmem [#allocation2], 546
  %v6074 = vld [vmem:[%s6073] ss:$2 sm:$0xff]
  %s6075 = scalar_lea.vmem [#allocation2], 562
  %v6076 = vld [vmem:[%s6075] ss:$2 sm:$0x7f]
  %v6077 = vadd.f32 %v6023, %v5845
  %v6078 = vadd.f32 %v6024, %v5850
  %v6079 = vadd.f32 %v6025, %v5855
  %v6080 = vadd.f32 %v6026, %v5860
  %v6081 = vadd.f32 %v6027, %v5865
  %v6082 = vadd.f32 %v6028, %v5870
  %v6083 = vadd.f32 %v6029, %v5875
  %v6084 = vadd.f32 %v6030, %v5880
  %v6085 = vadd.f32 %v6031, %v5885
  %v6086 = vadd.f32 %v6032, %v5890
  %v6087 = vadd.f32 %v6033, %v5895
  %v6088 = vadd.f32 %v6034, %v5900
  %v6089 = vadd.f32 %v6035, %v5905
  %v6090 = vadd.f32 %v6036, %v5910
  %v6091 = vadd.f32 %v6037, %v5915
  %v6092 = vadd.f32 %v6038, %v5920
  %v6093 = vadd.f32 %v6039, %v5925
  %v6094 = vadd.f32 %v6040, %v5930
  %v6095 = vadd.f32 %v6042, %v5935
  %v6096 = vadd.f32 %v6044, %v5940
  %v6097 = vadd.f32 %v6046, %v5945
  %v6098 = vadd.f32 %v6048, %v5950
  %v6099 = vadd.f32 %v6050, %v5955
  %v6100 = vadd.f32 %v6052, %v5960
  %v6101 = vadd.f32 %v6054, %v5965
  %v6102 = vadd.f32 %v6056, %v5970
  %v6103 = vadd.f32 %v6058, %v5975
  %v6104 = vadd.f32 %v6060, %v5980
  %v6105 = vadd.f32 %v6062, %v5985
  %v6106 = vadd.f32 %v6064, %v5990
  %v6107 = vadd.f32 %v6066, %v5995
  %v6108 = vadd.f32 %v6068, %v6000
  %v6109 = vadd.f32 %v6070, %v6005
  %v6110 = vadd.f32 %v6072, %v6010
  %v6111 = vadd.f32 %v6074, %v6015
  %v6112 = vadd.f32 %v6076, %v6020
  %6113 = vst [vmem:[%s268] ss:$2 sm:$0xff] %v6077
  %6114 = vst [vmem:[%s766] ss:$2 sm:$0xff] %v6078
  %6115 = vst [vmem:[%s768] ss:$2 sm:$0xff] %v6079
  %6116 = vst [vmem:[%s1702] ss:$2 sm:$0xff] %v6080
  %6117 = vst [vmem:[%s1704] ss:$2 sm:$0xff] %v6081
  %6118 = vst [vmem:[%s2428] ss:$2 sm:$0xff] %v6082
  %6119 = vst [vmem:[%s2430] ss:$2 sm:$0xff] %v6083
  %6120 = vst [vmem:[%s2432] ss:$2 sm:$0xff] %v6084
  %6121 = vst [vmem:[%s2434] ss:$2 sm:$0xff] %v6085
  %6122 = vst [vmem:[%s4262] ss:$2 sm:$0xff] %v6086
  %6123 = vst [vmem:[%s4264] ss:$2 sm:$0xff] %v6087
  %6124 = vst [vmem:[%s4266] ss:$2 sm:$0xff] %v6088
  %6125 = vst [vmem:[%s4268] ss:$2 sm:$0xff] %v6089
  %6126 = vst [vmem:[%s4270] ss:$2 sm:$0xff] %v6090
  %6127 = vst [vmem:[%s4272] ss:$2 sm:$0xff] %v6091
  %6128 = vst [vmem:[%s4274] ss:$2 sm:$0xff] %v6092
  %6129 = vst [vmem:[%s4276] ss:$2 sm:$0xff] %v6093
  %6130 = vst [vmem:[%s4278] ss:$2 sm:$0xff] %v6094
  %6131 = vst [vmem:[%s6041] ss:$2 sm:$0xff] %v6095
  %6132 = vst [vmem:[%s6043] ss:$2 sm:$0xff] %v6096
  %6133 = vst [vmem:[%s6045] ss:$2 sm:$0xff] %v6097
  %6134 = vst [vmem:[%s6047] ss:$2 sm:$0xff] %v6098
  %6135 = vst [vmem:[%s6049] ss:$2 sm:$0xff] %v6099
  %6136 = vst [vmem:[%s6051] ss:$2 sm:$0xff] %v6100
  %6137 = vst [vmem:[%s6053] ss:$2 sm:$0xff] %v6101
  %6138 = vst [vmem:[%s6055] ss:$2 sm:$0xff] %v6102
  %6139 = vst [vmem:[%s6057] ss:$2 sm:$0xff] %v6103
  %6140 = vst [vmem:[%s6059] ss:$2 sm:$0xff] %v6104
  %6141 = vst [vmem:[%s6061] ss:$2 sm:$0xff] %v6105
  %6142 = vst [vmem:[%s6063] ss:$2 sm:$0xff] %v6106
  %6143 = vst [vmem:[%s6065] ss:$2 sm:$0xff] %v6107
  %6144 = vst [vmem:[%s6067] ss:$2 sm:$0xff] %v6108
  %6145 = vst [vmem:[%s6069] ss:$2 sm:$0xff] %v6109
  %6146 = vst [vmem:[%s6071] ss:$2 sm:$0xff] %v6110
  %6147 = vst [vmem:[%s6073] ss:$2 sm:$0xff] %v6111
  %6148 = vst [vmem:[%s6075] ss:$2 sm:$0x7f] %v6112
  %v6149 = vld [vmem:[#allocation2] sm:$0xff]
  %v6150 = vld [vmem:[#allocation2 + $0x8] sm:$0xff]
  %v6151 = vld [vmem:[#allocation2 + $0x10] sm:$0xff]
  %v6152 = vld [vmem:[#allocation2 + $0x18] sm:$0xff]
  %v6153 = vld [vmem:[#allocation2 + $0x20] sm:$0xff]
  %v6154 = vld [vmem:[#allocation2 + $0x28] sm:$0xff]
  %v6155 = vld [vmem:[#allocation2 + $0x30] sm:$0xff]
  %v6156 = vld [vmem:[#allocation2 + $0x38] sm:$0xff]
  %v6157 = vld [vmem:[#allocation2 + $0x40] sm:$0xff]
  %v6158 = vld [vmem:[#allocation2 + $0x48] sm:$0xff]
  %v6159 = vld [vmem:[#allocation2 + $0x50] sm:$0xff]
  %v6160 = vld [vmem:[#allocation2 + $0x58] sm:$0xff]
  %v6161 = vld [vmem:[#allocation2 + $0x60] sm:$0xff]
  %v6162 = vld [vmem:[#allocation2 + $0x68] sm:$0xff]
  %v6163 = vld [vmem:[#allocation2 + $0x70] sm:$0xff]
  %v6164 = vld [vmem:[#allocation2 + $0x78] sm:$0xff]
  %v6165 = vld [vmem:[#allocation2 + $0x80] sm:$0xff]
  %v6166 = vld [vmem:[#allocation2 + $0x88] sm:$0xff]
  %v6167 = vld [vmem:[#allocation2 + $0x90] sm:$0xff]
  %v6168 = vld [vmem:[#allocation2 + $0x98] sm:$0xff]
  %v6169 = vld [vmem:[#allocation2 + $0xa0] sm:$0xff]
  %v6170 = vld [vmem:[#allocation2 + $0xa8] sm:$0xff]
  %v6171 = vld [vmem:[#allocation2 + $0xb0] sm:$0xff]
  %v6172 = vld [vmem:[#allocation2 + $0xb8] sm:$0xff]
  %v6173 = vld [vmem:[#allocation2 + $0xc0] sm:$0xff]
  %v6174 = vld [vmem:[#allocation2 + $0xc8] sm:$0xff]
  %v6175 = vld [vmem:[#allocation2 + $0xd0] sm:$0xff]
  %v6176 = vld [vmem:[#allocation2 + $0xd8] sm:$0xff]
  %v6177 = vld [vmem:[#allocation2 + $0xe0] sm:$0xff]
  %v6178 = vld [vmem:[#allocation2 + $0xe8] sm:$0xff]
  %v6179 = vld [vmem:[#allocation2 + $0xf0] sm:$0xff]
  %v6180 = vld [vmem:[#allocation2 + $0xf8] sm:$0xff]
  %v6181 = vld [vmem:[#allocation2 + $0x100] sm:$0xff]
  %v6182 = vld [vmem:[#allocation2 + $0x108] sm:$0xff]
  %v6183 = vld [vmem:[#allocation2 + $0x110] sm:$0xff]
  %v6184 = vld [vmem:[#allocation2 + $0x118] sm:$0xff]
  %v6185 = vld [vmem:[#allocation2 + $0x120] sm:$0xff]
  %v6186 = vld [vmem:[#allocation2 + $0x128] sm:$0xff]
  %v6187 = vld [vmem:[#allocation2 + $0x130] sm:$0xff]
  %v6188 = vld [vmem:[#allocation2 + $0x138] sm:$0xff]
  %v6189 = vld [vmem:[#allocation2 + $0x140] sm:$0xff]
  %v6190 = vld [vmem:[#allocation2 + $0x148] sm:$0xff]
  %v6191 = vld [vmem:[#allocation2 + $0x150] sm:$0xff]
  %v6192 = vld [vmem:[#allocation2 + $0x158] sm:$0xff]
  %v6193 = vld [vmem:[#allocation2 + $0x160] sm:$0xff]
  %v6194 = vld [vmem:[#allocation2 + $0x168] sm:$0xff]
  %v6195 = vld [vmem:[#allocation2 + $0x170] sm:$0xff]
  %v6196 = vld [vmem:[#allocation2 + $0x178] sm:$0xff]
  %v6197 = vld [vmem:[#allocation2 + $0x180] sm:$0xff]
  %v6198 = vld [vmem:[#allocation2 + $0x188] sm:$0xff]
  %v6199 = vld [vmem:[#allocation2 + $0x190] sm:$0xff]
  %v6200 = vld [vmem:[#allocation2 + $0x198] sm:$0xff]
  %v6201 = vld [vmem:[#allocation2 + $0x1a0] sm:$0xff]
  %v6202 = vld [vmem:[#allocation2 + $0x1a8] sm:$0xff]
  %v6203 = vld [vmem:[#allocation2 + $0x1b0] sm:$0xff]
  %v6204 = vld [vmem:[#allocation2 + $0x1b8] sm:$0xff]
  %v6205 = vld [vmem:[#allocation2 + $0x1c0] sm:$0xff]
  %v6206 = vld [vmem:[#allocation2 + $0x1c8] sm:$0xff]
  %v6207 = vld [vmem:[#allocation2 + $0x1d0] sm:$0xff]
  %v6208 = vld [vmem:[#allocation2 + $0x1d8] sm:$0xff]
  %v6209 = vld [vmem:[#allocation2 + $0x1e0] sm:$0xff]
  %v6210 = vld [vmem:[#allocation2 + $0x1e8] sm:$0xff]
  %v6211 = vld [vmem:[#allocation2 + $0x1f0] sm:$0xff]
  %v6212 = vld [vmem:[#allocation2 + $0x1f8] sm:$0xff]
  %v6213 = vld [vmem:[#allocation2 + $0x200] sm:$0xff]
  %v6214 = vld [vmem:[#allocation2 + $0x208] sm:$0xff]
  %v6215 = vld [vmem:[#allocation2 + $0x210] sm:$0xff]
  %v6216 = vld [vmem:[#allocation2 + $0x218] sm:$0xff]
  %v6217 = vld [vmem:[#allocation2 + $0x220] sm:$0xff]
  %v6218 = vld [vmem:[#allocation2 + $0x228] sm:$0xff]
  %v6219 = vld [vmem:[#allocation2 + $0x230] sm:$0xff]
  %v6220 = vld [vmem:[#allocation2 + $0x238] sm:$0x7f]
  %v6221 = vadd.f32 %v6149, %v279
  %v6222 = vadd.f32 %v6150, %v279
  %v6223 = vadd.f32 %v6151, %v279
  %v6224 = vadd.f32 %v6152, %v279
  %v6225 = vadd.f32 %v6153, %v279
  %v6226 = vadd.f32 %v6154, %v279
  %v6227 = vadd.f32 %v6155, %v279
  %v6228 = vadd.f32 %v6156, %v279
  %v6229 = vadd.f32 %v6157, %v279
  %v6230 = vadd.f32 %v6158, %v279
  %v6231 = vadd.f32 %v6159, %v279
  %v6232 = vadd.f32 %v6160, %v279
  %v6233 = vadd.f32 %v6161, %v279
  %v6234 = vadd.f32 %v6162, %v279
  %v6235 = vadd.f32 %v6163, %v279
  %v6236 = vadd.f32 %v6164, %v279
  %v6237 = vadd.f32 %v6165, %v279
  %v6238 = vadd.f32 %v6166, %v279
  %v6239 = vadd.f32 %v6167, %v279
  %v6240 = vadd.f32 %v6168, %v279
  %v6241 = vadd.f32 %v6169, %v279
  %v6242 = vadd.f32 %v6170, %v279
  %v6243 = vadd.f32 %v6171, %v279
  %v6244 = vadd.f32 %v6172, %v279
  %v6245 = vadd.f32 %v6173, %v279
  %v6246 = vadd.f32 %v6174, %v279
  %v6247 = vadd.f32 %v6175, %v279
  %v6248 = vadd.f32 %v6176, %v279
  %v6249 = vadd.f32 %v6177, %v279
  %v6250 = vadd.f32 %v6178, %v279
  %v6251 = vadd.f32 %v6179, %v279
  %v6252 = vadd.f32 %v6180, %v279
  %v6253 = vadd.f32 %v6181, %v279
  %v6254 = vadd.f32 %v6182, %v279
  %v6255 = vadd.f32 %v6183, %v279
  %v6256 = vadd.f32 %v6184, %v279
  %v6257 = vadd.f32 %v6185, %v279
  %v6258 = vadd.f32 %v6186, %v279
  %v6259 = vadd.f32 %v6187, %v279
  %v6260 = vadd.f32 %v6188, %v279
  %v6261 = vadd.f32 %v6189, %v279
  %v6262 = vadd.f32 %v6190, %v279
  %v6263 = vadd.f32 %v6191, %v279
  %v6264 = vadd.f32 %v6192, %v279
  %v6265 = vadd.f32 %v6193, %v279
  %v6266 = vadd.f32 %v6194, %v279
  %v6267 = vadd.f32 %v6195, %v279
  %v6268 = vadd.f32 %v6196, %v279
  %v6269 = vadd.f32 %v6197, %v279
  %v6270 = vadd.f32 %v6198, %v279
  %v6271 = vadd.f32 %v6199, %v279
  %v6272 = vadd.f32 %v6200, %v279
  %v6273 = vadd.f32 %v6201, %v279
  %v6274 = vadd.f32 %v6202, %v279
  %v6275 = vadd.f32 %v6203, %v279
  %v6276 = vadd.f32 %v6204, %v279
  %v6277 = vadd.f32 %v6205, %v279
  %v6278 = vadd.f32 %v6206, %v279
  %v6279 = vadd.f32 %v6207, %v279
  %v6280 = vadd.f32 %v6208, %v279
  %v6281 = vadd.f32 %v6209, %v279
  %v6282 = vadd.f32 %v6210, %v279
  %v6283 = vadd.f32 %v6211, %v279
  %v6284 = vadd.f32 %v6212, %v279
  %v6285 = vadd.f32 %v6213, %v279
  %v6286 = vadd.f32 %v6214, %v279
  %v6287 = vadd.f32 %v6215, %v279
  %v6288 = vadd.f32 %v6216, %v279
  %v6289 = vadd.f32 %v6217, %v279
  %v6290 = vadd.f32 %v6218, %v279
  %v6291 = vadd.f32 %v6219, %v279
  %v6292 = vadd.f32 %v6220, %v279
  %v6293 = vsel %vm38, %v6221, 0.0
  %v6294 = vsel %vm38, %v6222, 0.0
  %v6295 = vadd.f32 %v6293, %v6294
  %v6296 = vsel %vm38, %v6223, 0.0
  %v6297 = vadd.f32 %v6295, %v6296
  %v6298 = vsel %vm38, %v6224, 0.0
  %v6299 = vadd.f32 %v6297, %v6298
  %v6300 = vsel %vm38, %v6225, 0.0
  %v6301 = vadd.f32 %v6299, %v6300
  %v6302 = vsel %vm38, %v6226, 0.0
  %v6303 = vadd.f32 %v6301, %v6302
  %v6304 = vsel %vm38, %v6227, 0.0
  %v6305 = vadd.f32 %v6303, %v6304
  %v6306 = vsel %vm38, %v6228, 0.0
  %v6307 = vadd.f32 %v6305, %v6306
  %v6308 = vsel %vm38, %v6229, 0.0
  %v6309 = vadd.f32 %v6307, %v6308
  %v6310 = vsel %vm38, %v6230, 0.0
  %v6311 = vadd.f32 %v6309, %v6310
  %v6312 = vsel %vm38, %v6231, 0.0
  %v6313 = vadd.f32 %v6311, %v6312
  %v6314 = vsel %vm38, %v6232, 0.0
  %v6315 = vadd.f32 %v6313, %v6314
  %v6316 = vsel %vm38, %v6233, 0.0
  %v6317 = vadd.f32 %v6315, %v6316
  %v6318 = vsel %vm38, %v6234, 0.0
  %v6319 = vadd.f32 %v6317, %v6318
  %v6320 = vsel %vm38, %v6235, 0.0
  %v6321 = vadd.f32 %v6319, %v6320
  %v6322 = vsel %vm38, %v6236, 0.0
  %v6323 = vadd.f32 %v6321, %v6322
  %v6324 = vsel %vm38, %v6237, 0.0
  %v6325 = vadd.f32 %v6323, %v6324
  %v6326 = vsel %vm38, %v6238, 0.0
  %v6327 = vadd.f32 %v6325, %v6326
  %v6328 = vsel %vm38, %v6239, 0.0
  %v6329 = vadd.f32 %v6327, %v6328
  %v6330 = vsel %vm38, %v6240, 0.0
  %v6331 = vadd.f32 %v6329, %v6330
  %v6332 = vsel %vm38, %v6241, 0.0
  %v6333 = vadd.f32 %v6331, %v6332
  %v6334 = vsel %vm38, %v6242, 0.0
  %v6335 = vadd.f32 %v6333, %v6334
  %v6336 = vsel %vm38, %v6243, 0.0
  %v6337 = vadd.f32 %v6335, %v6336
  %v6338 = vsel %vm38, %v6244, 0.0
  %v6339 = vadd.f32 %v6337, %v6338
  %v6340 = vsel %vm38, %v6245, 0.0
  %v6341 = vadd.f32 %v6339, %v6340
  %v6342 = vsel %vm38, %v6246, 0.0
  %v6343 = vadd.f32 %v6341, %v6342
  %v6344 = vsel %vm38, %v6247, 0.0
  %v6345 = vadd.f32 %v6343, %v6344
  %v6346 = vsel %vm38, %v6248, 0.0
  %v6347 = vadd.f32 %v6345, %v6346
  %v6348 = vsel %vm38, %v6249, 0.0
  %v6349 = vadd.f32 %v6347, %v6348
  %v6350 = vsel %vm38, %v6250, 0.0
  %v6351 = vadd.f32 %v6349, %v6350
  %v6352 = vsel %vm38, %v6251, 0.0
  %v6353 = vadd.f32 %v6351, %v6352
  %v6354 = vsel %vm38, %v6252, 0.0
  %v6355 = vadd.f32 %v6353, %v6354
  %v6356 = vsel %vm38, %v6253, 0.0
  %v6357 = vadd.f32 %v6355, %v6356
  %v6358 = vsel %vm38, %v6254, 0.0
  %v6359 = vadd.f32 %v6357, %v6358
  %v6360 = vsel %vm38, %v6255, 0.0
  %v6361 = vadd.f32 %v6359, %v6360
  %v6362 = vsel %vm38, %v6256, 0.0
  %v6363 = vadd.f32 %v6361, %v6362
  %v6364 = vsel %vm38, %v6257, 0.0
  %v6365 = vadd.f32 %v6363, %v6364
  %v6366 = vsel %vm38, %v6258, 0.0
  %v6367 = vadd.f32 %v6365, %v6366
  %v6368 = vsel %vm38, %v6259, 0.0
  %v6369 = vadd.f32 %v6367, %v6368
  %v6370 = vsel %vm38, %v6260, 0.0
  %v6371 = vadd.f32 %v6369, %v6370
  %v6372 = vsel %vm38, %v6261, 0.0
  %v6373 = vadd.f32 %v6371, %v6372
  %v6374 = vsel %vm38, %v6262, 0.0
  %v6375 = vadd.f32 %v6373, %v6374
  %v6376 = vsel %vm38, %v6263, 0.0
  %v6377 = vadd.f32 %v6375, %v6376
  %v6378 = vsel %vm38, %v6264, 0.0
  %v6379 = vadd.f32 %v6377, %v6378
  %v6380 = vsel %vm38, %v6265, 0.0
  %v6381 = vadd.f32 %v6379, %v6380
  %v6382 = vsel %vm38, %v6266, 0.0
  %v6383 = vadd.f32 %v6381, %v6382
  %v6384 = vsel %vm38, %v6267, 0.0
  %v6385 = vadd.f32 %v6383, %v6384
  %v6386 = vsel %vm38, %v6268, 0.0
  %v6387 = vadd.f32 %v6385, %v6386
  %v6388 = vsel %vm38, %v6269, 0.0
  %v6389 = vadd.f32 %v6387, %v6388
  %v6390 = vsel %vm38, %v6270, 0.0
  %v6391 = vadd.f32 %v6389, %v6390
  %v6392 = vsel %vm38, %v6271, 0.0
  %v6393 = vadd.f32 %v6391, %v6392
  %v6394 = vsel %vm38, %v6272, 0.0
  %v6395 = vadd.f32 %v6393, %v6394
  %v6396 = vsel %vm38, %v6273, 0.0
  %v6397 = vadd.f32 %v6395, %v6396
  %v6398 = vsel %vm38, %v6274, 0.0
  %v6399 = vadd.f32 %v6397, %v6398
  %v6400 = vsel %vm38, %v6275, 0.0
  %v6401 = vadd.f32 %v6399, %v6400
  %v6402 = vsel %vm38, %v6276, 0.0
  %v6403 = vadd.f32 %v6401, %v6402
  %v6404 = vsel %vm38, %v6277, 0.0
  %v6405 = vadd.f32 %v6403, %v6404
  %v6406 = vsel %vm38, %v6278, 0.0
  %v6407 = vadd.f32 %v6405, %v6406
  %v6408 = vsel %vm38, %v6279, 0.0
  %v6409 = vadd.f32 %v6407, %v6408
  %v6410 = vsel %vm38, %v6280, 0.0
  %v6411 = vadd.f32 %v6409, %v6410
  %v6412 = vsel %vm38, %v6281, 0.0
  %v6413 = vadd.f32 %v6411, %v6412
  %v6414 = vsel %vm38, %v6282, 0.0
  %v6415 = vadd.f32 %v6413, %v6414
  %v6416 = vsel %vm38, %v6283, 0.0
  %v6417 = vadd.f32 %v6415, %v6416
  %v6418 = vsel %vm38, %v6284, 0.0
  %v6419 = vadd.f32 %v6417, %v6418
  %v6420 = vsel %vm38, %v6285, 0.0
  %v6421 = vadd.f32 %v6419, %v6420
  %v6422 = vsel %vm38, %v6286, 0.0
  %v6423 = vadd.f32 %v6421, %v6422
  %v6424 = vsel %vm38, %v6287, 0.0
  %v6425 = vadd.f32 %v6423, %v6424
  %v6426 = vsel %vm38, %v6288, 0.0
  %v6427 = vadd.f32 %v6425, %v6426
  %v6428 = vsel %vm38, %v6289, 0.0
  %v6429 = vadd.f32 %v6427, %v6428
  %v6430 = vsel %vm38, %v6290, 0.0
  %v6431 = vadd.f32 %v6429, %v6430
  %v6432 = vsel %vm38, %v6291, 0.0
  %v6433 = vadd.f32 %v6431, %v6432
  %v6434 = vsel %vm1390, %v6292, 0.0
  %v6435 = vadd.f32 %v6433, %v6434
  %v6436 = vrot.slane %v6435, 4
  %v6437 = vadd.f32 %v6435, %v6436
  %v6438 = vrot.slane %v6437, 2
  %v6439 = vadd.f32 %v6437, %v6438
  %v6440 = vrot.slane %v6439, 1
  %v6441 = vadd.f32 %v6439, %v6440
  %v6442 = vmul.f32 %v6221, %v6221
  %v6443 = vmul.f32 %v6222, %v6222
  %v6444 = vmul.f32 %v6223, %v6223
  %v6445 = vmul.f32 %v6224, %v6224
  %v6446 = vmul.f32 %v6225, %v6225
  %v6447 = vmul.f32 %v6226, %v6226
  %v6448 = vmul.f32 %v6227, %v6227
  %v6449 = vmul.f32 %v6228, %v6228
  %v6450 = vmul.f32 %v6229, %v6229
  %v6451 = vmul.f32 %v6230, %v6230
  %v6452 = vmul.f32 %v6231, %v6231
  %v6453 = vmul.f32 %v6232, %v6232
  %v6454 = vmul.f32 %v6233, %v6233
  %v6455 = vmul.f32 %v6234, %v6234
  %v6456 = vmul.f32 %v6235, %v6235
  %v6457 = vmul.f32 %v6236, %v6236
  %v6458 = vmul.f32 %v6237, %v6237
  %v6459 = vmul.f32 %v6238, %v6238
  %v6460 = vmul.f32 %v6239, %v6239
  %v6461 = vmul.f32 %v6240, %v6240
  %v6462 = vmul.f32 %v6241, %v6241
  %v6463 = vmul.f32 %v6242, %v6242
  %v6464 = vmul.f32 %v6243, %v6243
  %v6465 = vmul.f32 %v6244, %v6244
  %v6466 = vmul.f32 %v6245, %v6245
  %v6467 = vmul.f32 %v6246, %v6246
  %v6468 = vmul.f32 %v6247, %v6247
  %v6469 = vmul.f32 %v6248, %v6248
  %v6470 = vmul.f32 %v6249, %v6249
  %v6471 = vmul.f32 %v6250, %v6250
  %v6472 = vmul.f32 %v6251, %v6251
  %v6473 = vmul.f32 %v6252, %v6252
  %v6474 = vmul.f32 %v6253, %v6253
  %v6475 = vmul.f32 %v6254, %v6254
  %v6476 = vmul.f32 %v6255, %v6255
  %v6477 = vmul.f32 %v6256, %v6256
  %v6478 = vmul.f32 %v6257, %v6257
  %v6479 = vmul.f32 %v6258, %v6258
  %v6480 = vmul.f32 %v6259, %v6259
  %v6481 = vmul.f32 %v6260, %v6260
  %v6482 = vmul.f32 %v6261, %v6261
  %v6483 = vmul.f32 %v6262, %v6262
  %v6484 = vmul.f32 %v6263, %v6263
  %v6485 = vmul.f32 %v6264, %v6264
  %v6486 = vmul.f32 %v6265, %v6265
  %v6487 = vmul.f32 %v6266, %v6266
  %v6488 = vmul.f32 %v6267, %v6267
  %v6489 = vmul.f32 %v6268, %v6268
  %v6490 = vmul.f32 %v6269, %v6269
  %v6491 = vmul.f32 %v6270, %v6270
  %v6492 = vmul.f32 %v6271, %v6271
  %v6493 = vmul.f32 %v6272, %v6272
  %v6494 = vmul.f32 %v6273, %v6273
  %v6495 = vmul.f32 %v6274, %v6274
  %v6496 = vmul.f32 %v6275, %v6275
  %v6497 = vmul.f32 %v6276, %v6276
  %v6498 = vmul.f32 %v6277, %v6277
  %v6499 = vmul.f32 %v6278, %v6278
  %v6500 = vmul.f32 %v6279, %v6279
  %v6501 = vmul.f32 %v6280, %v6280
  %v6502 = vmul.f32 %v6281, %v6281
  %v6503 = vmul.f32 %v6282, %v6282
  %v6504 = vmul.f32 %v6283, %v6283
  %v6505 = vmul.f32 %v6284, %v6284
  %v6506 = vmul.f32 %v6285, %v6285
  %v6507 = vmul.f32 %v6286, %v6286
  %v6508 = vmul.f32 %v6287, %v6287
  %v6509 = vmul.f32 %v6288, %v6288
  %v6510 = vmul.f32 %v6289, %v6289
  %v6511 = vmul.f32 %v6290, %v6290
  %v6512 = vmul.f32 %v6291, %v6291
  %v6513 = vmul.f32 %v6292, %v6292
  %v6514 = vsel %vm38, %v6442, 0.0
  %v6515 = vsel %vm38, %v6443, 0.0
  %v6516 = vadd.f32 %v6514, %v6515
  %v6517 = vsel %vm38, %v6444, 0.0
  %v6518 = vadd.f32 %v6516, %v6517
  %v6519 = vsel %vm38, %v6445, 0.0
  %v6520 = vadd.f32 %v6518, %v6519
  %v6521 = vsel %vm38, %v6446, 0.0
  %v6522 = vadd.f32 %v6520, %v6521
  %v6523 = vsel %vm38, %v6447, 0.0
  %v6524 = vadd.f32 %v6522, %v6523
  %v6525 = vsel %vm38, %v6448, 0.0
  %v6526 = vadd.f32 %v6524, %v6525
  %v6527 = vsel %vm38, %v6449, 0.0
  %v6528 = vadd.f32 %v6526, %v6527
  %v6529 = vsel %vm38, %v6450, 0.0
  %v6530 = vadd.f32 %v6528, %v6529
  %v6531 = vsel %vm38, %v6451, 0.0
  %v6532 = vadd.f32 %v6530, %v6531
  %v6533 = vsel %vm38, %v6452, 0.0
  %v6534 = vadd.f32 %v6532, %v6533
  %v6535 = vsel %vm38, %v6453, 0.0
  %v6536 = vadd.f32 %v6534, %v6535
  %v6537 = vsel %vm38, %v6454, 0.0
  %v6538 = vadd.f32 %v6536, %v6537
  %v6539 = vsel %vm38, %v6455, 0.0
  %v6540 = vadd.f32 %v6538, %v6539
  %v6541 = vsel %vm38, %v6456, 0.0
  %v6542 = vadd.f32 %v6540, %v6541
  %v6543 = vsel %vm38, %v6457, 0.0
  %v6544 = vadd.f32 %v6542, %v6543
  %v6545 = vsel %vm38, %v6458, 0.0
  %v6546 = vadd.f32 %v6544, %v6545
  %v6547 = vsel %vm38, %v6459, 0.0
  %v6548 = vadd.f32 %v6546, %v6547
  %v6549 = vsel %vm38, %v6460, 0.0
  %v6550 = vadd.f32 %v6548, %v6549
  %v6551 = vsel %vm38, %v6461, 0.0
  %v6552 = vadd.f32 %v6550, %v6551
  %v6553 = vsel %vm38, %v6462, 0.0
  %v6554 = vadd.f32 %v6552, %v6553
  %v6555 = vsel %vm38, %v6463, 0.0
  %v6556 = vadd.f32 %v6554, %v6555
  %v6557 = vsel %vm38, %v6464, 0.0
  %v6558 = vadd.f32 %v6556, %v6557
  %v6559 = vsel %vm38, %v6465, 0.0
  %v6560 = vadd.f32 %v6558, %v6559
  %v6561 = vsel %vm38, %v6466, 0.0
  %v6562 = vadd.f32 %v6560, %v6561
  %v6563 = vsel %vm38, %v6467, 0.0
  %v6564 = vadd.f32 %v6562, %v6563
  %v6565 = vsel %vm38, %v6468, 0.0
  %v6566 = vadd.f32 %v6564, %v6565
  %v6567 = vsel %vm38, %v6469, 0.0
  %v6568 = vadd.f32 %v6566, %v6567
  %v6569 = vsel %vm38, %v6470, 0.0
  %v6570 = vadd.f32 %v6568, %v6569
  %v6571 = vsel %vm38, %v6471, 0.0
  %v6572 = vadd.f32 %v6570, %v6571
  %v6573 = vsel %vm38, %v6472, 0.0
  %v6574 = vadd.f32 %v6572, %v6573
  %v6575 = vsel %vm38, %v6473, 0.0
  %v6576 = vadd.f32 %v6574, %v6575
  %v6577 = vsel %vm38, %v6474, 0.0
  %v6578 = vadd.f32 %v6576, %v6577
  %v6579 = vsel %vm38, %v6475, 0.0
  %v6580 = vadd.f32 %v6578, %v6579
  %v6581 = vsel %vm38, %v6476, 0.0
  %v6582 = vadd.f32 %v6580, %v6581
  %v6583 = vsel %vm38, %v6477, 0.0
  %v6584 = vadd.f32 %v6582, %v6583
  %v6585 = vsel %vm38, %v6478, 0.0
  %v6586 = vadd.f32 %v6584, %v6585
  %v6587 = vsel %vm38, %v6479, 0.0
  %v6588 = vadd.f32 %v6586, %v6587
  %v6589 = vsel %vm38, %v6480, 0.0
  %v6590 = vadd.f32 %v6588, %v6589
  %v6591 = vsel %vm38, %v6481, 0.0
  %v6592 = vadd.f32 %v6590, %v6591
  %v6593 = vsel %vm38, %v6482, 0.0
  %v6594 = vadd.f32 %v6592, %v6593
  %v6595 = vsel %vm38, %v6483, 0.0
  %v6596 = vadd.f32 %v6594, %v6595
  %v6597 = vsel %vm38, %v6484, 0.0
  %v6598 = vadd.f32 %v6596, %v6597
  %v6599 = vsel %vm38, %v6485, 0.0
  %v6600 = vadd.f32 %v6598, %v6599
  %v6601 = vsel %vm38, %v6486, 0.0
  %v6602 = vadd.f32 %v6600, %v6601
  %v6603 = vsel %vm38, %v6487, 0.0
  %v6604 = vadd.f32 %v6602, %v6603
  %v6605 = vsel %vm38, %v6488, 0.0
  %v6606 = vadd.f32 %v6604, %v6605
  %v6607 = vsel %vm38, %v6489, 0.0
  %v6608 = vadd.f32 %v6606, %v6607
  %v6609 = vsel %vm38, %v6490, 0.0
  %v6610 = vadd.f32 %v6608, %v6609
  %v6611 = vsel %vm38, %v6491, 0.0
  %v6612 = vadd.f32 %v6610, %v6611
  %v6613 = vsel %vm38, %v6492, 0.0
  %v6614 = vadd.f32 %v6612, %v6613
  %v6615 = vsel %vm38, %v6493, 0.0
  %v6616 = vadd.f32 %v6614, %v6615
  %v6617 = vsel %vm38, %v6494, 0.0
  %v6618 = vadd.f32 %v6616, %v6617
  %v6619 = vsel %vm38, %v6495, 0.0
  %v6620 = vadd.f32 %v6618, %v6619
  %v6621 = vsel %vm38, %v6496, 0.0
  %v6622 = vadd.f32 %v6620, %v6621
  %v6623 = vsel %vm38, %v6497, 0.0
  %v6624 = vadd.f32 %v6622, %v6623
  %v6625 = vsel %vm38, %v6498, 0.0
  %v6626 = vadd.f32 %v6624, %v6625
  %v6627 = vsel %vm38, %v6499, 0.0
  %v6628 = vadd.f32 %v6626, %v6627
  %v6629 = vsel %vm38, %v6500, 0.0
  %v6630 = vadd.f32 %v6628, %v6629
  %v6631 = vsel %vm38, %v6501, 0.0
  %v6632 = vadd.f32 %v6630, %v6631
  %v6633 = vsel %vm38, %v6502, 0.0
  %v6634 = vadd.f32 %v6632, %v6633
  %v6635 = vsel %vm38, %v6503, 0.0
  %v6636 = vadd.f32 %v6634, %v6635
  %v6637 = vsel %vm38, %v6504, 0.0
  %v6638 = vadd.f32 %v6636, %v6637
  %v6639 = vsel %vm38, %v6505, 0.0
  %v6640 = vadd.f32 %v6638, %v6639
  %v6641 = vsel %vm38, %v6506, 0.0
  %v6642 = vadd.f32 %v6640, %v6641
  %v6643 = vsel %vm38, %v6507, 0.0
  %v6644 = vadd.f32 %v6642, %v6643
  %v6645 = vsel %vm38, %v6508, 0.0
  %v6646 = vadd.f32 %v6644, %v6645
  %v6647 = vsel %vm38, %v6509, 0.0
  %v6648 = vadd.f32 %v6646, %v6647
  %v6649 = vsel %vm38, %v6510, 0.0
  %v6650 = vadd.f32 %v6648, %v6649
  %v6651 = vsel %vm38, %v6511, 0.0
  %v6652 = vadd.f32 %v6650, %v6651
  %v6653 = vsel %vm38, %v6512, 0.0
  %v6654 = vadd.f32 %v6652, %v6653
  %v6655 = vsel %vm1390, %v6513, 0.0
  %v6656 = vadd.f32 %v6654, %v6655
  %v6657 = vrot.slane %v6656, 4
  %v6658 = vadd.f32 %v6656, %v6657
  %v6659 = vrot.slane %v6658, 2
  %v6660 = vadd.f32 %v6658, %v6659
  %v6661 = vrot.slane %v6660, 1
  %v6662 = vadd.f32 %v6660, %v6661
  %v6664 = vsel %vm38, %v6441, 0
  %6666 = vmatprep.subr.mxu0 0.0
  %6667 = vmatpush1.msra.mxu0 %v32
  %6668 = vmatprep.subr.mxu0 0.0
  %6669 = vmatpush1.msra.mxu0 0.0
  %6670 = vmatprep.subr.mxu0 0.0
  %6671 = vmatpush1.msra.mxu0 0.0
  %6672 = vmatprep.subr.mxu0 0.0
  %6673 = vmatpush1.msra.mxu0 0.0
  %6674 = vmatprep.subr.mxu0 0.0
  %6675 = vmatpush1.msra.mxu0 0.0
  %6676 = vmatprep.subr.mxu0 0.0
  %6677 = vmatpush1.msra.mxu0 0.0
  %6678 = vmatprep.subr.mxu0 0.0
  %6679 = vmatpush1.msra.mxu0 0.0
  %6680 = vmatprep.subr.mxu0 0.0
  %6681 = vmatpush1.msra.mxu0 0.0
  %6682 = vmatprep.subr.mxu0 0.0
  %6683 = vmatpush1.msra.mxu0 0.0
  %6684 = vmatprep.subr.mxu0 0.0
  %6685 = vmatpush1.msra.mxu0 0.0
  %6686 = vmatprep.subr.mxu0 0.0
  %6687 = vmatpush1.msra.mxu0 0.0
  %6688 = vmatprep.subr.mxu0 0.0
  %6689 = vmatpush1.msra.mxu0 0.0
  %6690 = vmatprep.subr.mxu0 0.0
  %6691 = vmatpush1.msra.mxu0 0.0
  %6692 = vmatprep.subr.mxu0 0.0
  %6693 = vmatpush1.msra.mxu0 0.0
  %6694 = vmatprep.subr.mxu0 0.0
  %6695 = vmatpush1.msra.mxu0 0.0
  %6696 = vmatprep.subr.mxu0 0.0
  %6697 = vmatpush1.msra.mxu0 0.0
  %6698 = vmatprep.subr.mxu0 0.0
  %6699 = vmatpush1.msra.mxu0 0.0
  %6700 = vmatprep.subr.mxu0 0.0
  %6701 = vmatpush1.msra.mxu0 0.0
  %6702 = vmatprep.subr.mxu0 0.0
  %6703 = vmatpush1.msra.mxu0 0.0
  %6704 = vmatprep.subr.mxu0 0.0
  %6705 = vmatpush1.msra.mxu0 0.0
  %6706 = vmatprep.subr.mxu0 0.0
  %6707 = vmatpush1.msra.mxu0 0.0
  %6708 = vmatprep.subr.mxu0 0.0
  %6709 = vmatpush1.msra.mxu0 0.0
  %6710 = vmatprep.subr.mxu0 0.0
  %6711 = vmatpush1.msra.mxu0 0.0
  %6712 = vmatprep.subr.mxu0 0.0
  %6713 = vmatpush1.msra.mxu0 0.0
  %6714 = vmatprep.subr.mxu0 0.0
  %6715 = vmatpush1.msra.mxu0 0.0
  %6716 = vmatprep.subr.mxu0 0.0
  %6717 = vmatpush1.msra.mxu0 0.0
  %6718 = vmatprep.subr.mxu0 0.0
  %6719 = vmatpush1.msra.mxu0 0.0
  %6720 = vmatprep.subr.mxu0 0.0
  %6721 = vmatpush1.msra.mxu0 0.0
  %6722 = vmatprep.subr.mxu0 0.0
  %6723 = vmatpush1.msra.mxu0 0.0
  %6724 = vmatprep.subr.mxu0 0.0
  %6725 = vmatpush1.msra.mxu0 0.0
  %6726 = vmatprep.subr.mxu0 0.0
  %6727 = vmatpush1.msra.mxu0 0.0
  %6728 = vmatprep.subr.mxu0 0.0
  %6729 = vmatpush1.msra.mxu0 0.0
  %6730 = vmatprep.mubr.f32.mxu0 0.0
  %6731 = vmatmul.mubr.f32.gmra.mrb[0].mxu0 %v6664
  %v6732 = vpop.f32.mrb[0].mxu0
  %v6733 = vadd.f32 0.0, %v6732
  %v6734 = vpop.f32.mrb[0].mxu0
  %6735 = vdwg.mxu0
  %v6737 = vsel %vm38, %v6662, 0
  %6739 = vmatprep.subr.mxu0 0.0
  %6740 = vmatpush1.msra.mxu0 %v32
  %6741 = vmatprep.subr.mxu0 0.0
  %6742 = vmatpush1.msra.mxu0 0.0
  %6743 = vmatprep.subr.mxu0 0.0
  %6744 = vmatpush1.msra.mxu0 0.0
  %6745 = vmatprep.subr.mxu0 0.0
  %6746 = vmatpush1.msra.mxu0 0.0
  %6747 = vmatprep.subr.mxu0 0.0
  %6748 = vmatpush1.msra.mxu0 0.0
  %6749 = vmatprep.subr.mxu0 0.0
  %6750 = vmatpush1.msra.mxu0 0.0
  %6751 = vmatprep.subr.mxu0 0.0
  %6752 = vmatpush1.msra.mxu0 0.0
  %6753 = vmatprep.subr.mxu0 0.0
  %6754 = vmatpush1.msra.mxu0 0.0
  %6755 = vmatprep.subr.mxu0 0.0
  %6756 = vmatpush1.msra.mxu0 0.0
  %6757 = vmatprep.subr.mxu0 0.0
  %6758 = vmatpush1.msra.mxu0 0.0
  %6759 = vmatprep.subr.mxu0 0.0
  %6760 = vmatpush1.msra.mxu0 0.0
  %6761 = vmatprep.subr.mxu0 0.0
  %6762 = vmatpush1.msra.mxu0 0.0
  %6763 = vmatprep.subr.mxu0 0.0
  %6764 = vmatpush1.msra.mxu0 0.0
  %6765 = vmatprep.subr.mxu0 0.0
  %6766 = vmatpush1.msra.mxu0 0.0
  %6767 = vmatprep.subr.mxu0 0.0
  %6768 = vmatpush1.msra.mxu0 0.0
  %6769 = vmatprep.subr.mxu0 0.0
  %6770 = vmatpush1.msra.mxu0 0.0
  %6771 = vmatprep.subr.mxu0 0.0
  %6772 = vmatpush1.msra.mxu0 0.0
  %6773 = vmatprep.subr.mxu0 0.0
  %6774 = vmatpush1.msra.mxu0 0.0
  %6775 = vmatprep.subr.mxu0 0.0
  %6776 = vmatpush1.msra.mxu0 0.0
  %6777 = vmatprep.subr.mxu0 0.0
  %6778 = vmatpush1.msra.mxu0 0.0
  %6779 = vmatprep.subr.mxu0 0.0
  %6780 = vmatpush1.msra.mxu0 0.0
  %6781 = vmatprep.subr.mxu0 0.0
  %6782 = vmatpush1.msra.mxu0 0.0
  %6783 = vmatprep.subr.mxu0 0.0
  %6784 = vmatpush1.msra.mxu0 0.0
  %6785 = vmatprep.subr.mxu0 0.0
  %6786 = vmatpush1.msra.mxu0 0.0
  %6787 = vmatprep.subr.mxu0 0.0
  %6788 = vmatpush1.msra.mxu0 0.0
  %6789 = vmatprep.subr.mxu0 0.0
  %6790 = vmatpush1.msra.mxu0 0.0
  %6791 = vmatprep.subr.mxu0 0.0
  %6792 = vmatpush1.msra.mxu0 0.0
  %6793 = vmatprep.subr.mxu0 0.0
  %6794 = vmatpush1.msra.mxu0 0.0
  %6795 = vmatprep.subr.mxu0 0.0
  %6796 = vmatpush1.msra.mxu0 0.0
  %6797 = vmatprep.subr.mxu0 0.0
  %6798 = vmatpush1.msra.mxu0 0.0
  %6799 = vmatprep.subr.mxu0 0.0
  %6800 = vmatpush1.msra.mxu0 0.0
  %6801 = vmatprep.subr.mxu0 0.0
  %6802 = vmatpush1.msra.mxu0 0.0
  %6803 = vmatprep.mubr.f32.mxu0 0.0
  %6804 = vmatmul.mubr.f32.gmra.mrb[0].mxu0 %v6737
  %v6805 = vpop.f32.mrb[0].mxu0
  %v6806 = vadd.f32 0.0, %v6805
  %v6807 = vpop.f32.mrb[0].mxu0
  %6808 = vdwg.mxu0
  %v6809 = vmul.f32 %v6733, 0.00086956524
  %v6810 = vmul.f32 %v6806, 0.00086956524
  %v6811 = vmul.f32 %v6809, %v6809
  %v6812 = vsub.f32 %v6810, %v6811
  %v6813 = vadd.f32 %v6812, 1e-05
  %v6814 = vrsqrt.pop %v6813
  %v6815 = vmul.f32 %v34, %v6814
  %v6816 = vmul.f32 %v6809, %v6815
  %v6817 = vsub.f32 %v35, %v6816
  %v6819 = vlaneseq
  %v6820 = vshrl.u32 %v6819, 7
  %v6821 = vsub.s32 0, %v6820
  %v6822 = vrot.slane %v6815, %v6821
  %v6824 = vmul.f32 %v6221, %v6822
  %v6825 = vmul.f32 %v6222, %v6822
  %v6826 = vmul.f32 %v6223, %v6822
  %v6827 = vmul.f32 %v6224, %v6822
  %v6828 = vmul.f32 %v6225, %v6822
  %v6829 = vmul.f32 %v6226, %v6822
  %v6830 = vmul.f32 %v6227, %v6822
  %v6831 = vmul.f32 %v6228, %v6822
  %v6832 = vmul.f32 %v6229, %v6822
  %v6833 = vmul.f32 %v6230, %v6822
  %v6834 = vmul.f32 %v6231, %v6822
  %v6835 = vmul.f32 %v6232, %v6822
  %v6836 = vmul.f32 %v6233, %v6822
  %v6837 = vmul.f32 %v6234, %v6822
  %v6838 = vmul.f32 %v6235, %v6822
  %v6839 = vmul.f32 %v6236, %v6822
  %v6840 = vmul.f32 %v6237, %v6822
  %v6841 = vmul.f32 %v6238, %v6822
  %v6842 = vmul.f32 %v6239, %v6822
  %v6843 = vmul.f32 %v6240, %v6822
  %v6844 = vmul.f32 %v6241, %v6822
  %v6845 = vmul.f32 %v6242, %v6822
  %v6846 = vmul.f32 %v6243, %v6822
  %v6847 = vmul.f32 %v6244, %v6822
  %v6848 = vmul.f32 %v6245, %v6822
  %v6849 = vmul.f32 %v6246, %v6822
  %v6850 = vmul.f32 %v6247, %v6822
  %v6851 = vmul.f32 %v6248, %v6822
  %v6852 = vmul.f32 %v6249, %v6822
  %v6853 = vmul.f32 %v6250, %v6822
  %v6854 = vmul.f32 %v6251, %v6822
  %v6855 = vmul.f32 %v6252, %v6822
  %v6856 = vmul.f32 %v6253, %v6822
  %v6857 = vmul.f32 %v6254, %v6822
  %v6858 = vmul.f32 %v6255, %v6822
  %v6859 = vmul.f32 %v6256, %v6822
  %v6860 = vmul.f32 %v6257, %v6822
  %v6861 = vmul.f32 %v6258, %v6822
  %v6862 = vmul.f32 %v6259, %v6822
  %v6863 = vmul.f32 %v6260, %v6822
  %v6864 = vmul.f32 %v6261, %v6822
  %v6865 = vmul.f32 %v6262, %v6822
  %v6866 = vmul.f32 %v6263, %v6822
  %v6867 = vmul.f32 %v6264, %v6822
  %v6868 = vmul.f32 %v6265, %v6822
  %v6869 = vmul.f32 %v6266, %v6822
  %v6870 = vmul.f32 %v6267, %v6822
  %v6871 = vmul.f32 %v6268, %v6822
  %v6872 = vmul.f32 %v6269, %v6822
  %v6873 = vmul.f32 %v6270, %v6822
  %v6874 = vmul.f32 %v6271, %v6822
  %v6875 = vmul.f32 %v6272, %v6822
  %v6876 = vmul.f32 %v6273, %v6822
  %v6877 = vmul.f32 %v6274, %v6822
  %v6878 = vmul.f32 %v6275, %v6822
  %v6879 = vmul.f32 %v6276, %v6822
  %v6880 = vmul.f32 %v6277, %v6822
  %v6881 = vmul.f32 %v6278, %v6822
  %v6882 = vmul.f32 %v6279, %v6822
  %v6883 = vmul.f32 %v6280, %v6822
  %v6884 = vmul.f32 %v6281, %v6822
  %v6885 = vmul.f32 %v6282, %v6822
  %v6886 = vmul.f32 %v6283, %v6822
  %v6887 = vmul.f32 %v6284, %v6822
  %v6888 = vmul.f32 %v6285, %v6822
  %v6889 = vmul.f32 %v6286, %v6822
  %v6890 = vmul.f32 %v6287, %v6822
  %v6891 = vmul.f32 %v6288, %v6822
  %v6892 = vmul.f32 %v6289, %v6822
  %v6893 = vmul.f32 %v6290, %v6822
  %v6894 = vmul.f32 %v6291, %v6822
  %v6895 = vmul.f32 %v6292, %v6822
  %v6897 = vlaneseq
  %v6898 = vshrl.u32 %v6897, 7
  %v6899 = vsub.s32 0, %v6898
  %v6900 = vrot.slane %v6817, %v6899
  %v6902 = vadd.f32 %v6824, %v6900
  %v6903 = vadd.f32 %v6825, %v6900
  %v6904 = vadd.f32 %v6826, %v6900
  %v6905 = vadd.f32 %v6827, %v6900
  %v6906 = vadd.f32 %v6828, %v6900
  %v6907 = vadd.f32 %v6829, %v6900
  %v6908 = vadd.f32 %v6830, %v6900
  %v6909 = vadd.f32 %v6831, %v6900
  %v6910 = vadd.f32 %v6832, %v6900
  %v6911 = vadd.f32 %v6833, %v6900
  %v6912 = vadd.f32 %v6834, %v6900
  %v6913 = vadd.f32 %v6835, %v6900
  %v6914 = vadd.f32 %v6836, %v6900
  %v6915 = vadd.f32 %v6837, %v6900
  %v6916 = vadd.f32 %v6838, %v6900
  %v6917 = vadd.f32 %v6839, %v6900
  %v6918 = vadd.f32 %v6840, %v6900
  %v6919 = vadd.f32 %v6841, %v6900
  %v6920 = vadd.f32 %v6842, %v6900
  %v6921 = vadd.f32 %v6843, %v6900
  %v6922 = vadd.f32 %v6844, %v6900
  %v6923 = vadd.f32 %v6845, %v6900
  %v6924 = vadd.f32 %v6846, %v6900
  %v6925 = vadd.f32 %v6847, %v6900
  %v6926 = vadd.f32 %v6848, %v6900
  %v6927 = vadd.f32 %v6849, %v6900
  %v6928 = vadd.f32 %v6850, %v6900
  %v6929 = vadd.f32 %v6851, %v6900
  %v6930 = vadd.f32 %v6852, %v6900
  %v6931 = vadd.f32 %v6853, %v6900
  %v6932 = vadd.f32 %v6854, %v6900
  %v6933 = vadd.f32 %v6855, %v6900
  %v6934 = vadd.f32 %v6856, %v6900
  %v6935 = vadd.f32 %v6857, %v6900
  %v6936 = vadd.f32 %v6858, %v6900
  %v6937 = vadd.f32 %v6859, %v6900
  %v6938 = vadd.f32 %v6860, %v6900
  %v6939 = vadd.f32 %v6861, %v6900
  %v6940 = vadd.f32 %v6862, %v6900
  %v6941 = vadd.f32 %v6863, %v6900
  %v6942 = vadd.f32 %v6864, %v6900
  %v6943 = vadd.f32 %v6865, %v6900
  %v6944 = vadd.f32 %v6866, %v6900
  %v6945 = vadd.f32 %v6867, %v6900
  %v6946 = vadd.f32 %v6868, %v6900
  %v6947 = vadd.f32 %v6869, %v6900
  %v6948 = vadd.f32 %v6870, %v6900
  %v6949 = vadd.f32 %v6871, %v6900
  %v6950 = vadd.f32 %v6872, %v6900
  %v6951 = vadd.f32 %v6873, %v6900
  %v6952 = vadd.f32 %v6874, %v6900
  %v6953 = vadd.f32 %v6875, %v6900
  %v6954 = vadd.f32 %v6876, %v6900
  %v6955 = vadd.f32 %v6877, %v6900
  %v6956 = vadd.f32 %v6878, %v6900
  %v6957 = vadd.f32 %v6879, %v6900
  %v6958 = vadd.f32 %v6880, %v6900
  %v6959 = vadd.f32 %v6881, %v6900
  %v6960 = vadd.f32 %v6882, %v6900
  %v6961 = vadd.f32 %v6883, %v6900
  %v6962 = vadd.f32 %v6884, %v6900
  %v6963 = vadd.f32 %v6885, %v6900
  %v6964 = vadd.f32 %v6886, %v6900
  %v6965 = vadd.f32 %v6887, %v6900
  %v6966 = vadd.f32 %v6888, %v6900
  %v6967 = vadd.f32 %v6889, %v6900
  %v6968 = vadd.f32 %v6890, %v6900
  %v6969 = vadd.f32 %v6891, %v6900
  %v6970 = vadd.f32 %v6892, %v6900
  %v6971 = vadd.f32 %v6893, %v6900
  %v6972 = vadd.f32 %v6894, %v6900
  %v6973 = vadd.f32 %v6895, %v6900
  %v6974 = vmax.f32 %v6902, 0.0
  %v6975 = vmax.f32 %v6903, 0.0
  %v6976 = vmax.f32 %v6904, 0.0
  %v6977 = vmax.f32 %v6905, 0.0
  %v6978 = vmax.f32 %v6906, 0.0
  %v6979 = vmax.f32 %v6907, 0.0
  %v6980 = vmax.f32 %v6908, 0.0
  %v6981 = vmax.f32 %v6909, 0.0
  %v6982 = vmax.f32 %v6910, 0.0
  %v6983 = vmax.f32 %v6911, 0.0
  %v6984 = vmax.f32 %v6912, 0.0
  %v6985 = vmax.f32 %v6913, 0.0
  %v6986 = vmax.f32 %v6914, 0.0
  %v6987 = vmax.f32 %v6915, 0.0
  %v6988 = vmax.f32 %v6916, 0.0
  %v6989 = vmax.f32 %v6917, 0.0
  %v6990 = vmax.f32 %v6918, 0.0
  %v6991 = vmax.f32 %v6919, 0.0
  %v6992 = vmax.f32 %v6920, 0.0
  %v6993 = vmax.f32 %v6921, 0.0
  %v6994 = vmax.f32 %v6922, 0.0
  %v6995 = vmax.f32 %v6923, 0.0
  %v6996 = vmax.f32 %v6924, 0.0
  %v6997 = vmax.f32 %v6925, 0.0
  %v6998 = vmax.f32 %v6926, 0.0
  %v6999 = vmax.f32 %v6927, 0.0
  %v7000 = vmax.f32 %v6928, 0.0
  %v7001 = vmax.f32 %v6929, 0.0
  %v7002 = vmax.f32 %v6930, 0.0
  %v7003 = vmax.f32 %v6931, 0.0
  %v7004 = vmax.f32 %v6932, 0.0
  %v7005 = vmax.f32 %v6933, 0.0
  %v7006 = vmax.f32 %v6934, 0.0
  %v7007 = vmax.f32 %v6935, 0.0
  %v7008 = vmax.f32 %v6936, 0.0
  %v7009 = vmax.f32 %v6937, 0.0
  %v7010 = vmax.f32 %v6938, 0.0
  %v7011 = vmax.f32 %v6939, 0.0
  %v7012 = vmax.f32 %v6940, 0.0
  %v7013 = vmax.f32 %v6941, 0.0
  %v7014 = vmax.f32 %v6942, 0.0
  %v7015 = vmax.f32 %v6943, 0.0
  %v7016 = vmax.f32 %v6944, 0.0
  %v7017 = vmax.f32 %v6945, 0.0
  %v7018 = vmax.f32 %v6946, 0.0
  %v7019 = vmax.f32 %v6947, 0.0
  %v7020 = vmax.f32 %v6948, 0.0
  %v7021 = vmax.f32 %v6949, 0.0
  %v7022 = vmax.f32 %v6950, 0.0
  %v7023 = vmax.f32 %v6951, 0.0
  %v7024 = vmax.f32 %v6952, 0.0
  %v7025 = vmax.f32 %v6953, 0.0
  %v7026 = vmax.f32 %v6954, 0.0
  %v7027 = vmax.f32 %v6955, 0.0
  %v7028 = vmax.f32 %v6956, 0.0
  %v7029 = vmax.f32 %v6957, 0.0
  %v7030 = vmax.f32 %v6958, 0.0
  %v7031 = vmax.f32 %v6959, 0.0
  %v7032 = vmax.f32 %v6960, 0.0
  %v7033 = vmax.f32 %v6961, 0.0
  %v7034 = vmax.f32 %v6962, 0.0
  %v7035 = vmax.f32 %v6963, 0.0
  %v7036 = vmax.f32 %v6964, 0.0
  %v7037 = vmax.f32 %v6965, 0.0
  %v7038 = vmax.f32 %v6966, 0.0
  %v7039 = vmax.f32 %v6967, 0.0
  %v7040 = vmax.f32 %v6968, 0.0
  %v7041 = vmax.f32 %v6969, 0.0
  %v7042 = vmax.f32 %v6970, 0.0
  %v7043 = vmax.f32 %v6971, 0.0
  %v7044 = vmax.f32 %v6972, 0.0
  %v7045 = vmax.f32 %v6973, 0.0
  %7046 = vst.msk [vmem:[#allocation2] sm:$0xff] %vm38, %v6974
  %7047 = vst.msk [vmem:[#allocation2 + $0x8] sm:$0xff] %vm38, %v6975
  %7048 = vst.msk [vmem:[#allocation2 + $0x10] sm:$0xff] %vm38, %v6976
  %7049 = vst.msk [vmem:[#allocation2 + $0x18] sm:$0xff] %vm38, %v6977
  %7050 = vst.msk [vmem:[#allocation2 + $0x20] sm:$0xff] %vm38, %v6978
  %7051 = vst.msk [vmem:[#allocation2 + $0x28] sm:$0xff] %vm38, %v6979
  %7052 = vst.msk [vmem:[#allocation2 + $0x30] sm:$0xff] %vm38, %v6980
  %7053 = vst.msk [vmem:[#allocation2 + $0x38] sm:$0xff] %vm38, %v6981
  %7054 = vst.msk [vmem:[#allocation2 + $0x40] sm:$0xff] %vm38, %v6982
  %7055 = vst.msk [vmem:[#allocation2 + $0x48] sm:$0xff] %vm38, %v6983
  %7056 = vst.msk [vmem:[#allocation2 + $0x50] sm:$0xff] %vm38, %v6984
  %7057 = vst.msk [vmem:[#allocation2 + $0x58] sm:$0xff] %vm38, %v6985
  %7058 = vst.msk [vmem:[#allocation2 + $0x60] sm:$0xff] %vm38, %v6986
  %7059 = vst.msk [vmem:[#allocation2 + $0x68] sm:$0xff] %vm38, %v6987
  %7060 = vst.msk [vmem:[#allocation2 + $0x70] sm:$0xff] %vm38, %v6988
  %7061 = vst.msk [vmem:[#allocation2 + $0x78] sm:$0xff] %vm38, %v6989
  %7062 = vst.msk [vmem:[#allocation2 + $0x80] sm:$0xff] %vm38, %v6990
  %7063 = vst.msk [vmem:[#allocation2 + $0x88] sm:$0xff] %vm38, %v6991
  %7064 = vst.msk [vmem:[#allocation2 + $0x90] sm:$0xff] %vm38, %v6992
  %7065 = vst.msk [vmem:[#allocation2 + $0x98] sm:$0xff] %vm38, %v6993
  %7066 = vst.msk [vmem:[#allocation2 + $0xa0] sm:$0xff] %vm38, %v6994
  %7067 = vst.msk [vmem:[#allocation2 + $0xa8] sm:$0xff] %vm38, %v6995
  %7068 = vst.msk [vmem:[#allocation2 + $0xb0] sm:$0xff] %vm38, %v6996
  %7069 = vst.msk [vmem:[#allocation2 + $0xb8] sm:$0xff] %vm38, %v6997
  %7070 = vst.msk [vmem:[#allocation2 + $0xc0] sm:$0xff] %vm38, %v6998
  %7071 = vst.msk [vmem:[#allocation2 + $0xc8] sm:$0xff] %vm38, %v6999
  %7072 = vst.msk [vmem:[#allocation2 + $0xd0] sm:$0xff] %vm38, %v7000
  %7073 = vst.msk [vmem:[#allocation2 + $0xd8] sm:$0xff] %vm38, %v7001
  %7074 = vst.msk [vmem:[#allocation2 + $0xe0] sm:$0xff] %vm38, %v7002
  %7075 = vst.msk [vmem:[#allocation2 + $0xe8] sm:$0xff] %vm38, %v7003
  %7076 = vst.msk [vmem:[#allocation2 + $0xf0] sm:$0xff] %vm38, %v7004
  %7077 = vst.msk [vmem:[#allocation2 + $0xf8] sm:$0xff] %vm38, %v7005
  %7078 = vst.msk [vmem:[#allocation2 + $0x100] sm:$0xff] %vm38, %v7006
  %7079 = vst.msk [vmem:[#allocation2 + $0x108] sm:$0xff] %vm38, %v7007
  %7080 = vst.msk [vmem:[#allocation2 + $0x110] sm:$0xff] %vm38, %v7008
  %7081 = vst.msk [vmem:[#allocation2 + $0x118] sm:$0xff] %vm38, %v7009
  %7082 = vst.msk [vmem:[#allocation2 + $0x120] sm:$0xff] %vm38, %v7010
  %7083 = vst.msk [vmem:[#allocation2 + $0x128] sm:$0xff] %vm38, %v7011
  %7084 = vst.msk [vmem:[#allocation2 + $0x130] sm:$0xff] %vm38, %v7012
  %7085 = vst.msk [vmem:[#allocation2 + $0x138] sm:$0xff] %vm38, %v7013
  %7086 = vst.msk [vmem:[#allocation2 + $0x140] sm:$0xff] %vm38, %v7014
  %7087 = vst.msk [vmem:[#allocation2 + $0x148] sm:$0xff] %vm38, %v7015
  %7088 = vst.msk [vmem:[#allocation2 + $0x150] sm:$0xff] %vm38, %v7016
  %7089 = vst.msk [vmem:[#allocation2 + $0x158] sm:$0xff] %vm38, %v7017
  %7090 = vst.msk [vmem:[#allocation2 + $0x160] sm:$0xff] %vm38, %v7018
  %7091 = vst.msk [vmem:[#allocation2 + $0x168] sm:$0xff] %vm38, %v7019
  %7092 = vst.msk [vmem:[#allocation2 + $0x170] sm:$0xff] %vm38, %v7020
  %7093 = vst.msk [vmem:[#allocation2 + $0x178] sm:$0xff] %vm38, %v7021
  %7094 = vst.msk [vmem:[#allocation2 + $0x180] sm:$0xff] %vm38, %v7022
  %7095 = vst.msk [vmem:[#allocation2 + $0x188] sm:$0xff] %vm38, %v7023
  %7096 = vst.msk [vmem:[#allocation2 + $0x190] sm:$0xff] %vm38, %v7024
  %7097 = vst.msk [vmem:[#allocation2 + $0x198] sm:$0xff] %vm38, %v7025
  %7098 = vst.msk [vmem:[#allocation2 + $0x1a0] sm:$0xff] %vm38, %v7026
  %7099 = vst.msk [vmem:[#allocation2 + $0x1a8] sm:$0xff] %vm38, %v7027
  %7100 = vst.msk [vmem:[#allocation2 + $0x1b0] sm:$0xff] %vm38, %v7028
  %7101 = vst.msk [vmem:[#allocation2 + $0x1b8] sm:$0xff] %vm38, %v7029
  %7102 = vst.msk [vmem:[#allocation2 + $0x1c0] sm:$0xff] %vm38, %v7030
  %7103 = vst.msk [vmem:[#allocation2 + $0x1c8] sm:$0xff] %vm38, %v7031
  %7104 = vst.msk [vmem:[#allocation2 + $0x1d0] sm:$0xff] %vm38, %v7032
  %7105 = vst.msk [vmem:[#allocation2 + $0x1d8] sm:$0xff] %vm38, %v7033
  %7106 = vst.msk [vmem:[#allocation2 + $0x1e0] sm:$0xff] %vm38, %v7034
  %7107 = vst.msk [vmem:[#allocation2 + $0x1e8] sm:$0xff] %vm38, %v7035
  %7108 = vst.msk [vmem:[#allocation2 + $0x1f0] sm:$0xff] %vm38, %v7036
  %7109 = vst.msk [vmem:[#allocation2 + $0x1f8] sm:$0xff] %vm38, %v7037
  %7110 = vst.msk [vmem:[#allocation2 + $0x200] sm:$0xff] %vm38, %v7038
  %7111 = vst.msk [vmem:[#allocation2 + $0x208] sm:$0xff] %vm38, %v7039
  %7112 = vst.msk [vmem:[#allocation2 + $0x210] sm:$0xff] %vm38, %v7040
  %7113 = vst.msk [vmem:[#allocation2 + $0x218] sm:$0xff] %vm38, %v7041
  %7114 = vst.msk [vmem:[#allocation2 + $0x220] sm:$0xff] %vm38, %v7042
  %7115 = vst.msk [vmem:[#allocation2 + $0x228] sm:$0xff] %vm38, %v7043
  %7116 = vst.msk [vmem:[#allocation2 + $0x230] sm:$0xff] %vm38, %v7044
  %7117 = vst.msk [vmem:[#allocation2 + $0x238] sm:$0x7f] %vm1390, %v7045
  %v7118 = vld [vmem:[%s1008] sm:$0xff]
  %v7119 = vld [vmem:[#allocation2 + $0x1] sm:$0xff]
  %v7120 = vld [vmem:[#allocation2 + $0x9] sm:$0xff]
  %v7121 = vld [vmem:[#allocation2 + $0x11] sm:$0xff]
  %v7122 = vld [vmem:[#allocation2 + $0x19] sm:$0xff]
  %v7123 = vld [vmem:[#allocation2 + $0x21] sm:$0xff]
  %v7124 = vld [vmem:[#allocation2 + $0x29] sm:$0xff]
  %v7125 = vld [vmem:[#allocation2 + $0x31] sm:$0xff]
  %v7126 = vld [vmem:[#allocation2 + $0x39] sm:$0xff]
  %v7127 = vld [vmem:[#allocation2 + $0x41] sm:$0xff]
  %v7128 = vld [vmem:[#allocation2 + $0x49] sm:$0xff]
  %v7129 = vld [vmem:[#allocation2 + $0x51] sm:$0xff]
  %v7130 = vld [vmem:[#allocation2 + $0x59] sm:$0xff]
  %v7131 = vld [vmem:[#allocation2 + $0x61] sm:$0xff]
  %v7132 = vld [vmem:[#allocation2 + $0x69] sm:$0xff]
  %v7133 = vld [vmem:[#allocation2 + $0x71] sm:$0xff]
  %v7134 = vld [vmem:[#allocation2 + $0x79] sm:$0xff]
  %v7135 = vld [vmem:[#allocation2 + $0x81] sm:$0xff]
  %v7136 = vld [vmem:[#allocation2 + $0x89] sm:$0xff]
  %v7137 = vld [vmem:[#allocation2 + $0x91] sm:$0xff]
  %v7138 = vld [vmem:[#allocation2 + $0x99] sm:$0xff]
  %v7139 = vld [vmem:[#allocation2 + $0xa1] sm:$0xff]
  %v7140 = vld [vmem:[#allocation2 + $0xa9] sm:$0xff]
  %v7141 = vld [vmem:[#allocation2 + $0xb1] sm:$0xff]
  %v7142 = vld [vmem:[#allocation2 + $0xb9] sm:$0xff]
  %v7143 = vld [vmem:[#allocation2 + $0xc1] sm:$0xff]
  %v7144 = vld [vmem:[#allocation2 + $0xc9] sm:$0xff]
  %v7145 = vld [vmem:[#allocation2 + $0xd1] sm:$0xff]
  %v7146 = vld [vmem:[#allocation2 + $0xd9] sm:$0xff]
  %v7147 = vld [vmem:[#allocation2 + $0xe1] sm:$0xff]
  %v7148 = vld [vmem:[#allocation2 + $0xe9] sm:$0xff]
  %v7149 = vld [vmem:[#allocation2 + $0xf1] sm:$0xff]
  %v7150 = vld [vmem:[#allocation2 + $0xf9] sm:$0xff]
  %v7151 = vld [vmem:[#allocation2 + $0x101] sm:$0xff]
  %v7152 = vld [vmem:[#allocation2 + $0x109] sm:$0xff]
  %v7153 = vld [vmem:[#allocation2 + $0x111] sm:$0xff]
  %v7154 = vld [vmem:[#allocation2 + $0x119] sm:$0xff]
  %v7155 = vld [vmem:[#allocation2 + $0x121] sm:$0xff]
  %v7156 = vld [vmem:[#allocation2 + $0x129] sm:$0xff]
  %v7157 = vld [vmem:[#allocation2 + $0x131] sm:$0xff]
  %v7158 = vld [vmem:[#allocation2 + $0x139] sm:$0xff]
  %v7159 = vld [vmem:[#allocation2 + $0x141] sm:$0xff]
  %v7160 = vld [vmem:[#allocation2 + $0x149] sm:$0xff]
  %v7161 = vld [vmem:[#allocation2 + $0x151] sm:$0xff]
  %v7162 = vld [vmem:[#allocation2 + $0x159] sm:$0xff]
  %v7163 = vld [vmem:[#allocation2 + $0x161] sm:$0xff]
  %v7164 = vld [vmem:[#allocation2 + $0x169] sm:$0xff]
  %v7165 = vld [vmem:[#allocation2 + $0x171] sm:$0xff]
  %v7166 = vld [vmem:[#allocation2 + $0x179] sm:$0xff]
  %v7167 = vld [vmem:[#allocation2 + $0x181] sm:$0xff]
  %v7168 = vld [vmem:[#allocation2 + $0x189] sm:$0xff]
  %v7169 = vld [vmem:[#allocation2 + $0x191] sm:$0xff]
  %v7170 = vld [vmem:[#allocation2 + $0x199] sm:$0xff]
  %v7171 = vld [vmem:[#allocation2 + $0x1a1] sm:$0xff]
  %v7172 = vld [vmem:[#allocation2 + $0x1a9] sm:$0xff]
  %v7173 = vld [vmem:[#allocation2 + $0x1b1] sm:$0xff]
  %v7174 = vld [vmem:[#allocation2 + $0x1b9] sm:$0xff]
  %v7175 = vld [vmem:[#allocation2 + $0x1c1] sm:$0xff]
  %v7176 = vld [vmem:[#allocation2 + $0x1c9] sm:$0xff]
  %v7177 = vld [vmem:[#allocation2 + $0x1d1] sm:$0xff]
  %v7178 = vld [vmem:[#allocation2 + $0x1d9] sm:$0xff]
  %v7179 = vld [vmem:[#allocation2 + $0x1e1] sm:$0xff]
  %v7180 = vld [vmem:[#allocation2 + $0x1e9] sm:$0xff]
  %v7181 = vld [vmem:[#allocation2 + $0x1f1] sm:$0xff]
  %v7182 = vld [vmem:[#allocation2 + $0x1f9] sm:$0xff]
  %v7183 = vld [vmem:[#allocation2 + $0x201] sm:$0xff]
  %v7184 = vld [vmem:[#allocation2 + $0x209] sm:$0xff]
  %v7185 = vld [vmem:[#allocation2 + $0x211] sm:$0xff]
  %v7186 = vld [vmem:[#allocation2 + $0x219] sm:$0xff]
  %v7187 = vld [vmem:[#allocation2 + $0x221] sm:$0xff]
  %v7188 = vld [vmem:[#allocation2 + $0x229] sm:$0xff]
  %v7189 = vld [vmem:[#allocation2 + $0x231] sm:$0xff]
  %v7190 = vld [vmem:[#allocation2 + $0x239] sm:$0x3f]
  %v7191 = vld [vmem:[%s2] sm:$0xff]
  %v7193 = vsel %vm38, %v7119, 0
  %v7196 = vsel %vm38, %v7120, 0
  %v7199 = vsel %vm38, %v7121, 0
  %v7202 = vsel %vm38, %v7122, 0
  %v7205 = vsel %vm38, %v7123, 0
  %v7208 = vsel %vm38, %v7124, 0
  %v7211 = vsel %vm38, %v7125, 0
  %v7214 = vsel %vm38, %v7126, 0
  %v7217 = vsel %vm38, %v7127, 0
  %v7220 = vsel %vm38, %v7128, 0
  %v7223 = vsel %vm38, %v7129, 0
  %v7226 = vsel %vm38, %v7130, 0
  %v7229 = vsel %vm38, %v7131, 0
  %v7232 = vsel %vm38, %v7132, 0
  %v7235 = vsel %vm38, %v7133, 0
  %v7238 = vsel %vm38, %v7134, 0
  %v7241 = vsel %vm38, %v7135, 0
  %v7244 = vsel %vm38, %v7136, 0
  %v7247 = vsel %vm38, %v7137, 0
  %v7250 = vsel %vm38, %v7138, 0
  %v7253 = vsel %vm38, %v7139, 0
  %v7256 = vsel %vm38, %v7140, 0
  %v7259 = vsel %vm38, %v7141, 0
  %v7262 = vsel %vm38, %v7142, 0
  %v7265 = vsel %vm38, %v7143, 0
  %v7268 = vsel %vm38, %v7144, 0
  %v7271 = vsel %vm38, %v7145, 0
  %v7274 = vsel %vm38, %v7146, 0
  %v7277 = vsel %vm38, %v7147, 0
  %v7280 = vsel %vm38, %v7148, 0
  %v7283 = vsel %vm38, %v7149, 0
  %v7286 = vsel %vm38, %v7150, 0
  %v7289 = vsel %vm38, %v7151, 0
  %v7292 = vsel %vm38, %v7152, 0
  %v7295 = vsel %vm38, %v7153, 0
  %v7298 = vsel %vm38, %v7154, 0
  %v7301 = vsel %vm38, %v7155, 0
  %v7304 = vsel %vm38, %v7156, 0
  %v7307 = vsel %vm38, %v7157, 0
  %v7310 = vsel %vm38, %v7158, 0
  %v7313 = vsel %vm38, %v7159, 0
  %v7316 = vsel %vm38, %v7160, 0
  %v7319 = vsel %vm38, %v7161, 0
  %v7322 = vsel %vm38, %v7162, 0
  %v7325 = vsel %vm38, %v7163, 0
  %v7328 = vsel %vm38, %v7164, 0
  %v7331 = vsel %vm38, %v7165, 0
  %v7334 = vsel %vm38, %v7166, 0
  %v7337 = vsel %vm38, %v7167, 0
  %v7340 = vsel %vm38, %v7168, 0
  %v7343 = vsel %vm38, %v7169, 0
  %v7346 = vsel %vm38, %v7170, 0
  %v7349 = vsel %vm38, %v7171, 0
  %v7352 = vsel %vm38, %v7172, 0
  %v7355 = vsel %vm38, %v7173, 0
  %v7358 = vsel %vm38, %v7174, 0
  %v7361 = vsel %vm38, %v7175, 0
  %v7364 = vsel %vm38, %v7176, 0
  %v7367 = vsel %vm38, %v7177, 0
  %v7370 = vsel %vm38, %v7178, 0
  %v7373 = vsel %vm38, %v7179, 0
  %v7376 = vsel %vm38, %v7180, 0
  %v7379 = vsel %vm38, %v7181, 0
  %v7382 = vsel %vm38, %v7182, 0
  %v7385 = vsel %vm38, %v7183, 0
  %v7388 = vsel %vm38, %v7184, 0
  %v7391 = vsel %vm38, %v7185, 0
  %v7394 = vsel %vm38, %v7186, 0
  %v7397 = vsel %vm38, %v7187, 0
  %v7400 = vsel %vm38, %v7188, 0
  %v7403 = vsel %vm38, %v7189, 0
  %v7406 = vsel %vm38, %v7190, 0
  %7408 = vmatprep.subr.mxu0 0.0
  %7409 = vmatpush1.msra.mxu0 %v7191
  %7410 = vmatprep.subr.mxu0 0.0
  %7411 = vmatpush1.msra.mxu0 0.0
  %7412 = vmatprep.subr.mxu0 0.0
  %7413 = vmatpush1.msra.mxu0 0.0
  %7414 = vmatprep.subr.mxu0 0.0
  %7415 = vmatpush1.msra.mxu0 0.0
  %7416 = vmatprep.subr.mxu0 0.0
  %7417 = vmatpush1.msra.mxu0 0.0
  %7418 = vmatprep.subr.mxu0 0.0
  %7419 = vmatpush1.msra.mxu0 0.0
  %7420 = vmatprep.subr.mxu0 0.0
  %7421 = vmatpush1.msra.mxu0 0.0
  %7422 = vmatprep.subr.mxu0 0.0
  %7423 = vmatpush1.msra.mxu0 0.0
  %7424 = vmatprep.subr.mxu0 0.0
  %7425 = vmatpush1.msra.mxu0 0.0
  %7426 = vmatprep.subr.mxu0 0.0
  %7427 = vmatpush1.msra.mxu0 0.0
  %7428 = vmatprep.subr.mxu0 0.0
  %7429 = vmatpush1.msra.mxu0 0.0
  %7430 = vmatprep.subr.mxu0 0.0
  %7431 = vmatpush1.msra.mxu0 0.0
  %7432 = vmatprep.subr.mxu0 0.0
  %7433 = vmatpush1.msra.mxu0 0.0
  %7434 = vmatprep.subr.mxu0 0.0
  %7435 = vmatpush1.msra.mxu0 0.0
  %7436 = vmatprep.subr.mxu0 0.0
  %7437 = vmatpush1.msra.mxu0 0.0
  %7438 = vmatprep.subr.mxu0 0.0
  %7439 = vmatpush1.msra.mxu0 0.0
  %7440 = vmatprep.subr.mxu0 0.0
  %7441 = vmatpush1.msra.mxu0 0.0
  %7442 = vmatprep.subr.mxu0 0.0
  %7443 = vmatpush1.msra.mxu0 0.0
  %7444 = vmatprep.subr.mxu0 0.0
  %7445 = vmatpush1.msra.mxu0 0.0
  %7446 = vmatprep.subr.mxu0 0.0
  %7447 = vmatpush1.msra.mxu0 0.0
  %7448 = vmatprep.subr.mxu0 0.0
  %7449 = vmatpush1.msra.mxu0 0.0
  %7450 = vmatprep.subr.mxu0 0.0
  %7451 = vmatpush1.msra.mxu0 0.0
  %7452 = vmatprep.subr.mxu0 0.0
  %7453 = vmatpush1.msra.mxu0 0.0
  %7454 = vmatprep.subr.mxu0 0.0
  %7455 = vmatpush1.msra.mxu0 0.0
  %7456 = vmatprep.subr.mxu0 0.0
  %7457 = vmatpush1.msra.mxu0 0.0
  %7458 = vmatprep.subr.mxu0 0.0
  %7459 = vmatpush1.msra.mxu0 0.0
  %7460 = vmatprep.subr.mxu0 0.0
  %7461 = vmatpush1.msra.mxu0 0.0
  %7462 = vmatprep.subr.mxu0 0.0
  %7463 = vmatpush1.msra.mxu0 0.0
  %7464 = vmatprep.subr.mxu0 0.0
  %7465 = vmatpush1.msra.mxu0 0.0
  %7466 = vmatprep.subr.mxu0 0.0
  %7467 = vmatpush1.msra.mxu0 0.0
  %7468 = vmatprep.subr.mxu0 0.0
  %7469 = vmatpush1.msra.mxu0 0.0
  %7470 = vmatprep.subr.mxu0 0.0
  %7471 = vmatpush1.msra.mxu0 0.0
  %7472 = vmatprep.mubr.f32.mxu0 0.0
  %7473 = vmatmul.mubr.f32.gmra.mrb[0].mxu0 %v7193
  %v7474 = vpop.f32.mrb[0].mxu0
  %v7475 = vadd.f32 0.0, %v7474
  %v7476 = vpop.f32.mrb[0].mxu0
  %7477 = vmatprep.mubr.f32.mxu0 0.0
  %7478 = vmatmul.mubr.f32.gmra.mrb[0].mxu0 %v7196
  %v7479 = vpop.f32.mrb[0].mxu0
  %v7480 = vadd.f32 0.0, %v7479
  %v7481 = vpop.f32.mrb[0].mxu0
  %7482 = vmatprep.mubr.f32.mxu0 0.0
  %7483 = vmatmul.mubr.f32.gmra.mrb[0].mxu0 %v7199
  %v7484 = vpop.f32.mrb[0].mxu0
  %v7485 = vadd.f32 0.0, %v7484
  %v7486 = vpop.f32.mrb[0].mxu0
  %7487 = vmatprep.mubr.f32.mxu0 0.0
  %7488 = vmatmul.mubr.f32.gmra.mrb[0].mxu0 %v7202
  %v7489 = vpop.f32.mrb[0].mxu0
  %v7490 = vadd.f32 0.0, %v7489
  %v7491 = vpop.f32.mrb[0].mxu0
  %7492 = vmatprep.mubr.f32.mxu0 0.0
  %7493 = vmatmul.mubr.f32.gmra.mrb[0].mxu0 %v7205
  %v7494 = vpop.f32.mrb[0].mxu0
  %v7495 = vadd.f32 0.0, %v7494
  %v7496 = vpop.f32.mrb[0].mxu0
  %7497 = vmatprep.mubr.f32.mxu0 0.0
  %7498 = vmatmul.mubr.f32.gmra.mrb[0].mxu0 %v7208
  %v7499 = vpop.f32.mrb[0].mxu0
  %v7500 = vadd.f32 0.0, %v7499
  %v7501 = vpop.f32.mrb[0].mxu0
  %7502 = vmatprep.mubr.f32.mxu0 0.0
  %7503 = vmatmul.mubr.f32.gmra.mrb[0].mxu0 %v7211
  %v7504 = vpop.f32.mrb[0].mxu0
  %v7505 = vadd.f32 0.0, %v7504
  %v7506 = vpop.f32.mrb[0].mxu0
  %7507 = vmatprep.mubr.f32.mxu0 0.0
  %7508 = vmatmul.mubr.f32.gmra.mrb[0].mxu0 %v7214
  %v7509 = vpop.f32.mrb[0].mxu0
  %v7510 = vadd.f32 0.0, %v7509
  %v7511 = vpop.f32.mrb[0].mxu0
  %7512 = vmatprep.mubr.f32.mxu0 0.0
  %7513 = vmatmul.mubr.f32.gmra.mrb[0].mxu0 %v7217
  %v7514 = vpop.f32.mrb[0].mxu0
  %v7515 = vadd.f32 0.0, %v7514
  %v7516 = vpop.f32.mrb[0].mxu0
  %7517 = vmatprep.mubr.f32.mxu0 0.0
  %7518 = vmatmul.mubr.f32.gmra.mrb[0].mxu0 %v7220
  %v7519 = vpop.f32.mrb[0].mxu0
  %v7520 = vadd.f32 0.0, %v7519
  %v7521 = vpop.f32.mrb[0].mxu0
  %7522 = vmatprep.mubr.f32.mxu0 0.0
  %7523 = vmatmul.mubr.f32.gmra.mrb[0].mxu0 %v7223
  %v7524 = vpop.f32.mrb[0].mxu0
  %v7525 = vadd.f32 0.0, %v7524
  %v7526 = vpop.f32.mrb[0].mxu0
  %7527 = vmatprep.mubr.f32.mxu0 0.0
  %7528 = vmatmul.mubr.f32.gmra.mrb[0].mxu0 %v7226
  %v7529 = vpop.f32.mrb[0].mxu0
  %v7530 = vadd.f32 0.0, %v7529
  %v7531 = vpop.f32.mrb[0].mxu0
  %7532 = vmatprep.mubr.f32.mxu0 0.0
  %7533 = vmatmul.mubr.f32.gmra.mrb[0].mxu0 %v7229
  %v7534 = vpop.f32.mrb[0].mxu0
  %v7535 = vadd.f32 0.0, %v7534
  %v7536 = vpop.f32.mrb[0].mxu0
  %7537 = vmatprep.mubr.f32.mxu0 0.0
  %7538 = vmatmul.mubr.f32.gmra.mrb[0].mxu0 %v7232
  %v7539 = vpop.f32.mrb[0].mxu0
  %v7540 = vadd.f32 0.0, %v7539
  %v7541 = vpop.f32.mrb[0].mxu0
  %7542 = vmatprep.mubr.f32.mxu0 0.0
  %7543 = vmatmul.mubr.f32.gmra.mrb[0].mxu0 %v7235
  %v7544 = vpop.f32.mrb[0].mxu0
  %v7545 = vadd.f32 0.0, %v7544
  %v7546 = vpop.f32.mrb[0].mxu0
  %7547 = vmatprep.mubr.f32.mxu0 0.0
  %7548 = vmatmul.mubr.f32.gmra.mrb[0].mxu0 %v7238
  %v7549 = vpop.f32.mrb[0].mxu0
  %v7550 = vadd.f32 0.0, %v7549
  %v7551 = vpop.f32.mrb[0].mxu0
  %7552 = vmatprep.mubr.f32.mxu0 0.0
  %7553 = vmatmul.mubr.f32.gmra.mrb[0].mxu0 %v7241
  %v7554 = vpop.f32.mrb[0].mxu0
  %v7555 = vadd.f32 0.0, %v7554
  %v7556 = vpop.f32.mrb[0].mxu0
  %7557 = vmatprep.mubr.f32.mxu0 0.0
  %7558 = vmatmul.mubr.f32.gmra.mrb[0].mxu0 %v7244
  %v7559 = vpop.f32.mrb[0].mxu0
  %v7560 = vadd.f32 0.0, %v7559
  %v7561 = vpop.f32.mrb[0].mxu0
  %7562 = vmatprep.mubr.f32.mxu0 0.0
  %7563 = vmatmul.mubr.f32.gmra.mrb[0].mxu0 %v7247
  %v7564 = vpop.f32.mrb[0].mxu0
  %v7565 = vadd.f32 0.0, %v7564
  %v7566 = vpop.f32.mrb[0].mxu0
  %7567 = vmatprep.mubr.f32.mxu0 0.0
  %7568 = vmatmul.mubr.f32.gmra.mrb[0].mxu0 %v7250
  %v7569 = vpop.f32.mrb[0].mxu0
  %v7570 = vadd.f32 0.0, %v7569
  %v7571 = vpop.f32.mrb[0].mxu0
  %7572 = vmatprep.mubr.f32.mxu0 0.0
  %7573 = vmatmul.mubr.f32.gmra.mrb[0].mxu0 %v7253
  %v7574 = vpop.f32.mrb[0].mxu0
  %v7575 = vadd.f32 0.0, %v7574
  %v7576 = vpop.f32.mrb[0].mxu0
  %7577 = vmatprep.mubr.f32.mxu0 0.0
  %7578 = vmatmul.mubr.f32.gmra.mrb[0].mxu0 %v7256
  %v7579 = vpop.f32.mrb[0].mxu0
  %v7580 = vadd.f32 0.0, %v7579
  %v7581 = vpop.f32.mrb[0].mxu0
  %7582 = vmatprep.mubr.f32.mxu0 0.0
  %7583 = vmatmul.mubr.f32.gmra.mrb[0].mxu0 %v7259
  %v7584 = vpop.f32.mrb[0].mxu0
  %v7585 = vadd.f32 0.0, %v7584
  %v7586 = vpop.f32.mrb[0].mxu0
  %7587 = vmatprep.mubr.f32.mxu0 0.0
  %7588 = vmatmul.mubr.f32.gmra.mrb[0].mxu0 %v7262
  %v7589 = vpop.f32.mrb[0].mxu0
  %v7590 = vadd.f32 0.0, %v7589
  %v7591 = vpop.f32.mrb[0].mxu0
  %7592 = vmatprep.mubr.f32.mxu0 0.0
  %7593 = vmatmul.mubr.f32.gmra.mrb[0].mxu0 %v7265
  %v7594 = vpop.f32.mrb[0].mxu0
  %v7595 = vadd.f32 0.0, %v7594
  %v7596 = vpop.f32.mrb[0].mxu0
  %7597 = vmatprep.mubr.f32.mxu0 0.0
  %7598 = vmatmul.mubr.f32.gmra.mrb[0].mxu0 %v7268
  %v7599 = vpop.f32.mrb[0].mxu0
  %v7600 = vadd.f32 0.0, %v7599
  %v7601 = vpop.f32.mrb[0].mxu0
  %7602 = vmatprep.mubr.f32.mxu0 0.0
  %7603 = vmatmul.mubr.f32.gmra.mrb[0].mxu0 %v7271
  %v7604 = vpop.f32.mrb[0].mxu0
  %v7605 = vadd.f32 0.0, %v7604
  %v7606 = vpop.f32.mrb[0].mxu0
  %7607 = vmatprep.mubr.f32.mxu0 0.0
  %7608 = vmatmul.mubr.f32.gmra.mrb[0].mxu0 %v7274
  %v7609 = vpop.f32.mrb[0].mxu0
  %v7610 = vadd.f32 0.0, %v7609
  %v7611 = vpop.f32.mrb[0].mxu0
  %7612 = vmatprep.mubr.f32.mxu0 0.0
  %7613 = vmatmul.mubr.f32.gmra.mrb[0].mxu0 %v7277
  %v7614 = vpop.f32.mrb[0].mxu0
  %v7615 = vadd.f32 0.0, %v7614
  %v7616 = vpop.f32.mrb[0].mxu0
  %7617 = vmatprep.mubr.f32.mxu0 0.0
  %7618 = vmatmul.mubr.f32.gmra.mrb[0].mxu0 %v7280
  %v7619 = vpop.f32.mrb[0].mxu0
  %v7620 = vadd.f32 0.0, %v7619
  %v7621 = vpop.f32.mrb[0].mxu0
  %7622 = vmatprep.mubr.f32.mxu0 0.0
  %7623 = vmatmul.mubr.f32.gmra.mrb[0].mxu0 %v7283
  %v7624 = vpop.f32.mrb[0].mxu0
  %v7625 = vadd.f32 0.0, %v7624
  %v7626 = vpop.f32.mrb[0].mxu0
  %7627 = vmatprep.mubr.f32.mxu0 0.0
  %7628 = vmatmul.mubr.f32.gmra.mrb[0].mxu0 %v7286
  %v7629 = vpop.f32.mrb[0].mxu0
  %v7630 = vadd.f32 0.0, %v7629
  %v7631 = vpop.f32.mrb[0].mxu0
  %7632 = vmatprep.mubr.f32.mxu0 0.0
  %7633 = vmatmul.mubr.f32.gmra.mrb[0].mxu0 %v7289
  %v7634 = vpop.f32.mrb[0].mxu0
  %v7635 = vadd.f32 0.0, %v7634
  %v7636 = vpop.f32.mrb[0].mxu0
  %7637 = vmatprep.mubr.f32.mxu0 0.0
  %7638 = vmatmul.mubr.f32.gmra.mrb[0].mxu0 %v7292
  %v7639 = vpop.f32.mrb[0].mxu0
  %v7640 = vadd.f32 0.0, %v7639
  %v7641 = vpop.f32.mrb[0].mxu0
  %7642 = vmatprep.mubr.f32.mxu0 0.0
  %7643 = vmatmul.mubr.f32.gmra.mrb[0].mxu0 %v7295
  %v7644 = vpop.f32.mrb[0].mxu0
  %v7645 = vadd.f32 0.0, %v7644
  %v7646 = vpop.f32.mrb[0].mxu0
  %7647 = vmatprep.mubr.f32.mxu0 0.0
  %7648 = vmatmul.mubr.f32.gmra.mrb[0].mxu0 %v7298
  %v7649 = vpop.f32.mrb[0].mxu0
  %v7650 = vadd.f32 0.0, %v7649
  %v7651 = vpop.f32.mrb[0].mxu0
  %7652 = vmatprep.mubr.f32.mxu0 0.0
  %7653 = vmatmul.mubr.f32.gmra.mrb[0].mxu0 %v7301
  %v7654 = vpop.f32.mrb[0].mxu0
  %v7655 = vadd.f32 0.0, %v7654
  %v7656 = vpop.f32.mrb[0].mxu0
  %7657 = vmatprep.mubr.f32.mxu0 0.0
  %7658 = vmatmul.mubr.f32.gmra.mrb[0].mxu0 %v7304
  %v7659 = vpop.f32.mrb[0].mxu0
  %v7660 = vadd.f32 0.0, %v7659
  %v7661 = vpop.f32.mrb[0].mxu0
  %7662 = vmatprep.mubr.f32.mxu0 0.0
  %7663 = vmatmul.mubr.f32.gmra.mrb[0].mxu0 %v7307
  %v7664 = vpop.f32.mrb[0].mxu0
  %v7665 = vadd.f32 0.0, %v7664
  %v7666 = vpop.f32.mrb[0].mxu0
  %7667 = vmatprep.mubr.f32.mxu0 0.0
  %7668 = vmatmul.mubr.f32.gmra.mrb[0].mxu0 %v7310
  %v7669 = vpop.f32.mrb[0].mxu0
  %v7670 = vadd.f32 0.0, %v7669
  %v7671 = vpop.f32.mrb[0].mxu0
  %7672 = vmatprep.mubr.f32.mxu0 0.0
  %7673 = vmatmul.mubr.f32.gmra.mrb[0].mxu0 %v7313
  %v7674 = vpop.f32.mrb[0].mxu0
  %v7675 = vadd.f32 0.0, %v7674
  %v7676 = vpop.f32.mrb[0].mxu0
  %7677 = vmatprep.mubr.f32.mxu0 0.0
  %7678 = vmatmul.mubr.f32.gmra.mrb[0].mxu0 %v7316
  %v7679 = vpop.f32.mrb[0].mxu0
  %v7680 = vadd.f32 0.0, %v7679
  %v7681 = vpop.f32.mrb[0].mxu0
  %7682 = vmatprep.mubr.f32.mxu0 0.0
  %7683 = vmatmul.mubr.f32.gmra.mrb[0].mxu0 %v7319
  %v7684 = vpop.f32.mrb[0].mxu0
  %v7685 = vadd.f32 0.0, %v7684
  %v7686 = vpop.f32.mrb[0].mxu0
  %7687 = vmatprep.mubr.f32.mxu0 0.0
  %7688 = vmatmul.mubr.f32.gmra.mrb[0].mxu0 %v7322
  %v7689 = vpop.f32.mrb[0].mxu0
  %v7690 = vadd.f32 0.0, %v7689
  %v7691 = vpop.f32.mrb[0].mxu0
  %7692 = vmatprep.mubr.f32.mxu0 0.0
  %7693 = vmatmul.mubr.f32.gmra.mrb[0].mxu0 %v7325
  %v7694 = vpop.f32.mrb[0].mxu0
  %v7695 = vadd.f32 0.0, %v7694
  %v7696 = vpop.f32.mrb[0].mxu0
  %7697 = vmatprep.mubr.f32.mxu0 0.0
  %7698 = vmatmul.mubr.f32.gmra.mrb[0].mxu0 %v7328
  %v7699 = vpop.f32.mrb[0].mxu0
  %v7700 = vadd.f32 0.0, %v7699
  %v7701 = vpop.f32.mrb[0].mxu0
  %7702 = vmatprep.mubr.f32.mxu0 0.0
  %7703 = vmatmul.mubr.f32.gmra.mrb[0].mxu0 %v7331
  %v7704 = vpop.f32.mrb[0].mxu0
  %v7705 = vadd.f32 0.0, %v7704
  %v7706 = vpop.f32.mrb[0].mxu0
  %7707 = vmatprep.mubr.f32.mxu0 0.0
  %7708 = vmatmul.mubr.f32.gmra.mrb[0].mxu0 %v7334
  %v7709 = vpop.f32.mrb[0].mxu0
  %v7710 = vadd.f32 0.0, %v7709
  %v7711 = vpop.f32.mrb[0].mxu0
  %7712 = vmatprep.mubr.f32.mxu0 0.0
  %7713 = vmatmul.mubr.f32.gmra.mrb[0].mxu0 %v7337
  %v7714 = vpop.f32.mrb[0].mxu0
  %v7715 = vadd.f32 0.0, %v7714
  %v7716 = vpop.f32.mrb[0].mxu0
  %7717 = vmatprep.mubr.f32.mxu0 0.0
  %7718 = vmatmul.mubr.f32.gmra.mrb[0].mxu0 %v7340
  %v7719 = vpop.f32.mrb[0].mxu0
  %v7720 = vadd.f32 0.0, %v7719
  %v7721 = vpop.f32.mrb[0].mxu0
  %7722 = vmatprep.mubr.f32.mxu0 0.0
  %7723 = vmatmul.mubr.f32.gmra.mrb[0].mxu0 %v7343
  %v7724 = vpop.f32.mrb[0].mxu0
  %v7725 = vadd.f32 0.0, %v7724
  %v7726 = vpop.f32.mrb[0].mxu0
  %7727 = vmatprep.mubr.f32.mxu0 0.0
  %7728 = vmatmul.mubr.f32.gmra.mrb[0].mxu0 %v7346
  %v7729 = vpop.f32.mrb[0].mxu0
  %v7730 = vadd.f32 0.0, %v7729
  %v7731 = vpop.f32.mrb[0].mxu0
  %7732 = vmatprep.mubr.f32.mxu0 0.0
  %7733 = vmatmul.mubr.f32.gmra.mrb[0].mxu0 %v7349
  %v7734 = vpop.f32.mrb[0].mxu0
  %v7735 = vadd.f32 0.0, %v7734
  %v7736 = vpop.f32.mrb[0].mxu0
  %7737 = vmatprep.mubr.f32.mxu0 0.0
  %7738 = vmatmul.mubr.f32.gmra.mrb[0].mxu0 %v7352
  %v7739 = vpop.f32.mrb[0].mxu0
  %v7740 = vadd.f32 0.0, %v7739
  %v7741 = vpop.f32.mrb[0].mxu0
  %7742 = vmatprep.mubr.f32.mxu0 0.0
  %7743 = vmatmul.mubr.f32.gmra.mrb[0].mxu0 %v7355
  %v7744 = vpop.f32.mrb[0].mxu0
  %v7745 = vadd.f32 0.0, %v7744
  %v7746 = vpop.f32.mrb[0].mxu0
  %7747 = vmatprep.mubr.f32.mxu0 0.0
  %7748 = vmatmul.mubr.f32.gmra.mrb[0].mxu0 %v7358
  %v7749 = vpop.f32.mrb[0].mxu0
  %v7750 = vadd.f32 0.0, %v7749
  %v7751 = vpop.f32.mrb[0].mxu0
  %7752 = vmatprep.mubr.f32.mxu0 0.0
  %7753 = vmatmul.mubr.f32.gmra.mrb[0].mxu0 %v7361
  %v7754 = vpop.f32.mrb[0].mxu0
  %v7755 = vadd.f32 0.0, %v7754
  %v7756 = vpop.f32.mrb[0].mxu0
  %7757 = vmatprep.mubr.f32.mxu0 0.0
  %7758 = vmatmul.mubr.f32.gmra.mrb[0].mxu0 %v7364
  %v7759 = vpop.f32.mrb[0].mxu0
  %v7760 = vadd.f32 0.0, %v7759
  %v7761 = vpop.f32.mrb[0].mxu0
  %7762 = vmatprep.mubr.f32.mxu0 0.0
  %7763 = vmatmul.mubr.f32.gmra.mrb[0].mxu0 %v7367
  %v7764 = vpop.f32.mrb[0].mxu0
  %v7765 = vadd.f32 0.0, %v7764
  %v7766 = vpop.f32.mrb[0].mxu0
  %7767 = vmatprep.mubr.f32.mxu0 0.0
  %7768 = vmatmul.mubr.f32.gmra.mrb[0].mxu0 %v7370
  %v7769 = vpop.f32.mrb[0].mxu0
  %v7770 = vadd.f32 0.0, %v7769
  %v7771 = vpop.f32.mrb[0].mxu0
  %7772 = vmatprep.mubr.f32.mxu0 0.0
  %7773 = vmatmul.mubr.f32.gmra.mrb[0].mxu0 %v7373
  %v7774 = vpop.f32.mrb[0].mxu0
  %v7775 = vadd.f32 0.0, %v7774
  %v7776 = vpop.f32.mrb[0].mxu0
  %7777 = vmatprep.mubr.f32.mxu0 0.0
  %7778 = vmatmul.mubr.f32.gmra.mrb[0].mxu0 %v7376
  %v7779 = vpop.f32.mrb[0].mxu0
  %v7780 = vadd.f32 0.0, %v7779
  %v7781 = vpop.f32.mrb[0].mxu0
  %7782 = vmatprep.mubr.f32.mxu0 0.0
  %7783 = vmatmul.mubr.f32.gmra.mrb[0].mxu0 %v7379
  %v7784 = vpop.f32.mrb[0].mxu0
  %v7785 = vadd.f32 0.0, %v7784
  %v7786 = vpop.f32.mrb[0].mxu0
  %7787 = vmatprep.mubr.f32.mxu0 0.0
  %7788 = vmatmul.mubr.f32.gmra.mrb[0].mxu0 %v7382
  %v7789 = vpop.f32.mrb[0].mxu0
  %v7790 = vadd.f32 0.0, %v7789
  %v7791 = vpop.f32.mrb[0].mxu0
  %7792 = vmatprep.mubr.f32.mxu0 0.0
  %7793 = vmatmul.mubr.f32.gmra.mrb[0].mxu0 %v7385
  %v7794 = vpop.f32.mrb[0].mxu0
  %v7795 = vadd.f32 0.0, %v7794
  %v7796 = vpop.f32.mrb[0].mxu0
  %7797 = vmatprep.mubr.f32.mxu0 0.0
  %7798 = vmatmul.mubr.f32.gmra.mrb[0].mxu0 %v7388
  %v7799 = vpop.f32.mrb[0].mxu0
  %v7800 = vadd.f32 0.0, %v7799
  %v7801 = vpop.f32.mrb[0].mxu0
  %7802 = vmatprep.mubr.f32.mxu0 0.0
  %7803 = vmatmul.mubr.f32.gmra.mrb[0].mxu0 %v7391
  %v7804 = vpop.f32.mrb[0].mxu0
  %v7805 = vadd.f32 0.0, %v7804
  %v7806 = vpop.f32.mrb[0].mxu0
  %7807 = vmatprep.mubr.f32.mxu0 0.0
  %7808 = vmatmul.mubr.f32.gmra.mrb[0].mxu0 %v7394
  %v7809 = vpop.f32.mrb[0].mxu0
  %v7810 = vadd.f32 0.0, %v7809
  %v7811 = vpop.f32.mrb[0].mxu0
  %7812 = vmatprep.mubr.f32.mxu0 0.0
  %7813 = vmatmul.mubr.f32.gmra.mrb[0].mxu0 %v7397
  %v7814 = vpop.f32.mrb[0].mxu0
  %v7815 = vadd.f32 0.0, %v7814
  %v7816 = vpop.f32.mrb[0].mxu0
  %7817 = vmatprep.mubr.f32.mxu0 0.0
  %7818 = vmatmul.mubr.f32.gmra.mrb[0].mxu0 %v7400
  %v7819 = vpop.f32.mrb[0].mxu0
  %v7820 = vadd.f32 0.0, %v7819
  %v7821 = vpop.f32.mrb[0].mxu0
  %7822 = vmatprep.mubr.f32.mxu0 0.0
  %7823 = vmatmul.mubr.f32.gmra.mrb[0].mxu0 %v7403
  %v7824 = vpop.f32.mrb[0].mxu0
  %v7825 = vadd.f32 0.0, %v7824
  %v7826 = vpop.f32.mrb[0].mxu0
  %7827 = vmatprep.mubr.f32.mxu0 0.0
  %7828 = vmatmul.mubr.f32.gmra.mrb[0].mxu0 %v7406
  %v7829 = vpop.f32.mrb[0].mxu0
  %v7830 = vadd.f32 0.0, %v7829
  %v7831 = vpop.f32.mrb[0].mxu0
  %7832 = vdwg.mxu0
  %v7833 = vld [vmem:[#allocation2] sm:$0xff]
  %v7834 = vld [vmem:[#allocation2 + $0x8] sm:$0xff]
  %v7835 = vld [vmem:[#allocation2 + $0x10] sm:$0xff]
  %v7836 = vld [vmem:[#allocation2 + $0x18] sm:$0xff]
  %v7837 = vld [vmem:[#allocation2 + $0x20] sm:$0xff]
  %v7838 = vld [vmem:[#allocation2 + $0x28] sm:$0xff]
  %v7839 = vld [vmem:[#allocation2 + $0x30] sm:$0xff]
  %v7840 = vld [vmem:[#allocation2 + $0x38] sm:$0xff]
  %v7841 = vld [vmem:[#allocation2 + $0x40] sm:$0xff]
  %v7842 = vld [vmem:[#allocation2 + $0x48] sm:$0xff]
  %v7843 = vld [vmem:[#allocation2 + $0x50] sm:$0xff]
  %v7844 = vld [vmem:[#allocation2 + $0x58] sm:$0xff]
  %v7845 = vld [vmem:[#allocation2 + $0x60] sm:$0xff]
  %v7846 = vld [vmem:[#allocation2 + $0x68] sm:$0xff]
  %v7847 = vld [vmem:[#allocation2 + $0x70] sm:$0xff]
  %v7848 = vld [vmem:[#allocation2 + $0x78] sm:$0xff]
  %v7849 = vld [vmem:[#allocation2 + $0x80] sm:$0xff]
  %v7850 = vld [vmem:[#allocation2 + $0x88] sm:$0xff]
  %v7851 = vld [vmem:[#allocation2 + $0x90] sm:$0xff]
  %v7852 = vld [vmem:[#allocation2 + $0x98] sm:$0xff]
  %v7853 = vld [vmem:[#allocation2 + $0xa0] sm:$0xff]
  %v7854 = vld [vmem:[#allocation2 + $0xa8] sm:$0xff]
  %v7855 = vld [vmem:[#allocation2 + $0xb0] sm:$0xff]
  %v7856 = vld [vmem:[#allocation2 + $0xb8] sm:$0xff]
  %v7857 = vld [vmem:[#allocation2 + $0xc0] sm:$0xff]
  %v7858 = vld [vmem:[#allocation2 + $0xc8] sm:$0xff]
  %v7859 = vld [vmem:[#allocation2 + $0xd0] sm:$0xff]
  %v7860 = vld [vmem:[#allocation2 + $0xd8] sm:$0xff]
  %v7861 = vld [vmem:[#allocation2 + $0xe0] sm:$0xff]
  %v7862 = vld [vmem:[#allocation2 + $0xe8] sm:$0xff]
  %v7863 = vld [vmem:[#allocation2 + $0xf0] sm:$0xff]
  %v7864 = vld [vmem:[#allocation2 + $0xf8] sm:$0xff]
  %v7865 = vld [vmem:[#allocation2 + $0x100] sm:$0xff]
  %v7866 = vld [vmem:[#allocation2 + $0x108] sm:$0xff]
  %v7867 = vld [vmem:[#allocation2 + $0x110] sm:$0xff]
  %v7868 = vld [vmem:[#allocation2 + $0x118] sm:$0xff]
  %v7869 = vld [vmem:[#allocation2 + $0x120] sm:$0xff]
  %v7870 = vld [vmem:[#allocation2 + $0x128] sm:$0xff]
  %v7871 = vld [vmem:[#allocation2 + $0x130] sm:$0xff]
  %v7872 = vld [vmem:[#allocation2 + $0x138] sm:$0xff]
  %v7873 = vld [vmem:[#allocation2 + $0x140] sm:$0xff]
  %v7874 = vld [vmem:[#allocation2 + $0x148] sm:$0xff]
  %v7875 = vld [vmem:[#allocation2 + $0x150] sm:$0xff]
  %v7876 = vld [vmem:[#allocation2 + $0x158] sm:$0xff]
  %v7877 = vld [vmem:[#allocation2 + $0x160] sm:$0xff]
  %v7878 = vld [vmem:[#allocation2 + $0x168] sm:$0xff]
  %v7879 = vld [vmem:[#allocation2 + $0x170] sm:$0xff]
  %v7880 = vld [vmem:[#allocation2 + $0x178] sm:$0xff]
  %v7881 = vld [vmem:[#allocation2 + $0x180] sm:$0xff]
  %v7882 = vld [vmem:[#allocation2 + $0x188] sm:$0xff]
  %v7883 = vld [vmem:[#allocation2 + $0x190] sm:$0xff]
  %v7884 = vld [vmem:[#allocation2 + $0x198] sm:$0xff]
  %v7885 = vld [vmem:[#allocation2 + $0x1a0] sm:$0xff]
  %v7886 = vld [vmem:[#allocation2 + $0x1a8] sm:$0xff]
  %v7887 = vld [vmem:[#allocation2 + $0x1b0] sm:$0xff]
  %v7888 = vld [vmem:[#allocation2 + $0x1b8] sm:$0xff]
  %v7889 = vld [vmem:[#allocation2 + $0x1c0] sm:$0xff]
  %v7890 = vld [vmem:[#allocation2 + $0x1c8] sm:$0xff]
  %v7891 = vld [vmem:[#allocation2 + $0x1d0] sm:$0xff]
  %v7892 = vld [vmem:[#allocation2 + $0x1d8] sm:$0xff]
  %v7893 = vld [vmem:[#allocation2 + $0x1e0] sm:$0xff]
  %v7894 = vld [vmem:[#allocation2 + $0x1e8] sm:$0xff]
  %v7895 = vld [vmem:[#allocation2 + $0x1f0] sm:$0xff]
  %v7896 = vld [vmem:[#allocation2 + $0x1f8] sm:$0xff]
  %v7897 = vld [vmem:[#allocation2 + $0x200] sm:$0xff]
  %v7898 = vld [vmem:[#allocation2 + $0x208] sm:$0xff]
  %v7899 = vld [vmem:[#allocation2 + $0x210] sm:$0xff]
  %v7900 = vld [vmem:[#allocation2 + $0x218] sm:$0xff]
  %v7901 = vld [vmem:[#allocation2 + $0x220] sm:$0xff]
  %v7902 = vld [vmem:[#allocation2 + $0x228] sm:$0xff]
  %v7903 = vld [vmem:[#allocation2 + $0x230] sm:$0xff]
  %v7904 = vld [vmem:[#allocation2 + $0x238] sm:$0x3f]
  %v7905 = vld [vmem:[%s1126] sm:$0xff]
  %v7907 = vsel %vm38, %v7833, 0
  %v7910 = vsel %vm38, %v7834, 0
  %v7913 = vsel %vm38, %v7835, 0
  %v7916 = vsel %vm38, %v7836, 0
  %v7919 = vsel %vm38, %v7837, 0
  %v7922 = vsel %vm38, %v7838, 0
  %v7925 = vsel %vm38, %v7839, 0
  %v7928 = vsel %vm38, %v7840, 0
  %v7931 = vsel %vm38, %v7841, 0
  %v7934 = vsel %vm38, %v7842, 0
  %v7937 = vsel %vm38, %v7843, 0
  %v7940 = vsel %vm38, %v7844, 0
  %v7943 = vsel %vm38, %v7845, 0
  %v7946 = vsel %vm38, %v7846, 0
  %v7949 = vsel %vm38, %v7847, 0
  %v7952 = vsel %vm38, %v7848, 0
  %v7955 = vsel %vm38, %v7849, 0
  %v7958 = vsel %vm38, %v7850, 0
  %v7961 = vsel %vm38, %v7851, 0
  %v7964 = vsel %vm38, %v7852, 0
  %v7967 = vsel %vm38, %v7853, 0
  %v7970 = vsel %vm38, %v7854, 0
  %v7973 = vsel %vm38, %v7855, 0
  %v7976 = vsel %vm38, %v7856, 0
  %v7979 = vsel %vm38, %v7857, 0
  %v7982 = vsel %vm38, %v7858, 0
  %v7985 = vsel %vm38, %v7859, 0
  %v7988 = vsel %vm38, %v7860, 0
  %v7991 = vsel %vm38, %v7861, 0
  %v7994 = vsel %vm38, %v7862, 0
  %v7997 = vsel %vm38, %v7863, 0
  %v8000 = vsel %vm38, %v7864, 0
  %v8003 = vsel %vm38, %v7865, 0
  %v8006 = vsel %vm38, %v7866, 0
  %v8009 = vsel %vm38, %v7867, 0
  %v8012 = vsel %vm38, %v7868, 0
  %v8015 = vsel %vm38, %v7869, 0
  %v8018 = vsel %vm38, %v7870, 0
  %v8021 = vsel %vm38, %v7871, 0
  %v8024 = vsel %vm38, %v7872, 0
  %v8027 = vsel %vm38, %v7873, 0
  %v8030 = vsel %vm38, %v7874, 0
  %v8033 = vsel %vm38, %v7875, 0
  %v8036 = vsel %vm38, %v7876, 0
  %v8039 = vsel %vm38, %v7877, 0
  %v8042 = vsel %vm38, %v7878, 0
  %v8045 = vsel %vm38, %v7879, 0
  %v8048 = vsel %vm38, %v7880, 0
  %v8051 = vsel %vm38, %v7881, 0
  %v8054 = vsel %vm38, %v7882, 0
  %v8057 = vsel %vm38, %v7883, 0
  %v8060 = vsel %vm38, %v7884, 0
  %v8063 = vsel %vm38, %v7885, 0
  %v8066 = vsel %vm38, %v7886, 0
  %v8069 = vsel %vm38, %v7887, 0
  %v8072 = vsel %vm38, %v7888, 0
  %v8075 = vsel %vm38, %v7889, 0
  %v8078 = vsel %vm38, %v7890, 0
  %v8081 = vsel %vm38, %v7891, 0
  %v8084 = vsel %vm38, %v7892, 0
  %v8087 = vsel %vm38, %v7893, 0
  %v8090 = vsel %vm38, %v7894, 0
  %v8093 = vsel %vm38, %v7895, 0
  %v8096 = vsel %vm38, %v7896, 0
  %v8099 = vsel %vm38, %v7897, 0
  %v8102 = vsel %vm38, %v7898, 0
  %v8105 = vsel %vm38, %v7899, 0
  %v8108 = vsel %vm38, %v7900, 0
  %v8111 = vsel %vm38, %v7901, 0
  %v8114 = vsel %vm38, %v7902, 0
  %v8117 = vsel %vm38, %v7903, 0
  %v8120 = vsel %vm38, %v7904, 0
  %8122 = vmatprep.subr.mxu0 0.0
  %8123 = vmatpush1.msra.mxu0 %v7905
  %8124 = vmatprep.subr.mxu0 0.0
  %8125 = vmatpush1.msra.mxu0 0.0
  %8126 = vmatprep.subr.mxu0 0.0
  %8127 = vmatpush1.msra.mxu0 0.0
  %8128 = vmatprep.subr.mxu0 0.0
  %8129 = vmatpush1.msra.mxu0 0.0
  %8130 = vmatprep.subr.mxu0 0.0
  %8131 = vmatpush1.msra.mxu0 0.0
  %8132 = vmatprep.subr.mxu0 0.0
  %8133 = vmatpush1.msra.mxu0 0.0
  %8134 = vmatprep.subr.mxu0 0.0
  %8135 = vmatpush1.msra.mxu0 0.0
  %8136 = vmatprep.subr.mxu0 0.0
  %8137 = vmatpush1.msra.mxu0 0.0
  %8138 = vmatprep.subr.mxu0 0.0
  %8139 = vmatpush1.msra.mxu0 0.0
  %8140 = vmatprep.subr.mxu0 0.0
  %8141 = vmatpush1.msra.mxu0 0.0
  %8142 = vmatprep.subr.mxu0 0.0
  %8143 = vmatpush1.msra.mxu0 0.0
  %8144 = vmatprep.subr.mxu0 0.0
  %8145 = vmatpush1.msra.mxu0 0.0
  %8146 = vmatprep.subr.mxu0 0.0
  %8147 = vmatpush1.msra.mxu0 0.0
  %8148 = vmatprep.subr.mxu0 0.0
  %8149 = vmatpush1.msra.mxu0 0.0
  %8150 = vmatprep.subr.mxu0 0.0
  %8151 = vmatpush1.msra.mxu0 0.0
  %8152 = vmatprep.subr.mxu0 0.0
  %8153 = vmatpush1.msra.mxu0 0.0
  %8154 = vmatprep.subr.mxu0 0.0
  %8155 = vmatpush1.msra.mxu0 0.0
  %8156 = vmatprep.subr.mxu0 0.0
  %8157 = vmatpush1.msra.mxu0 0.0
  %8158 = vmatprep.subr.mxu0 0.0
  %8159 = vmatpush1.msra.mxu0 0.0
  %8160 = vmatprep.subr.mxu0 0.0
  %8161 = vmatpush1.msra.mxu0 0.0
  %8162 = vmatprep.subr.mxu0 0.0
  %8163 = vmatpush1.msra.mxu0 0.0
  %8164 = vmatprep.subr.mxu0 0.0
  %8165 = vmatpush1.msra.mxu0 0.0
  %8166 = vmatprep.subr.mxu0 0.0
  %8167 = vmatpush1.msra.mxu0 0.0
  %8168 = vmatprep.subr.mxu0 0.0
  %8169 = vmatpush1.msra.mxu0 0.0
  %8170 = vmatprep.subr.mxu0 0.0
  %8171 = vmatpush1.msra.mxu0 0.0
  %8172 = vmatprep.subr.mxu0 0.0
  %8173 = vmatpush1.msra.mxu0 0.0
  %8174 = vmatprep.subr.mxu0 0.0
  %8175 = vmatpush1.msra.mxu0 0.0
  %8176 = vmatprep.subr.mxu0 0.0
  %8177 = vmatpush1.msra.mxu0 0.0
  %8178 = vmatprep.subr.mxu0 0.0
  %8179 = vmatpush1.msra.mxu0 0.0
  %8180 = vmatprep.subr.mxu0 0.0
  %8181 = vmatpush1.msra.mxu0 0.0
  %8182 = vmatprep.subr.mxu0 0.0
  %8183 = vmatpush1.msra.mxu0 0.0
  %8184 = vmatprep.subr.mxu0 0.0
  %8185 = vmatpush1.msra.mxu0 0.0
  %8186 = vmatprep.mubr.f32.mxu0 0.0
  %8187 = vmatmul.mubr.f32.gmra.mrb[0].mxu0 %v7907
  %v8188 = vpop.f32.mrb[0].mxu0
  %v8189 = vadd.f32 0.0, %v8188
  %v8190 = vpop.f32.mrb[0].mxu0
  %8191 = vmatprep.mubr.f32.mxu0 0.0
  %8192 = vmatmul.mubr.f32.gmra.mrb[0].mxu0 %v7910
  %v8193 = vpop.f32.mrb[0].mxu0
  %v8194 = vadd.f32 0.0, %v8193
  %v8195 = vpop.f32.mrb[0].mxu0
  %8196 = vmatprep.mubr.f32.mxu0 0.0
  %8197 = vmatmul.mubr.f32.gmra.mrb[0].mxu0 %v7913
  %v8198 = vpop.f32.mrb[0].mxu0
  %v8199 = vadd.f32 0.0, %v8198
  %v8200 = vpop.f32.mrb[0].mxu0
  %8201 = vmatprep.mubr.f32.mxu0 0.0
  %8202 = vmatmul.mubr.f32.gmra.mrb[0].mxu0 %v7916
  %v8203 = vpop.f32.mrb[0].mxu0
  %v8204 = vadd.f32 0.0, %v8203
  %v8205 = vpop.f32.mrb[0].mxu0
  %8206 = vmatprep.mubr.f32.mxu0 0.0
  %8207 = vmatmul.mubr.f32.gmra.mrb[0].mxu0 %v7919
  %v8208 = vpop.f32.mrb[0].mxu0
  %v8209 = vadd.f32 0.0, %v8208
  %v8210 = vpop.f32.mrb[0].mxu0
  %8211 = vmatprep.mubr.f32.mxu0 0.0
  %8212 = vmatmul.mubr.f32.gmra.mrb[0].mxu0 %v7922
  %v8213 = vpop.f32.mrb[0].mxu0
  %v8214 = vadd.f32 0.0, %v8213
  %v8215 = vpop.f32.mrb[0].mxu0
  %8216 = vmatprep.mubr.f32.mxu0 0.0
  %8217 = vmatmul.mubr.f32.gmra.mrb[0].mxu0 %v7925
  %v8218 = vpop.f32.mrb[0].mxu0
  %v8219 = vadd.f32 0.0, %v8218
  %v8220 = vpop.f32.mrb[0].mxu0
  %8221 = vmatprep.mubr.f32.mxu0 0.0
  %8222 = vmatmul.mubr.f32.gmra.mrb[0].mxu0 %v7928
  %v8223 = vpop.f32.mrb[0].mxu0
  %v8224 = vadd.f32 0.0, %v8223
  %v8225 = vpop.f32.mrb[0].mxu0
  %8226 = vmatprep.mubr.f32.mxu0 0.0
  %8227 = vmatmul.mubr.f32.gmra.mrb[0].mxu0 %v7931
  %v8228 = vpop.f32.mrb[0].mxu0
  %v8229 = vadd.f32 0.0, %v8228
  %v8230 = vpop.f32.mrb[0].mxu0
  %8231 = vmatprep.mubr.f32.mxu0 0.0
  %8232 = vmatmul.mubr.f32.gmra.mrb[0].mxu0 %v7934
  %v8233 = vpop.f32.mrb[0].mxu0
  %v8234 = vadd.f32 0.0, %v8233
  %v8235 = vpop.f32.mrb[0].mxu0
  %8236 = vmatprep.mubr.f32.mxu0 0.0
  %8237 = vmatmul.mubr.f32.gmra.mrb[0].mxu0 %v7937
  %v8238 = vpop.f32.mrb[0].mxu0
  %v8239 = vadd.f32 0.0, %v8238
  %v8240 = vpop.f32.mrb[0].mxu0
  %8241 = vmatprep.mubr.f32.mxu0 0.0
  %8242 = vmatmul.mubr.f32.gmra.mrb[0].mxu0 %v7940
  %v8243 = vpop.f32.mrb[0].mxu0
  %v8244 = vadd.f32 0.0, %v8243
  %v8245 = vpop.f32.mrb[0].mxu0
  %8246 = vmatprep.mubr.f32.mxu0 0.0
  %8247 = vmatmul.mubr.f32.gmra.mrb[0].mxu0 %v7943
  %v8248 = vpop.f32.mrb[0].mxu0
  %v8249 = vadd.f32 0.0, %v8248
  %v8250 = vpop.f32.mrb[0].mxu0
  %8251 = vmatprep.mubr.f32.mxu0 0.0
  %8252 = vmatmul.mubr.f32.gmra.mrb[0].mxu0 %v7946
  %v8253 = vpop.f32.mrb[0].mxu0
  %v8254 = vadd.f32 0.0, %v8253
  %v8255 = vpop.f32.mrb[0].mxu0
  %8256 = vmatprep.mubr.f32.mxu0 0.0
  %8257 = vmatmul.mubr.f32.gmra.mrb[0].mxu0 %v7949
  %v8258 = vpop.f32.mrb[0].mxu0
  %v8259 = vadd.f32 0.0, %v8258
  %v8260 = vpop.f32.mrb[0].mxu0
  %8261 = vmatprep.mubr.f32.mxu0 0.0
  %8262 = vmatmul.mubr.f32.gmra.mrb[0].mxu0 %v7952
  %v8263 = vpop.f32.mrb[0].mxu0
  %v8264 = vadd.f32 0.0, %v8263
  %v8265 = vpop.f32.mrb[0].mxu0
  %8266 = vmatprep.mubr.f32.mxu0 0.0
  %8267 = vmatmul.mubr.f32.gmra.mrb[0].mxu0 %v7955
  %v8268 = vpop.f32.mrb[0].mxu0
  %v8269 = vadd.f32 0.0, %v8268
  %v8270 = vpop.f32.mrb[0].mxu0
  %8271 = vmatprep.mubr.f32.mxu0 0.0
  %8272 = vmatmul.mubr.f32.gmra.mrb[0].mxu0 %v7958
  %v8273 = vpop.f32.mrb[0].mxu0
  %v8274 = vadd.f32 0.0, %v8273
  %v8275 = vpop.f32.mrb[0].mxu0
  %8276 = vmatprep.mubr.f32.mxu0 0.0
  %8277 = vmatmul.mubr.f32.gmra.mrb[0].mxu0 %v7961
  %v8278 = vpop.f32.mrb[0].mxu0
  %v8279 = vadd.f32 0.0, %v8278
  %v8280 = vpop.f32.mrb[0].mxu0
  %8281 = vmatprep.mubr.f32.mxu0 0.0
  %8282 = vmatmul.mubr.f32.gmra.mrb[0].mxu0 %v7964
  %v8283 = vpop.f32.mrb[0].mxu0
  %v8284 = vadd.f32 0.0, %v8283
  %v8285 = vpop.f32.mrb[0].mxu0
  %8286 = vmatprep.mubr.f32.mxu0 0.0
  %8287 = vmatmul.mubr.f32.gmra.mrb[0].mxu0 %v7967
  %v8288 = vpop.f32.mrb[0].mxu0
  %v8289 = vadd.f32 0.0, %v8288
  %v8290 = vpop.f32.mrb[0].mxu0
  %8291 = vmatprep.mubr.f32.mxu0 0.0
  %8292 = vmatmul.mubr.f32.gmra.mrb[0].mxu0 %v7970
  %v8293 = vpop.f32.mrb[0].mxu0
  %v8294 = vadd.f32 0.0, %v8293
  %v8295 = vpop.f32.mrb[0].mxu0
  %8296 = vmatprep.mubr.f32.mxu0 0.0
  %8297 = vmatmul.mubr.f32.gmra.mrb[0].mxu0 %v7973
  %v8298 = vpop.f32.mrb[0].mxu0
  %v8299 = vadd.f32 0.0, %v8298
  %v8300 = vpop.f32.mrb[0].mxu0
  %8301 = vmatprep.mubr.f32.mxu0 0.0
  %8302 = vmatmul.mubr.f32.gmra.mrb[0].mxu0 %v7976
  %v8303 = vpop.f32.mrb[0].mxu0
  %v8304 = vadd.f32 0.0, %v8303
  %v8305 = vpop.f32.mrb[0].mxu0
  %8306 = vmatprep.mubr.f32.mxu0 0.0
  %8307 = vmatmul.mubr.f32.gmra.mrb[0].mxu0 %v7979
  %v8308 = vpop.f32.mrb[0].mxu0
  %v8309 = vadd.f32 0.0, %v8308
  %v8310 = vpop.f32.mrb[0].mxu0
  %8311 = vmatprep.mubr.f32.mxu0 0.0
  %8312 = vmatmul.mubr.f32.gmra.mrb[0].mxu0 %v7982
  %v8313 = vpop.f32.mrb[0].mxu0
  %v8314 = vadd.f32 0.0, %v8313
  %v8315 = vpop.f32.mrb[0].mxu0
  %8316 = vmatprep.mubr.f32.mxu0 0.0
  %8317 = vmatmul.mubr.f32.gmra.mrb[0].mxu0 %v7985
  %v8318 = vpop.f32.mrb[0].mxu0
  %v8319 = vadd.f32 0.0, %v8318
  %v8320 = vpop.f32.mrb[0].mxu0
  %8321 = vmatprep.mubr.f32.mxu0 0.0
  %8322 = vmatmul.mubr.f32.gmra.mrb[0].mxu0 %v7988
  %v8323 = vpop.f32.mrb[0].mxu0
  %v8324 = vadd.f32 0.0, %v8323
  %v8325 = vpop.f32.mrb[0].mxu0
  %8326 = vmatprep.mubr.f32.mxu0 0.0
  %8327 = vmatmul.mubr.f32.gmra.mrb[0].mxu0 %v7991
  %v8328 = vpop.f32.mrb[0].mxu0
  %v8329 = vadd.f32 0.0, %v8328
  %v8330 = vpop.f32.mrb[0].mxu0
  %8331 = vmatprep.mubr.f32.mxu0 0.0
  %8332 = vmatmul.mubr.f32.gmra.mrb[0].mxu0 %v7994
  %v8333 = vpop.f32.mrb[0].mxu0
  %v8334 = vadd.f32 0.0, %v8333
  %v8335 = vpop.f32.mrb[0].mxu0
  %8336 = vmatprep.mubr.f32.mxu0 0.0
  %8337 = vmatmul.mubr.f32.gmra.mrb[0].mxu0 %v7997
  %v8338 = vpop.f32.mrb[0].mxu0
  %v8339 = vadd.f32 0.0, %v8338
  %v8340 = vpop.f32.mrb[0].mxu0
  %8341 = vmatprep.mubr.f32.mxu0 0.0
  %8342 = vmatmul.mubr.f32.gmra.mrb[0].mxu0 %v8000
  %v8343 = vpop.f32.mrb[0].mxu0
  %v8344 = vadd.f32 0.0, %v8343
  %v8345 = vpop.f32.mrb[0].mxu0
  %8346 = vmatprep.mubr.f32.mxu0 0.0
  %8347 = vmatmul.mubr.f32.gmra.mrb[0].mxu0 %v8003
  %v8348 = vpop.f32.mrb[0].mxu0
  %v8349 = vadd.f32 0.0, %v8348
  %v8350 = vpop.f32.mrb[0].mxu0
  %8351 = vmatprep.mubr.f32.mxu0 0.0
  %8352 = vmatmul.mubr.f32.gmra.mrb[0].mxu0 %v8006
  %v8353 = vpop.f32.mrb[0].mxu0
  %v8354 = vadd.f32 0.0, %v8353
  %v8355 = vpop.f32.mrb[0].mxu0
  %8356 = vmatprep.mubr.f32.mxu0 0.0
  %8357 = vmatmul.mubr.f32.gmra.mrb[0].mxu0 %v8009
  %v8358 = vpop.f32.mrb[0].mxu0
  %v8359 = vadd.f32 0.0, %v8358
  %v8360 = vpop.f32.mrb[0].mxu0
  %8361 = vmatprep.mubr.f32.mxu0 0.0
  %8362 = vmatmul.mubr.f32.gmra.mrb[0].mxu0 %v8012
  %v8363 = vpop.f32.mrb[0].mxu0
  %v8364 = vadd.f32 0.0, %v8363
  %v8365 = vpop.f32.mrb[0].mxu0
  %8366 = vmatprep.mubr.f32.mxu0 0.0
  %8367 = vmatmul.mubr.f32.gmra.mrb[0].mxu0 %v8015
  %v8368 = vpop.f32.mrb[0].mxu0
  %v8369 = vadd.f32 0.0, %v8368
  %v8370 = vpop.f32.mrb[0].mxu0
  %8371 = vmatprep.mubr.f32.mxu0 0.0
  %8372 = vmatmul.mubr.f32.gmra.mrb[0].mxu0 %v8018
  %v8373 = vpop.f32.mrb[0].mxu0
  %v8374 = vadd.f32 0.0, %v8373
  %v8375 = vpop.f32.mrb[0].mxu0
  %8376 = vmatprep.mubr.f32.mxu0 0.0
  %8377 = vmatmul.mubr.f32.gmra.mrb[0].mxu0 %v8021
  %v8378 = vpop.f32.mrb[0].mxu0
  %v8379 = vadd.f32 0.0, %v8378
  %v8380 = vpop.f32.mrb[0].mxu0
  %8381 = vmatprep.mubr.f32.mxu0 0.0
  %8382 = vmatmul.mubr.f32.gmra.mrb[0].mxu0 %v8024
  %v8383 = vpop.f32.mrb[0].mxu0
  %v8384 = vadd.f32 0.0, %v8383
  %v8385 = vpop.f32.mrb[0].mxu0
  %8386 = vmatprep.mubr.f32.mxu0 0.0
  %8387 = vmatmul.mubr.f32.gmra.mrb[0].mxu0 %v8027
  %v8388 = vpop.f32.mrb[0].mxu0
  %v8389 = vadd.f32 0.0, %v8388
  %v8390 = vpop.f32.mrb[0].mxu0
  %8391 = vmatprep.mubr.f32.mxu0 0.0
  %8392 = vmatmul.mubr.f32.gmra.mrb[0].mxu0 %v8030
  %v8393 = vpop.f32.mrb[0].mxu0
  %v8394 = vadd.f32 0.0, %v8393
  %v8395 = vpop.f32.mrb[0].mxu0
  %8396 = vmatprep.mubr.f32.mxu0 0.0
  %8397 = vmatmul.mubr.f32.gmra.mrb[0].mxu0 %v8033
  %v8398 = vpop.f32.mrb[0].mxu0
  %v8399 = vadd.f32 0.0, %v8398
  %v8400 = vpop.f32.mrb[0].mxu0
  %8401 = vmatprep.mubr.f32.mxu0 0.0
  %8402 = vmatmul.mubr.f32.gmra.mrb[0].mxu0 %v8036
  %v8403 = vpop.f32.mrb[0].mxu0
  %v8404 = vadd.f32 0.0, %v8403
  %v8405 = vpop.f32.mrb[0].mxu0
  %8406 = vmatprep.mubr.f32.mxu0 0.0
  %8407 = vmatmul.mubr.f32.gmra.mrb[0].mxu0 %v8039
  %v8408 = vpop.f32.mrb[0].mxu0
  %v8409 = vadd.f32 0.0, %v8408
  %v8410 = vpop.f32.mrb[0].mxu0
  %8411 = vmatprep.mubr.f32.mxu0 0.0
  %8412 = vmatmul.mubr.f32.gmra.mrb[0].mxu0 %v8042
  %v8413 = vpop.f32.mrb[0].mxu0
  %v8414 = vadd.f32 0.0, %v8413
  %v8415 = vpop.f32.mrb[0].mxu0
  %8416 = vmatprep.mubr.f32.mxu0 0.0
  %8417 = vmatmul.mubr.f32.gmra.mrb[0].mxu0 %v8045
  %v8418 = vpop.f32.mrb[0].mxu0
  %v8419 = vadd.f32 0.0, %v8418
  %v8420 = vpop.f32.mrb[0].mxu0
  %8421 = vmatprep.mubr.f32.mxu0 0.0
  %8422 = vmatmul.mubr.f32.gmra.mrb[0].mxu0 %v8048
  %v8423 = vpop.f32.mrb[0].mxu0
  %v8424 = vadd.f32 0.0, %v8423
  %v8425 = vpop.f32.mrb[0].mxu0
  %8426 = vmatprep.mubr.f32.mxu0 0.0
  %8427 = vmatmul.mubr.f32.gmra.mrb[0].mxu0 %v8051
  %v8428 = vpop.f32.mrb[0].mxu0
  %v8429 = vadd.f32 0.0, %v8428
  %v8430 = vpop.f32.mrb[0].mxu0
  %8431 = vmatprep.mubr.f32.mxu0 0.0
  %8432 = vmatmul.mubr.f32.gmra.mrb[0].mxu0 %v8054
  %v8433 = vpop.f32.mrb[0].mxu0
  %v8434 = vadd.f32 0.0, %v8433
  %v8435 = vpop.f32.mrb[0].mxu0
  %8436 = vmatprep.mubr.f32.mxu0 0.0
  %8437 = vmatmul.mubr.f32.gmra.mrb[0].mxu0 %v8057
  %v8438 = vpop.f32.mrb[0].mxu0
  %v8439 = vadd.f32 0.0, %v8438
  %v8440 = vpop.f32.mrb[0].mxu0
  %8441 = vmatprep.mubr.f32.mxu0 0.0
  %8442 = vmatmul.mubr.f32.gmra.mrb[0].mxu0 %v8060
  %v8443 = vpop.f32.mrb[0].mxu0
  %v8444 = vadd.f32 0.0, %v8443
  %v8445 = vpop.f32.mrb[0].mxu0
  %8446 = vmatprep.mubr.f32.mxu0 0.0
  %8447 = vmatmul.mubr.f32.gmra.mrb[0].mxu0 %v8063
  %v8448 = vpop.f32.mrb[0].mxu0
  %v8449 = vadd.f32 0.0, %v8448
  %v8450 = vpop.f32.mrb[0].mxu0
  %8451 = vmatprep.mubr.f32.mxu0 0.0
  %8452 = vmatmul.mubr.f32.gmra.mrb[0].mxu0 %v8066
  %v8453 = vpop.f32.mrb[0].mxu0
  %v8454 = vadd.f32 0.0, %v8453
  %v8455 = vpop.f32.mrb[0].mxu0
  %8456 = vmatprep.mubr.f32.mxu0 0.0
  %8457 = vmatmul.mubr.f32.gmra.mrb[0].mxu0 %v8069
  %v8458 = vpop.f32.mrb[0].mxu0
  %v8459 = vadd.f32 0.0, %v8458
  %v8460 = vpop.f32.mrb[0].mxu0
  %8461 = vmatprep.mubr.f32.mxu0 0.0
  %8462 = vmatmul.mubr.f32.gmra.mrb[0].mxu0 %v8072
  %v8463 = vpop.f32.mrb[0].mxu0
  %v8464 = vadd.f32 0.0, %v8463
  %v8465 = vpop.f32.mrb[0].mxu0
  %8466 = vmatprep.mubr.f32.mxu0 0.0
  %8467 = vmatmul.mubr.f32.gmra.mrb[0].mxu0 %v8075
  %v8468 = vpop.f32.mrb[0].mxu0
  %v8469 = vadd.f32 0.0, %v8468
  %v8470 = vpop.f32.mrb[0].mxu0
  %8471 = vmatprep.mubr.f32.mxu0 0.0
  %8472 = vmatmul.mubr.f32.gmra.mrb[0].mxu0 %v8078
  %v8473 = vpop.f32.mrb[0].mxu0
  %v8474 = vadd.f32 0.0, %v8473
  %v8475 = vpop.f32.mrb[0].mxu0
  %8476 = vmatprep.mubr.f32.mxu0 0.0
  %8477 = vmatmul.mubr.f32.gmra.mrb[0].mxu0 %v8081
  %v8478 = vpop.f32.mrb[0].mxu0
  %v8479 = vadd.f32 0.0, %v8478
  %v8480 = vpop.f32.mrb[0].mxu0
  %8481 = vmatprep.mubr.f32.mxu0 0.0
  %8482 = vmatmul.mubr.f32.gmra.mrb[0].mxu0 %v8084
  %v8483 = vpop.f32.mrb[0].mxu0
  %v8484 = vadd.f32 0.0, %v8483
  %v8485 = vpop.f32.mrb[0].mxu0
  %8486 = vmatprep.mubr.f32.mxu0 0.0
  %8487 = vmatmul.mubr.f32.gmra.mrb[0].mxu0 %v8087
  %v8488 = vpop.f32.mrb[0].mxu0
  %v8489 = vadd.f32 0.0, %v8488
  %v8490 = vpop.f32.mrb[0].mxu0
  %8491 = vmatprep.mubr.f32.mxu0 0.0
  %8492 = vmatmul.mubr.f32.gmra.mrb[0].mxu0 %v8090
  %v8493 = vpop.f32.mrb[0].mxu0
  %v8494 = vadd.f32 0.0, %v8493
  %v8495 = vpop.f32.mrb[0].mxu0
  %8496 = vmatprep.mubr.f32.mxu0 0.0
  %8497 = vmatmul.mubr.f32.gmra.mrb[0].mxu0 %v8093
  %v8498 = vpop.f32.mrb[0].mxu0
  %v8499 = vadd.f32 0.0, %v8498
  %v8500 = vpop.f32.mrb[0].mxu0
  %8501 = vmatprep.mubr.f32.mxu0 0.0
  %8502 = vmatmul.mubr.f32.gmra.mrb[0].mxu0 %v8096
  %v8503 = vpop.f32.mrb[0].mxu0
  %v8504 = vadd.f32 0.0, %v8503
  %v8505 = vpop.f32.mrb[0].mxu0
  %8506 = vmatprep.mubr.f32.mxu0 0.0
  %8507 = vmatmul.mubr.f32.gmra.mrb[0].mxu0 %v8099
  %v8508 = vpop.f32.mrb[0].mxu0
  %v8509 = vadd.f32 0.0, %v8508
  %v8510 = vpop.f32.mrb[0].mxu0
  %8511 = vmatprep.mubr.f32.mxu0 0.0
  %8512 = vmatmul.mubr.f32.gmra.mrb[0].mxu0 %v8102
  %v8513 = vpop.f32.mrb[0].mxu0
  %v8514 = vadd.f32 0.0, %v8513
  %v8515 = vpop.f32.mrb[0].mxu0
  %8516 = vmatprep.mubr.f32.mxu0 0.0
  %8517 = vmatmul.mubr.f32.gmra.mrb[0].mxu0 %v8105
  %v8518 = vpop.f32.mrb[0].mxu0
  %v8519 = vadd.f32 0.0, %v8518
  %v8520 = vpop.f32.mrb[0].mxu0
  %8521 = vmatprep.mubr.f32.mxu0 0.0
  %8522 = vmatmul.mubr.f32.gmra.mrb[0].mxu0 %v8108
  %v8523 = vpop.f32.mrb[0].mxu0
  %v8524 = vadd.f32 0.0, %v8523
  %v8525 = vpop.f32.mrb[0].mxu0
  %8526 = vmatprep.mubr.f32.mxu0 0.0
  %8527 = vmatmul.mubr.f32.gmra.mrb[0].mxu0 %v8111
  %v8528 = vpop.f32.mrb[0].mxu0
  %v8529 = vadd.f32 0.0, %v8528
  %v8530 = vpop.f32.mrb[0].mxu0
  %8531 = vmatprep.mubr.f32.mxu0 0.0
  %8532 = vmatmul.mubr.f32.gmra.mrb[0].mxu0 %v8114
  %v8533 = vpop.f32.mrb[0].mxu0
  %v8534 = vadd.f32 0.0, %v8533
  %v8535 = vpop.f32.mrb[0].mxu0
  %8536 = vmatprep.mubr.f32.mxu0 0.0
  %8537 = vmatmul.mubr.f32.gmra.mrb[0].mxu0 %v8117
  %v8538 = vpop.f32.mrb[0].mxu0
  %v8539 = vadd.f32 0.0, %v8538
  %v8540 = vpop.f32.mrb[0].mxu0
  %8541 = vmatprep.mubr.f32.mxu0 0.0
  %8542 = vmatmul.mubr.f32.gmra.mrb[0].mxu0 %v8120
  %v8543 = vpop.f32.mrb[0].mxu0
  %v8544 = vadd.f32 0.0, %v8543
  %v8545 = vpop.f32.mrb[0].mxu0
  %8546 = vdwg.mxu0
  %v8548 = vsel %vm38, %v6974, 0
  %v8551 = vsel %vm38, %v6975, 0
  %v8554 = vsel %vm38, %v6976, 0
  %v8557 = vsel %vm38, %v6977, 0
  %v8560 = vsel %vm38, %v6978, 0
  %v8563 = vsel %vm38, %v6979, 0
  %v8566 = vsel %vm38, %v6980, 0
  %v8569 = vsel %vm38, %v6981, 0
  %v8572 = vsel %vm38, %v6982, 0
  %v8575 = vsel %vm38, %v6983, 0
  %v8578 = vsel %vm38, %v6984, 0
  %v8581 = vsel %vm38, %v6985, 0
  %v8584 = vsel %vm38, %v6986, 0
  %v8587 = vsel %vm38, %v6987, 0
  %v8590 = vsel %vm38, %v6988, 0
  %v8593 = vsel %vm38, %v6989, 0
  %v8596 = vsel %vm38, %v6990, 0
  %v8599 = vsel %vm38, %v6991, 0
  %v8602 = vsel %vm38, %v6992, 0
  %v8605 = vsel %vm38, %v6993, 0
  %v8608 = vsel %vm38, %v6994, 0
  %v8611 = vsel %vm38, %v6995, 0
  %v8614 = vsel %vm38, %v6996, 0
  %v8617 = vsel %vm38, %v6997, 0
  %v8620 = vsel %vm38, %v6998, 0
  %v8623 = vsel %vm38, %v6999, 0
  %v8626 = vsel %vm38, %v7000, 0
  %v8629 = vsel %vm38, %v7001, 0
  %v8632 = vsel %vm38, %v7002, 0
  %v8635 = vsel %vm38, %v7003, 0
  %v8638 = vsel %vm38, %v7004, 0
  %v8641 = vsel %vm38, %v7005, 0
  %v8644 = vsel %vm38, %v7006, 0
  %v8647 = vsel %vm38, %v7007, 0
  %v8650 = vsel %vm38, %v7008, 0
  %v8653 = vsel %vm38, %v7009, 0
  %v8656 = vsel %vm38, %v7010, 0
  %v8659 = vsel %vm38, %v7011, 0
  %v8662 = vsel %vm38, %v7012, 0
  %v8665 = vsel %vm38, %v7013, 0
  %v8668 = vsel %vm38, %v7014, 0
  %v8671 = vsel %vm38, %v7015, 0
  %v8674 = vsel %vm38, %v7016, 0
  %v8677 = vsel %vm38, %v7017, 0
  %v8680 = vsel %vm38, %v7018, 0
  %v8683 = vsel %vm38, %v7019, 0
  %v8686 = vsel %vm38, %v7020, 0
  %v8689 = vsel %vm38, %v7021, 0
  %v8692 = vsel %vm38, %v7022, 0
  %v8695 = vsel %vm38, %v7023, 0
  %v8698 = vsel %vm38, %v7024, 0
  %v8701 = vsel %vm38, %v7025, 0
  %v8704 = vsel %vm38, %v7026, 0
  %v8707 = vsel %vm38, %v7027, 0
  %v8710 = vsel %vm38, %v7028, 0
  %v8713 = vsel %vm38, %v7029, 0
  %v8716 = vsel %vm38, %v7030, 0
  %v8719 = vsel %vm38, %v7031, 0
  %v8722 = vsel %vm38, %v7032, 0
  %v8725 = vsel %vm38, %v7033, 0
  %v8728 = vsel %vm38, %v7034, 0
  %v8731 = vsel %vm38, %v7035, 0
  %v8734 = vsel %vm38, %v7036, 0
  %v8737 = vsel %vm38, %v7037, 0
  %v8740 = vsel %vm38, %v7038, 0
  %v8743 = vsel %vm38, %v7039, 0
  %v8746 = vsel %vm38, %v7040, 0
  %v8749 = vsel %vm38, %v7041, 0
  %v8752 = vsel %vm38, %v7042, 0
  %v8755 = vsel %vm38, %v7043, 0
  %v8758 = vsel %vm38, %v7044, 0
  %v8761 = vsel %vm38, %v7045, 0
  %8763 = vmatprep.subr.mxu0 0.0
  %8764 = vmatpush1.msra.mxu0 %v7118
  %8765 = vmatprep.subr.mxu0 0.0
  %8766 = vmatpush1.msra.mxu0 0.0
  %8767 = vmatprep.subr.mxu0 0.0
  %8768 = vmatpush1.msra.mxu0 0.0
  %8769 = vmatprep.subr.mxu0 0.0
  %8770 = vmatpush1.msra.mxu0 0.0
  %8771 = vmatprep.subr.mxu0 0.0
  %8772 = vmatpush1.msra.mxu0 0.0
  %8773 = vmatprep.subr.mxu0 0.0
  %8774 = vmatpush1.msra.mxu0 0.0
  %8775 = vmatprep.subr.mxu0 0.0
  %8776 = vmatpush1.msra.mxu0 0.0
  %8777 = vmatprep.subr.mxu0 0.0
  %8778 = vmatpush1.msra.mxu0 0.0
  %8779 = vmatprep.subr.mxu0 0.0
  %8780 = vmatpush1.msra.mxu0 0.0
  %8781 = vmatprep.subr.mxu0 0.0
  %8782 = vmatpush1.msra.mxu0 0.0
  %8783 = vmatprep.subr.mxu0 0.0
  %8784 = vmatpush1.msra.mxu0 0.0
  %8785 = vmatprep.subr.mxu0 0.0
  %8786 = vmatpush1.msra.mxu0 0.0
  %8787 = vmatprep.subr.mxu0 0.0
  %8788 = vmatpush1.msra.mxu0 0.0
  %8789 = vmatprep.subr.mxu0 0.0
  %8790 = vmatpush1.msra.mxu0 0.0
  %8791 = vmatprep.subr.mxu0 0.0
  %8792 = vmatpush1.msra.mxu0 0.0
  %8793 = vmatprep.subr.mxu0 0.0
  %8794 = vmatpush1.msra.mxu0 0.0
  %8795 = vmatprep.subr.mxu0 0.0
  %8796 = vmatpush1.msra.mxu0 0.0
  %8797 = vmatprep.subr.mxu0 0.0
  %8798 = vmatpush1.msra.mxu0 0.0
  %8799 = vmatprep.subr.mxu0 0.0
  %8800 = vmatpush1.msra.mxu0 0.0
  %8801 = vmatprep.subr.mxu0 0.0
  %8802 = vmatpush1.msra.mxu0 0.0
  %8803 = vmatprep.subr.mxu0 0.0
  %8804 = vmatpush1.msra.mxu0 0.0
  %8805 = vmatprep.subr.mxu0 0.0
  %8806 = vmatpush1.msra.mxu0 0.0
  %8807 = vmatprep.subr.mxu0 0.0
  %8808 = vmatpush1.msra.mxu0 0.0
  %8809 = vmatprep.subr.mxu0 0.0
  %8810 = vmatpush1.msra.mxu0 0.0
  %8811 = vmatprep.subr.mxu0 0.0
  %8812 = vmatpush1.msra.mxu0 0.0
  %8813 = vmatprep.subr.mxu0 0.0
  %8814 = vmatpush1.msra.mxu0 0.0
  %8815 = vmatprep.subr.mxu0 0.0
  %8816 = vmatpush1.msra.mxu0 0.0
  %8817 = vmatprep.subr.mxu0 0.0
  %8818 = vmatpush1.msra.mxu0 0.0
  %8819 = vmatprep.subr.mxu0 0.0
  %8820 = vmatpush1.msra.mxu0 0.0
  %8821 = vmatprep.subr.mxu0 0.0
  %8822 = vmatpush1.msra.mxu0 0.0
  %8823 = vmatprep.subr.mxu0 0.0
  %8824 = vmatpush1.msra.mxu0 0.0
  %8825 = vmatprep.subr.mxu0 0.0
  %8826 = vmatpush1.msra.mxu0 0.0
  %8827 = vmatprep.mubr.f32.mxu0 0.0
  %8828 = vmatmul.mubr.f32.gmra.mrb[0].mxu0 %v8548
  %v8829 = vpop.f32.mrb[0].mxu0
  %v8830 = vadd.f32 %v1237, %v8829
  %v8831 = vpop.f32.mrb[0].mxu0
  %8832 = vmatprep.mubr.f32.mxu0 0.0
  %8833 = vmatmul.mubr.f32.gmra.mrb[0].mxu0 %v8551
  %v8834 = vpop.f32.mrb[0].mxu0
  %v8835 = vadd.f32 %v1237, %v8834
  %v8836 = vpop.f32.mrb[0].mxu0
  %8837 = vmatprep.mubr.f32.mxu0 0.0
  %8838 = vmatmul.mubr.f32.gmra.mrb[0].mxu0 %v8554
  %v8839 = vpop.f32.mrb[0].mxu0
  %v8840 = vadd.f32 %v1237, %v8839
  %v8841 = vpop.f32.mrb[0].mxu0
  %8842 = vmatprep.mubr.f32.mxu0 0.0
  %8843 = vmatmul.mubr.f32.gmra.mrb[0].mxu0 %v8557
  %v8844 = vpop.f32.mrb[0].mxu0
  %v8845 = vadd.f32 %v1237, %v8844
  %v8846 = vpop.f32.mrb[0].mxu0
  %8847 = vmatprep.mubr.f32.mxu0 0.0
  %8848 = vmatmul.mubr.f32.gmra.mrb[0].mxu0 %v8560
  %v8849 = vpop.f32.mrb[0].mxu0
  %v8850 = vadd.f32 %v1237, %v8849
  %v8851 = vpop.f32.mrb[0].mxu0
  %8852 = vmatprep.mubr.f32.mxu0 0.0
  %8853 = vmatmul.mubr.f32.gmra.mrb[0].mxu0 %v8563
  %v8854 = vpop.f32.mrb[0].mxu0
  %v8855 = vadd.f32 %v1237, %v8854
  %v8856 = vpop.f32.mrb[0].mxu0
  %8857 = vmatprep.mubr.f32.mxu0 0.0
  %8858 = vmatmul.mubr.f32.gmra.mrb[0].mxu0 %v8566
  %v8859 = vpop.f32.mrb[0].mxu0
  %v8860 = vadd.f32 %v1237, %v8859
  %v8861 = vpop.f32.mrb[0].mxu0
  %8862 = vmatprep.mubr.f32.mxu0 0.0
  %8863 = vmatmul.mubr.f32.gmra.mrb[0].mxu0 %v8569
  %v8864 = vpop.f32.mrb[0].mxu0
  %v8865 = vadd.f32 %v1237, %v8864
  %v8866 = vpop.f32.mrb[0].mxu0
  %8867 = vmatprep.mubr.f32.mxu0 0.0
  %8868 = vmatmul.mubr.f32.gmra.mrb[0].mxu0 %v8572
  %v8869 = vpop.f32.mrb[0].mxu0
  %v8870 = vadd.f32 %v1237, %v8869
  %v8871 = vpop.f32.mrb[0].mxu0
  %8872 = vmatprep.mubr.f32.mxu0 0.0
  %8873 = vmatmul.mubr.f32.gmra.mrb[0].mxu0 %v8575
  %v8874 = vpop.f32.mrb[0].mxu0
  %v8875 = vadd.f32 %v1237, %v8874
  %v8876 = vpop.f32.mrb[0].mxu0
  %8877 = vmatprep.mubr.f32.mxu0 0.0
  %8878 = vmatmul.mubr.f32.gmra.mrb[0].mxu0 %v8578
  %v8879 = vpop.f32.mrb[0].mxu0
  %v8880 = vadd.f32 %v1237, %v8879
  %v8881 = vpop.f32.mrb[0].mxu0
  %8882 = vmatprep.mubr.f32.mxu0 0.0
  %8883 = vmatmul.mubr.f32.gmra.mrb[0].mxu0 %v8581
  %v8884 = vpop.f32.mrb[0].mxu0
  %v8885 = vadd.f32 %v1237, %v8884
  %v8886 = vpop.f32.mrb[0].mxu0
  %8887 = vmatprep.mubr.f32.mxu0 0.0
  %8888 = vmatmul.mubr.f32.gmra.mrb[0].mxu0 %v8584
  %v8889 = vpop.f32.mrb[0].mxu0
  %v8890 = vadd.f32 %v1237, %v8889
  %v8891 = vpop.f32.mrb[0].mxu0
  %8892 = vmatprep.mubr.f32.mxu0 0.0
  %8893 = vmatmul.mubr.f32.gmra.mrb[0].mxu0 %v8587
  %v8894 = vpop.f32.mrb[0].mxu0
  %v8895 = vadd.f32 %v1237, %v8894
  %v8896 = vpop.f32.mrb[0].mxu0
  %8897 = vmatprep.mubr.f32.mxu0 0.0
  %8898 = vmatmul.mubr.f32.gmra.mrb[0].mxu0 %v8590
  %v8899 = vpop.f32.mrb[0].mxu0
  %v8900 = vadd.f32 %v1237, %v8899
  %v8901 = vpop.f32.mrb[0].mxu0
  %8902 = vmatprep.mubr.f32.mxu0 0.0
  %8903 = vmatmul.mubr.f32.gmra.mrb[0].mxu0 %v8593
  %v8904 = vpop.f32.mrb[0].mxu0
  %v8905 = vadd.f32 %v1237, %v8904
  %v8906 = vpop.f32.mrb[0].mxu0
  %8907 = vmatprep.mubr.f32.mxu0 0.0
  %8908 = vmatmul.mubr.f32.gmra.mrb[0].mxu0 %v8596
  %v8909 = vpop.f32.mrb[0].mxu0
  %v8910 = vadd.f32 %v1237, %v8909
  %v8911 = vpop.f32.mrb[0].mxu0
  %8912 = vmatprep.mubr.f32.mxu0 0.0
  %8913 = vmatmul.mubr.f32.gmra.mrb[0].mxu0 %v8599
  %v8914 = vpop.f32.mrb[0].mxu0
  %v8915 = vadd.f32 %v1237, %v8914
  %v8916 = vpop.f32.mrb[0].mxu0
  %8917 = vmatprep.mubr.f32.mxu0 0.0
  %8918 = vmatmul.mubr.f32.gmra.mrb[0].mxu0 %v8602
  %v8919 = vpop.f32.mrb[0].mxu0
  %v8920 = vadd.f32 %v1237, %v8919
  %v8921 = vpop.f32.mrb[0].mxu0
  %8922 = vmatprep.mubr.f32.mxu0 0.0
  %8923 = vmatmul.mubr.f32.gmra.mrb[0].mxu0 %v8605
  %v8924 = vpop.f32.mrb[0].mxu0
  %v8925 = vadd.f32 %v1237, %v8924
  %v8926 = vpop.f32.mrb[0].mxu0
  %8927 = vmatprep.mubr.f32.mxu0 0.0
  %8928 = vmatmul.mubr.f32.gmra.mrb[0].mxu0 %v8608
  %v8929 = vpop.f32.mrb[0].mxu0
  %v8930 = vadd.f32 %v1237, %v8929
  %v8931 = vpop.f32.mrb[0].mxu0
  %8932 = vmatprep.mubr.f32.mxu0 0.0
  %8933 = vmatmul.mubr.f32.gmra.mrb[0].mxu0 %v8611
  %v8934 = vpop.f32.mrb[0].mxu0
  %v8935 = vadd.f32 %v1237, %v8934
  %v8936 = vpop.f32.mrb[0].mxu0
  %8937 = vmatprep.mubr.f32.mxu0 0.0
  %8938 = vmatmul.mubr.f32.gmra.mrb[0].mxu0 %v8614
  %v8939 = vpop.f32.mrb[0].mxu0
  %v8940 = vadd.f32 %v1237, %v8939
  %v8941 = vpop.f32.mrb[0].mxu0
  %8942 = vmatprep.mubr.f32.mxu0 0.0
  %8943 = vmatmul.mubr.f32.gmra.mrb[0].mxu0 %v8617
  %v8944 = vpop.f32.mrb[0].mxu0
  %v8945 = vadd.f32 %v1237, %v8944
  %v8946 = vpop.f32.mrb[0].mxu0
  %8947 = vmatprep.mubr.f32.mxu0 0.0
  %8948 = vmatmul.mubr.f32.gmra.mrb[0].mxu0 %v8620
  %v8949 = vpop.f32.mrb[0].mxu0
  %v8950 = vadd.f32 %v1237, %v8949
  %v8951 = vpop.f32.mrb[0].mxu0
  %8952 = vmatprep.mubr.f32.mxu0 0.0
  %8953 = vmatmul.mubr.f32.gmra.mrb[0].mxu0 %v8623
  %v8954 = vpop.f32.mrb[0].mxu0
  %v8955 = vadd.f32 %v1237, %v8954
  %v8956 = vpop.f32.mrb[0].mxu0
  %8957 = vmatprep.mubr.f32.mxu0 0.0
  %8958 = vmatmul.mubr.f32.gmra.mrb[0].mxu0 %v8626
  %v8959 = vpop.f32.mrb[0].mxu0
  %v8960 = vadd.f32 %v1237, %v8959
  %v8961 = vpop.f32.mrb[0].mxu0
  %8962 = vmatprep.mubr.f32.mxu0 0.0
  %8963 = vmatmul.mubr.f32.gmra.mrb[0].mxu0 %v8629
  %v8964 = vpop.f32.mrb[0].mxu0
  %v8965 = vadd.f32 %v1237, %v8964
  %v8966 = vpop.f32.mrb[0].mxu0
  %8967 = vmatprep.mubr.f32.mxu0 0.0
  %8968 = vmatmul.mubr.f32.gmra.mrb[0].mxu0 %v8632
  %v8969 = vpop.f32.mrb[0].mxu0
  %v8970 = vadd.f32 %v1237, %v8969
  %v8971 = vpop.f32.mrb[0].mxu0
  %8972 = vmatprep.mubr.f32.mxu0 0.0
  %8973 = vmatmul.mubr.f32.gmra.mrb[0].mxu0 %v8635
  %v8974 = vpop.f32.mrb[0].mxu0
  %v8975 = vadd.f32 %v1237, %v8974
  %v8976 = vpop.f32.mrb[0].mxu0
  %8977 = vmatprep.mubr.f32.mxu0 0.0
  %8978 = vmatmul.mubr.f32.gmra.mrb[0].mxu0 %v8638
  %v8979 = vpop.f32.mrb[0].mxu0
  %v8980 = vadd.f32 %v1237, %v8979
  %v8981 = vpop.f32.mrb[0].mxu0
  %8982 = vmatprep.mubr.f32.mxu0 0.0
  %8983 = vmatmul.mubr.f32.gmra.mrb[0].mxu0 %v8641
  %v8984 = vpop.f32.mrb[0].mxu0
  %v8985 = vadd.f32 %v1237, %v8984
  %v8986 = vpop.f32.mrb[0].mxu0
  %8987 = vmatprep.mubr.f32.mxu0 0.0
  %8988 = vmatmul.mubr.f32.gmra.mrb[0].mxu0 %v8644
  %v8989 = vpop.f32.mrb[0].mxu0
  %v8990 = vadd.f32 %v1237, %v8989
  %v8991 = vpop.f32.mrb[0].mxu0
  %8992 = vmatprep.mubr.f32.mxu0 0.0
  %8993 = vmatmul.mubr.f32.gmra.mrb[0].mxu0 %v8647
  %v8994 = vpop.f32.mrb[0].mxu0
  %v8995 = vadd.f32 %v1237, %v8994
  %v8996 = vpop.f32.mrb[0].mxu0
  %8997 = vmatprep.mubr.f32.mxu0 0.0
  %8998 = vmatmul.mubr.f32.gmra.mrb[0].mxu0 %v8650
  %v8999 = vpop.f32.mrb[0].mxu0
  %v9000 = vadd.f32 %v1237, %v8999
  %v9001 = vpop.f32.mrb[0].mxu0
  %9002 = vmatprep.mubr.f32.mxu0 0.0
  %9003 = vmatmul.mubr.f32.gmra.mrb[0].mxu0 %v8653
  %v9004 = vpop.f32.mrb[0].mxu0
  %v9005 = vadd.f32 %v1237, %v9004
  %v9006 = vpop.f32.mrb[0].mxu0
  %9007 = vmatprep.mubr.f32.mxu0 0.0
  %9008 = vmatmul.mubr.f32.gmra.mrb[0].mxu0 %v8656
  %v9009 = vpop.f32.mrb[0].mxu0
  %v9010 = vadd.f32 %v1237, %v9009
  %v9011 = vpop.f32.mrb[0].mxu0
  %9012 = vmatprep.mubr.f32.mxu0 0.0
  %9013 = vmatmul.mubr.f32.gmra.mrb[0].mxu0 %v8659
  %v9014 = vpop.f32.mrb[0].mxu0
  %v9015 = vadd.f32 %v1237, %v9014
  %v9016 = vpop.f32.mrb[0].mxu0
  %9017 = vmatprep.mubr.f32.mxu0 0.0
  %9018 = vmatmul.mubr.f32.gmra.mrb[0].mxu0 %v8662
  %v9019 = vpop.f32.mrb[0].mxu0
  %v9020 = vadd.f32 %v1237, %v9019
  %v9021 = vpop.f32.mrb[0].mxu0
  %9022 = vmatprep.mubr.f32.mxu0 0.0
  %9023 = vmatmul.mubr.f32.gmra.mrb[0].mxu0 %v8665
  %v9024 = vpop.f32.mrb[0].mxu0
  %v9025 = vadd.f32 %v1237, %v9024
  %v9026 = vpop.f32.mrb[0].mxu0
  %9027 = vmatprep.mubr.f32.mxu0 0.0
  %9028 = vmatmul.mubr.f32.gmra.mrb[0].mxu0 %v8668
  %v9029 = vpop.f32.mrb[0].mxu0
  %v9030 = vadd.f32 %v1237, %v9029
  %v9031 = vpop.f32.mrb[0].mxu0
  %9032 = vmatprep.mubr.f32.mxu0 0.0
  %9033 = vmatmul.mubr.f32.gmra.mrb[0].mxu0 %v8671
  %v9034 = vpop.f32.mrb[0].mxu0
  %v9035 = vadd.f32 %v1237, %v9034
  %v9036 = vpop.f32.mrb[0].mxu0
  %9037 = vmatprep.mubr.f32.mxu0 0.0
  %9038 = vmatmul.mubr.f32.gmra.mrb[0].mxu0 %v8674
  %v9039 = vpop.f32.mrb[0].mxu0
  %v9040 = vadd.f32 %v1237, %v9039
  %v9041 = vpop.f32.mrb[0].mxu0
  %9042 = vmatprep.mubr.f32.mxu0 0.0
  %9043 = vmatmul.mubr.f32.gmra.mrb[0].mxu0 %v8677
  %v9044 = vpop.f32.mrb[0].mxu0
  %v9045 = vadd.f32 %v1237, %v9044
  %v9046 = vpop.f32.mrb[0].mxu0
  %9047 = vmatprep.mubr.f32.mxu0 0.0
  %9048 = vmatmul.mubr.f32.gmra.mrb[0].mxu0 %v8680
  %v9049 = vpop.f32.mrb[0].mxu0
  %v9050 = vadd.f32 %v1237, %v9049
  %v9051 = vpop.f32.mrb[0].mxu0
  %9052 = vmatprep.mubr.f32.mxu0 0.0
  %9053 = vmatmul.mubr.f32.gmra.mrb[0].mxu0 %v8683
  %v9054 = vpop.f32.mrb[0].mxu0
  %v9055 = vadd.f32 %v1237, %v9054
  %v9056 = vpop.f32.mrb[0].mxu0
  %9057 = vmatprep.mubr.f32.mxu0 0.0
  %9058 = vmatmul.mubr.f32.gmra.mrb[0].mxu0 %v8686
  %v9059 = vpop.f32.mrb[0].mxu0
  %v9060 = vadd.f32 %v1237, %v9059
  %v9061 = vpop.f32.mrb[0].mxu0
  %9062 = vmatprep.mubr.f32.mxu0 0.0
  %9063 = vmatmul.mubr.f32.gmra.mrb[0].mxu0 %v8689
  %v9064 = vpop.f32.mrb[0].mxu0
  %v9065 = vadd.f32 %v1237, %v9064
  %v9066 = vpop.f32.mrb[0].mxu0
  %9067 = vmatprep.mubr.f32.mxu0 0.0
  %9068 = vmatmul.mubr.f32.gmra.mrb[0].mxu0 %v8692
  %v9069 = vpop.f32.mrb[0].mxu0
  %v9070 = vadd.f32 %v1237, %v9069
  %v9071 = vpop.f32.mrb[0].mxu0
  %9072 = vmatprep.mubr.f32.mxu0 0.0
  %9073 = vmatmul.mubr.f32.gmra.mrb[0].mxu0 %v8695
  %v9074 = vpop.f32.mrb[0].mxu0
  %v9075 = vadd.f32 %v1237, %v9074
  %v9076 = vpop.f32.mrb[0].mxu0
  %9077 = vmatprep.mubr.f32.mxu0 0.0
  %9078 = vmatmul.mubr.f32.gmra.mrb[0].mxu0 %v8698
  %v9079 = vpop.f32.mrb[0].mxu0
  %v9080 = vadd.f32 %v1237, %v9079
  %v9081 = vpop.f32.mrb[0].mxu0
  %9082 = vmatprep.mubr.f32.mxu0 0.0
  %9083 = vmatmul.mubr.f32.gmra.mrb[0].mxu0 %v8701
  %v9084 = vpop.f32.mrb[0].mxu0
  %v9085 = vadd.f32 %v1237, %v9084
  %v9086 = vpop.f32.mrb[0].mxu0
  %9087 = vmatprep.mubr.f32.mxu0 0.0
  %9088 = vmatmul.mubr.f32.gmra.mrb[0].mxu0 %v8704
  %v9089 = vpop.f32.mrb[0].mxu0
  %v9090 = vadd.f32 %v1237, %v9089
  %v9091 = vpop.f32.mrb[0].mxu0
  %9092 = vmatprep.mubr.f32.mxu0 0.0
  %9093 = vmatmul.mubr.f32.gmra.mrb[0].mxu0 %v8707
  %v9094 = vpop.f32.mrb[0].mxu0
  %v9095 = vadd.f32 %v1237, %v9094
  %v9096 = vpop.f32.mrb[0].mxu0
  %9097 = vmatprep.mubr.f32.mxu0 0.0
  %9098 = vmatmul.mubr.f32.gmra.mrb[0].mxu0 %v8710
  %v9099 = vpop.f32.mrb[0].mxu0
  %v9100 = vadd.f32 %v1237, %v9099
  %v9101 = vpop.f32.mrb[0].mxu0
  %9102 = vmatprep.mubr.f32.mxu0 0.0
  %9103 = vmatmul.mubr.f32.gmra.mrb[0].mxu0 %v8713
  %v9104 = vpop.f32.mrb[0].mxu0
  %v9105 = vadd.f32 %v1237, %v9104
  %v9106 = vpop.f32.mrb[0].mxu0
  %9107 = vmatprep.mubr.f32.mxu0 0.0
  %9108 = vmatmul.mubr.f32.gmra.mrb[0].mxu0 %v8716
  %v9109 = vpop.f32.mrb[0].mxu0
  %v9110 = vadd.f32 %v1237, %v9109
  %v9111 = vpop.f32.mrb[0].mxu0
  %9112 = vmatprep.mubr.f32.mxu0 0.0
  %9113 = vmatmul.mubr.f32.gmra.mrb[0].mxu0 %v8719
  %v9114 = vpop.f32.mrb[0].mxu0
  %v9115 = vadd.f32 %v1237, %v9114
  %v9116 = vpop.f32.mrb[0].mxu0
  %9117 = vmatprep.mubr.f32.mxu0 0.0
  %9118 = vmatmul.mubr.f32.gmra.mrb[0].mxu0 %v8722
  %v9119 = vpop.f32.mrb[0].mxu0
  %v9120 = vadd.f32 %v1237, %v9119
  %v9121 = vpop.f32.mrb[0].mxu0
  %9122 = vmatprep.mubr.f32.mxu0 0.0
  %9123 = vmatmul.mubr.f32.gmra.mrb[0].mxu0 %v8725
  %v9124 = vpop.f32.mrb[0].mxu0
  %v9125 = vadd.f32 %v1237, %v9124
  %v9126 = vpop.f32.mrb[0].mxu0
  %9127 = vmatprep.mubr.f32.mxu0 0.0
  %9128 = vmatmul.mubr.f32.gmra.mrb[0].mxu0 %v8728
  %v9129 = vpop.f32.mrb[0].mxu0
  %v9130 = vadd.f32 %v1237, %v9129
  %v9131 = vpop.f32.mrb[0].mxu0
  %9132 = vmatprep.mubr.f32.mxu0 0.0
  %9133 = vmatmul.mubr.f32.gmra.mrb[0].mxu0 %v8731
  %v9134 = vpop.f32.mrb[0].mxu0
  %v9135 = vadd.f32 %v1237, %v9134
  %v9136 = vpop.f32.mrb[0].mxu0
  %9137 = vmatprep.mubr.f32.mxu0 0.0
  %9138 = vmatmul.mubr.f32.gmra.mrb[0].mxu0 %v8734
  %v9139 = vpop.f32.mrb[0].mxu0
  %v9140 = vadd.f32 %v1237, %v9139
  %v9141 = vpop.f32.mrb[0].mxu0
  %9142 = vmatprep.mubr.f32.mxu0 0.0
  %9143 = vmatmul.mubr.f32.gmra.mrb[0].mxu0 %v8737
  %v9144 = vpop.f32.mrb[0].mxu0
  %v9145 = vadd.f32 %v1237, %v9144
  %v9146 = vpop.f32.mrb[0].mxu0
  %9147 = vmatprep.mubr.f32.mxu0 0.0
  %9148 = vmatmul.mubr.f32.gmra.mrb[0].mxu0 %v8740
  %v9149 = vpop.f32.mrb[0].mxu0
  %v9150 = vadd.f32 %v1237, %v9149
  %v9151 = vpop.f32.mrb[0].mxu0
  %9152 = vmatprep.mubr.f32.mxu0 0.0
  %9153 = vmatmul.mubr.f32.gmra.mrb[0].mxu0 %v8743
  %v9154 = vpop.f32.mrb[0].mxu0
  %v9155 = vadd.f32 %v1237, %v9154
  %v9156 = vpop.f32.mrb[0].mxu0
  %9157 = vmatprep.mubr.f32.mxu0 0.0
  %9158 = vmatmul.mubr.f32.gmra.mrb[0].mxu0 %v8746
  %v9159 = vpop.f32.mrb[0].mxu0
  %v9160 = vadd.f32 %v1237, %v9159
  %v9161 = vpop.f32.mrb[0].mxu0
  %9162 = vmatprep.mubr.f32.mxu0 0.0
  %9163 = vmatmul.mubr.f32.gmra.mrb[0].mxu0 %v8749
  %v9164 = vpop.f32.mrb[0].mxu0
  %v9165 = vadd.f32 %v1237, %v9164
  %v9166 = vpop.f32.mrb[0].mxu0
  %9167 = vmatprep.mubr.f32.mxu0 0.0
  %9168 = vmatmul.mubr.f32.gmra.mrb[0].mxu0 %v8752
  %v9169 = vpop.f32.mrb[0].mxu0
  %v9170 = vadd.f32 %v1237, %v9169
  %v9171 = vpop.f32.mrb[0].mxu0
  %9172 = vmatprep.mubr.f32.mxu0 0.0
  %9173 = vmatmul.mubr.f32.gmra.mrb[0].mxu0 %v8755
  %v9174 = vpop.f32.mrb[0].mxu0
  %v9175 = vadd.f32 %v1237, %v9174
  %v9176 = vpop.f32.mrb[0].mxu0
  %9177 = vmatprep.mubr.f32.mxu0 0.0
  %9178 = vmatmul.mubr.f32.gmra.mrb[0].mxu0 %v8758
  %v9179 = vpop.f32.mrb[0].mxu0
  %v9180 = vadd.f32 %v1237, %v9179
  %v9181 = vpop.f32.mrb[0].mxu0
  %9182 = vmatprep.mubr.f32.mxu0 0.0
  %9183 = vmatmul.mubr.f32.gmra.mrb[0].mxu0 %v8761
  %v9184 = vpop.f32.mrb[0].mxu0
  %v9185 = vadd.f32 %v1237, %v9184
  %v9186 = vpop.f32.mrb[0].mxu0
  %9187 = vdwg.mxu0
  %9188 = vst.msk [vmem:[%s10] sm:$0xff] %vm1344, %v8830
  %9189 = vst.msk [vmem:[%s10 + $0x8] sm:$0xff] %vm1344, %v8835
  %9190 = vst.msk [vmem:[%s10 + $0x10] sm:$0xff] %vm1344, %v8840
  %9191 = vst.msk [vmem:[%s10 + $0x18] sm:$0xff] %vm1344, %v8845
  %9192 = vst.msk [vmem:[%s10 + $0x20] sm:$0xff] %vm1344, %v8850
  %9193 = vst.msk [vmem:[%s10 + $0x28] sm:$0xff] %vm1344, %v8855
  %9194 = vst.msk [vmem:[%s10 + $0x30] sm:$0xff] %vm1344, %v8860
  %9195 = vst.msk [vmem:[%s10 + $0x38] sm:$0xff] %vm1344, %v8865
  %9196 = vst.msk [vmem:[%s10 + $0x40] sm:$0xff] %vm1344, %v8870
  %9197 = vst.msk [vmem:[%s10 + $0x48] sm:$0xff] %vm1344, %v8875
  %9198 = vst.msk [vmem:[%s10 + $0x50] sm:$0xff] %vm1344, %v8880
  %9199 = vst.msk [vmem:[%s10 + $0x58] sm:$0xff] %vm1344, %v8885
  %9200 = vst.msk [vmem:[%s10 + $0x60] sm:$0xff] %vm1344, %v8890
  %9201 = vst.msk [vmem:[%s10 + $0x68] sm:$0xff] %vm1344, %v8895
  %9202 = vst.msk [vmem:[%s10 + $0x70] sm:$0xff] %vm1344, %v8900
  %9203 = vst.msk [vmem:[%s10 + $0x78] sm:$0xff] %vm1344, %v8905
  %9204 = vst.msk [vmem:[%s10 + $0x80] sm:$0xff] %vm1344, %v8910
  %9205 = vst.msk [vmem:[%s10 + $0x88] sm:$0xff] %vm1344, %v8915
  %9206 = vst.msk [vmem:[%s10 + $0x90] sm:$0xff] %vm1344, %v8920
  %9207 = vst.msk [vmem:[%s10 + $0x98] sm:$0xff] %vm1344, %v8925
  %9208 = vst.msk [vmem:[%s10 + $0xa0] sm:$0xff] %vm1344, %v8930
  %9209 = vst.msk [vmem:[%s10 + $0xa8] sm:$0xff] %vm1344, %v8935
  %9210 = vst.msk [vmem:[%s10 + $0xb0] sm:$0xff] %vm1344, %v8940
  %9211 = vst.msk [vmem:[%s10 + $0xb8] sm:$0xff] %vm1344, %v8945
  %9212 = vst.msk [vmem:[%s10 + $0xc0] sm:$0xff] %vm1344, %v8950
  %9213 = vst.msk [vmem:[%s10 + $0xc8] sm:$0xff] %vm1344, %v8955
  %9214 = vst.msk [vmem:[%s10 + $0xd0] sm:$0xff] %vm1344, %v8960
  %9215 = vst.msk [vmem:[%s10 + $0xd8] sm:$0xff] %vm1344, %v8965
  %9216 = vst.msk [vmem:[%s10 + $0xe0] sm:$0xff] %vm1344, %v8970
  %9217 = vst.msk [vmem:[%s10 + $0xe8] sm:$0xff] %vm1344, %v8975
  %9218 = vst.msk [vmem:[%s10 + $0xf0] sm:$0xff] %vm1344, %v8980
  %9219 = vst.msk [vmem:[%s10 + $0xf8] sm:$0xff] %vm1344, %v8985
  %9220 = vst.msk [vmem:[%s10 + $0x100] sm:$0xff] %vm1344, %v8990
  %9221 = vst.msk [vmem:[%s10 + $0x108] sm:$0xff] %vm1344, %v8995
  %9222 = vst.msk [vmem:[%s10 + $0x110] sm:$0xff] %vm1344, %v9000
  %9223 = vst.msk [vmem:[%s10 + $0x118] sm:$0xff] %vm1344, %v9005
  %9224 = vst.msk [vmem:[%s10 + $0x120] sm:$0xff] %vm1344, %v9010
  %9225 = vst.msk [vmem:[%s10 + $0x128] sm:$0xff] %vm1344, %v9015
  %9226 = vst.msk [vmem:[%s10 + $0x130] sm:$0xff] %vm1344, %v9020
  %9227 = vst.msk [vmem:[%s10 + $0x138] sm:$0xff] %vm1344, %v9025
  %9228 = vst.msk [vmem:[%s10 + $0x140] sm:$0xff] %vm1344, %v9030
  %9229 = vst.msk [vmem:[%s10 + $0x148] sm:$0xff] %vm1344, %v9035
  %9230 = vst.msk [vmem:[%s10 + $0x150] sm:$0xff] %vm1344, %v9040
  %9231 = vst.msk [vmem:[%s10 + $0x158] sm:$0xff] %vm1344, %v9045
  %9232 = vst.msk [vmem:[%s10 + $0x160] sm:$0xff] %vm1344, %v9050
  %9233 = vst.msk [vmem:[%s10 + $0x168] sm:$0xff] %vm1344, %v9055
  %9234 = vst.msk [vmem:[%s10 + $0x170] sm:$0xff] %vm1344, %v9060
  %9235 = vst.msk [vmem:[%s10 + $0x178] sm:$0xff] %vm1344, %v9065
  %9236 = vst.msk [vmem:[%s10 + $0x180] sm:$0xff] %vm1344, %v9070
  %9237 = vst.msk [vmem:[%s10 + $0x188] sm:$0xff] %vm1344, %v9075
  %9238 = vst.msk [vmem:[%s10 + $0x190] sm:$0xff] %vm1344, %v9080
  %9239 = vst.msk [vmem:[%s10 + $0x198] sm:$0xff] %vm1344, %v9085
  %9240 = vst.msk [vmem:[%s10 + $0x1a0] sm:$0xff] %vm1344, %v9090
  %9241 = vst.msk [vmem:[%s10 + $0x1a8] sm:$0xff] %vm1344, %v9095
  %9242 = vst.msk [vmem:[%s10 + $0x1b0] sm:$0xff] %vm1344, %v9100
  %9243 = vst.msk [vmem:[%s10 + $0x1b8] sm:$0xff] %vm1344, %v9105
  %9244 = vst.msk [vmem:[%s10 + $0x1c0] sm:$0xff] %vm1344, %v9110
  %9245 = vst.msk [vmem:[%s10 + $0x1c8] sm:$0xff] %vm1344, %v9115
  %9246 = vst.msk [vmem:[%s10 + $0x1d0] sm:$0xff] %vm1344, %v9120
  %9247 = vst.msk [vmem:[%s10 + $0x1d8] sm:$0xff] %vm1344, %v9125
  %9248 = vst.msk [vmem:[%s10 + $0x1e0] sm:$0xff] %vm1344, %v9130
  %9249 = vst.msk [vmem:[%s10 + $0x1e8] sm:$0xff] %vm1344, %v9135
  %9250 = vst.msk [vmem:[%s10 + $0x1f0] sm:$0xff] %vm1344, %v9140
  %9251 = vst.msk [vmem:[%s10 + $0x1f8] sm:$0xff] %vm1344, %v9145
  %9252 = vst.msk [vmem:[%s10 + $0x200] sm:$0xff] %vm1344, %v9150
  %9253 = vst.msk [vmem:[%s10 + $0x208] sm:$0xff] %vm1344, %v9155
  %9254 = vst.msk [vmem:[%s10 + $0x210] sm:$0xff] %vm1344, %v9160
  %9255 = vst.msk [vmem:[%s10 + $0x218] sm:$0xff] %vm1344, %v9165
  %9256 = vst.msk [vmem:[%s10 + $0x220] sm:$0xff] %vm1344, %v9170
  %9257 = vst.msk [vmem:[%s10 + $0x228] sm:$0xff] %vm1344, %v9175
  %9258 = vst.msk [vmem:[%s10 + $0x230] sm:$0xff] %vm1344, %v9180
  %9259 = vst.msk [vmem:[%s10 + $0x238] sm:$0x7f] %vm3512, %v9185
  %v9260 = vld [vmem:[%s10] sm:$0xff]
  %v9261 = vld [vmem:[%s10 + $0x8] sm:$0xff]
  %v9262 = vld [vmem:[%s10 + $0x10] sm:$0xff]
  %v9263 = vld [vmem:[%s10 + $0x18] sm:$0xff]
  %v9264 = vld [vmem:[%s10 + $0x20] sm:$0xff]
  %v9265 = vld [vmem:[%s10 + $0x28] sm:$0xff]
  %v9266 = vld [vmem:[%s10 + $0x30] sm:$0xff]
  %v9267 = vld [vmem:[%s10 + $0x38] sm:$0xff]
  %v9268 = vld [vmem:[%s10 + $0x40] sm:$0xff]
  %v9269 = vld [vmem:[%s10 + $0x48] sm:$0xff]
  %v9270 = vld [vmem:[%s10 + $0x50] sm:$0xff]
  %v9271 = vld [vmem:[%s10 + $0x58] sm:$0xff]
  %v9272 = vld [vmem:[%s10 + $0x60] sm:$0xff]
  %v9273 = vld [vmem:[%s10 + $0x68] sm:$0xff]
  %v9274 = vld [vmem:[%s10 + $0x70] sm:$0xff]
  %v9275 = vld [vmem:[%s10 + $0x78] sm:$0xff]
  %v9276 = vld [vmem:[%s10 + $0x80] sm:$0xff]
  %v9277 = vld [vmem:[%s10 + $0x88] sm:$0xff]
  %v9278 = vld [vmem:[%s10 + $0x90] sm:$0xff]
  %v9279 = vld [vmem:[%s10 + $0x98] sm:$0xff]
  %v9280 = vld [vmem:[%s10 + $0xa0] sm:$0xff]
  %v9281 = vld [vmem:[%s10 + $0xa8] sm:$0xff]
  %v9282 = vld [vmem:[%s10 + $0xb0] sm:$0xff]
  %v9283 = vld [vmem:[%s10 + $0xb8] sm:$0xff]
  %v9284 = vld [vmem:[%s10 + $0xc0] sm:$0xff]
  %v9285 = vld [vmem:[%s10 + $0xc8] sm:$0xff]
  %v9286 = vld [vmem:[%s10 + $0xd0] sm:$0xff]
  %v9287 = vld [vmem:[%s10 + $0xd8] sm:$0xff]
  %v9288 = vld [vmem:[%s10 + $0xe0] sm:$0xff]
  %v9289 = vld [vmem:[%s10 + $0xe8] sm:$0xff]
  %v9290 = vld [vmem:[%s10 + $0xf0] sm:$0xff]
  %v9291 = vld [vmem:[%s10 + $0xf8] sm:$0xff]
  %v9292 = vld [vmem:[%s10 + $0x100] sm:$0xff]
  %v9293 = vld [vmem:[%s10 + $0x108] sm:$0xff]
  %v9294 = vld [vmem:[%s10 + $0x110] sm:$0xff]
  %v9295 = vld [vmem:[%s10 + $0x118] sm:$0xff]
  %v9296 = vld [vmem:[%s10 + $0x120] sm:$0xff]
  %v9297 = vld [vmem:[%s10 + $0x128] sm:$0xff]
  %v9298 = vld [vmem:[%s10 + $0x130] sm:$0xff]
  %v9299 = vld [vmem:[%s10 + $0x138] sm:$0xff]
  %v9300 = vld [vmem:[%s10 + $0x140] sm:$0xff]
  %v9301 = vld [vmem:[%s10 + $0x148] sm:$0xff]
  %v9302 = vld [vmem:[%s10 + $0x150] sm:$0xff]
  %v9303 = vld [vmem:[%s10 + $0x158] sm:$0xff]
  %v9304 = vld [vmem:[%s10 + $0x160] sm:$0xff]
  %v9305 = vld [vmem:[%s10 + $0x168] sm:$0xff]
  %v9306 = vld [vmem:[%s10 + $0x170] sm:$0xff]
  %v9307 = vld [vmem:[%s10 + $0x178] sm:$0xff]
  %v9308 = vld [vmem:[%s10 + $0x180] sm:$0xff]
  %v9309 = vld [vmem:[%s10 + $0x188] sm:$0xff]
  %v9310 = vld [vmem:[%s10 + $0x190] sm:$0xff]
  %v9311 = vld [vmem:[%s10 + $0x198] sm:$0xff]
  %v9312 = vld [vmem:[%s10 + $0x1a0] sm:$0xff]
  %v9313 = vld [vmem:[%s10 + $0x1a8] sm:$0xff]
  %v9314 = vld [vmem:[%s10 + $0x1b0] sm:$0xff]
  %v9315 = vld [vmem:[%s10 + $0x1b8] sm:$0xff]
  %v9316 = vld [vmem:[%s10 + $0x1c0] sm:$0xff]
  %v9317 = vld [vmem:[%s10 + $0x1c8] sm:$0xff]
  %v9318 = vld [vmem:[%s10 + $0x1d0] sm:$0xff]
  %v9319 = vld [vmem:[%s10 + $0x1d8] sm:$0xff]
  %v9320 = vld [vmem:[%s10 + $0x1e0] sm:$0xff]
  %v9321 = vld [vmem:[%s10 + $0x1e8] sm:$0xff]
  %v9322 = vld [vmem:[%s10 + $0x1f0] sm:$0xff]
  %v9323 = vld [vmem:[%s10 + $0x1f8] sm:$0xff]
  %v9324 = vld [vmem:[%s10 + $0x200] sm:$0xff]
  %v9325 = vld [vmem:[%s10 + $0x208] sm:$0xff]
  %v9326 = vld [vmem:[%s10 + $0x210] sm:$0xff]
  %v9327 = vld [vmem:[%s10 + $0x218] sm:$0xff]
  %v9328 = vld [vmem:[%s10 + $0x220] sm:$0xff]
  %v9329 = vld [vmem:[%s10 + $0x228] sm:$0xff]
  %v9330 = vld [vmem:[%s10 + $0x230] sm:$0xff]
  %v9331 = vld [vmem:[%s10 + $0x238] sm:$0x3f]
  %v9332 = vadd.f32 %v9260, %v7475
  %v9333 = vadd.f32 %v9261, %v7480
  %v9334 = vadd.f32 %v9262, %v7485
  %v9335 = vadd.f32 %v9263, %v7490
  %v9336 = vadd.f32 %v9264, %v7495
  %v9337 = vadd.f32 %v9265, %v7500
  %v9338 = vadd.f32 %v9266, %v7505
  %v9339 = vadd.f32 %v9267, %v7510
  %v9340 = vadd.f32 %v9268, %v7515
  %v9341 = vadd.f32 %v9269, %v7520
  %v9342 = vadd.f32 %v9270, %v7525
  %v9343 = vadd.f32 %v9271, %v7530
  %v9344 = vadd.f32 %v9272, %v7535
  %v9345 = vadd.f32 %v9273, %v7540
  %v9346 = vadd.f32 %v9274, %v7545
  %v9347 = vadd.f32 %v9275, %v7550
  %v9348 = vadd.f32 %v9276, %v7555
  %v9349 = vadd.f32 %v9277, %v7560
  %v9350 = vadd.f32 %v9278, %v7565
  %v9351 = vadd.f32 %v9279, %v7570
  %v9352 = vadd.f32 %v9280, %v7575
  %v9353 = vadd.f32 %v9281, %v7580
  %v9354 = vadd.f32 %v9282, %v7585
  %v9355 = vadd.f32 %v9283, %v7590
  %v9356 = vadd.f32 %v9284, %v7595
  %v9357 = vadd.f32 %v9285, %v7600
  %v9358 = vadd.f32 %v9286, %v7605
  %v9359 = vadd.f32 %v9287, %v7610
  %v9360 = vadd.f32 %v9288, %v7615
  %v9361 = vadd.f32 %v9289, %v7620
  %v9362 = vadd.f32 %v9290, %v7625
  %v9363 = vadd.f32 %v9291, %v7630
  %v9364 = vadd.f32 %v9292, %v7635
  %v9365 = vadd.f32 %v9293, %v7640
  %v9366 = vadd.f32 %v9294, %v7645
  %v9367 = vadd.f32 %v9295, %v7650
  %v9368 = vadd.f32 %v9296, %v7655
  %v9369 = vadd.f32 %v9297, %v7660
  %v9370 = vadd.f32 %v9298, %v7665
  %v9371 = vadd.f32 %v9299, %v7670
  %v9372 = vadd.f32 %v9300, %v7675
  %v9373 = vadd.f32 %v9301, %v7680
  %v9374 = vadd.f32 %v9302, %v7685
  %v9375 = vadd.f32 %v9303, %v7690
  %v9376 = vadd.f32 %v9304, %v7695
  %v9377 = vadd.f32 %v9305, %v7700
  %v9378 = vadd.f32 %v9306, %v7705
  %v9379 = vadd.f32 %v9307, %v7710
  %v9380 = vadd.f32 %v9308, %v7715
  %v9381 = vadd.f32 %v9309, %v7720
  %v9382 = vadd.f32 %v9310, %v7725
  %v9383 = vadd.f32 %v9311, %v7730
  %v9384 = vadd.f32 %v9312, %v7735
  %v9385 = vadd.f32 %v9313, %v7740
  %v9386 = vadd.f32 %v9314, %v7745
  %v9387 = vadd.f32 %v9315, %v7750
  %v9388 = vadd.f32 %v9316, %v7755
  %v9389 = vadd.f32 %v9317, %v7760
  %v9390 = vadd.f32 %v9318, %v7765
  %v9391 = vadd.f32 %v9319, %v7770
  %v9392 = vadd.f32 %v9320, %v7775
  %v9393 = vadd.f32 %v9321, %v7780
  %v9394 = vadd.f32 %v9322, %v7785
  %v9395 = vadd.f32 %v9323, %v7790
  %v9396 = vadd.f32 %v9324, %v7795
  %v9397 = vadd.f32 %v9325, %v7800
  %v9398 = vadd.f32 %v9326, %v7805
  %v9399 = vadd.f32 %v9327, %v7810
  %v9400 = vadd.f32 %v9328, %v7815
  %v9401 = vadd.f32 %v9329, %v7820
  %v9402 = vadd.f32 %v9330, %v7825
  %v9403 = vadd.f32 %v9331, %v7830
  %9404 = vst.msk [vmem:[%s10] sm:$0xff] %vm1344, %v9332
  %9405 = vst.msk [vmem:[%s10 + $0x8] sm:$0xff] %vm1344, %v9333
  %9406 = vst.msk [vmem:[%s10 + $0x10] sm:$0xff] %vm1344, %v9334
  %9407 = vst.msk [vmem:[%s10 + $0x18] sm:$0xff] %vm1344, %v9335
  %9408 = vst.msk [vmem:[%s10 + $0x20] sm:$0xff] %vm1344, %v9336
  %9409 = vst.msk [vmem:[%s10 + $0x28] sm:$0xff] %vm1344, %v9337
  %9410 = vst.msk [vmem:[%s10 + $0x30] sm:$0xff] %vm1344, %v9338
  %9411 = vst.msk [vmem:[%s10 + $0x38] sm:$0xff] %vm1344, %v9339
  %9412 = vst.msk [vmem:[%s10 + $0x40] sm:$0xff] %vm1344, %v9340
  %9413 = vst.msk [vmem:[%s10 + $0x48] sm:$0xff] %vm1344, %v9341
  %9414 = vst.msk [vmem:[%s10 + $0x50] sm:$0xff] %vm1344, %v9342
  %9415 = vst.msk [vmem:[%s10 + $0x58] sm:$0xff] %vm1344, %v9343
  %9416 = vst.msk [vmem:[%s10 + $0x60] sm:$0xff] %vm1344, %v9344
  %9417 = vst.msk [vmem:[%s10 + $0x68] sm:$0xff] %vm1344, %v9345
  %9418 = vst.msk [vmem:[%s10 + $0x70] sm:$0xff] %vm1344, %v9346
  %9419 = vst.msk [vmem:[%s10 + $0x78] sm:$0xff] %vm1344, %v9347
  %9420 = vst.msk [vmem:[%s10 + $0x80] sm:$0xff] %vm1344, %v9348
  %9421 = vst.msk [vmem:[%s10 + $0x88] sm:$0xff] %vm1344, %v9349
  %9422 = vst.msk [vmem:[%s10 + $0x90] sm:$0xff] %vm1344, %v9350
  %9423 = vst.msk [vmem:[%s10 + $0x98] sm:$0xff] %vm1344, %v9351
  %9424 = vst.msk [vmem:[%s10 + $0xa0] sm:$0xff] %vm1344, %v9352
  %9425 = vst.msk [vmem:[%s10 + $0xa8] sm:$0xff] %vm1344, %v9353
  %9426 = vst.msk [vmem:[%s10 + $0xb0] sm:$0xff] %vm1344, %v9354
  %9427 = vst.msk [vmem:[%s10 + $0xb8] sm:$0xff] %vm1344, %v9355
  %9428 = vst.msk [vmem:[%s10 + $0xc0] sm:$0xff] %vm1344, %v9356
  %9429 = vst.msk [vmem:[%s10 + $0xc8] sm:$0xff] %vm1344, %v9357
  %9430 = vst.msk [vmem:[%s10 + $0xd0] sm:$0xff] %vm1344, %v9358
  %9431 = vst.msk [vmem:[%s10 + $0xd8] sm:$0xff] %vm1344, %v9359
  %9432 = vst.msk [vmem:[%s10 + $0xe0] sm:$0xff] %vm1344, %v9360
  %9433 = vst.msk [vmem:[%s10 + $0xe8] sm:$0xff] %vm1344, %v9361
  %9434 = vst.msk [vmem:[%s10 + $0xf0] sm:$0xff] %vm1344, %v9362
  %9435 = vst.msk [vmem:[%s10 + $0xf8] sm:$0xff] %vm1344, %v9363
  %9436 = vst.msk [vmem:[%s10 + $0x100] sm:$0xff] %vm1344, %v9364
  %9437 = vst.msk [vmem:[%s10 + $0x108] sm:$0xff] %vm1344, %v9365
  %9438 = vst.msk [vmem:[%s10 + $0x110] sm:$0xff] %vm1344, %v9366
  %9439 = vst.msk [vmem:[%s10 + $0x118] sm:$0xff] %vm1344, %v9367
  %9440 = vst.msk [vmem:[%s10 + $0x120] sm:$0xff] %vm1344, %v9368
  %9441 = vst.msk [vmem:[%s10 + $0x128] sm:$0xff] %vm1344, %v9369
  %9442 = vst.msk [vmem:[%s10 + $0x130] sm:$0xff] %vm1344, %v9370
  %9443 = vst.msk [vmem:[%s10 + $0x138] sm:$0xff] %vm1344, %v9371
  %9444 = vst.msk [vmem:[%s10 + $0x140] sm:$0xff] %vm1344, %v9372
  %9445 = vst.msk [vmem:[%s10 + $0x148] sm:$0xff] %vm1344, %v9373
  %9446 = vst.msk [vmem:[%s10 + $0x150] sm:$0xff] %vm1344, %v9374
  %9447 = vst.msk [vmem:[%s10 + $0x158] sm:$0xff] %vm1344, %v9375
  %9448 = vst.msk [vmem:[%s10 + $0x160] sm:$0xff] %vm1344, %v9376
  %9449 = vst.msk [vmem:[%s10 + $0x168] sm:$0xff] %vm1344, %v9377
  %9450 = vst.msk [vmem:[%s10 + $0x170] sm:$0xff] %vm1344, %v9378
  %9451 = vst.msk [vmem:[%s10 + $0x178] sm:$0xff] %vm1344, %v9379
  %9452 = vst.msk [vmem:[%s10 + $0x180] sm:$0xff] %vm1344, %v9380
  %9453 = vst.msk [vmem:[%s10 + $0x188] sm:$0xff] %vm1344, %v9381
  %9454 = vst.msk [vmem:[%s10 + $0x190] sm:$0xff] %vm1344, %v9382
  %9455 = vst.msk [vmem:[%s10 + $0x198] sm:$0xff] %vm1344, %v9383
  %9456 = vst.msk [vmem:[%s10 + $0x1a0] sm:$0xff] %vm1344, %v9384
  %9457 = vst.msk [vmem:[%s10 + $0x1a8] sm:$0xff] %vm1344, %v9385
  %9458 = vst.msk [vmem:[%s10 + $0x1b0] sm:$0xff] %vm1344, %v9386
  %9459 = vst.msk [vmem:[%s10 + $0x1b8] sm:$0xff] %vm1344, %v9387
  %9460 = vst.msk [vmem:[%s10 + $0x1c0] sm:$0xff] %vm1344, %v9388
  %9461 = vst.msk [vmem:[%s10 + $0x1c8] sm:$0xff] %vm1344, %v9389
  %9462 = vst.msk [vmem:[%s10 + $0x1d0] sm:$0xff] %vm1344, %v9390
  %9463 = vst.msk [vmem:[%s10 + $0x1d8] sm:$0xff] %vm1344, %v9391
  %9464 = vst.msk [vmem:[%s10 + $0x1e0] sm:$0xff] %vm1344, %v9392
  %9465 = vst.msk [vmem:[%s10 + $0x1e8] sm:$0xff] %vm1344, %v9393
  %9466 = vst.msk [vmem:[%s10 + $0x1f0] sm:$0xff] %vm1344, %v9394
  %9467 = vst.msk [vmem:[%s10 + $0x1f8] sm:$0xff] %vm1344, %v9395
  %9468 = vst.msk [vmem:[%s10 + $0x200] sm:$0xff] %vm1344, %v9396
  %9469 = vst.msk [vmem:[%s10 + $0x208] sm:$0xff] %vm1344, %v9397
  %9470 = vst.msk [vmem:[%s10 + $0x210] sm:$0xff] %vm1344, %v9398
  %9471 = vst.msk [vmem:[%s10 + $0x218] sm:$0xff] %vm1344, %v9399
  %9472 = vst.msk [vmem:[%s10 + $0x220] sm:$0xff] %vm1344, %v9400
  %9473 = vst.msk [vmem:[%s10 + $0x228] sm:$0xff] %vm1344, %v9401
  %9474 = vst.msk [vmem:[%s10 + $0x230] sm:$0xff] %vm1344, %v9402
  %9475 = vst.msk [vmem:[%s10 + $0x238] sm:$0x3f] %vm3567, %v9403
  %v9476 = vld [vmem:[%s10 + $0x1] sm:$0xff]
  %v9477 = vld [vmem:[%s10 + $0x9] sm:$0xff]
  %v9478 = vld [vmem:[%s10 + $0x11] sm:$0xff]
  %v9479 = vld [vmem:[%s10 + $0x19] sm:$0xff]
  %v9480 = vld [vmem:[%s10 + $0x21] sm:$0xff]
  %v9481 = vld [vmem:[%s10 + $0x29] sm:$0xff]
  %v9482 = vld [vmem:[%s10 + $0x31] sm:$0xff]
  %v9483 = vld [vmem:[%s10 + $0x39] sm:$0xff]
  %v9484 = vld [vmem:[%s10 + $0x41] sm:$0xff]
  %v9485 = vld [vmem:[%s10 + $0x49] sm:$0xff]
  %v9486 = vld [vmem:[%s10 + $0x51] sm:$0xff]
  %v9487 = vld [vmem:[%s10 + $0x59] sm:$0xff]
  %v9488 = vld [vmem:[%s10 + $0x61] sm:$0xff]
  %v9489 = vld [vmem:[%s10 + $0x69] sm:$0xff]
  %v9490 = vld [vmem:[%s10 + $0x71] sm:$0xff]
  %v9491 = vld [vmem:[%s10 + $0x79] sm:$0xff]
  %v9492 = vld [vmem:[%s10 + $0x81] sm:$0xff]
  %v9493 = vld [vmem:[%s10 + $0x89] sm:$0xff]
  %v9494 = vld [vmem:[%s10 + $0x91] sm:$0xff]
  %v9495 = vld [vmem:[%s10 + $0x99] sm:$0xff]
  %v9496 = vld [vmem:[%s10 + $0xa1] sm:$0xff]
  %v9497 = vld [vmem:[%s10 + $0xa9] sm:$0xff]
  %v9498 = vld [vmem:[%s10 + $0xb1] sm:$0xff]
  %v9499 = vld [vmem:[%s10 + $0xb9] sm:$0xff]
  %v9500 = vld [vmem:[%s10 + $0xc1] sm:$0xff]
  %v9501 = vld [vmem:[%s10 + $0xc9] sm:$0xff]
  %v9502 = vld [vmem:[%s10 + $0xd1] sm:$0xff]
  %v9503 = vld [vmem:[%s10 + $0xd9] sm:$0xff]
  %v9504 = vld [vmem:[%s10 + $0xe1] sm:$0xff]
  %v9505 = vld [vmem:[%s10 + $0xe9] sm:$0xff]
  %v9506 = vld [vmem:[%s10 + $0xf1] sm:$0xff]
  %v9507 = vld [vmem:[%s10 + $0xf9] sm:$0xff]
  %v9508 = vld [vmem:[%s10 + $0x101] sm:$0xff]
  %v9509 = vld [vmem:[%s10 + $0x109] sm:$0xff]
  %v9510 = vld [vmem:[%s10 + $0x111] sm:$0xff]
  %v9511 = vld [vmem:[%s10 + $0x119] sm:$0xff]
  %v9512 = vld [vmem:[%s10 + $0x121] sm:$0xff]
  %v9513 = vld [vmem:[%s10 + $0x129] sm:$0xff]
  %v9514 = vld [vmem:[%s10 + $0x131] sm:$0xff]
  %v9515 = vld [vmem:[%s10 + $0x139] sm:$0xff]
  %v9516 = vld [vmem:[%s10 + $0x141] sm:$0xff]
  %v9517 = vld [vmem:[%s10 + $0x149] sm:$0xff]
  %v9518 = vld [vmem:[%s10 + $0x151] sm:$0xff]
  %v9519 = vld [vmem:[%s10 + $0x159] sm:$0xff]
  %v9520 = vld [vmem:[%s10 + $0x161] sm:$0xff]
  %v9521 = vld [vmem:[%s10 + $0x169] sm:$0xff]
  %v9522 = vld [vmem:[%s10 + $0x171] sm:$0xff]
  %v9523 = vld [vmem:[%s10 + $0x179] sm:$0xff]
  %v9524 = vld [vmem:[%s10 + $0x181] sm:$0xff]
  %v9525 = vld [vmem:[%s10 + $0x189] sm:$0xff]
  %v9526 = vld [vmem:[%s10 + $0x191] sm:$0xff]
  %v9527 = vld [vmem:[%s10 + $0x199] sm:$0xff]
  %v9528 = vld [vmem:[%s10 + $0x1a1] sm:$0xff]
  %v9529 = vld [vmem:[%s10 + $0x1a9] sm:$0xff]
  %v9530 = vld [vmem:[%s10 + $0x1b1] sm:$0xff]
  %v9531 = vld [vmem:[%s10 + $0x1b9] sm:$0xff]
  %v9532 = vld [vmem:[%s10 + $0x1c1] sm:$0xff]
  %v9533 = vld [vmem:[%s10 + $0x1c9] sm:$0xff]
  %v9534 = vld [vmem:[%s10 + $0x1d1] sm:$0xff]
  %v9535 = vld [vmem:[%s10 + $0x1d9] sm:$0xff]
  %v9536 = vld [vmem:[%s10 + $0x1e1] sm:$0xff]
  %v9537 = vld [vmem:[%s10 + $0x1e9] sm:$0xff]
  %v9538 = vld [vmem:[%s10 + $0x1f1] sm:$0xff]
  %v9539 = vld [vmem:[%s10 + $0x1f9] sm:$0xff]
  %v9540 = vld [vmem:[%s10 + $0x201] sm:$0xff]
  %v9541 = vld [vmem:[%s10 + $0x209] sm:$0xff]
  %v9542 = vld [vmem:[%s10 + $0x211] sm:$0xff]
  %v9543 = vld [vmem:[%s10 + $0x219] sm:$0xff]
  %v9544 = vld [vmem:[%s10 + $0x221] sm:$0xff]
  %v9545 = vld [vmem:[%s10 + $0x229] sm:$0xff]
  %v9546 = vld [vmem:[%s10 + $0x231] sm:$0xff]
  %v9547 = vld [vmem:[%s10 + $0x239] sm:$0x3f]
  %v9548 = vadd.f32 %v9476, %v8189
  %v9549 = vadd.f32 %v9477, %v8194
  %v9550 = vadd.f32 %v9478, %v8199
  %v9551 = vadd.f32 %v9479, %v8204
  %v9552 = vadd.f32 %v9480, %v8209
  %v9553 = vadd.f32 %v9481, %v8214
  %v9554 = vadd.f32 %v9482, %v8219
  %v9555 = vadd.f32 %v9483, %v8224
  %v9556 = vadd.f32 %v9484, %v8229
  %v9557 = vadd.f32 %v9485, %v8234
  %v9558 = vadd.f32 %v9486, %v8239
  %v9559 = vadd.f32 %v9487, %v8244
  %v9560 = vadd.f32 %v9488, %v8249
  %v9561 = vadd.f32 %v9489, %v8254
  %v9562 = vadd.f32 %v9490, %v8259
  %v9563 = vadd.f32 %v9491, %v8264
  %v9564 = vadd.f32 %v9492, %v8269
  %v9565 = vadd.f32 %v9493, %v8274
  %v9566 = vadd.f32 %v9494, %v8279
  %v9567 = vadd.f32 %v9495, %v8284
  %v9568 = vadd.f32 %v9496, %v8289
  %v9569 = vadd.f32 %v9497, %v8294
  %v9570 = vadd.f32 %v9498, %v8299
  %v9571 = vadd.f32 %v9499, %v8304
  %v9572 = vadd.f32 %v9500, %v8309
  %v9573 = vadd.f32 %v9501, %v8314
  %v9574 = vadd.f32 %v9502, %v8319
  %v9575 = vadd.f32 %v9503, %v8324
  %v9576 = vadd.f32 %v9504, %v8329
  %v9577 = vadd.f32 %v9505, %v8334
  %v9578 = vadd.f32 %v9506, %v8339
  %v9579 = vadd.f32 %v9507, %v8344
  %v9580 = vadd.f32 %v9508, %v8349
  %v9581 = vadd.f32 %v9509, %v8354
  %v9582 = vadd.f32 %v9510, %v8359
  %v9583 = vadd.f32 %v9511, %v8364
  %v9584 = vadd.f32 %v9512, %v8369
  %v9585 = vadd.f32 %v9513, %v8374
  %v9586 = vadd.f32 %v9514, %v8379
  %v9587 = vadd.f32 %v9515, %v8384
  %v9588 = vadd.f32 %v9516, %v8389
  %v9589 = vadd.f32 %v9517, %v8394
  %v9590 = vadd.f32 %v9518, %v8399
  %v9591 = vadd.f32 %v9519, %v8404
  %v9592 = vadd.f32 %v9520, %v8409
  %v9593 = vadd.f32 %v9521, %v8414
  %v9594 = vadd.f32 %v9522, %v8419
  %v9595 = vadd.f32 %v9523, %v8424
  %v9596 = vadd.f32 %v9524, %v8429
  %v9597 = vadd.f32 %v9525, %v8434
  %v9598 = vadd.f32 %v9526, %v8439
  %v9599 = vadd.f32 %v9527, %v8444
  %v9600 = vadd.f32 %v9528, %v8449
  %v9601 = vadd.f32 %v9529, %v8454
  %v9602 = vadd.f32 %v9530, %v8459
  %v9603 = vadd.f32 %v9531, %v8464
  %v9604 = vadd.f32 %v9532, %v8469
  %v9605 = vadd.f32 %v9533, %v8474
  %v9606 = vadd.f32 %v9534, %v8479
  %v9607 = vadd.f32 %v9535, %v8484
  %v9608 = vadd.f32 %v9536, %v8489
  %v9609 = vadd.f32 %v9537, %v8494
  %v9610 = vadd.f32 %v9538, %v8499
  %v9611 = vadd.f32 %v9539, %v8504
  %v9612 = vadd.f32 %v9540, %v8509
  %v9613 = vadd.f32 %v9541, %v8514
  %v9614 = vadd.f32 %v9542, %v8519
  %v9615 = vadd.f32 %v9543, %v8524
  %v9616 = vadd.f32 %v9544, %v8529
  %v9617 = vadd.f32 %v9545, %v8534
  %v9618 = vadd.f32 %v9546, %v8539
  %v9619 = vadd.f32 %v9547, %v8544
  %9620 = vst.msk [vmem:[%s10 + $0x1] sm:$0xff] %vm1344, %v9548
  %9621 = vst.msk [vmem:[%s10 + $0x9] sm:$0xff] %vm1344, %v9549
  %9622 = vst.msk [vmem:[%s10 + $0x11] sm:$0xff] %vm1344, %v9550
  %9623 = vst.msk [vmem:[%s10 + $0x19] sm:$0xff] %vm1344, %v9551
  %9624 = vst.msk [vmem:[%s10 + $0x21] sm:$0xff] %vm1344, %v9552
  %9625 = vst.msk [vmem:[%s10 + $0x29] sm:$0xff] %vm1344, %v9553
  %9626 = vst.msk [vmem:[%s10 + $0x31] sm:$0xff] %vm1344, %v9554
  %9627 = vst.msk [vmem:[%s10 + $0x39] sm:$0xff] %vm1344, %v9555
  %9628 = vst.msk [vmem:[%s10 + $0x41] sm:$0xff] %vm1344, %v9556
  %9629 = vst.msk [vmem:[%s10 + $0x49] sm:$0xff] %vm1344, %v9557
  %9630 = vst.msk [vmem:[%s10 + $0x51] sm:$0xff] %vm1344, %v9558
  %9631 = vst.msk [vmem:[%s10 + $0x59] sm:$0xff] %vm1344, %v9559
  %9632 = vst.msk [vmem:[%s10 + $0x61] sm:$0xff] %vm1344, %v9560
  %9633 = vst.msk [vmem:[%s10 + $0x69] sm:$0xff] %vm1344, %v9561
  %9634 = vst.msk [vmem:[%s10 + $0x71] sm:$0xff] %vm1344, %v9562
  %9635 = vst.msk [vmem:[%s10 + $0x79] sm:$0xff] %vm1344, %v9563
  %9636 = vst.msk [vmem:[%s10 + $0x81] sm:$0xff] %vm1344, %v9564
  %9637 = vst.msk [vmem:[%s10 + $0x89] sm:$0xff] %vm1344, %v9565
  %9638 = vst.msk [vmem:[%s10 + $0x91] sm:$0xff] %vm1344, %v9566
  %9639 = vst.msk [vmem:[%s10 + $0x99] sm:$0xff] %vm1344, %v9567
  %9640 = vst.msk [vmem:[%s10 + $0xa1] sm:$0xff] %vm1344, %v9568
  %9641 = vst.msk [vmem:[%s10 + $0xa9] sm:$0xff] %vm1344, %v9569
  %9642 = vst.msk [vmem:[%s10 + $0xb1] sm:$0xff] %vm1344, %v9570
  %9643 = vst.msk [vmem:[%s10 + $0xb9] sm:$0xff] %vm1344, %v9571
  %9644 = vst.msk [vmem:[%s10 + $0xc1] sm:$0xff] %vm1344, %v9572
  %9645 = vst.msk [vmem:[%s10 + $0xc9] sm:$0xff] %vm1344, %v9573
  %9646 = vst.msk [vmem:[%s10 + $0xd1] sm:$0xff] %vm1344, %v9574
  %9647 = vst.msk [vmem:[%s10 + $0xd9] sm:$0xff] %vm1344, %v9575
  %9648 = vst.msk [vmem:[%s10 + $0xe1] sm:$0xff] %vm1344, %v9576
  %9649 = vst.msk [vmem:[%s10 + $0xe9] sm:$0xff] %vm1344, %v9577
  %9650 = vst.msk [vmem:[%s10 + $0xf1] sm:$0xff] %vm1344, %v9578
  %9651 = vst.msk [vmem:[%s10 + $0xf9] sm:$0xff] %vm1344, %v9579
  %9652 = vst.msk [vmem:[%s10 + $0x101] sm:$0xff] %vm1344, %v9580
  %9653 = vst.msk [vmem:[%s10 + $0x109] sm:$0xff] %vm1344, %v9581
  %9654 = vst.msk [vmem:[%s10 + $0x111] sm:$0xff] %vm1344, %v9582
  %9655 = vst.msk [vmem:[%s10 + $0x119] sm:$0xff] %vm1344, %v9583
  %9656 = vst.msk [vmem:[%s10 + $0x121] sm:$0xff] %vm1344, %v9584
  %9657 = vst.msk [vmem:[%s10 + $0x129] sm:$0xff] %vm1344, %v9585
  %9658 = vst.msk [vmem:[%s10 + $0x131] sm:$0xff] %vm1344, %v9586
  %9659 = vst.msk [vmem:[%s10 + $0x139] sm:$0xff] %vm1344, %v9587
  %9660 = vst.msk [vmem:[%s10 + $0x141] sm:$0xff] %vm1344, %v9588
  %9661 = vst.msk [vmem:[%s10 + $0x149] sm:$0xff] %vm1344, %v9589
  %9662 = vst.msk [vmem:[%s10 + $0x151] sm:$0xff] %vm1344, %v9590
  %9663 = vst.msk [vmem:[%s10 + $0x159] sm:$0xff] %vm1344, %v9591
  %9664 = vst.msk [vmem:[%s10 + $0x161] sm:$0xff] %vm1344, %v9592
  %9665 = vst.msk [vmem:[%s10 + $0x169] sm:$0xff] %vm1344, %v9593
  %9666 = vst.msk [vmem:[%s10 + $0x171] sm:$0xff] %vm1344, %v9594
  %9667 = vst.msk [vmem:[%s10 + $0x179] sm:$0xff] %vm1344, %v9595
  %9668 = vst.msk [vmem:[%s10 + $0x181] sm:$0xff] %vm1344, %v9596
  %9669 = vst.msk [vmem:[%s10 + $0x189] sm:$0xff] %vm1344, %v9597
  %9670 = vst.msk [vmem:[%s10 + $0x191] sm:$0xff] %vm1344, %v9598
  %9671 = vst.msk [vmem:[%s10 + $0x199] sm:$0xff] %vm1344, %v9599
  %9672 = vst.msk [vmem:[%s10 + $0x1a1] sm:$0xff] %vm1344, %v9600
  %9673 = vst.msk [vmem:[%s10 + $0x1a9] sm:$0xff] %vm1344, %v9601
  %9674 = vst.msk [vmem:[%s10 + $0x1b1] sm:$0xff] %vm1344, %v9602
  %9675 = vst.msk [vmem:[%s10 + $0x1b9] sm:$0xff] %vm1344, %v9603
  %9676 = vst.msk [vmem:[%s10 + $0x1c1] sm:$0xff] %vm1344, %v9604
  %9677 = vst.msk [vmem:[%s10 + $0x1c9] sm:$0xff] %vm1344, %v9605
  %9678 = vst.msk [vmem:[%s10 + $0x1d1] sm:$0xff] %vm1344, %v9606
  %9679 = vst.msk [vmem:[%s10 + $0x1d9] sm:$0xff] %vm1344, %v9607
  %9680 = vst.msk [vmem:[%s10 + $0x1e1] sm:$0xff] %vm1344, %v9608
  %9681 = vst.msk [vmem:[%s10 + $0x1e9] sm:$0xff] %vm1344, %v9609
  %9682 = vst.msk [vmem:[%s10 + $0x1f1] sm:$0xff] %vm1344, %v9610
  %9683 = vst.msk [vmem:[%s10 + $0x1f9] sm:$0xff] %vm1344, %v9611
  %9684 = vst.msk [vmem:[%s10 + $0x201] sm:$0xff] %vm1344, %v9612
  %9685 = vst.msk [vmem:[%s10 + $0x209] sm:$0xff] %vm1344, %v9613
  %9686 = vst.msk [vmem:[%s10 + $0x211] sm:$0xff] %vm1344, %v9614
  %9687 = vst.msk [vmem:[%s10 + $0x219] sm:$0xff] %vm1344, %v9615
  %9688 = vst.msk [vmem:[%s10 + $0x221] sm:$0xff] %vm1344, %v9616
  %9689 = vst.msk [vmem:[%s10 + $0x229] sm:$0xff] %vm1344, %v9617
  %9690 = vst.msk [vmem:[%s10 + $0x231] sm:$0xff] %vm1344, %v9618
  %9691 = vst.msk [vmem:[%s10 + $0x239] sm:$0x3f] %vm3567, %v9619
  // Predicated region
  $region34: #{cnn_decoder_share_forward.1} parent=0 // pred_check
    _
  $region35: #{cnn_decoder_share_forward.1} parent=0 // pred_check_branch
    %9693 = sbr.rel (0) target = $region37
  $region36: #{cnn_decoder_share_forward.1} parent=0 // pred_region
    _
  $region37: #{cnn_decoder_share_forward.1} parent=0 // pred_fallthru
    _
  // Predicated region
  $region38: #{cnn_decoder_share_forward.1} parent=0 // pred_check
    _
  $region39: #{cnn_decoder_share_forward.1} parent=0 // pred_check_branch
    %9695 = sbr.rel (0) target = $region41
  $region40: #{cnn_decoder_share_forward.1} parent=0 // pred_region
    _
  $region41: #{cnn_decoder_share_forward.1} parent=0 // pred_fallthru
    _
  // Predicated region
  $region42: #{cnn_decoder_share_forward.1} parent=0 // pred_check
    _
  $region43: #{cnn_decoder_share_forward.1} parent=0 // pred_check_branch
    %9697 = sbr.rel (0) target = $region45
  $region44: #{cnn_decoder_share_forward.1} parent=0 // pred_region
    _
  $region45: #{cnn_decoder_share_forward.1} parent=0 // pred_fallthru
    _
  // Predicated region
  $region46: #{cnn_decoder_share_forward.1} parent=0 // pred_check
    _
  $region47: #{cnn_decoder_share_forward.1} parent=0 // pred_check_branch
    %9699 = sbr.rel (0) target = $region49
  $region48: #{cnn_decoder_share_forward.1} parent=0 // pred_region
    _
  $region49: #{cnn_decoder_share_forward.1} parent=0 // pred_fallthru
    _
  // Predicated region
  $region50: #{cnn_decoder_share_forward.1} parent=0 // pred_check
    _
  $region51: #{cnn_decoder_share_forward.1} parent=0 // pred_check_branch
    %9701 = sbr.rel (0) target = $region53
  $region52: #{cnn_decoder_share_forward.1} parent=0 // pred_region
    _
  $region53: #{cnn_decoder_share_forward.1} parent=0 // pred_fallthru
    _
  // Predicated region
  $region54: #{cnn_decoder_share_forward.1} parent=0 // pred_check
    _
  $region55: #{cnn_decoder_share_forward.1} parent=0 // pred_check_branch
    %9703 = sbr.rel (0) target = $region57
  $region56: #{cnn_decoder_share_forward.1} parent=0 // pred_region
    _
  $region57: #{cnn_decoder_share_forward.1} parent=0 // pred_fallthru
    _

</llo_original>
